<compile_context>
chip_gen: v7x
topology: tpu7x:2x2x1
jax: 0.10.0
libtpu: 0.0.40
codegen_flags: <defaults>
</compile_context>

<pallas_src>
import math
from functools import partial

import jax
import jax.numpy as jnp
from jax.experimental import pallas as pl
from jax.experimental.pallas import tpu as pltpu


# ---------------------------------------------------------------------------
# helpers
# ---------------------------------------------------------------------------

_VMEM_LIMIT = 32 * 1024 * 1024  # raises the v5e default (16 MiB), within v6e/v7x limits


def _pick_tile(dim, pref):
    """Largest tile <= pref that evenly divides dim (falls back to the full dim)."""
    if dim <= pref:
        return dim
    for t in (pref, pref // 2, pref // 4, 128, 8):
        if t <= dim and dim % t == 0:
            return t
    return dim


# ---------------------------------------------------------------------------
# fused LayerNorm -> Linear (-> GELU) kernel   (used for q/k/v and fc1)
# ---------------------------------------------------------------------------

def _ln_linear_kernel(x_ref, g_ref, b_ref, w_ref, bias_ref, o_ref, *, eps, act):
    x = x_ref[...]                                           # (tm, K) f32, K = full feature dim
    mu = jnp.mean(x, axis=-1, keepdims=True)
    xc = x - mu
    var = jnp.mean(xc * xc, axis=-1, keepdims=True)
    h = xc * jax.lax.rsqrt(var + eps) * g_ref[...] + b_ref[...]
    y = jnp.dot(h.astype(jnp.bfloat16), w_ref[...],          # bf16 x bf16 MXU, f32 accumulate
                preferred_element_type=jnp.float32)
    y = y + bias_ref[...]
    if act == "gelu":
        c = math.sqrt(2.0 / math.pi)
        y = 0.5 * y * (1.0 + jnp.tanh(c * (y + 0.044715 * (y * y * y))))
    o_ref[...] = y.astype(o_ref.dtype)


def ln_linear(x, gamma, beta, w, bias, *, act=None, eps=1e-6, tm_pref=256, tn_pref=256):
    """o = act(LayerNorm(x) @ w + bias). x: (M, K) f32, w: (K, N), bias: (N,)."""
    M, K = x.shape
    N = w.shape[1]
    tm = _pick_tile(M, tm_pref)
    tn = _pick_tile(N, tn_pref)
    w_bf = w.astype(jnp.bfloat16)                            # halve weight DMA traffic
    g2 = gamma.reshape(1, K).astype(jnp.float32)
    b2 = beta.reshape(1, K).astype(jnp.float32)
    bias2 = bias.reshape(1, N).astype(jnp.float32)
    return pl.pallas_call(
        partial(_ln_linear_kernel, eps=eps, act=act),
        grid=(M // tm, N // tn),
        in_specs=[
            pl.BlockSpec((tm, K), lambda i, j: (i, 0)),
            pl.BlockSpec((1, K), lambda i, j: (0, 0)),
            pl.BlockSpec((1, K), lambda i, j: (0, 0)),
            pl.BlockSpec((K, tn), lambda i, j: (0, j)),
            pl.BlockSpec((1, tn), lambda i, j: (0, j)),
        ],
        out_specs=pl.BlockSpec((tm, tn), lambda i, j: (i, j)),
        out_shape=jax.ShapeDtypeStruct((M, N), jnp.float32),
        compiler_params=pltpu.CompilerParams(
            dimension_semantics=("parallel", "parallel"),
            vmem_limit_bytes=_VMEM_LIMIT),
        cost_estimate=pl.CostEstimate(
            flops=2 * M * N * K + 8 * M * K,
            transcendentals=M * N if act == "gelu" else 0,
            bytes_accessed=4 * M * K + 2 * K * N + 4 * M * N),
    )(x.astype(jnp.float32), g2, b2, w_bf, bias2)


# ---------------------------------------------------------------------------
# tiled Linear + bias + residual kernel (K-grid with f32 accumulator)
#   (used for attn.proj + shortcut and fc2 + residual)
# ---------------------------------------------------------------------------

def _linear_residual_kernel(x_ref, w_ref, bias_ref, r_ref, o_ref, acc_ref):
    @pl.when(pl.program_id(2) == 0)
    def _():
        acc_ref[...] = jnp.zeros(acc_ref.shape, acc_ref.dtype)

    acc_ref[...] += jnp.dot(x_ref[...].astype(jnp.bfloat16), w_ref[...],
                            preferred_element_type=jnp.float32)

    @pl.when(pl.program_id(2) == pl.num_programs(2) - 1)
    def _():
        o_ref[...] = (acc_ref[...] + bias_ref[...] + r_ref[...]).astype(o_ref.dtype)


def linear_residual(x, w, bias, residual, *, tm_pref=256, tn_pref=256, tk_pref=512):
    """o = x @ w + bias + residual.  x: (M, K), w: (K, N), residual: (M, N)."""
    M, K = x.shape
    N = w.shape[1]
    tm = _pick_tile(M, tm_pref)
    tn = _pick_tile(N, tn_pref)
    tk = _pick_tile(K, tk_pref)
    w_bf = w.astype(jnp.bfloat16)
    bias2 = bias.reshape(1, N).astype(jnp.float32)
    return pl.pallas_call(
        _linear_residual_kernel,
        grid=(M // tm, N // tn, K // tk),
        in_specs=[
            pl.BlockSpec((tm, tk), lambda i, j, k: (i, k)),
            pl.BlockSpec((tk, tn), lambda i, j, k: (k, j)),
            pl.BlockSpec((1, tn), lambda i, j, k: (0, j)),
            pl.BlockSpec((tm, tn), lambda i, j, k: (i, j)),
        ],
        out_specs=pl.BlockSpec((tm, tn), lambda i, j, k: (i, j)),
        out_shape=jax.ShapeDtypeStruct((M, N), jnp.float32),
        scratch_shapes=[pltpu.VMEM((tm, tn), jnp.float32)],
        compiler_params=pltpu.CompilerParams(
            dimension_semantics=("parallel", "parallel", "arbitrary"),
            vmem_limit_bytes=_VMEM_LIMIT),
        cost_estimate=pl.CostEstimate(
            flops=2 * M * N * K,
            transcendentals=0,
            bytes_accessed=4 * M * K + 2 * K * N + 8 * M * N),
    )(x.astype(jnp.float32), w_bf, bias2, residual.astype(jnp.float32))


# ---------------------------------------------------------------------------
# flash-style multi-head attention (online softmax over KV tiles)
# q, k, v: (B, N, E) with heads packed head-major along E  ->  (B, N, E)
# ---------------------------------------------------------------------------

def _flash_attn_kernel(q_ref, k_ref, v_ref, o_ref, m_sc, l_sc, acc_sc, *, nh, hd, scale):
    kv = pl.program_id(2)

    @pl.when(kv == 0)
    def _():
        m_sc[...] = jnp.full(m_sc.shape, -jnp.inf, m_sc.dtype)
        l_sc[...] = jnp.zeros(l_sc.shape, l_sc.dtype)
        acc_sc[...] = jnp.zeros(acc_sc.shape, acc_sc.dtype)

    q = q_ref[0]                       # (tq, nh*hd) f32, lane-dense block
    k = k_ref[0]                       # (tk, nh*hd)
    v = v_ref[0]

    for h in range(nh):                # static unroll over heads (static lane slices)
        sl = slice(h * hd, (h + 1) * hd)
        qh = q[:, sl].astype(jnp.bfloat16)
        kh = k[:, sl].astype(jnp.bfloat16)
        vh = v[:, sl].astype(jnp.bfloat16)
        # s[n, m] = sum_d q[n, d] * k[m, d]   (bf16 MXU, f32 accumulate)
        s = jax.lax.dot_general(qh, kh, (((1,), (1,)), ((), ())),
                                preferred_element_type=jnp.float32) * scale
        m_prev = m_sc[h]                                            # (tq, 1)
        m_new = jnp.maximum(m_prev, jnp.max(s, axis=-1, keepdims=True))
        alpha = jnp.exp(m_prev - m_new)
        p = jnp.exp(s - m_new)
        l_sc[h] = alpha * l_sc[h] + jnp.sum(p, axis=-1, keepdims=True)
        acc_sc[h] = alpha * acc_sc[h] + jnp.dot(p.astype(jnp.bfloat16), vh,
                                                preferred_element_type=jnp.float32)
        m_sc[h] = m_new

    @pl.when(kv == pl.num_programs(2) - 1)
    def _():
        outs = []
        for h in range(nh):
            inv = pl.reciprocal(l_sc[h], approx=True)    # EUP slot, off the VALU
            outs.append(acc_sc[h] * inv)
        # single lane-dense (tq, nh*hd) store
        o_ref[0] = jnp.concatenate(outs, axis=-1).astype(o_ref.dtype)


def flash_attention(q, k, v, *, num_heads, tq_pref=128, tk_pref=128):
    B, N, E = q.shape
    hd = E // num_heads
    scale = hd ** (-0.5)
    tq = _pick_tile(N, tq_pref)
    tk = _pick_tile(N, tk_pref)
    q_spec = pl.BlockSpec((1, tq, E), lambda b, qi, ki: (b, qi, 0))
    kv_spec = pl.BlockSpec((1, tk, E), lambda b, qi, ki: (b, ki, 0))
    return pl.pallas_call(
        partial(_flash_attn_kernel, nh=num_heads, hd=hd, scale=scale),
        grid=(B, N // tq, N // tk),
        in_specs=[q_spec, kv_spec, kv_spec],
        out_specs=q_spec,
        out_shape=jax.ShapeDtypeStruct((B, N, E), jnp.float32),
        scratch_shapes=[
            pltpu.VMEM((num_heads, tq, 1), jnp.float32),   # running max
            pltpu.VMEM((num_heads, tq, 1), jnp.float32),   # running denominator
            pltpu.VMEM((num_heads, tq, hd), jnp.float32),  # running output
        ],
        compiler_params=pltpu.CompilerParams(
            dimension_semantics=("parallel", "parallel", "arbitrary"),
            vmem_limit_bytes=_VMEM_LIMIT),
        cost_estimate=pl.CostEstimate(
            flops=4 * B * num_heads * N * N * hd,
            transcendentals=B * num_heads * N * N,
            bytes_accessed=4 * 4 * B * N * E),
    )(q.astype(jnp.float32), k.astype(jnp.float32), v.astype(jnp.float32))


# ---------------------------------------------------------------------------
# Block forward (glue in plain JAX, all compute in the Pallas kernels above)
# ---------------------------------------------------------------------------

def block_forward(x_bhwc, params, *, num_heads, eps=1e-6):
    B, H, W, C = x_bhwc.shape
    N = H * W
    E = C
    tok = x_bhwc.reshape(B * N, C).astype(jnp.float32)   # channels-last token layout
    shortcut = tok

    # --- attention branch: LN1 fused into each of the q/k/v projections ----------
    # q/k/v weights are static column slices of qkv_w (parameters only) so no (B*N, 3E)
    # activation reshape/transpose ever hits HBM.
    q = ln_linear(tok, params["ln1_g"], params["ln1_b"],
                  params["qkv_w"][:, :E], params["qkv_b"][:E], eps=eps)
    k = ln_linear(tok, params["ln1_g"], params["ln1_b"],
                  params["qkv_w"][:, E:2 * E], params["qkv_b"][E:2 * E], eps=eps)
    v = ln_linear(tok, params["ln1_g"], params["ln1_b"],
                  params["qkv_w"][:, 2 * E:], params["qkv_b"][2 * E:], eps=eps)

    attn = flash_attention(q.reshape(B, N, E), k.reshape(B, N, E), v.reshape(B, N, E),
                           num_heads=num_heads)
    attn = attn.reshape(B * N, E)

    # proj linear with the residual (x = shortcut + attn(norm1(x))) fused in the epilogue
    tok = linear_residual(attn, params["proj_w"], params["proj_b"], shortcut)

    # --- MLP branch: LN2 + fc1 + GELU fused; fc2 + residual fused ----------------
    hmid = ln_linear(tok, params["ln2_g"], params["ln2_b"],
                     params["fc1_w"], params["fc1_b"], act="gelu", eps=eps)
    tok = linear_residual(hmid, params["fc2_w"], params["fc2_b"], tok)

    return tok.reshape(B, H, W, C)


# ---------------------------------------------------------------------------
# deterministic synthetic parameters + pure-JAX reference for a sanity check
# ---------------------------------------------------------------------------

def init_block_params(key, dim, mlp_ratio=4.0):
    mlp = int(dim * mlp_ratio)
    keys = iter(jax.random.split(key, 12))

    def nrm(shape, scale=0.02):
        return scale * jax.random.normal(next(keys), shape, jnp.float32)

    return dict(
        ln1_g=1.0 + nrm((dim,)), ln1_b=nrm((dim,)),
        qkv_w=nrm((dim, 3 * dim)), qkv_b=nrm((3 * dim,)),
        proj_w=nrm((dim, dim)), proj_b=nrm((dim,)),
        ln2_g=1.0 + nrm((dim,)), ln2_b=nrm((dim,)),
        fc1_w=nrm((dim, mlp)), fc1_b=nrm((mlp,)),
        fc2_w=nrm((mlp, dim)), fc2_b=nrm((dim,)),
    )


def block_forward_reference(x_bhwc, params, *, num_heads, eps=1e-6):
    B, H, W, C = x_bhwc.shape
    N = H * W
    hd = C // num_heads
    scale = hd ** (-0.5)
    x = x_bhwc.reshape(B, N, C).astype(jnp.float32)

    def ln(t, g, b):
        mu = jnp.mean(t, -1, keepdims=True)
        var = jnp.mean((t - mu) ** 2, -1, keepdims=True)
        return (t - mu) * jax.lax.rsqrt(var + eps) * g + b

    def gelu(t):
        c = math.sqrt(2.0 / math.pi)
        return 0.5 * t * (1.0 + jnp.tanh(c * (t + 0.044715 * t ** 3)))

    shortcut = x
    h = ln(x, params["ln1_g"], params["ln1_b"])
    qkv = h @ params["qkv_w"] + params["qkv_b"]
    qkv = qkv.reshape(B, N, 3, num_heads, hd).transpose(2, 0, 3, 1, 4)
    q, k, v = qkv[0], qkv[1], qkv[2]
    s = jnp.einsum("bhnd,bhmd->bhnm", q * scale, k)
    p = jax.nn.softmax(s, axis=-1)
    o = jnp.einsum("bhnm,bhmd->bhnd", p, v)
    o = o.transpose(0, 2, 1, 3).reshape(B, N, C)
    o = o @ params["proj_w"] + params["proj_b"]
    x = shortcut + o
    m = gelu(ln(x, params["ln2_g"], params["ln2_b"]) @ params["fc1_w"] + params["fc1_b"])
    x = x + (m @ params["fc2_w"] + params["fc2_b"])
    return x.reshape(B, H, W, C)


# ---------------------------------------------------------------------------
# main
# ---------------------------------------------------------------------------

if __name__ == "__main__":
    B, H, W = 2, 16, 16
    dim, num_heads, mlp_ratio = 32, 4, 4.0

    key = jax.random.PRNGKey(0)
    kx, kp = jax.random.split(key)
    x = jax.random.normal(kx, (B, H, W, dim), dtype=jnp.float32)
    params = init_block_params(kp, dim, mlp_ratio)

    fwd = jax.jit(partial(block_forward, num_heads=num_heads))
    out = jax.block_until_ready(fwd(x, params))

    assert out.shape == (B, H, W, dim), out.shape
    assert bool(jnp.all(jnp.isfinite(out)))

    ref = block_forward_reference(x, params, num_heads=num_heads)
    max_err = float(jnp.max(jnp.abs(out - ref)))
    assert max_err < 1e-1, f"max |pallas - reference| = {max_err}"

    print("KERNEL_OK")
</pallas_src>

<mosaic_0001>
module attributes {stable_mosaic.version = 11 : i64} {
  func.func @_ln_linear_kernel(%arg0: i32, %arg1: i32, %arg2: memref<256x32xf32, #tpu.memory_space<vmem>>, %arg3: memref<1x32xf32, #tpu.memory_space<vmem>>, %arg4: memref<1x32xf32, #tpu.memory_space<vmem>>, %arg5: memref<32x32xbf16, #tpu.memory_space<vmem>>, %arg6: memref<1x32xf32, #tpu.memory_space<vmem>>, %arg7: memref<256x32xf32, #tpu.memory_space<vmem>>) attributes {dimension_semantics = [#tpu.dimension_semantics<parallel>, #tpu.dimension_semantics<parallel>], iteration_bounds = array<i64: 2, 1>, scalar_prefetch = 0 : i64, scratch_operands = 0 : i64, tpu.core_type = #tpu.core_type<tc>, window_params = [{transform_indices = @transform_0, window_bounds = array<i64: 256, 32>}, {pipeline_mode = #tpu.pipeline_mode<synchronous>, transform_indices = @transform_1, window_bounds = array<i64: 1, 32>}, {pipeline_mode = #tpu.pipeline_mode<synchronous>, transform_indices = @transform_2, window_bounds = array<i64: 1, 32>}, {transform_indices = @transform_3, window_bounds = array<i64: 32, 32>}, {transform_indices = @transform_4, window_bounds = array<i64: 1, 32>}, {transform_indices = @transform_5, window_bounds = array<i64: 256, 32>}]} {
    %c0 = arith.constant 0 : index
    %c0_0 = arith.constant 0 : index
    %0 = vector.load %arg2[%c0, %c0_0] : memref<256x32xf32, #tpu.memory_space<vmem>>, vector<256x32xf32>
    %cst = arith.constant dense<0.000000e+00> : vector<256xf32>
    %1 = vector.multi_reduction <add>, %0, %cst [1] : vector<256x32xf32> to vector<256xf32>
    %2 = vector.shape_cast %1 : vector<256xf32> to vector<256x1xf32>
    %cst_1 = arith.constant 3.200000e+01 : f32
    %3 = vector.broadcast %cst_1 : f32 to vector<256x1xf32>
    %4 = arith.divf %2, %3 : vector<256x1xf32>
    %5 = vector.broadcast %4 : vector<256x1xf32> to vector<256x32xf32>
    %6 = arith.subf %0, %5 : vector<256x32xf32>
    %7 = arith.mulf %6, %6 : vector<256x32xf32>
    %cst_2 = arith.constant dense<0.000000e+00> : vector<256xf32>
    %8 = vector.multi_reduction <add>, %7, %cst_2 [1] : vector<256x32xf32> to vector<256xf32>
    %9 = vector.shape_cast %8 : vector<256xf32> to vector<256x1xf32>
    %cst_3 = arith.constant 3.200000e+01 : f32
    %10 = vector.broadcast %cst_3 : f32 to vector<256x1xf32>
    %11 = arith.divf %9, %10 : vector<256x1xf32>
    %cst_4 = arith.constant 9.99999997E-7 : f32
    %12 = vector.broadcast %cst_4 : f32 to vector<256x1xf32>
    %13 = arith.addf %11, %12 : vector<256x1xf32>
    %14 = math.rsqrt %13 : vector<256x1xf32>
    %15 = vector.broadcast %14 : vector<256x1xf32> to vector<256x32xf32>
    %16 = arith.mulf %6, %15 : vector<256x32xf32>
    %c0_5 = arith.constant 0 : index
    %c0_6 = arith.constant 0 : index
    %17 = vector.load %arg3[%c0_5, %c0_6] : memref<1x32xf32, #tpu.memory_space<vmem>>, vector<1x32xf32>
    %18 = vector.broadcast %17 : vector<1x32xf32> to vector<256x32xf32>
    %19 = arith.mulf %16, %18 : vector<256x32xf32>
    %c0_7 = arith.constant 0 : index
    %c0_8 = arith.constant 0 : index
    %20 = vector.load %arg4[%c0_7, %c0_8] : memref<1x32xf32, #tpu.memory_space<vmem>>, vector<1x32xf32>
    %21 = vector.broadcast %20 : vector<1x32xf32> to vector<256x32xf32>
    %22 = arith.addf %19, %21 : vector<256x32xf32>
    %23 = arith.truncf %22 : vector<256x32xf32> to vector<256x32xbf16>
    %c0_9 = arith.constant 0 : index
    %c0_10 = arith.constant 0 : index
    %24 = vector.load %arg5[%c0_9, %c0_10] : memref<32x32xbf16, #tpu.memory_space<vmem>>, vector<32x32xbf16>
    %cst_11 = arith.constant dense<0.000000e+00> : vector<256x32xf32>
    %25 = tpu.matmul %23, %24, %cst_11 {dimension_numbers = #tpu.dot_dimension_numbers<[1], [0], [0], [1], [0, 0, 1, 1], [], []>} : vector<256x32xbf16>, vector<32x32xbf16>, vector<256x32xf32> -> vector<256x32xf32>
    %c0_12 = arith.constant 0 : index
    %c0_13 = arith.constant 0 : index
    %26 = vector.load %arg6[%c0_12, %c0_13] : memref<1x32xf32, #tpu.memory_space<vmem>>, vector<1x32xf32>
    %27 = vector.broadcast %26 : vector<1x32xf32> to vector<256x32xf32>
    %28 = arith.addf %25, %27 : vector<256x32xf32>
    %c0_14 = arith.constant 0 : index
    %c0_15 = arith.constant 0 : index
    %29 = vector.load %arg7[%c0_14, %c0_15] : memref<256x32xf32, #tpu.memory_space<vmem>>, vector<256x32xf32>
    tpu.vector_store %arg7[%c0_14, %c0_15], %28 {strides = array<i32>} : memref<256x32xf32, #tpu.memory_space<vmem>>, vector<256x32xf32>,
    return
  }
  func.func @transform_0(%arg0: i32, %arg1: i32) -> (i32, i32) {
    %c0_i32 = arith.constant 0 : i32
    %c0_i32_0 = arith.constant 0 : i32
    return %arg0, %c0_i32 : i32, i32
  }
  func.func @transform_1(%arg0: i32, %arg1: i32) -> (i32, i32) {
    %c0_i32 = arith.constant 0 : i32
    %c0_i32_0 = arith.constant 0 : i32
    %c0_i32_1 = arith.constant 0 : i32
    return %c0_i32, %c0_i32_0 : i32, i32
  }
  func.func @transform_2(%arg0: i32, %arg1: i32) -> (i32, i32) {
    %c0_i32 = arith.constant 0 : i32
    %c0_i32_0 = arith.constant 0 : i32
    %c0_i32_1 = arith.constant 0 : i32
    return %c0_i32, %c0_i32_0 : i32, i32
  }
  func.func @transform_3(%arg0: i32, %arg1: i32) -> (i32, i32) {
    %c0_i32 = arith.constant 0 : i32
    %c0_i32_0 = arith.constant 0 : i32
    return %c0_i32, %arg1 : i32, i32
  }
  func.func @transform_4(%arg0: i32, %arg1: i32) -> (i32, i32) {
    %c0_i32 = arith.constant 0 : i32
    %c0_i32_0 = arith.constant 0 : i32
    return %c0_i32, %arg1 : i32, i32
  }
  func.func @transform_5(%arg0: i32, %arg1: i32) -> (i32, i32) {
    %c0_i32 = arith.constant 0 : i32
    return %arg0, %arg1 : i32, i32
  }
}

module attributes {stable_mosaic.version = 11 : i64} {
  func.func @_ln_linear_kernel(%arg0: i32, %arg1: i32, %arg2: memref<256x32xf32, #tpu.memory_space<vmem>>, %arg3: memref<1x32xf32, #tpu.memory_space<vmem>>, %arg4: memref<1x32xf32, #tpu.memory_space<vmem>>, %arg5: memref<32x32xbf16, #tpu.memory_space<vmem>>, %arg6: memref<1x32xf32, #tpu.memory_space<vmem>>, %arg7: memref<256x32xf32, #tpu.memory_space<vmem>>) attributes {dimension_semantics = [#tpu.dimension_semantics<parallel>, #tpu.dimension_semantics<parallel>], iteration_bounds = array<i64: 2, 1>, scalar_prefetch = 0 : i64, scratch_operands = 0 : i64, tpu.core_type = #tpu.core_type<tc>, window_params = [{transform_indices = @transform_0, window_bounds = array<i64: 256, 32>}, {pipeline_mode = #tpu.pipeline_mode<synchronous>, transform_indices = @transform_1, window_bounds = array<i64: 1, 32>}, {pipeline_mode = #tpu.pipeline_mode<synchronous>, transform_indices = @transform_2, window_bounds = array<i64: 1, 32>}, {transform_indices = @transform_3, window_bounds = array<i64: 32, 32>}, {transform_indices = @transform_4, window_bounds = array<i64: 1, 32>}, {transform_indices = @transform_5, window_bounds = array<i64: 256, 32>}]} {
    %c0 = arith.constant 0 : index
    %c0_0 = arith.constant 0 : index
    %0 = vector.load %arg2[%c0, %c0_0] : memref<256x32xf32, #tpu.memory_space<vmem>>, vector<256x32xf32>
    %cst = arith.constant dense<0.000000e+00> : vector<256xf32>
    %1 = vector.multi_reduction <add>, %0, %cst [1] : vector<256x32xf32> to vector<256xf32>
    %2 = vector.shape_cast %1 : vector<256xf32> to vector<256x1xf32>
    %cst_1 = arith.constant 3.200000e+01 : f32
    %3 = vector.broadcast %cst_1 : f32 to vector<256x1xf32>
    %4 = arith.divf %2, %3 : vector<256x1xf32>
    %5 = vector.broadcast %4 : vector<256x1xf32> to vector<256x32xf32>
    %6 = arith.subf %0, %5 : vector<256x32xf32>
    %7 = arith.mulf %6, %6 : vector<256x32xf32>
    %cst_2 = arith.constant dense<0.000000e+00> : vector<256xf32>
    %8 = vector.multi_reduction <add>, %7, %cst_2 [1] : vector<256x32xf32> to vector<256xf32>
    %9 = vector.shape_cast %8 : vector<256xf32> to vector<256x1xf32>
    %cst_3 = arith.constant 3.200000e+01 : f32
    %10 = vector.broadcast %cst_3 : f32 to vector<256x1xf32>
    %11 = arith.divf %9, %10 : vector<256x1xf32>
    %cst_4 = arith.constant 9.99999997E-7 : f32
    %12 = vector.broadcast %cst_4 : f32 to vector<256x1xf32>
    %13 = arith.addf %11, %12 : vector<256x1xf32>
    %14 = math.rsqrt %13 : vector<256x1xf32>
    %15 = vector.broadcast %14 : vector<256x1xf32> to vector<256x32xf32>
    %16 = arith.mulf %6, %15 : vector<256x32xf32>
    %c0_5 = arith.constant 0 : index
    %c0_6 = arith.constant 0 : index
    %17 = vector.load %arg3[%c0_5, %c0_6] : memref<1x32xf32, #tpu.memory_space<vmem>>, vector<1x32xf32>
    %18 = vector.broadcast %17 : vector<1x32xf32> to vector<256x32xf32>
    %19 = arith.mulf %16, %18 : vector<256x32xf32>
    %c0_7 = arith.constant 0 : index
    %c0_8 = arith.constant 0 : index
    %20 = vector.load %arg4[%c0_7, %c0_8] : memref<1x32xf32, #tpu.memory_space<vmem>>, vector<1x32xf32>
    %21 = vector.broadcast %20 : vector<1x32xf32> to vector<256x32xf32>
    %22 = arith.addf %19, %21 : vector<256x32xf32>
    %23 = arith.truncf %22 : vector<256x32xf32> to vector<256x32xbf16>
    %c0_9 = arith.constant 0 : index
    %c0_10 = arith.constant 0 : index
    %24 = vector.load %arg5[%c0_9, %c0_10] : memref<32x32xbf16, #tpu.memory_space<vmem>>, vector<32x32xbf16>
    %cst_11 = arith.constant dense<0.000000e+00> : vector<256x32xf32>
    %25 = tpu.matmul %23, %24, %cst_11 {dimension_numbers = #tpu.dot_dimension_numbers<[1], [0], [0], [1], [0, 0, 1, 1], [], []>} : vector<256x32xbf16>, vector<32x32xbf16>, vector<256x32xf32> -> vector<256x32xf32>
    %c0_12 = arith.constant 0 : index
    %c0_13 = arith.constant 0 : index
    %26 = vector.load %arg6[%c0_12, %c0_13] : memref<1x32xf32, #tpu.memory_space<vmem>>, vector<1x32xf32>
    %27 = vector.broadcast %26 : vector<1x32xf32> to vector<256x32xf32>
    %28 = arith.addf %25, %27 : vector<256x32xf32>
    %c0_14 = arith.constant 0 : index
    %c0_15 = arith.constant 0 : index
    %29 = vector.load %arg7[%c0_14, %c0_15] : memref<256x32xf32, #tpu.memory_space<vmem>>, vector<256x32xf32>
    tpu.vector_store %arg7[%c0_14, %c0_15], %28 {strides = array<i32>} : memref<256x32xf32, #tpu.memory_space<vmem>>, vector<256x32xf32>,
    return
  }
  func.func @transform_0(%arg0: i32, %arg1: i32) -> (i32, i32) {
    %c0_i32 = arith.constant 0 : i32
    %c0_i32_0 = arith.constant 0 : i32
    return %arg0, %c0_i32 : i32, i32
  }
  func.func @transform_1(%arg0: i32, %arg1: i32) -> (i32, i32) {
    %c0_i32 = arith.constant 0 : i32
    %c0_i32_0 = arith.constant 0 : i32
    %c0_i32_1 = arith.constant 0 : i32
    return %c0_i32, %c0_i32_0 : i32, i32
  }
  func.func @transform_2(%arg0: i32, %arg1: i32) -> (i32, i32) {
    %c0_i32 = arith.constant 0 : i32
    %c0_i32_0 = arith.constant 0 : i32
    %c0_i32_1 = arith.constant 0 : i32
    return %c0_i32, %c0_i32_0 : i32, i32
  }
  func.func @transform_3(%arg0: i32, %arg1: i32) -> (i32, i32) {
    %c0_i32 = arith.constant 0 : i32
    %c0_i32_0 = arith.constant 0 : i32
    return %c0_i32, %arg1 : i32, i32
  }
  func.func @transform_4(%arg0: i32, %arg1: i32) -> (i32, i32) {
    %c0_i32 = arith.constant 0 : i32
    %c0_i32_0 = arith.constant 0 : i32
    return %c0_i32, %arg1 : i32, i32
  }
  func.func @transform_5(%arg0: i32, %arg1: i32) -> (i32, i32) {
    %c0_i32 = arith.constant 0 : i32
    return %arg0, %arg1 : i32, i32
  }
}

module attributes {stable_mosaic.version = 11 : i64} {
  func.func @_linear_residual_kernel(%arg0: i32, %arg1: i32, %arg2: i32, %arg3: memref<256x32xf32, #tpu.memory_space<vmem>>, %arg4: memref<32x32xbf16, #tpu.memory_space<vmem>>, %arg5: memref<1x32xf32, #tpu.memory_space<vmem>>, %arg6: memref<256x32xf32, #tpu.memory_space<vmem>>, %arg7: memref<256x32xf32, #tpu.memory_space<vmem>>, %arg8: memref<256x32xf32, #tpu.memory_space<vmem>>) attributes {dimension_semantics = [#tpu.dimension_semantics<parallel>, #tpu.dimension_semantics<parallel>, #tpu.dimension_semantics<arbitrary>], iteration_bounds = array<i64: 2, 1, 1>, scalar_prefetch = 0 : i64, scratch_operands = 1 : i64, tpu.core_type = #tpu.core_type<tc>, window_params = [{transform_indices = @transform_0, window_bounds = array<i64: 256, 32>}, {transform_indices = @transform_1, window_bounds = array<i64: 32, 32>}, {transform_indices = @transform_2, window_bounds = array<i64: 1, 32>}, {transform_indices = @transform_3, window_bounds = array<i64: 256, 32>}, {transform_indices = @transform_4, window_bounds = array<i64: 256, 32>}]} {
    %c0_i32 = arith.constant 0 : i32
    %0 = arith.cmpi eq, %arg2, %c0_i32 : i32
    %1 = arith.extui %0 : i1 to i32
    %c0_i32_0 = arith.constant 0 : i32
    %2 = arith.cmpi ne, %1, %c0_i32_0 : i32
    scf.if %2 {
      %cst_10 = arith.constant 0.000000e+00 : f32
      %13 = vector.broadcast %cst_10 : f32 to vector<256x32xf32>
      %c0_11 = arith.constant 0 : index
      %c0_12 = arith.constant 0 : index
      %14 = vector.load %arg8[%c0_11, %c0_12] : memref<256x32xf32, #tpu.memory_space<vmem>>, vector<256x32xf32>
      tpu.vector_store %arg8[%c0_11, %c0_12], %13 {strides = array<i32>} : memref<256x32xf32, #tpu.memory_space<vmem>>, vector<256x32xf32>,
    } else {
    }
    %c0 = arith.constant 0 : index
    %c0_1 = arith.constant 0 : index
    %3 = vector.load %arg8[%c0, %c0_1] : memref<256x32xf32, #tpu.memory_space<vmem>>, vector<256x32xf32>
    %c0_2 = arith.constant 0 : index
    %c0_3 = arith.constant 0 : index
    %4 = vector.load %arg3[%c0_2, %c0_3] : memref<256x32xf32, #tpu.memory_space<vmem>>, vector<256x32xf32>
    %5 = arith.truncf %4 : vector<256x32xf32> to vector<256x32xbf16>
    %c0_4 = arith.constant 0 : index
    %c0_5 = arith.constant 0 : index
    %6 = vector.load %arg4[%c0_4, %c0_5] : memref<32x32xbf16, #tpu.memory_space<vmem>>, vector<32x32xbf16>
    %cst = arith.constant dense<0.000000e+00> : vector<256x32xf32>
    %7 = tpu.matmul %5, %6, %cst {dimension_numbers = #tpu.dot_dimension_numbers<[1], [0], [0], [1], [0, 0, 1, 1], [], []>} : vector<256x32xbf16>, vector<32x32xbf16>, vector<256x32xf32> -> vector<256x32xf32>
    %8 = arith.addf %3, %7 : vector<256x32xf32>
    %c0_6 = arith.constant 0 : index
    %c0_7 = arith.constant 0 : index
    %9 = vector.load %arg8[%c0_6, %c0_7] : memref<256x32xf32, #tpu.memory_space<vmem>>, vector<256x32xf32>
    tpu.vector_store %arg8[%c0_6, %c0_7], %8 {strides = array<i32>} : memref<256x32xf32, #tpu.memory_space<vmem>>, vector<256x32xf32>,
    %c0_i32_8 = arith.constant 0 : i32
    %10 = arith.cmpi eq, %arg2, %c0_i32_8 : i32
    %11 = arith.extui %10 : i1 to i32
    %c0_i32_9 = arith.constant 0 : i32
    %12 = arith.cmpi ne, %11, %c0_i32_9 : i32
    scf.if %12 {
      %c0_10 = arith.constant 0 : index
      %c0_11 = arith.constant 0 : index
      %13 = vector.load %arg8[%c0_10, %c0_11] : memref<256x32xf32, #tpu.memory_space<vmem>>, vector<256x32xf32>
      %c0_12 = arith.constant 0 : index
      %c0_13 = arith.constant 0 : index
      %14 = vector.load %arg5[%c0_12, %c0_13] : memref<1x32xf32, #tpu.memory_space<vmem>>, vector<1x32xf32>
      %15 = vector.broadcast %14 : vector<1x32xf32> to vector<256x32xf32>
      %16 = arith.addf %13, %15 : vector<256x32xf32>
      %c0_14 = arith.constant 0 : index
      %c0_15 = arith.constant 0 : index
      %17 = vector.load %arg6[%c0_14, %c0_15] : memref<256x32xf32, #tpu.memory_space<vmem>>, vector<256x32xf32>
      %18 = arith.addf %16, %17 : vector<256x32xf32>
      %c0_16 = arith.constant 0 : index
      %c0_17 = arith.constant 0 : index
      %19 = vector.load %arg7[%c0_16, %c0_17] : memref<256x32xf32, #tpu.memory_space<vmem>>, vector<256x32xf32>
      tpu.vector_store %arg7[%c0_16, %c0_17], %18 {strides = array<i32>} : memref<256x32xf32, #tpu.memory_space<vmem>>, vector<256x32xf32>,
    } else {
    }
    return
  }
  func.func @transform_0(%arg0: i32, %arg1: i32, %arg2: i32) -> (i32, i32) {
    %c0_i32 = arith.constant 0 : i32
    return %arg0, %arg2 : i32, i32
  }
  func.func @transform_1(%arg0: i32, %arg1: i32, %arg2: i32) -> (i32, i32) {
    %c0_i32 = arith.constant 0 : i32
    return %arg2, %arg1 : i32, i32
  }
  func.func @transform_2(%arg0: i32, %arg1: i32, %arg2: i32) -> (i32, i32) {
    %c0_i32 = arith.constant 0 : i32
    %c0_i32_0 = arith.constant 0 : i32
    return %c0_i32, %arg1 : i32, i32
  }
  func.func @transform_3(%arg0: i32, %arg1: i32, %arg2: i32) -> (i32, i32) {
    %c0_i32 = arith.constant 0 : i32
    return %arg0, %arg1 : i32, i32
  }
  func.func @transform_4(%arg0: i32, %arg1: i32, %arg2: i32) -> (i32, i32) {
    %c0_i32 = arith.constant 0 : i32
    return %arg0, %arg1 : i32, i32
  }
}

module attributes {stable_mosaic.version = 11 : i64} {
  func.func @_flash_attn_kernel(%arg0: i32, %arg1: i32, %arg2: i32, %arg3: memref<1x128x32xf32, #tpu.memory_space<vmem>>, %arg4: memref<1x128x32xf32, #tpu.memory_space<vmem>>, %arg5: memref<1x128x32xf32, #tpu.memory_space<vmem>>, %arg6: memref<1x128x32xf32, #tpu.memory_space<vmem>>, %arg7: memref<4x128x1xf32, #tpu.memory_space<vmem>>, %arg8: memref<4x128x1xf32, #tpu.memory_space<vmem>>, %arg9: memref<4x128x8xf32, #tpu.memory_space<vmem>>) attributes {dimension_semantics = [#tpu.dimension_semantics<parallel>, #tpu.dimension_semantics<parallel>, #tpu.dimension_semantics<arbitrary>], iteration_bounds = array<i64: 2, 2, 2>, scalar_prefetch = 0 : i64, scratch_operands = 3 : i64, tpu.core_type = #tpu.core_type<tc>, window_params = [{transform_indices = @transform_0, window_bounds = array<i64: 1, 128, 32>}, {transform_indices = @transform_1, window_bounds = array<i64: 1, 128, 32>}, {transform_indices = @transform_2, window_bounds = array<i64: 1, 128, 32>}, {transform_indices = @transform_3, window_bounds = array<i64: 1, 128, 32>}]} {
    %c0_i32 = arith.constant 0 : i32
    %0 = arith.cmpi eq, %arg2, %c0_i32 : i32
    %1 = arith.extui %0 : i1 to i32
    %c0_i32_0 = arith.constant 0 : i32
    %2 = arith.cmpi ne, %1, %c0_i32_0 : i32
    scf.if %2 {
      %cst_98 = arith.constant 0xFF800000 : f32
      %176 = vector.broadcast %cst_98 : f32 to vector<4x128x1xf32>
      %c0_99 = arith.constant 0 : index
      %c0_100 = arith.constant 0 : index
      %c0_101 = arith.constant 0 : index
      %177 = vector.load %arg7[%c0_99, %c0_100, %c0_101] : memref<4x128x1xf32, #tpu.memory_space<vmem>>, vector<4x128x1xf32>
      tpu.vector_store %arg7[%c0_99, %c0_100, %c0_101], %176 {strides = array<i32>} : memref<4x128x1xf32, #tpu.memory_space<vmem>>, vector<4x128x1xf32>,
      %cst_102 = arith.constant 0.000000e+00 : f32
      %178 = vector.broadcast %cst_102 : f32 to vector<4x128x1xf32>
      %c0_103 = arith.constant 0 : index
      %c0_104 = arith.constant 0 : index
      %c0_105 = arith.constant 0 : index
      %179 = vector.load %arg8[%c0_103, %c0_104, %c0_105] : memref<4x128x1xf32, #tpu.memory_space<vmem>>, vector<4x128x1xf32>
      tpu.vector_store %arg8[%c0_103, %c0_104, %c0_105], %178 {strides = array<i32>} : memref<4x128x1xf32, #tpu.memory_space<vmem>>, vector<4x128x1xf32>,
      %cst_106 = arith.constant 0.000000e+00 : f32
      %180 = vector.broadcast %cst_106 : f32 to vector<4x128x8xf32>
      %c0_107 = arith.constant 0 : index
      %c0_108 = arith.constant 0 : index
      %c0_109 = arith.constant 0 : index
      %181 = vector.load %arg9[%c0_107, %c0_108, %c0_109] : memref<4x128x8xf32, #tpu.memory_space<vmem>>, vector<4x128x8xf32>
      tpu.vector_store %arg9[%c0_107, %c0_108, %c0_109], %180 {strides = array<i32>} : memref<4x128x8xf32, #tpu.memory_space<vmem>>, vector<4x128x8xf32>,
    } else {
    }
    %c0 = arith.constant 0 : index
    %c0_1 = arith.constant 0 : index
    %c0_2 = arith.constant 0 : index
    %3 = vector.load %arg3[%c0, %c0_1, %c0_2] : memref<1x128x32xf32, #tpu.memory_space<vmem>>, vector<1x128x32xf32>
    %4 = vector.shape_cast %3 : vector<1x128x32xf32> to vector<128x32xf32>
    %c0_3 = arith.constant 0 : index
    %c0_4 = arith.constant 0 : index
    %c0_5 = arith.constant 0 : index
    %5 = vector.load %arg4[%c0_3, %c0_4, %c0_5] : memref<1x128x32xf32, #tpu.memory_space<vmem>>, vector<1x128x32xf32>
    %6 = vector.shape_cast %5 : vector<1x128x32xf32> to vector<128x32xf32>
    %c0_6 = arith.constant 0 : index
    %c0_7 = arith.constant 0 : index
    %c0_8 = arith.constant 0 : index
    %7 = vector.load %arg5[%c0_6, %c0_7, %c0_8] : memref<1x128x32xf32, #tpu.memory_space<vmem>>, vector<1x128x32xf32>
    %8 = vector.shape_cast %7 : vector<1x128x32xf32> to vector<128x32xf32>
    %9 = vector.extract_strided_slice %4 {offsets = [0, 0], sizes = [128, 8], strides = [1, 1]} : vector<128x32xf32> to vector<128x8xf32>
    %10 = arith.truncf %9 : vector<128x8xf32> to vector<128x8xbf16>
    %11 = vector.extract_strided_slice %6 {offsets = [0, 0], sizes = [128, 8], strides = [1, 1]} : vector<128x32xf32> to vector<128x8xf32>
    %12 = arith.truncf %11 : vector<128x8xf32> to vector<128x8xbf16>
    %13 = vector.extract_strided_slice %8 {offsets = [0, 0], sizes = [128, 8], strides = [1, 1]} : vector<128x32xf32> to vector<128x8xf32>
    %14 = arith.truncf %13 : vector<128x8xf32> to vector<128x8xbf16>
    %cst = arith.constant dense<0.000000e+00> : vector<128x128xf32>
    %15 = tpu.matmul %10, %12, %cst {dimension_numbers = #tpu.dot_dimension_numbers<[1], [1], [0], [0], [0, 0, 1, 0], [], []>} : vector<128x8xbf16>, vector<128x8xbf16>, vector<128x128xf32> -> vector<128x128xf32>
    %cst_9 = arith.constant 0.353553385 : f32
    %16 = vector.broadcast %cst_9 : f32 to vector<128x128xf32>
    %17 = arith.mulf %15, %16 : vector<128x128xf32>
    %c0_10 = arith.constant 0 : index
    %c0_11 = arith.constant 0 : index
    %c0_12 = arith.constant 0 : index
    %18 = vector.load %arg7[%c0_10, %c0_11, %c0_12] : memref<4x128x1xf32, #tpu.memory_space<vmem>>, vector<1x128x1xf32>
    %19 = vector.shape_cast %18 : vector<1x128x1xf32> to vector<128x1xf32>
    %cst_13 = arith.constant dense<0xFF800000> : vector<128xf32>
    %20 = vector.multi_reduction <maximumf>, %17, %cst_13 [1] : vector<128x128xf32> to vector<128xf32>
    %21 = vector.shape_cast %20 : vector<128xf32> to vector<128x1xf32>
    %22 = arith.maximumf %19, %21 : vector<128x1xf32>
    %23 = arith.subf %19, %22 : vector<128x1xf32>
    %24 = math.exp %23 : vector<128x1xf32>
    %25 = vector.broadcast %22 : vector<128x1xf32> to vector<128x128xf32>
    %26 = arith.subf %17, %25 : vector<128x128xf32>
    %27 = math.exp %26 : vector<128x128xf32>
    %c0_14 = arith.constant 0 : index
    %c0_15 = arith.constant 0 : index
    %c0_16 = arith.constant 0 : index
    %28 = vector.load %arg8[%c0_14, %c0_15, %c0_16] : memref<4x128x1xf32, #tpu.memory_space<vmem>>, vector<1x128x1xf32>
    %29 = vector.shape_cast %28 : vector<1x128x1xf32> to vector<128x1xf32>
    %30 = arith.mulf %24, %29 : vector<128x1xf32>
    %cst_17 = arith.constant dense<0.000000e+00> : vector<128xf32>
    %31 = vector.multi_reduction <add>, %27, %cst_17 [1] : vector<128x128xf32> to vector<128xf32>
    %32 = vector.shape_cast %31 : vector<128xf32> to vector<128x1xf32>
    %33 = arith.addf %30, %32 : vector<128x1xf32>
    %c0_18 = arith.constant 0 : index
    %c0_19 = arith.constant 0 : index
    %c0_20 = arith.constant 0 : index
    %34 = vector.load %arg8[%c0_18, %c0_19, %c0_20] : memref<4x128x1xf32, #tpu.memory_space<vmem>>, vector<1x128x1xf32>
    %35 = vector.shape_cast %34 : vector<1x128x1xf32> to vector<128x1xf32>
    %36 = vector.shape_cast %33 : vector<128x1xf32> to vector<1x128x1xf32>
    tpu.vector_store %arg8[%c0_18, %c0_19, %c0_20], %36 {strides = array<i32>} : memref<4x128x1xf32, #tpu.memory_space<vmem>>, vector<1x128x1xf32>,
    %c0_21 = arith.constant 0 : index
    %c0_22 = arith.constant 0 : index
    %c0_23 = arith.constant 0 : index
    %37 = vector.load %arg9[%c0_21, %c0_22, %c0_23] : memref<4x128x8xf32, #tpu.memory_space<vmem>>, vector<1x128x8xf32>
    %38 = vector.shape_cast %37 : vector<1x128x8xf32> to vector<128x8xf32>
    %39 = vector.broadcast %24 : vector<128x1xf32> to vector<128x8xf32>
    %40 = arith.mulf %39, %38 : vector<128x8xf32>
    %41 = arith.truncf %27 : vector<128x128xf32> to vector<128x128xbf16>
    %cst_24 = arith.constant dense<0.000000e+00> : vector<128x8xf32>
    %42 = tpu.matmul %41, %14, %cst_24 {dimension_numbers = #tpu.dot_dimension_numbers<[1], [0], [0], [1], [0, 0, 1, 1], [], []>} : vector<128x128xbf16>, vector<128x8xbf16>, vector<128x8xf32> -> vector<128x8xf32>
    %43 = arith.addf %40, %42 : vector<128x8xf32>
    %c0_25 = arith.constant 0 : index
    %c0_26 = arith.constant 0 : index
    %c0_27 = arith.constant 0 : index
    %44 = vector.load %arg9[%c0_25, %c0_26, %c0_27] : memref<4x128x8xf32, #tpu.memory_space<vmem>>, vector<1x128x8xf32>
    %45 = vector.shape_cast %44 : vector<1x128x8xf32> to vector<128x8xf32>
    %46 = vector.shape_cast %43 : vector<128x8xf32> to vector<1x128x8xf32>
    tpu.vector_store %arg9[%c0_25, %c0_26, %c0_27], %46 {strides = array<i32>} : memref<4x128x8xf32, #tpu.memory_space<vmem>>, vector<1x128x8xf32>,
    %c0_28 = arith.constant 0 : index
    %c0_29 = arith.constant 0 : index
    %c0_30 = arith.constant 0 : index
    %47 = vector.load %arg7[%c0_28, %c0_29, %c0_30] : memref<4x128x1xf32, #tpu.memory_space<vmem>>, vector<1x128x1xf32>
    %48 = vector.shape_cast %47 : vector<1x128x1xf32> to vector<128x1xf32>
    %49 = vector.shape_cast %22 : vector<128x1xf32> to vector<1x128x1xf32>
    tpu.vector_store %arg7[%c0_28, %c0_29, %c0_30], %49 {strides = array<i32>} : memref<4x128x1xf32, #tpu.memory_space<vmem>>, vector<1x128x1xf32>,
    %50 = vector.extract_strided_slice %4 {offsets = [0, 8], sizes = [128, 8], strides = [1, 1]} : vector<128x32xf32> to vector<128x8xf32>
    %51 = arith.truncf %50 : vector<128x8xf32> to vector<128x8xbf16>
    %52 = vector.extract_strided_slice %6 {offsets = [0, 8], sizes = [128, 8], strides = [1, 1]} : vector<128x32xf32> to vector<128x8xf32>
    %53 = arith.truncf %52 : vector<128x8xf32> to vector<128x8xbf16>
    %54 = vector.extract_strided_slice %8 {offsets = [0, 8], sizes = [128, 8], strides = [1, 1]} : vector<128x32xf32> to vector<128x8xf32>
    %55 = arith.truncf %54 : vector<128x8xf32> to vector<128x8xbf16>
    %cst_31 = arith.constant dense<0.000000e+00> : vector<128x128xf32>
    %56 = tpu.matmul %51, %53, %cst_31 {dimension_numbers = #tpu.dot_dimension_numbers<[1], [1], [0], [0], [0, 0, 1, 0], [], []>} : vector<128x8xbf16>, vector<128x8xbf16>, vector<128x128xf32> -> vector<128x128xf32>
    %cst_32 = arith.constant 0.353553385 : f32
    %57 = vector.broadcast %cst_32 : f32 to vector<128x128xf32>
    %58 = arith.mulf %56, %57 : vector<128x128xf32>
    %c1 = arith.constant 1 : index
    %c0_33 = arith.constant 0 : index
    %c0_34 = arith.constant 0 : index
    %59 = vector.load %arg7[%c1, %c0_33, %c0_34] : memref<4x128x1xf32, #tpu.memory_space<vmem>>, vector<1x128x1xf32>
    %60 = vector.shape_cast %59 : vector<1x128x1xf32> to vector<128x1xf32>
    %cst_35 = arith.constant dense<0xFF800000> : vector<128xf32>
    %61 = vector.multi_reduction <maximumf>, %58, %cst_35 [1] : vector<128x128xf32> to vector<128xf32>
    %62 = vector.shape_cast %61 : vector<128xf32> to vector<128x1xf32>
    %63 = arith.maximumf %60, %62 : vector<128x1xf32>
    %64 = arith.subf %60, %63 : vector<128x1xf32>
    %65 = math.exp %64 : vector<128x1xf32>
    %66 = vector.broadcast %63 : vector<128x1xf32> to vector<128x128xf32>
    %67 = arith.subf %58, %66 : vector<128x128xf32>
    %68 = math.exp %67 : vector<128x128xf32>
    %c1_36 = arith.constant 1 : index
    %c0_37 = arith.constant 0 : index
    %c0_38 = arith.constant 0 : index
    %69 = vector.load %arg8[%c1_36, %c0_37, %c0_38] : memref<4x128x1xf32, #tpu.memory_space<vmem>>, vector<1x128x1xf32>
    %70 = vector.shape_cast %69 : vector<1x128x1xf32> to vector<128x1xf32>
    %71 = arith.mulf %65, %70 : vector<128x1xf32>
    %cst_39 = arith.constant dense<0.000000e+00> : vector<128xf32>
    %72 = vector.multi_reduction <add>, %68, %cst_39 [1] : vector<128x128xf32> to vector<128xf32>
    %73 = vector.shape_cast %72 : vector<128xf32> to vector<128x1xf32>
    %74 = arith.addf %71, %73 : vector<128x1xf32>
    %c1_40 = arith.constant 1 : index
    %c0_41 = arith.constant 0 : index
    %c0_42 = arith.constant 0 : index
    %75 = vector.load %arg8[%c1_40, %c0_41, %c0_42] : memref<4x128x1xf32, #tpu.memory_space<vmem>>, vector<1x128x1xf32>
    %76 = vector.shape_cast %75 : vector<1x128x1xf32> to vector<128x1xf32>
    %77 = vector.shape_cast %74 : vector<128x1xf32> to vector<1x128x1xf32>
    tpu.vector_store %arg8[%c1_40, %c0_41, %c0_42], %77 {strides = array<i32>} : memref<4x128x1xf32, #tpu.memory_space<vmem>>, vector<1x128x1xf32>,
    %c1_43 = arith.constant 1 : index
    %c0_44 = arith.constant 0 : index
    %c0_45 = arith.constant 0 : index
    %78 = vector.load %arg9[%c1_43, %c0_44, %c0_45] : memref<4x128x8xf32, #tpu.memory_space<vmem>>, vector<1x128x8xf32>
    %79 = vector.shape_cast %78 : vector<1x128x8xf32> to vector<128x8xf32>
    %80 = vector.broadcast %65 : vector<128x1xf32> to vector<128x8xf32>
    %81 = arith.mulf %80, %79 : vector<128x8xf32>
    %82 = arith.truncf %68 : vector<128x128xf32> to vector<128x128xbf16>
    %cst_46 = arith.constant dense<0.000000e+00> : vector<128x8xf32>
    %83 = tpu.matmul %82, %55, %cst_46 {dimension_numbers = #tpu.dot_dimension_numbers<[1], [0], [0], [1], [0, 0, 1, 1], [], []>} : vector<128x128xbf16>, vector<128x8xbf16>, vector<128x8xf32> -> vector<128x8xf32>
    %84 = arith.addf %81, %83 : vector<128x8xf32>
    %c1_47 = arith.constant 1 : index
    %c0_48 = arith.constant 0 : index
    %c0_49 = arith.constant 0 : index
    %85 = vector.load %arg9[%c1_47, %c0_48, %c0_49] : memref<4x128x8xf32, #tpu.memory_space<vmem>>, vector<1x128x8xf32>
    %86 = vector.shape_cast %85 : vector<1x128x8xf32> to vector<128x8xf32>
    %87 = vector.shape_cast %84 : vector<128x8xf32> to vector<1x128x8xf32>
    tpu.vector_store %arg9[%c1_47, %c0_48, %c0_49], %87 {strides = array<i32>} : memref<4x128x8xf32, #tpu.memory_space<vmem>>, vector<1x128x8xf32>,
    %c1_50 = arith.constant 1 : index
    %c0_51 = arith.constant 0 : index
    %c0_52 = arith.constant 0 : index
    %88 = vector.load %arg7[%c1_50, %c0_51, %c0_52] : memref<4x128x1xf32, #tpu.memory_space<vmem>>, vector<1x128x1xf32>
    %89 = vector.shape_cast %88 : vector<1x128x1xf32> to vector<128x1xf32>
    %90 = vector.shape_cast %63 : vector<128x1xf32> to vector<1x128x1xf32>
    tpu.vector_store %arg7[%c1_50, %c0_51, %c0_52], %90 {strides = array<i32>} : memref<4x128x1xf32, #tpu.memory_space<vmem>>, vector<1x128x1xf32>,
    %91 = vector.extract_strided_slice %4 {offsets = [0, 16], sizes = [128, 8], strides = [1, 1]} : vector<128x32xf32> to vector<128x8xf32>
    %92 = arith.truncf %91 : vector<128x8xf32> to vector<128x8xbf16>
    %93 = vector.extract_strided_slice %6 {offsets = [0, 16], sizes = [128, 8], strides = [1, 1]} : vector<128x32xf32> to vector<128x8xf32>
    %94 = arith.truncf %93 : vector<128x8xf32> to vector<128x8xbf16>
    %95 = vector.extract_strided_slice %8 {offsets = [0, 16], sizes = [128, 8], strides = [1, 1]} : vector<128x32xf32> to vector<128x8xf32>
    %96 = arith.truncf %95 : vector<128x8xf32> to vector<128x8xbf16>
    %cst_53 = arith.constant dense<0.000000e+00> : vector<128x128xf32>
    %97 = tpu.matmul %92, %94, %cst_53 {dimension_numbers = #tpu.dot_dimension_numbers<[1], [1], [0], [0], [0, 0, 1, 0], [], []>} : vector<128x8xbf16>, vector<128x8xbf16>, vector<128x128xf32> -> vector<128x128xf32>
    %cst_54 = arith.constant 0.353553385 : f32
    %98 = vector.broadcast %cst_54 : f32 to vector<128x128xf32>
    %99 = arith.mulf %97, %98 : vector<128x128xf32>
    %c2 = arith.constant 2 : index
    %c0_55 = arith.constant 0 : index
    %c0_56 = arith.constant 0 : index
    %100 = vector.load %arg7[%c2, %c0_55, %c0_56] : memref<4x128x1xf32, #tpu.memory_space<vmem>>, vector<1x128x1xf32>
    %101 = vector.shape_cast %100 : vector<1x128x1xf32> to vector<128x1xf32>
    %cst_57 = arith.constant dense<0xFF800000> : vector<128xf32>
    %102 = vector.multi_reduction <maximumf>, %99, %cst_57 [1] : vector<128x128xf32> to vector<128xf32>
    %103 = vector.shape_cast %102 : vector<128xf32> to vector<128x1xf32>
    %104 = arith.maximumf %101, %103 : vector<128x1xf32>
    %105 = arith.subf %101, %104 : vector<128x1xf32>
    %106 = math.exp %105 : vector<128x1xf32>
    %107 = vector.broadcast %104 : vector<128x1xf32> to vector<128x128xf32>
    %108 = arith.subf %99, %107 : vector<128x128xf32>
    %109 = math.exp %108 : vector<128x128xf32>
    %c2_58 = arith.constant 2 : index
    %c0_59 = arith.constant 0 : index
    %c0_60 = arith.constant 0 : index
    %110 = vector.load %arg8[%c2_58, %c0_59, %c0_60] : memref<4x128x1xf32, #tpu.memory_space<vmem>>, vector<1x128x1xf32>
    %111 = vector.shape_cast %110 : vector<1x128x1xf32> to vector<128x1xf32>
    %112 = arith.mulf %106, %111 : vector<128x1xf32>
    %cst_61 = arith.constant dense<0.000000e+00> : vector<128xf32>
    %113 = vector.multi_reduction <add>, %109, %cst_61 [1] : vector<128x128xf32> to vector<128xf32>
    %114 = vector.shape_cast %113 : vector<128xf32> to vector<128x1xf32>
    %115 = arith.addf %112, %114 : vector<128x1xf32>
    %c2_62 = arith.constant 2 : index
    %c0_63 = arith.constant 0 : index
    %c0_64 = arith.constant 0 : index
    %116 = vector.load %arg8[%c2_62, %c0_63, %c0_64] : memref<4x128x1xf32, #tpu.memory_space<vmem>>, vector<1x128x1xf32>
    %117 = vector.shape_cast %116 : vector<1x128x1xf32> to vector<128x1xf32>
    %118 = vector.shape_cast %115 : vector<128x1xf32> to vector<1x128x1xf32>
    tpu.vector_store %arg8[%c2_62, %c0_63, %c0_64], %118 {strides = array<i32>} : memref<4x128x1xf32, #tpu.memory_space<vmem>>, vector<1x128x1xf32>,
    %c2_65 = arith.constant 2 : index
    %c0_66 = arith.constant 0 : index
    %c0_67 = arith.constant 0 : index
    %119 = vector.load %arg9[%c2_65, %c0_66, %c0_67] : memref<4x128x8xf32, #tpu.memory_space<vmem>>, vector<1x128x8xf32>
    %120 = vector.shape_cast %119 : vector<1x128x8xf32> to vector<128x8xf32>
    %121 = vector.broadcast %106 : vector<128x1xf32> to vector<128x8xf32>
    %122 = arith.mulf %121, %120 : vector<128x8xf32>
    %123 = arith.truncf %109 : vector<128x128xf32> to vector<128x128xbf16>
    %cst_68 = arith.constant dense<0.000000e+00> : vector<128x8xf32>
    %124 = tpu.matmul %123, %96, %cst_68 {dimension_numbers = #tpu.dot_dimension_numbers<[1], [0], [0], [1], [0, 0, 1, 1], [], []>} : vector<128x128xbf16>, vector<128x8xbf16>, vector<128x8xf32> -> vector<128x8xf32>
    %125 = arith.addf %122, %124 : vector<128x8xf32>
    %c2_69 = arith.constant 2 : index
    %c0_70 = arith.constant 0 : index
    %c0_71 = arith.constant 0 : index
    %126 = vector.load %arg9[%c2_69, %c0_70, %c0_71] : memref<4x128x8xf32, #tpu.memory_space<vmem>>, vector<1x128x8xf32>
    %127 = vector.shape_cast %126 : vector<1x128x8xf32> to vector<128x8xf32>
    %128 = vector.shape_cast %125 : vector<128x8xf32> to vector<1x128x8xf32>
    tpu.vector_store %arg9[%c2_69, %c0_70, %c0_71], %128 {strides = array<i32>} : memref<4x128x8xf32, #tpu.memory_space<vmem>>, vector<1x128x8xf32>,
    %c2_72 = arith.constant 2 : index
    %c0_73 = arith.constant 0 : index
    %c0_74 = arith.constant 0 : index
    %129 = vector.load %arg7[%c2_72, %c0_73, %c0_74] : memref<4x128x1xf32, #tpu.memory_space<vmem>>, vector<1x128x1xf32>
    %130 = vector.shape_cast %129 : vector<1x128x1xf32> to vector<128x1xf32>
    %131 = vector.shape_cast %104 : vector<128x1xf32> to vector<1x128x1xf32>
    tpu.vector_store %arg7[%c2_72, %c0_73, %c0_74], %131 {strides = array<i32>} : memref<4x128x1xf32, #tpu.memory_space<vmem>>, vector<1x128x1xf32>,
    %132 = vector.extract_strided_slice %4 {offsets = [0, 24], sizes = [128, 8], strides = [1, 1]} : vector<128x32xf32> to vector<128x8xf32>
    %133 = arith.truncf %132 : vector<128x8xf32> to vector<128x8xbf16>
    %134 = vector.extract_strided_slice %6 {offsets = [0, 24], sizes = [128, 8], strides = [1, 1]} : vector<128x32xf32> to vector<128x8xf32>
    %135 = arith.truncf %134 : vector<128x8xf32> to vector<128x8xbf16>
    %136 = vector.extract_strided_slice %8 {offsets = [0, 24], sizes = [128, 8], strides = [1, 1]} : vector<128x32xf32> to vector<128x8xf32>
    %137 = arith.truncf %136 : vector<128x8xf32> to vector<128x8xbf16>
    %cst_75 = arith.constant dense<0.000000e+00> : vector<128x128xf32>
    %138 = tpu.matmul %133, %135, %cst_75 {dimension_numbers = #tpu.dot_dimension_numbers<[1], [1], [0], [0], [0, 0, 1, 0], [], []>} : vector<128x8xbf16>, vector<128x8xbf16>, vector<128x128xf32> -> vector<128x128xf32>
    %cst_76 = arith.constant 0.353553385 : f32
    %139 = vector.broadcast %cst_76 : f32 to vector<128x128xf32>
    %140 = arith.mulf %138, %139 : vector<128x128xf32>
    %c3 = arith.constant 3 : index
    %c0_77 = arith.constant 0 : index
    %c0_78 = arith.constant 0 : index
    %141 = vector.load %arg7[%c3, %c0_77, %c0_78] : memref<4x128x1xf32, #tpu.memory_space<vmem>>, vector<1x128x1xf32>
    %142 = vector.shape_cast %141 : vector<1x128x1xf32> to vector<128x1xf32>
    %cst_79 = arith.constant dense<0xFF800000> : vector<128xf32>
    %143 = vector.multi_reduction <maximumf>, %140, %cst_79 [1] : vector<128x128xf32> to vector<128xf32>
    %144 = vector.shape_cast %143 : vector<128xf32> to vector<128x1xf32>
    %145 = arith.maximumf %142, %144 : vector<128x1xf32>
    %146 = arith.subf %142, %145 : vector<128x1xf32>
    %147 = math.exp %146 : vector<128x1xf32>
    %148 = vector.broadcast %145 : vector<128x1xf32> to vector<128x128xf32>
    %149 = arith.subf %140, %148 : vector<128x128xf32>
    %150 = math.exp %149 : vector<128x128xf32>
    %c3_80 = arith.constant 3 : index
    %c0_81 = arith.constant 0 : index
    %c0_82 = arith.constant 0 : index
    %151 = vector.load %arg8[%c3_80, %c0_81, %c0_82] : memref<4x128x1xf32, #tpu.memory_space<vmem>>, vector<1x128x1xf32>
    %152 = vector.shape_cast %151 : vector<1x128x1xf32> to vector<128x1xf32>
    %153 = arith.mulf %147, %152 : vector<128x1xf32>
    %cst_83 = arith.constant dense<0.000000e+00> : vector<128xf32>
    %154 = vector.multi_reduction <add>, %150, %cst_83 [1] : vector<128x128xf32> to vector<128xf32>
    %155 = vector.shape_cast %154 : vector<128xf32> to vector<128x1xf32>
    %156 = arith.addf %153, %155 : vector<128x1xf32>
    %c3_84 = arith.constant 3 : index
    %c0_85 = arith.constant 0 : index
    %c0_86 = arith.constant 0 : index
    %157 = vector.load %arg8[%c3_84, %c0_85, %c0_86] : memref<4x128x1xf32, #tpu.memory_space<vmem>>, vector<1x128x1xf32>
    %158 = vector.shape_cast %157 : vector<1x128x1xf32> to vector<128x1xf32>
    %159 = vector.shape_cast %156 : vector<128x1xf32> to vector<1x128x1xf32>
    tpu.vector_store %arg8[%c3_84, %c0_85, %c0_86], %159 {strides = array<i32>} : memref<4x128x1xf32, #tpu.memory_space<vmem>>, vector<1x128x1xf32>,
    %c3_87 = arith.constant 3 : index
    %c0_88 = arith.constant 0 : index
    %c0_89 = arith.constant 0 : index
    %160 = vector.load %arg9[%c3_87, %c0_88, %c0_89] : memref<4x128x8xf32, #tpu.memory_space<vmem>>, vector<1x128x8xf32>
    %161 = vector.shape_cast %160 : vector<1x128x8xf32> to vector<128x8xf32>
    %162 = vector.broadcast %147 : vector<128x1xf32> to vector<128x8xf32>
    %163 = arith.mulf %162, %161 : vector<128x8xf32>
    %164 = arith.truncf %150 : vector<128x128xf32> to vector<128x128xbf16>
    %cst_90 = arith.constant dense<0.000000e+00> : vector<128x8xf32>
    %165 = tpu.matmul %164, %137, %cst_90 {dimension_numbers = #tpu.dot_dimension_numbers<[1], [0], [0], [1], [0, 0, 1, 1], [], []>} : vector<128x128xbf16>, vector<128x8xbf16>, vector<128x8xf32> -> vector<128x8xf32>
    %166 = arith.addf %163, %165 : vector<128x8xf32>
    %c3_91 = arith.constant 3 : index
    %c0_92 = arith.constant 0 : index
    %c0_93 = arith.constant 0 : index
    %167 = vector.load %arg9[%c3_91, %c0_92, %c0_93] : memref<4x128x8xf32, #tpu.memory_space<vmem>>, vector<1x128x8xf32>
    %168 = vector.shape_cast %167 : vector<1x128x8xf32> to vector<128x8xf32>
    %169 = vector.shape_cast %166 : vector<128x8xf32> to vector<1x128x8xf32>
    tpu.vector_store %arg9[%c3_91, %c0_92, %c0_93], %169 {strides = array<i32>} : memref<4x128x8xf32, #tpu.memory_space<vmem>>, vector<1x128x8xf32>,
    %c3_94 = arith.constant 3 : index
    %c0_95 = arith.constant 0 : index
    %c0_96 = arith.constant 0 : index
    %170 = vector.load %arg7[%c3_94, %c0_95, %c0_96] : memref<4x128x1xf32, #tpu.memory_space<vmem>>, vector<1x128x1xf32>
    %171 = vector.shape_cast %170 : vector<1x128x1xf32> to vector<128x1xf32>
    %172 = vector.shape_cast %145 : vector<128x1xf32> to vector<1x128x1xf32>
    tpu.vector_store %arg7[%c3_94, %c0_95, %c0_96], %172 {strides = array<i32>} : memref<4x128x1xf32, #tpu.memory_space<vmem>>, vector<1x128x1xf32>,
    %c1_i32 = arith.constant 1 : i32
    %173 = arith.cmpi eq, %arg2, %c1_i32 : i32
    %174 = arith.extui %173 : i1 to i32
    %c0_i32_97 = arith.constant 0 : i32
    %175 = arith.cmpi ne, %174, %c0_i32_97 : i32
    scf.if %175 {
      %c0_98 = arith.constant 0 : index
      %c0_99 = arith.constant 0 : index
      %c0_100 = arith.constant 0 : index
      %176 = vector.load %arg8[%c0_98, %c0_99, %c0_100] : memref<4x128x1xf32, #tpu.memory_space<vmem>>, vector<1x128x1xf32>
      %177 = vector.shape_cast %176 : vector<1x128x1xf32> to vector<128x1xf32>
      %178 = tpu.reciprocal %177 {approx = true} : vector<128x1xf32> -> vector<128x1xf32>
      %c0_101 = arith.constant 0 : index
      %c0_102 = arith.constant 0 : index
      %c0_103 = arith.constant 0 : index
      %179 = vector.load %arg9[%c0_101, %c0_102, %c0_103] : memref<4x128x8xf32, #tpu.memory_space<vmem>>, vector<1x128x8xf32>
      %180 = vector.shape_cast %179 : vector<1x128x8xf32> to vector<128x8xf32>
      %181 = vector.broadcast %178 : vector<128x1xf32> to vector<128x8xf32>
      %182 = arith.mulf %180, %181 : vector<128x8xf32>
      %c1_104 = arith.constant 1 : index
      %c0_105 = arith.constant 0 : index
      %c0_106 = arith.constant 0 : index
      %183 = vector.load %arg8[%c1_104, %c0_105, %c0_106] : memref<4x128x1xf32, #tpu.memory_space<vmem>>, vector<1x128x1xf32>
      %184 = vector.shape_cast %183 : vector<1x128x1xf32> to vector<128x1xf32>
      %185 = tpu.reciprocal %184 {approx = true} : vector<128x1xf32> -> vector<128x1xf32>
      %c1_107 = arith.constant 1 : index
      %c0_108 = arith.constant 0 : index
      %c0_109 = arith.constant 0 : index
      %186 = vector.load %arg9[%c1_107, %c0_108, %c0_109] : memref<4x128x8xf32, #tpu.memory_space<vmem>>, vector<1x128x8xf32>
      %187 = vector.shape_cast %186 : vector<1x128x8xf32> to vector<128x8xf32>
      %188 = vector.broadcast %185 : vector<128x1xf32> to vector<128x8xf32>
      %189 = arith.mulf %187, %188 : vector<128x8xf32>
      %c2_110 = arith.constant 2 : index
      %c0_111 = arith.constant 0 : index
      %c0_112 = arith.constant 0 : index
      %190 = vector.load %arg8[%c2_110, %c0_111, %c0_112] : memref<4x128x1xf32, #tpu.memory_space<vmem>>, vector<1x128x1xf32>
      %191 = vector.shape_cast %190 : vector<1x128x1xf32> to vector<128x1xf32>
      %192 = tpu.reciprocal %191 {approx = true} : vector<128x1xf32> -> vector<128x1xf32>
      %c2_113 = arith.constant 2 : index
      %c0_114 = arith.constant 0 : index
      %c0_115 = arith.constant 0 : index
      %193 = vector.load %arg9[%c2_113, %c0_114, %c0_115] : memref<4x128x8xf32, #tpu.memory_space<vmem>>, vector<1x128x8xf32>
      %194 = vector.shape_cast %193 : vector<1x128x8xf32> to vector<128x8xf32>
      %195 = vector.broadcast %192 : vector<128x1xf32> to vector<128x8xf32>
      %196 = arith.mulf %194, %195 : vector<128x8xf32>
      %c3_116 = arith.constant 3 : index
      %c0_117 = arith.constant 0 : index
      %c0_118 = arith.constant 0 : index
      %197 = vector.load %arg8[%c3_116, %c0_117, %c0_118] : memref<4x128x1xf32, #tpu.memory_space<vmem>>, vector<1x128x1xf32>
      %198 = vector.shape_cast %197 : vector<1x128x1xf32> to vector<128x1xf32>
      %199 = tpu.reciprocal %198 {approx = true} : vector<128x1xf32> -> vector<128x1xf32>
      %c3_119 = arith.constant 3 : index
      %c0_120 = arith.constant 0 : index
      %c0_121 = arith.constant 0 : index
      %200 = vector.load %arg9[%c3_119, %c0_120, %c0_121] : memref<4x128x8xf32, #tpu.memory_space<vmem>>, vector<1x128x8xf32>
      %201 = vector.shape_cast %200 : vector<1x128x8xf32> to vector<128x8xf32>
      %202 = vector.broadcast %199 : vector<128x1xf32> to vector<128x8xf32>
      %203 = arith.mulf %201, %202 : vector<128x8xf32>
      %204 = tpu.concatenate %182, %189, %196, %203 in 1 : vector<128x8xf32>, vector<128x8xf32>, vector<128x8xf32>, vector<128x8xf32> -> vector<128x32xf32>
      %c0_122 = arith.constant 0 : index
      %c0_123 = arith.constant 0 : index
      %c0_124 = arith.constant 0 : index
      %205 = vector.load %arg6[%c0_122, %c0_123, %c0_124] : memref<1x128x32xf32, #tpu.memory_space<vmem>>, vector<1x128x32xf32>
      %206 = vector.shape_cast %205 : vector<1x128x32xf32> to vector<128x32xf32>
      %207 = vector.shape_cast %204 : vector<128x32xf32> to vector<1x128x32xf32>
      tpu.vector_store %arg6[%c0_122, %c0_123, %c0_124], %207 {strides = array<i32>} : memref<1x128x32xf32, #tpu.memory_space<vmem>>, vector<1x128x32xf32>,
    } else {
    }
    return
  }
  func.func @transform_0(%arg0: i32, %arg1: i32, %arg2: i32) -> (i32, i32, i32) {
    %c0_i32 = arith.constant 0 : i32
    %c0_i32_0 = arith.constant 0 : i32
    return %arg0, %arg1, %c0_i32 : i32, i32, i32
  }
  func.func @transform_1(%arg0: i32, %arg1: i32, %arg2: i32) -> (i32, i32, i32) {
    %c0_i32 = arith.constant 0 : i32
    %c0_i32_0 = arith.constant 0 : i32
    return %arg0, %arg2, %c0_i32 : i32, i32, i32
  }
  func.func @transform_2(%arg0: i32, %arg1: i32, %arg2: i32) -> (i32, i32, i32) {
    %c0_i32 = arith.constant 0 : i32
    %c0_i32_0 = arith.constant 0 : i32
    return %arg0, %arg2, %c0_i32 : i32, i32, i32
  }
  func.func @transform_3(%arg0: i32, %arg1: i32, %arg2: i32) -> (i32, i32, i32) {
    %c0_i32 = arith.constant 0 : i32
    %c0_i32_0 = arith.constant 0 : i32
    return %arg0, %arg1, %c0_i32 : i32, i32, i32
  }
}

module attributes {stable_mosaic.version = 11 : i64} {
  func.func @_ln_linear_kernel(%arg0: i32, %arg1: i32, %arg2: memref<256x32xf32, #tpu.memory_space<vmem>>, %arg3: memref<1x32xf32, #tpu.memory_space<vmem>>, %arg4: memref<1x32xf32, #tpu.memory_space<vmem>>, %arg5: memref<32x128xbf16, #tpu.memory_space<vmem>>, %arg6: memref<1x128xf32, #tpu.memory_space<vmem>>, %arg7: memref<256x128xf32, #tpu.memory_space<vmem>>) attributes {dimension_semantics = [#tpu.dimension_semantics<parallel>, #tpu.dimension_semantics<parallel>], iteration_bounds = array<i64: 2, 1>, scalar_prefetch = 0 : i64, scratch_operands = 0 : i64, tpu.core_type = #tpu.core_type<tc>, window_params = [{transform_indices = @transform_0, window_bounds = array<i64: 256, 32>}, {pipeline_mode = #tpu.pipeline_mode<synchronous>, transform_indices = @transform_1, window_bounds = array<i64: 1, 32>}, {pipeline_mode = #tpu.pipeline_mode<synchronous>, transform_indices = @transform_2, window_bounds = array<i64: 1, 32>}, {transform_indices = @transform_3, window_bounds = array<i64: 32, 128>}, {transform_indices = @transform_4, window_bounds = array<i64: 1, 128>}, {transform_indices = @transform_5, window_bounds = array<i64: 256, 128>}]} {
    %c0 = arith.constant 0 : index
    %c0_0 = arith.constant 0 : index
    %0 = vector.load %arg2[%c0, %c0_0] : memref<256x32xf32, #tpu.memory_space<vmem>>, vector<256x32xf32>
    %cst = arith.constant dense<0.000000e+00> : vector<256xf32>
    %1 = vector.multi_reduction <add>, %0, %cst [1] : vector<256x32xf32> to vector<256xf32>
    %2 = vector.shape_cast %1 : vector<256xf32> to vector<256x1xf32>
    %cst_1 = arith.constant 3.200000e+01 : f32
    %3 = vector.broadcast %cst_1 : f32 to vector<256x1xf32>
    %4 = arith.divf %2, %3 : vector<256x1xf32>
    %5 = vector.broadcast %4 : vector<256x1xf32> to vector<256x32xf32>
    %6 = arith.subf %0, %5 : vector<256x32xf32>
    %7 = arith.mulf %6, %6 : vector<256x32xf32>
    %cst_2 = arith.constant dense<0.000000e+00> : vector<256xf32>
    %8 = vector.multi_reduction <add>, %7, %cst_2 [1] : vector<256x32xf32> to vector<256xf32>
    %9 = vector.shape_cast %8 : vector<256xf32> to vector<256x1xf32>
    %cst_3 = arith.constant 3.200000e+01 : f32
    %10 = vector.broadcast %cst_3 : f32 to vector<256x1xf32>
    %11 = arith.divf %9, %10 : vector<256x1xf32>
    %cst_4 = arith.constant 9.99999997E-7 : f32
    %12 = vector.broadcast %cst_4 : f32 to vector<256x1xf32>
    %13 = arith.addf %11, %12 : vector<256x1xf32>
    %14 = math.rsqrt %13 : vector<256x1xf32>
    %15 = vector.broadcast %14 : vector<256x1xf32> to vector<256x32xf32>
    %16 = arith.mulf %6, %15 : vector<256x32xf32>
    %c0_5 = arith.constant 0 : index
    %c0_6 = arith.constant 0 : index
    %17 = vector.load %arg3[%c0_5, %c0_6] : memref<1x32xf32, #tpu.memory_space<vmem>>, vector<1x32xf32>
    %18 = vector.broadcast %17 : vector<1x32xf32> to vector<256x32xf32>
    %19 = arith.mulf %16, %18 : vector<256x32xf32>
    %c0_7 = arith.constant 0 : index
    %c0_8 = arith.constant 0 : index
    %20 = vector.load %arg4[%c0_7, %c0_8] : memref<1x32xf32, #tpu.memory_space<vmem>>, vector<1x32xf32>
    %21 = vector.broadcast %20 : vector<1x32xf32> to vector<256x32xf32>
    %22 = arith.addf %19, %21 : vector<256x32xf32>
    %23 = arith.truncf %22 : vector<256x32xf32> to vector<256x32xbf16>
    %c0_9 = arith.constant 0 : index
    %c0_10 = arith.constant 0 : index
    %24 = vector.load %arg5[%c0_9, %c0_10] : memref<32x128xbf16, #tpu.memory_space<vmem>>, vector<32x128xbf16>
    %cst_11 = arith.constant dense<0.000000e+00> : vector<256x128xf32>
    %25 = tpu.matmul %23, %24, %cst_11 {dimension_numbers = #tpu.dot_dimension_numbers<[1], [0], [0], [1], [0, 0, 1, 1], [], []>} : vector<256x32xbf16>, vector<32x128xbf16>, vector<256x128xf32> -> vector<256x128xf32>
    %c0_12 = arith.constant 0 : index
    %c0_13 = arith.constant 0 : index
    %26 = vector.load %arg6[%c0_12, %c0_13] : memref<1x128xf32, #tpu.memory_space<vmem>>, vector<1x128xf32>
    %27 = vector.broadcast %26 : vector<1x128xf32> to vector<256x128xf32>
    %28 = arith.addf %25, %27 : vector<256x128xf32>
    %cst_14 = arith.constant 5.000000e-01 : f32
    %29 = vector.broadcast %cst_14 : f32 to vector<256x128xf32>
    %30 = arith.mulf %29, %28 : vector<256x128xf32>
    %31 = arith.mulf %28, %28 : vector<256x128xf32>
    %32 = arith.mulf %31, %28 : vector<256x128xf32>
    %cst_15 = arith.constant 4.471500e-02 : f32
    %33 = vector.broadcast %cst_15 : f32 to vector<256x128xf32>
    %34 = arith.mulf %33, %32 : vector<256x128xf32>
    %35 = arith.addf %28, %34 : vector<256x128xf32>
    %cst_16 = arith.constant 0.797884583 : f32
    %36 = vector.broadcast %cst_16 : f32 to vector<256x128xf32>
    %37 = arith.mulf %36, %35 : vector<256x128xf32>
    %38 = math.tanh %37 : vector<256x128xf32>
    %cst_17 = arith.constant 1.000000e+00 : f32
    %39 = vector.broadcast %cst_17 : f32 to vector<256x128xf32>
    %40 = arith.addf %39, %38 : vector<256x128xf32>
    %41 = arith.mulf %30, %40 : vector<256x128xf32>
    %c0_18 = arith.constant 0 : index
    %c0_19 = arith.constant 0 : index
    %42 = vector.load %arg7[%c0_18, %c0_19] : memref<256x128xf32, #tpu.memory_space<vmem>>, vector<256x128xf32>
    tpu.vector_store %arg7[%c0_18, %c0_19], %41 {strides = array<i32>} : memref<256x128xf32, #tpu.memory_space<vmem>>, vector<256x128xf32>,
    return
  }
  func.func @transform_0(%arg0: i32, %arg1: i32) -> (i32, i32) {
    %c0_i32 = arith.constant 0 : i32
    %c0_i32_0 = arith.constant 0 : i32
    return %arg0, %c0_i32 : i32, i32
  }
  func.func @transform_1(%arg0: i32, %arg1: i32) -> (i32, i32) {
    %c0_i32 = arith.constant 0 : i32
    %c0_i32_0 = arith.constant 0 : i32
    %c0_i32_1 = arith.constant 0 : i32
    return %c0_i32, %c0_i32_0 : i32, i32
  }
  func.func @transform_2(%arg0: i32, %arg1: i32) -> (i32, i32) {
    %c0_i32 = arith.constant 0 : i32
    %c0_i32_0 = arith.constant 0 : i32
    %c0_i32_1 = arith.constant 0 : i32
    return %c0_i32, %c0_i32_0 : i32, i32
  }
  func.func @transform_3(%arg0: i32, %arg1: i32) -> (i32, i32) {
    %c0_i32 = arith.constant 0 : i32
    %c0_i32_0 = arith.constant 0 : i32
    return %c0_i32, %arg1 : i32, i32
  }
  func.func @transform_4(%arg0: i32, %arg1: i32) -> (i32, i32) {
    %c0_i32 = arith.constant 0 : i32
    %c0_i32_0 = arith.constant 0 : i32
    return %c0_i32, %arg1 : i32, i32
  }
  func.func @transform_5(%arg0: i32, %arg1: i32) -> (i32, i32) {
    %c0_i32 = arith.constant 0 : i32
    return %arg0, %arg1 : i32, i32
  }
}

module attributes {stable_mosaic.version = 11 : i64} {
  func.func @_linear_residual_kernel(%arg0: i32, %arg1: i32, %arg2: i32, %arg3: memref<256x128xf32, #tpu.memory_space<vmem>>, %arg4: memref<128x32xbf16, #tpu.memory_space<vmem>>, %arg5: memref<1x32xf32, #tpu.memory_space<vmem>>, %arg6: memref<256x32xf32, #tpu.memory_space<vmem>>, %arg7: memref<256x32xf32, #tpu.memory_space<vmem>>, %arg8: memref<256x32xf32, #tpu.memory_space<vmem>>) attributes {dimension_semantics = [#tpu.dimension_semantics<parallel>, #tpu.dimension_semantics<parallel>, #tpu.dimension_semantics<arbitrary>], iteration_bounds = array<i64: 2, 1, 1>, scalar_prefetch = 0 : i64, scratch_operands = 1 : i64, tpu.core_type = #tpu.core_type<tc>, window_params = [{transform_indices = @transform_0, window_bounds = array<i64: 256, 128>}, {transform_indices = @transform_1, window_bounds = array<i64: 128, 32>}, {transform_indices = @transform_2, window_bounds = array<i64: 1, 32>}, {transform_indices = @transform_3, window_bounds = array<i64: 256, 32>}, {transform_indices = @transform_4, window_bounds = array<i64: 256, 32>}]} {
    %c0_i32 = arith.constant 0 : i32
    %0 = arith.cmpi eq, %arg2, %c0_i32 : i32
    %1 = arith.extui %0 : i1 to i32
    %c0_i32_0 = arith.constant 0 : i32
    %2 = arith.cmpi ne, %1, %c0_i32_0 : i32
    scf.if %2 {
      %cst_10 = arith.constant 0.000000e+00 : f32
      %13 = vector.broadcast %cst_10 : f32 to vector<256x32xf32>
      %c0_11 = arith.constant 0 : index
      %c0_12 = arith.constant 0 : index
      %14 = vector.load %arg8[%c0_11, %c0_12] : memref<256x32xf32, #tpu.memory_space<vmem>>, vector<256x32xf32>
      tpu.vector_store %arg8[%c0_11, %c0_12], %13 {strides = array<i32>} : memref<256x32xf32, #tpu.memory_space<vmem>>, vector<256x32xf32>,
    } else {
    }
    %c0 = arith.constant 0 : index
    %c0_1 = arith.constant 0 : index
    %3 = vector.load %arg8[%c0, %c0_1] : memref<256x32xf32, #tpu.memory_space<vmem>>, vector<256x32xf32>
    %c0_2 = arith.constant 0 : index
    %c0_3 = arith.constant 0 : index
    %4 = vector.load %arg3[%c0_2, %c0_3] : memref<256x128xf32, #tpu.memory_space<vmem>>, vector<256x128xf32>
    %5 = arith.truncf %4 : vector<256x128xf32> to vector<256x128xbf16>
    %c0_4 = arith.constant 0 : index
    %c0_5 = arith.constant 0 : index
    %6 = vector.load %arg4[%c0_4, %c0_5] : memref<128x32xbf16, #tpu.memory_space<vmem>>, vector<128x32xbf16>
    %cst = arith.constant dense<0.000000e+00> : vector<256x32xf32>
    %7 = tpu.matmul %5, %6, %cst {dimension_numbers = #tpu.dot_dimension_numbers<[1], [0], [0], [1], [0, 0, 1, 1], [], []>} : vector<256x128xbf16>, vector<128x32xbf16>, vector<256x32xf32> -> vector<256x32xf32>
    %8 = arith.addf %3, %7 : vector<256x32xf32>
    %c0_6 = arith.constant 0 : index
    %c0_7 = arith.constant 0 : index
    %9 = vector.load %arg8[%c0_6, %c0_7] : memref<256x32xf32, #tpu.memory_space<vmem>>, vector<256x32xf32>
    tpu.vector_store %arg8[%c0_6, %c0_7], %8 {strides = array<i32>} : memref<256x32xf32, #tpu.memory_space<vmem>>, vector<256x32xf32>,
    %c0_i32_8 = arith.constant 0 : i32
    %10 = arith.cmpi eq, %arg2, %c0_i32_8 : i32
    %11 = arith.extui %10 : i1 to i32
    %c0_i32_9 = arith.constant 0 : i32
    %12 = arith.cmpi ne, %11, %c0_i32_9 : i32
    scf.if %12 {
      %c0_10 = arith.constant 0 : index
      %c0_11 = arith.constant 0 : index
      %13 = vector.load %arg8[%c0_10, %c0_11] : memref<256x32xf32, #tpu.memory_space<vmem>>, vector<256x32xf32>
      %c0_12 = arith.constant 0 : index
      %c0_13 = arith.constant 0 : index
      %14 = vector.load %arg5[%c0_12, %c0_13] : memref<1x32xf32, #tpu.memory_space<vmem>>, vector<1x32xf32>
      %15 = vector.broadcast %14 : vector<1x32xf32> to vector<256x32xf32>
      %16 = arith.addf %13, %15 : vector<256x32xf32>
      %c0_14 = arith.constant 0 : index
      %c0_15 = arith.constant 0 : index
      %17 = vector.load %arg6[%c0_14, %c0_15] : memref<256x32xf32, #tpu.memory_space<vmem>>, vector<256x32xf32>
      %18 = arith.addf %16, %17 : vector<256x32xf32>
      %c0_16 = arith.constant 0 : index
      %c0_17 = arith.constant 0 : index
      %19 = vector.load %arg7[%c0_16, %c0_17] : memref<256x32xf32, #tpu.memory_space<vmem>>, vector<256x32xf32>
      tpu.vector_store %arg7[%c0_16, %c0_17], %18 {strides = array<i32>} : memref<256x32xf32, #tpu.memory_space<vmem>>, vector<256x32xf32>,
    } else {
    }
    return
  }
  func.func @transform_0(%arg0: i32, %arg1: i32, %arg2: i32) -> (i32, i32) {
    %c0_i32 = arith.constant 0 : i32
    return %arg0, %arg2 : i32, i32
  }
  func.func @transform_1(%arg0: i32, %arg1: i32, %arg2: i32) -> (i32, i32) {
    %c0_i32 = arith.constant 0 : i32
    return %arg2, %arg1 : i32, i32
  }
  func.func @transform_2(%arg0: i32, %arg1: i32, %arg2: i32) -> (i32, i32) {
    %c0_i32 = arith.constant 0 : i32
    %c0_i32_0 = arith.constant 0 : i32
    return %c0_i32, %arg1 : i32, i32
  }
  func.func @transform_3(%arg0: i32, %arg1: i32, %arg2: i32) -> (i32, i32) {
    %c0_i32 = arith.constant 0 : i32
    return %arg0, %arg1 : i32, i32
  }
  func.func @transform_4(%arg0: i32, %arg1: i32, %arg2: i32) -> (i32, i32) {
    %c0_i32 = arith.constant 0 : i32
    return %arg0, %arg1 : i32, i32
  }
}

</mosaic_0001>

<llo_original>
// kernel: block_forward.7
$region0: #{block_forward.7}
  #allocation0 [shape = 'u32[]', space=smem, size = 0x4, offset = 0x4, fixed_abs, tag = 'smem constant byte address 0x4 - core index']
  #allocation1 [shape = 'u32[144,128]{1,0:T(1,128)}', space=vmem, size = 0x12000, scoped, tag = 'internal scratch']
  %s0 = inlined_call_operand.hbm [shape: f32[512,32], index: 0, kind: input, shape index: {}]
  %s1 = inlined_call_operand.vmem [shape: f32[1,32], index: 1, kind: input, shape index: {}]
  %s2 = inlined_call_operand.vmem [shape: f32[1,32], index: 2, kind: input, shape index: {}]
  %s3 = inlined_call_operand.vmem [shape: bf16[32,32], index: 3, kind: input, shape index: {}]
  %s4 = inlined_call_operand.vmem [shape: f32[1,32], index: 4, kind: input, shape index: {}]
  %s5 = inlined_call_operand.vmem [shape: f32[512,32], index: 5, kind: output, shape index: {}]
  %s6 = sld [smem:[#allocation0]]
  $region57: #{block_forward.7} parent=0
    _
  %s8 = ssub.s32 1, %s6
  %s9 = scalar_select 0, %s8, %s6
  $region1: #{block_forward.7} parent=0
    #allocation2 [shape = 'u8[262144]{0}', space=vmem, size = 0x40000, scoped, tag = 'input window, operand 0']
    #allocation3 [shape = 's32[2]{0}', space=sflag, size = 0x8, scoped, tag = 'scoped memory for block_forward.7']
    %10 = vsyncpa [#allocation3], 0
    %s11 = scalar_lea.sflag [#allocation3], 1
    %12 = vsyncpa %s11, 0
    loop: start=0, step=1, limit=4
    $region2: #{block_forward.7} parent=1 // loop_pre_header
      _
    $region3: #{block_forward.7} parent=1 // loop_header
      %s14 = sphi 0, %s18
      %p15 = scmp.ge.s32.totalorder %s14, 4
      %s21 = sphi 0, %s33
      %s22 = sphi 0, %s29
      %s23 = sphi 0, %s21
      %s24 = sphi 0, %s22
      %s25 = sphi 0, %s23
      %s26 = sphi 0, %s24
      %s36 = sphi 0, %s38
      %s39 = sphi 0, %s36
      %s40 = sphi 0, %s39
      %s56 = sphi 0, %s40
      %s60 = sphi 0, %s60
      %s62 = sphi 0, %s60
      %s63 = sphi 0, %s62
      %s77 = sphi 0, %s63
      %s81 = sphi 0, %s81
      %s83 = sphi 0, %s81
      %s84 = sphi 0, %s83
      %s98 = sphi 0, %s84
      %s104 = sphi 0, %s106
      %s107 = sphi 0, %s104
      %s108 = sphi 0, %s107
      %s124 = sphi 0, %s108
      %s130 = sphi 0, %s132
      %s133 = sphi 0, %s130
      %s134 = sphi 0, %s133
      %s150 = sphi 0, %s134
      %s158 = sphi 0, %s160
      %s161 = sphi 0, %s158
      %s162 = sphi 0, %s161
      %s178 = sphi 0, %s162
    $region4: #{block_forward.7} parent=1 // loop_header_branch
      %17 = sbr.rel (%p15) target = $region8
    $region5: #{block_forward.7} parent=1 // loop_body
      %s19 = ssub.s32 %s14, 1
      %s20 = ssub.s32 %s14, 2
      %s27 = sadd.s32 1, %s22
      %p28 = scmp.ge.s32.totalorder %s27, 1
      %s29 = scalar_select %p28, 0, %s27
      %s30 = sadd.s32 1, %s21
      %s31 = scalar_select %p28, %s30, %s21
      %p32 = scmp.ge.s32.totalorder %s31, 2
      %s33 = scalar_select %p32, 0, %s31
      %s34 = ssub.s32 %s21, %s33
      %p35 = scmp.eq.s32.totalorder %s34, 0
      %s37 = sadd.s32 %s36, 1
      %s38 = scalar_select %p35, %s36, %s37
      %p41 = pneg %p35
      %p42 = scmp.eq.s32.totalorder %s14, 1
      %p43 = por %p41, %p42
      %p44 = scmp.ne.s32.totalorder %s36, %s39
      %p45 = scmp.eq.s32.totalorder %s14, 0
      %p46 = por %p44, %p45
      %p47 = scmp.ne.s32.totalorder %s36, %s39
      %p48 = scmp.eq.s32.totalorder %s19, 1
      %p49 = por %p47, %p48
      %p50 = scmp.ne.s32.totalorder %s39, %s40
      %p51 = scmp.eq.s32.totalorder %s19, 0
      %p52 = por %p50, %p51
      %p53 = scmp.ne.s32.totalorder %s39, %s40
      %p54 = scmp.eq.s32.totalorder %s20, 1
      %p55 = por %p53, %p54
      %p57 = scmp.ne.s32.totalorder %s40, %s56
      %p58 = scmp.eq.s32.totalorder %s20, 0
      %p59 = por %p57, %p58
      %s61 = sadd.s32 %s60, 1
      %p64 = scmp.eq.s32.totalorder %s14, 1
      %p65 = scmp.ne.s32.totalorder %s60, %s62
      %p66 = scmp.eq.s32.totalorder %s14, 0
      %p67 = por %p65, %p66
      %p68 = scmp.ne.s32.totalorder %s60, %s62
      %p69 = scmp.eq.s32.totalorder %s19, 1
      %p70 = por %p68, %p69
      %p71 = scmp.ne.s32.totalorder %s62, %s63
      %p72 = scmp.eq.s32.totalorder %s19, 0
      %p73 = por %p71, %p72
      %p74 = scmp.ne.s32.totalorder %s62, %s63
      %p75 = scmp.eq.s32.totalorder %s20, 1
      %p76 = por %p74, %p75
      %p78 = scmp.ne.s32.totalorder %s63, %s77
      %p79 = scmp.eq.s32.totalorder %s20, 0
      %p80 = por %p78, %p79
      %s82 = sadd.s32 %s81, 1
      %p85 = scmp.eq.s32.totalorder %s14, 1
      %p86 = scmp.ne.s32.totalorder %s81, %s83
      %p87 = scmp.eq.s32.totalorder %s14, 0
      %p88 = por %p86, %p87
      %p89 = scmp.ne.s32.totalorder %s81, %s83
      %p90 = scmp.eq.s32.totalorder %s19, 1
      %p91 = por %p89, %p90
      %p92 = scmp.ne.s32.totalorder %s83, %s84
      %p93 = scmp.eq.s32.totalorder %s19, 0
      %p94 = por %p92, %p93
      %p95 = scmp.ne.s32.totalorder %s83, %s84
      %p96 = scmp.eq.s32.totalorder %s20, 1
      %p97 = por %p95, %p96
      %p99 = scmp.ne.s32.totalorder %s84, %s98
      %p100 = scmp.eq.s32.totalorder %s20, 0
      %p101 = por %p99, %p100
      %s102 = ssub.s32 %s22, %s29
      %p103 = scmp.eq.s32.totalorder %s102, 0
      %s105 = sadd.s32 %s104, 1
      %s106 = scalar_select %p103, %s104, %s105
      %p109 = pneg %p103
      %p110 = scmp.eq.s32.totalorder %s14, 1
      %p111 = por %p109, %p110
      %p112 = scmp.ne.s32.totalorder %s104, %s107
      %p113 = scmp.eq.s32.totalorder %s14, 0
      %p114 = por %p112, %p113
      %p115 = scmp.ne.s32.totalorder %s104, %s107
      %p116 = scmp.eq.s32.totalorder %s19, 1
      %p117 = por %p115, %p116
      %p118 = scmp.ne.s32.totalorder %s107, %s108
      %p119 = scmp.eq.s32.totalorder %s19, 0
      %p120 = por %p118, %p119
      %p121 = scmp.ne.s32.totalorder %s107, %s108
      %p122 = scmp.eq.s32.totalorder %s20, 1
      %p123 = por %p121, %p122
      %p125 = scmp.ne.s32.totalorder %s108, %s124
      %p126 = scmp.eq.s32.totalorder %s20, 0
      %p127 = por %p125, %p126
      %s128 = ssub.s32 %s22, %s29
      %p129 = scmp.eq.s32.totalorder %s128, 0
      %s131 = sadd.s32 %s130, 1
      %s132 = scalar_select %p129, %s130, %s131
      %p135 = pneg %p129
      %p136 = scmp.eq.s32.totalorder %s14, 1
      %p137 = por %p135, %p136
      %p138 = scmp.ne.s32.totalorder %s130, %s133
      %p139 = scmp.eq.s32.totalorder %s14, 0
      %p140 = por %p138, %p139
      %p141 = scmp.ne.s32.totalorder %s130, %s133
      %p142 = scmp.eq.s32.totalorder %s19, 1
      %p143 = por %p141, %p142
      %p144 = scmp.ne.s32.totalorder %s133, %s134
      %p145 = scmp.eq.s32.totalorder %s19, 0
      %p146 = por %p144, %p145
      %p147 = scmp.ne.s32.totalorder %s133, %s134
      %p148 = scmp.eq.s32.totalorder %s20, 1
      %p149 = por %p147, %p148
      %p151 = scmp.ne.s32.totalorder %s134, %s150
      %p152 = scmp.eq.s32.totalorder %s20, 0
      %p153 = por %p151, %p152
      %s154 = ssub.s32 %s21, %s33
      %s155 = ssub.s32 %s22, %s29
      %s156 = sor.u32 %s154, %s155
      %p157 = scmp.eq.s32.totalorder %s156, 0
      %s159 = sadd.s32 %s158, 1
      %s160 = scalar_select %p157, %s158, %s159
      %p163 = pneg %p157
      %p164 = scmp.eq.s32.totalorder %s14, 1
      %p165 = por %p163, %p164
      %p166 = scmp.ne.s32.totalorder %s158, %s161
      %p167 = scmp.eq.s32.totalorder %s14, 0
      %p168 = por %p166, %p167
      %p169 = scmp.ne.s32.totalorder %s158, %s161
      %p170 = scmp.eq.s32.totalorder %s19, 1
      %p171 = por %p169, %p170
      %p172 = scmp.ne.s32.totalorder %s161, %s162
      %p173 = scmp.eq.s32.totalorder %s19, 0
      %p174 = por %p172, %p173
      %p175 = scmp.ne.s32.totalorder %s161, %s162
      %p176 = scmp.eq.s32.totalorder %s20, 1
      %p177 = por %p175, %p176
      %p179 = scmp.ne.s32.totalorder %s162, %s178
      %p180 = scmp.eq.s32.totalorder %s20, 0
      %p181 = por %p179, %p180
      %p182 = scmp.le.s32.totalorder 1, %s14
      %p183 = scmp.lt.s32.totalorder %s14, 3
      %p184 = pnand %p182, %p183
      %p185 = pneg %p184
      // Predicated region
      $region9: #{block_forward.7} parent=5 // pred_check
        _
      $region10: #{block_forward.7} parent=5 // pred_check_branch
        %187 = sbr.rel (%p184) target = $region12
      $region11: #{block_forward.7} parent=5 // pred_region
        %s188 = ssub.s32 %s14, 1
        // Predicated region
        $region13: #{block_forward.7} parent=11 // pred_check
          %p189 = pneg %p73
        $region14: #{block_forward.7} parent=11 // pred_check_branch
          %191 = sbr.rel (%p189) target = $region16
        $region15: #{block_forward.7} parent=11 // pred_region
          _
        $region16: #{block_forward.7} parent=11 // pred_fallthru
          _
        // Predicated region
        $region17: #{block_forward.7} parent=11 // pred_check
          %p192 = pneg %p94
        $region18: #{block_forward.7} parent=11 // pred_check_branch
          %194 = sbr.rel (%p192) target = $region20
        $region19: #{block_forward.7} parent=11 // pred_region
          _
        $region20: #{block_forward.7} parent=11 // pred_fallthru
          _
        // Predicated region
        $region21: #{block_forward.7} parent=11 // pred_check
          %p195 = pneg %p120
        $region22: #{block_forward.7} parent=11 // pred_check_branch
          %197 = sbr.rel (%p195) target = $region24
        $region23: #{block_forward.7} parent=11 // pred_region
          %p198 = scmp.lt.s32.totalorder %s24, 0
          %s199 = scalar_select %p198, %s24, 0
          %s200 = smul.addr %s199, 4
          %s201 = scalar_lea.vmem %s3, %s200
        $region24: #{block_forward.7} parent=11 // pred_fallthru
          _
        // Predicated region
        $region25: #{block_forward.7} parent=11 // pred_check
          %p202 = pneg %p146
        $region26: #{block_forward.7} parent=11 // pred_check_branch
          %204 = sbr.rel (%p202) target = $region28
        $region27: #{block_forward.7} parent=11 // pred_region
          %p205 = scmp.lt.s32.totalorder %s24, 0
          %s206 = scalar_select %p205, %s24, 0
          %s207 = scalar_lea.vmem %s4, %s206
        $region28: #{block_forward.7} parent=11 // pred_fallthru
          _
      $region12: #{block_forward.7} parent=5 // pred_fallthru
        _
      %p208 = scmp.lt.s32.totalorder %s14, 2
      // Predicated region
      $region29: #{block_forward.7} parent=5 // pred_check
        %p209 = pneg %p208
      $region30: #{block_forward.7} parent=5 // pred_check_branch
        %211 = sbr.rel (%p209) target = $region32
      $region31: #{block_forward.7} parent=5 // pred_region
        // Predicated region
        $region33: #{block_forward.7} parent=31 // pred_check
          %p212 = pneg %p46
        $region34: #{block_forward.7} parent=31 // pred_check_branch
          %214 = sbr.rel (%p212) target = $region36
        $region35: #{block_forward.7} parent=31 // pred_region
          %s215 = sand.u32 %s36, 1
          %s216 = scalar_lea.sflag [#allocation3], %s215
          %s217 = sand.u32 %s36, 1
          %s218 = smul.addr %s217, 256
          %s219 = scalar_lea.vmem [#allocation2], %s218
          %s220 = smul.u32 32, %s21
          %s222 = ssub.s32 4096, 4096
          %223 = vsyncadd %s216, %s222
          %s224 = smul.addr %s220, 128
          %s225 = scalar_lea.hbm %s0, %s224
          %s226 = sshll.u32 %s219, 4
          %s227 = int_to_ptr.vmem [resolvable:$true] %s226
          %232 = dma.hbm_to_vmem [thread:$0]  %s225, 4096, %s227, %s216, 128, 128, 8
        $region36: #{block_forward.7} parent=31 // pred_fallthru
          _
      $region32: #{block_forward.7} parent=5 // pred_fallthru
        _
      %p233 = scmp.le.s32.totalorder 1, %s14
      %p234 = scmp.lt.s32.totalorder %s14, 3
      %p235 = pnand %p233, %p234
      %p236 = pneg %p235
      // Predicated region
      $region37: #{block_forward.7} parent=5 // pred_check
        _
      $region38: #{block_forward.7} parent=5 // pred_check_branch
        %238 = sbr.rel (%p235) target = $region40
      $region39: #{block_forward.7} parent=5 // pred_region
        %s239 = ssub.s32 %s14, 1
        %s240 = sand.u32 %s39, 1
        %s241 = scalar_lea.sflag [#allocation3], %s240
        %s242 = sand.u32 %s39, 1
        %s243 = smul.addr %s242, 256
        %s244 = scalar_lea.vmem [#allocation2], %s243
        // Predicated region
        $region41: #{block_forward.7} parent=39 // pred_check
          %p245 = pneg %p52
        $region42: #{block_forward.7} parent=39 // pred_check_branch
          %247 = sbr.rel (%p245) target = $region44
        $region43: #{block_forward.7} parent=39 // pred_region
          %248 = dma.done %s241, 4096
        $region44: #{block_forward.7} parent=39 // pred_fallthru
          _
        %s249 = sand.u32 %s39, 1
        %s250 = scalar_lea.sflag [#allocation3], %s249
        %s251 = sand.u32 %s39, 1
        %s252 = smul.addr %s251, 256
        %s253 = scalar_lea.vmem [#allocation2], %s252
        %p254 = pneg %p52
        %p255 = pneg %p49
        %p256 = pneg %p73
        %p257 = pneg %p70
        %p258 = pneg %p94
        %p259 = pneg %p91
        %p260 = scmp.lt.s32.totalorder %s24, 0
        %s261 = scalar_select %p260, %s24, 0
        %s262 = smul.addr %s261, 4
        %s263 = scalar_lea.vmem %s3, %s262
        %p264 = pneg %p120
        %p265 = pneg %p117
        %p266 = scmp.lt.s32.totalorder %s24, 0
        %s267 = scalar_select %p266, %s24, 0
        %s268 = scalar_lea.vmem %s4, %s267
        %p269 = pneg %p146
        %p270 = pneg %p143
        %p271 = pneg %p174
        %p272 = pneg %p171
        %s273 = smul.u32 32, %s23
        %p274 = scmp.lt.s32.totalorder %s273, 63
        %s275 = scalar_select %p274, %s273, 63
        %p276 = scmp.lt.s32.totalorder %s24, 0
        %s277 = scalar_select %p276, %s24, 0
        %s278 = sadd.s32 %s277, %s275
        %s279 = smul.addr %s278, 8
        %s280 = scalar_lea.vmem %s5, %s279
        %s281 = smul.u32 32, %s23
        %p282 = scmp.lt.s32.totalorder %s24, 0
        %s283 = scalar_select %p282, %s24, 0
        %s284 = smul.addr %s283, 4
        %s285 = scalar_lea.vmem %s3, %s284
        %p286 = scmp.lt.s32.totalorder %s24, 0
        %s287 = scalar_select %p286, %s24, 0
        %s288 = scalar_lea.vmem %s4, %s287
        %s289 = smul.u32 32, %s23
        %p290 = scmp.lt.s32.totalorder %s289, 63
        %s291 = scalar_select %p290, %s289, 63
        %p292 = scmp.lt.s32.totalorder %s24, 0
        %s293 = scalar_select %p292, %s24, 0
        %s294 = sadd.s32 %s293, %s291
        %s295 = smul.addr %s294, 8
        %s296 = scalar_lea.vmem %s5, %s295
        %s297 = smul.u32 32, %s23
        %v299 = vld [vmem:[%s244] sm:$0xff]
        %v300 = vld [vmem:[%s244 + $0x8] sm:$0xff]
        %v301 = vld [vmem:[%s244 + $0x10] sm:$0xff]
        %v302 = vld [vmem:[%s244 + $0x18] sm:$0xff]
        %v303 = vld [vmem:[%s244 + $0x20] sm:$0xff]
        %v304 = vld [vmem:[%s244 + $0x28] sm:$0xff]
        %v305 = vld [vmem:[%s244 + $0x30] sm:$0xff]
        %v306 = vld [vmem:[%s244 + $0x38] sm:$0xff]
        %v307 = vld [vmem:[%s244 + $0x40] sm:$0xff]
        %v308 = vld [vmem:[%s244 + $0x48] sm:$0xff]
        %v309 = vld [vmem:[%s244 + $0x50] sm:$0xff]
        %v310 = vld [vmem:[%s244 + $0x58] sm:$0xff]
        %v311 = vld [vmem:[%s244 + $0x60] sm:$0xff]
        %v312 = vld [vmem:[%s244 + $0x68] sm:$0xff]
        %v313 = vld [vmem:[%s244 + $0x70] sm:$0xff]
        %v314 = vld [vmem:[%s244 + $0x78] sm:$0xff]
        %v315 = vld [vmem:[%s244 + $0x80] sm:$0xff]
        %v316 = vld [vmem:[%s244 + $0x88] sm:$0xff]
        %v317 = vld [vmem:[%s244 + $0x90] sm:$0xff]
        %v318 = vld [vmem:[%s244 + $0x98] sm:$0xff]
        %v319 = vld [vmem:[%s244 + $0xa0] sm:$0xff]
        %v320 = vld [vmem:[%s244 + $0xa8] sm:$0xff]
        %v321 = vld [vmem:[%s244 + $0xb0] sm:$0xff]
        %v322 = vld [vmem:[%s244 + $0xb8] sm:$0xff]
        %v323 = vld [vmem:[%s244 + $0xc0] sm:$0xff]
        %v324 = vld [vmem:[%s244 + $0xc8] sm:$0xff]
        %v325 = vld [vmem:[%s244 + $0xd0] sm:$0xff]
        %v326 = vld [vmem:[%s244 + $0xd8] sm:$0xff]
        %v327 = vld [vmem:[%s244 + $0xe0] sm:$0xff]
        %v328 = vld [vmem:[%s244 + $0xe8] sm:$0xff]
        %v329 = vld [vmem:[%s244 + $0xf0] sm:$0xff]
        %v330 = vld [vmem:[%s244 + $0xf8] sm:$0xff]
        %vm331 = vcmask 261120
        %v332 = vsel %vm331, %v299, 0.0
        %333 = vadd.xlane.f32.xlu0 %v332
        %v334 = vpop.xlane.xlu0 %333
        %v335 = vsel %vm331, %v300, 0.0
        %336 = vadd.xlane.f32.xlu0 %v335
        %v337 = vpop.xlane.xlu0 %336
        %v338 = vsel %vm331, %v301, 0.0
        %339 = vadd.xlane.f32.xlu0 %v338
        %v340 = vpop.xlane.xlu0 %339
        %v341 = vsel %vm331, %v302, 0.0
        %342 = vadd.xlane.f32.xlu0 %v341
        %v343 = vpop.xlane.xlu0 %342
        %v344 = vsel %vm331, %v303, 0.0
        %345 = vadd.xlane.f32.xlu0 %v344
        %v346 = vpop.xlane.xlu0 %345
        %v347 = vsel %vm331, %v304, 0.0
        %348 = vadd.xlane.f32.xlu0 %v347
        %v349 = vpop.xlane.xlu0 %348
        %v350 = vsel %vm331, %v305, 0.0
        %351 = vadd.xlane.f32.xlu0 %v350
        %v352 = vpop.xlane.xlu0 %351
        %v353 = vsel %vm331, %v306, 0.0
        %354 = vadd.xlane.f32.xlu0 %v353
        %v355 = vpop.xlane.xlu0 %354
        %v356 = vsel %vm331, %v307, 0.0
        %357 = vadd.xlane.f32.xlu0 %v356
        %v358 = vpop.xlane.xlu0 %357
        %v359 = vsel %vm331, %v308, 0.0
        %360 = vadd.xlane.f32.xlu0 %v359
        %v361 = vpop.xlane.xlu0 %360
        %v362 = vsel %vm331, %v309, 0.0
        %363 = vadd.xlane.f32.xlu0 %v362
        %v364 = vpop.xlane.xlu0 %363
        %v365 = vsel %vm331, %v310, 0.0
        %366 = vadd.xlane.f32.xlu0 %v365
        %v367 = vpop.xlane.xlu0 %366
        %v368 = vsel %vm331, %v311, 0.0
        %369 = vadd.xlane.f32.xlu0 %v368
        %v370 = vpop.xlane.xlu0 %369
        %v371 = vsel %vm331, %v312, 0.0
        %372 = vadd.xlane.f32.xlu0 %v371
        %v373 = vpop.xlane.xlu0 %372
        %v374 = vsel %vm331, %v313, 0.0
        %375 = vadd.xlane.f32.xlu0 %v374
        %v376 = vpop.xlane.xlu0 %375
        %v377 = vsel %vm331, %v314, 0.0
        %378 = vadd.xlane.f32.xlu0 %v377
        %v379 = vpop.xlane.xlu0 %378
        %v380 = vsel %vm331, %v315, 0.0
        %381 = vadd.xlane.f32.xlu0 %v380
        %v382 = vpop.xlane.xlu0 %381
        %v383 = vsel %vm331, %v316, 0.0
        %384 = vadd.xlane.f32.xlu0 %v383
        %v385 = vpop.xlane.xlu0 %384
        %v386 = vsel %vm331, %v317, 0.0
        %387 = vadd.xlane.f32.xlu0 %v386
        %v388 = vpop.xlane.xlu0 %387
        %v389 = vsel %vm331, %v318, 0.0
        %390 = vadd.xlane.f32.xlu0 %v389
        %v391 = vpop.xlane.xlu0 %390
        %v392 = vsel %vm331, %v319, 0.0
        %393 = vadd.xlane.f32.xlu0 %v392
        %v394 = vpop.xlane.xlu0 %393
        %v395 = vsel %vm331, %v320, 0.0
        %396 = vadd.xlane.f32.xlu0 %v395
        %v397 = vpop.xlane.xlu0 %396
        %v398 = vsel %vm331, %v321, 0.0
        %399 = vadd.xlane.f32.xlu0 %v398
        %v400 = vpop.xlane.xlu0 %399
        %v401 = vsel %vm331, %v322, 0.0
        %402 = vadd.xlane.f32.xlu0 %v401
        %v403 = vpop.xlane.xlu0 %402
        %v404 = vsel %vm331, %v323, 0.0
        %405 = vadd.xlane.f32.xlu0 %v404
        %v406 = vpop.xlane.xlu0 %405
        %v407 = vsel %vm331, %v324, 0.0
        %408 = vadd.xlane.f32.xlu0 %v407
        %v409 = vpop.xlane.xlu0 %408
        %v410 = vsel %vm331, %v325, 0.0
        %411 = vadd.xlane.f32.xlu0 %v410
        %v412 = vpop.xlane.xlu0 %411
        %v413 = vsel %vm331, %v326, 0.0
        %414 = vadd.xlane.f32.xlu0 %v413
        %v415 = vpop.xlane.xlu0 %414
        %v416 = vsel %vm331, %v327, 0.0
        %417 = vadd.xlane.f32.xlu0 %v416
        %v418 = vpop.xlane.xlu0 %417
        %v419 = vsel %vm331, %v328, 0.0
        %420 = vadd.xlane.f32.xlu0 %v419
        %v421 = vpop.xlane.xlu0 %420
        %v422 = vsel %vm331, %v329, 0.0
        %423 = vadd.xlane.f32.xlu0 %v422
        %v424 = vpop.xlane.xlu0 %423
        %v425 = vsel %vm331, %v330, 0.0
        %426 = vadd.xlane.f32.xlu0 %v425
        %v427 = vpop.xlane.xlu0 %426
        %v428 = vrcp.pop 32.0
        %v429 = vmul.f32 %v334, %v428
        %v430 = vmul.f32 %v337, %v428
        %v431 = vmul.f32 %v340, %v428
        %v432 = vmul.f32 %v343, %v428
        %v433 = vmul.f32 %v346, %v428
        %v434 = vmul.f32 %v349, %v428
        %v435 = vmul.f32 %v352, %v428
        %v436 = vmul.f32 %v355, %v428
        %v437 = vmul.f32 %v358, %v428
        %v438 = vmul.f32 %v361, %v428
        %v439 = vmul.f32 %v364, %v428
        %v440 = vmul.f32 %v367, %v428
        %v441 = vmul.f32 %v370, %v428
        %v442 = vmul.f32 %v373, %v428
        %v443 = vmul.f32 %v376, %v428
        %v444 = vmul.f32 %v379, %v428
        %v445 = vmul.f32 %v382, %v428
        %v446 = vmul.f32 %v385, %v428
        %v447 = vmul.f32 %v388, %v428
        %v448 = vmul.f32 %v391, %v428
        %v449 = vmul.f32 %v394, %v428
        %v450 = vmul.f32 %v397, %v428
        %v451 = vmul.f32 %v400, %v428
        %v452 = vmul.f32 %v403, %v428
        %v453 = vmul.f32 %v406, %v428
        %v454 = vmul.f32 %v409, %v428
        %v455 = vmul.f32 %v412, %v428
        %v456 = vmul.f32 %v415, %v428
        %v457 = vmul.f32 %v418, %v428
        %v458 = vmul.f32 %v421, %v428
        %v459 = vmul.f32 %v424, %v428
        %v460 = vmul.f32 %v427, %v428
        %v461 = vsub.f32 %v299, %v429
        %v462 = vsub.f32 %v300, %v430
        %v463 = vsub.f32 %v301, %v431
        %v464 = vsub.f32 %v302, %v432
        %v465 = vsub.f32 %v303, %v433
        %v466 = vsub.f32 %v304, %v434
        %v467 = vsub.f32 %v305, %v435
        %v468 = vsub.f32 %v306, %v436
        %v469 = vsub.f32 %v307, %v437
        %v470 = vsub.f32 %v308, %v438
        %v471 = vsub.f32 %v309, %v439
        %v472 = vsub.f32 %v310, %v440
        %v473 = vsub.f32 %v311, %v441
        %v474 = vsub.f32 %v312, %v442
        %v475 = vsub.f32 %v313, %v443
        %v476 = vsub.f32 %v314, %v444
        %v477 = vsub.f32 %v315, %v445
        %v478 = vsub.f32 %v316, %v446
        %v479 = vsub.f32 %v317, %v447
        %v480 = vsub.f32 %v318, %v448
        %v481 = vsub.f32 %v319, %v449
        %v482 = vsub.f32 %v320, %v450
        %v483 = vsub.f32 %v321, %v451
        %v484 = vsub.f32 %v322, %v452
        %v485 = vsub.f32 %v323, %v453
        %v486 = vsub.f32 %v324, %v454
        %v487 = vsub.f32 %v325, %v455
        %v488 = vsub.f32 %v326, %v456
        %v489 = vsub.f32 %v327, %v457
        %v490 = vsub.f32 %v328, %v458
        %v491 = vsub.f32 %v329, %v459
        %v492 = vsub.f32 %v330, %v460
        %v493 = vmul.f32 %v461, %v461
        %v494 = vmul.f32 %v462, %v462
        %v495 = vmul.f32 %v463, %v463
        %v496 = vmul.f32 %v464, %v464
        %v497 = vmul.f32 %v465, %v465
        %v498 = vmul.f32 %v466, %v466
        %v499 = vmul.f32 %v467, %v467
        %v500 = vmul.f32 %v468, %v468
        %v501 = vmul.f32 %v469, %v469
        %v502 = vmul.f32 %v470, %v470
        %v503 = vmul.f32 %v471, %v471
        %v504 = vmul.f32 %v472, %v472
        %v505 = vmul.f32 %v473, %v473
        %v506 = vmul.f32 %v474, %v474
        %v507 = vmul.f32 %v475, %v475
        %v508 = vmul.f32 %v476, %v476
        %v509 = vmul.f32 %v477, %v477
        %v510 = vmul.f32 %v478, %v478
        %v511 = vmul.f32 %v479, %v479
        %v512 = vmul.f32 %v480, %v480
        %v513 = vmul.f32 %v481, %v481
        %v514 = vmul.f32 %v482, %v482
        %v515 = vmul.f32 %v483, %v483
        %v516 = vmul.f32 %v484, %v484
        %v517 = vmul.f32 %v485, %v485
        %v518 = vmul.f32 %v486, %v486
        %v519 = vmul.f32 %v487, %v487
        %v520 = vmul.f32 %v488, %v488
        %v521 = vmul.f32 %v489, %v489
        %v522 = vmul.f32 %v490, %v490
        %v523 = vmul.f32 %v491, %v491
        %v524 = vmul.f32 %v492, %v492
        %v525 = vsel %vm331, %v493, 0.0
        %526 = vadd.xlane.f32.xlu0 %v525
        %v527 = vpop.xlane.xlu0 %526
        %v528 = vsel %vm331, %v494, 0.0
        %529 = vadd.xlane.f32.xlu0 %v528
        %v530 = vpop.xlane.xlu0 %529
        %v531 = vsel %vm331, %v495, 0.0
        %532 = vadd.xlane.f32.xlu0 %v531
        %v533 = vpop.xlane.xlu0 %532
        %v534 = vsel %vm331, %v496, 0.0
        %535 = vadd.xlane.f32.xlu0 %v534
        %v536 = vpop.xlane.xlu0 %535
        %v537 = vsel %vm331, %v497, 0.0
        %538 = vadd.xlane.f32.xlu0 %v537
        %v539 = vpop.xlane.xlu0 %538
        %v540 = vsel %vm331, %v498, 0.0
        %541 = vadd.xlane.f32.xlu0 %v540
        %v542 = vpop.xlane.xlu0 %541
        %v543 = vsel %vm331, %v499, 0.0
        %544 = vadd.xlane.f32.xlu0 %v543
        %v545 = vpop.xlane.xlu0 %544
        %v546 = vsel %vm331, %v500, 0.0
        %547 = vadd.xlane.f32.xlu0 %v546
        %v548 = vpop.xlane.xlu0 %547
        %v549 = vsel %vm331, %v501, 0.0
        %550 = vadd.xlane.f32.xlu0 %v549
        %v551 = vpop.xlane.xlu0 %550
        %v552 = vsel %vm331, %v502, 0.0
        %553 = vadd.xlane.f32.xlu0 %v552
        %v554 = vpop.xlane.xlu0 %553
        %v555 = vsel %vm331, %v503, 0.0
        %556 = vadd.xlane.f32.xlu0 %v555
        %v557 = vpop.xlane.xlu0 %556
        %v558 = vsel %vm331, %v504, 0.0
        %559 = vadd.xlane.f32.xlu0 %v558
        %v560 = vpop.xlane.xlu0 %559
        %v561 = vsel %vm331, %v505, 0.0
        %562 = vadd.xlane.f32.xlu0 %v561
        %v563 = vpop.xlane.xlu0 %562
        %v564 = vsel %vm331, %v506, 0.0
        %565 = vadd.xlane.f32.xlu0 %v564
        %v566 = vpop.xlane.xlu0 %565
        %v567 = vsel %vm331, %v507, 0.0
        %568 = vadd.xlane.f32.xlu0 %v567
        %v569 = vpop.xlane.xlu0 %568
        %v570 = vsel %vm331, %v508, 0.0
        %571 = vadd.xlane.f32.xlu0 %v570
        %v572 = vpop.xlane.xlu0 %571
        %v573 = vsel %vm331, %v509, 0.0
        %574 = vadd.xlane.f32.xlu0 %v573
        %v575 = vpop.xlane.xlu0 %574
        %v576 = vsel %vm331, %v510, 0.0
        %577 = vadd.xlane.f32.xlu0 %v576
        %v578 = vpop.xlane.xlu0 %577
        %v579 = vsel %vm331, %v511, 0.0
        %580 = vadd.xlane.f32.xlu0 %v579
        %v581 = vpop.xlane.xlu0 %580
        %v582 = vsel %vm331, %v512, 0.0
        %583 = vadd.xlane.f32.xlu0 %v582
        %v584 = vpop.xlane.xlu0 %583
        %v585 = vsel %vm331, %v513, 0.0
        %586 = vadd.xlane.f32.xlu0 %v585
        %v587 = vpop.xlane.xlu0 %586
        %v588 = vsel %vm331, %v514, 0.0
        %589 = vadd.xlane.f32.xlu0 %v588
        %v590 = vpop.xlane.xlu0 %589
        %v591 = vsel %vm331, %v515, 0.0
        %592 = vadd.xlane.f32.xlu0 %v591
        %v593 = vpop.xlane.xlu0 %592
        %v594 = vsel %vm331, %v516, 0.0
        %595 = vadd.xlane.f32.xlu0 %v594
        %v596 = vpop.xlane.xlu0 %595
        %v597 = vsel %vm331, %v517, 0.0
        %598 = vadd.xlane.f32.xlu0 %v597
        %v599 = vpop.xlane.xlu0 %598
        %v600 = vsel %vm331, %v518, 0.0
        %601 = vadd.xlane.f32.xlu0 %v600
        %v602 = vpop.xlane.xlu0 %601
        %v603 = vsel %vm331, %v519, 0.0
        %604 = vadd.xlane.f32.xlu0 %v603
        %v605 = vpop.xlane.xlu0 %604
        %v606 = vsel %vm331, %v520, 0.0
        %607 = vadd.xlane.f32.xlu0 %v606
        %v608 = vpop.xlane.xlu0 %607
        %v609 = vsel %vm331, %v521, 0.0
        %610 = vadd.xlane.f32.xlu0 %v609
        %v611 = vpop.xlane.xlu0 %610
        %v612 = vsel %vm331, %v522, 0.0
        %613 = vadd.xlane.f32.xlu0 %v612
        %v614 = vpop.xlane.xlu0 %613
        %v615 = vsel %vm331, %v523, 0.0
        %616 = vadd.xlane.f32.xlu0 %v615
        %v617 = vpop.xlane.xlu0 %616
        %v618 = vsel %vm331, %v524, 0.0
        %619 = vadd.xlane.f32.xlu0 %v618
        %v620 = vpop.xlane.xlu0 %619
        %v621 = vmul.f32 %v527, %v428
        %v622 = vmul.f32 %v530, %v428
        %v623 = vmul.f32 %v533, %v428
        %v624 = vmul.f32 %v536, %v428
        %v625 = vmul.f32 %v539, %v428
        %v626 = vmul.f32 %v542, %v428
        %v627 = vmul.f32 %v545, %v428
        %v628 = vmul.f32 %v548, %v428
        %v629 = vmul.f32 %v551, %v428
        %v630 = vmul.f32 %v554, %v428
        %v631 = vmul.f32 %v557, %v428
        %v632 = vmul.f32 %v560, %v428
        %v633 = vmul.f32 %v563, %v428
        %v634 = vmul.f32 %v566, %v428
        %v635 = vmul.f32 %v569, %v428
        %v636 = vmul.f32 %v572, %v428
        %v637 = vmul.f32 %v575, %v428
        %v638 = vmul.f32 %v578, %v428
        %v639 = vmul.f32 %v581, %v428
        %v640 = vmul.f32 %v584, %v428
        %v641 = vmul.f32 %v587, %v428
        %v642 = vmul.f32 %v590, %v428
        %v643 = vmul.f32 %v593, %v428
        %v644 = vmul.f32 %v596, %v428
        %v645 = vmul.f32 %v599, %v428
        %v646 = vmul.f32 %v602, %v428
        %v647 = vmul.f32 %v605, %v428
        %v648 = vmul.f32 %v608, %v428
        %v649 = vmul.f32 %v611, %v428
        %v650 = vmul.f32 %v614, %v428
        %v651 = vmul.f32 %v617, %v428
        %v652 = vmul.f32 %v620, %v428
        %v653 = vadd.f32 %v621, 1e-06
        %v654 = vadd.f32 %v622, 1e-06
        %v655 = vadd.f32 %v623, 1e-06
        %v656 = vadd.f32 %v624, 1e-06
        %v657 = vadd.f32 %v625, 1e-06
        %v658 = vadd.f32 %v626, 1e-06
        %v659 = vadd.f32 %v627, 1e-06
        %v660 = vadd.f32 %v628, 1e-06
        %v661 = vadd.f32 %v629, 1e-06
        %v662 = vadd.f32 %v630, 1e-06
        %v663 = vadd.f32 %v631, 1e-06
        %v664 = vadd.f32 %v632, 1e-06
        %v665 = vadd.f32 %v633, 1e-06
        %v666 = vadd.f32 %v634, 1e-06
        %v667 = vadd.f32 %v635, 1e-06
        %v668 = vadd.f32 %v636, 1e-06
        %v669 = vadd.f32 %v637, 1e-06
        %v670 = vadd.f32 %v638, 1e-06
        %v671 = vadd.f32 %v639, 1e-06
        %v672 = vadd.f32 %v640, 1e-06
        %v673 = vadd.f32 %v641, 1e-06
        %v674 = vadd.f32 %v642, 1e-06
        %v675 = vadd.f32 %v643, 1e-06
        %v676 = vadd.f32 %v644, 1e-06
        %v677 = vadd.f32 %v645, 1e-06
        %v678 = vadd.f32 %v646, 1e-06
        %v679 = vadd.f32 %v647, 1e-06
        %v680 = vadd.f32 %v648, 1e-06
        %v681 = vadd.f32 %v649, 1e-06
        %v682 = vadd.f32 %v650, 1e-06
        %v683 = vadd.f32 %v651, 1e-06
        %v684 = vadd.f32 %v652, 1e-06
        %v685 = vrsqrt.pop %v653
        %v686 = vrsqrt.pop %v654
        %v687 = vrsqrt.pop %v655
        %v688 = vrsqrt.pop %v656
        %v689 = vrsqrt.pop %v657
        %v690 = vrsqrt.pop %v658
        %v691 = vrsqrt.pop %v659
        %v692 = vrsqrt.pop %v660
        %v693 = vrsqrt.pop %v661
        %v694 = vrsqrt.pop %v662
        %v695 = vrsqrt.pop %v663
        %v696 = vrsqrt.pop %v664
        %v697 = vrsqrt.pop %v665
        %v698 = vrsqrt.pop %v666
        %v699 = vrsqrt.pop %v667
        %v700 = vrsqrt.pop %v668
        %v701 = vrsqrt.pop %v669
        %v702 = vrsqrt.pop %v670
        %v703 = vrsqrt.pop %v671
        %v704 = vrsqrt.pop %v672
        %v705 = vrsqrt.pop %v673
        %v706 = vrsqrt.pop %v674
        %v707 = vrsqrt.pop %v675
        %v708 = vrsqrt.pop %v676
        %v709 = vrsqrt.pop %v677
        %v710 = vrsqrt.pop %v678
        %v711 = vrsqrt.pop %v679
        %v712 = vrsqrt.pop %v680
        %v713 = vrsqrt.pop %v681
        %v714 = vrsqrt.pop %v682
        %v715 = vrsqrt.pop %v683
        %v716 = vrsqrt.pop %v684
        %v717 = vmul.f32 %v461, %v685
        %v718 = vmul.f32 %v462, %v686
        %v719 = vmul.f32 %v463, %v687
        %v720 = vmul.f32 %v464, %v688
        %v721 = vmul.f32 %v465, %v689
        %v722 = vmul.f32 %v466, %v690
        %v723 = vmul.f32 %v467, %v691
        %v724 = vmul.f32 %v468, %v692
        %v725 = vmul.f32 %v469, %v693
        %v726 = vmul.f32 %v470, %v694
        %v727 = vmul.f32 %v471, %v695
        %v728 = vmul.f32 %v472, %v696
        %v729 = vmul.f32 %v473, %v697
        %v730 = vmul.f32 %v474, %v698
        %v731 = vmul.f32 %v475, %v699
        %v732 = vmul.f32 %v476, %v700
        %v733 = vmul.f32 %v477, %v701
        %v734 = vmul.f32 %v478, %v702
        %v735 = vmul.f32 %v479, %v703
        %v736 = vmul.f32 %v480, %v704
        %v737 = vmul.f32 %v481, %v705
        %v738 = vmul.f32 %v482, %v706
        %v739 = vmul.f32 %v483, %v707
        %v740 = vmul.f32 %v484, %v708
        %v741 = vmul.f32 %v485, %v709
        %v742 = vmul.f32 %v486, %v710
        %v743 = vmul.f32 %v487, %v711
        %v744 = vmul.f32 %v488, %v712
        %v745 = vmul.f32 %v489, %v713
        %v746 = vmul.f32 %v490, %v714
        %v747 = vmul.f32 %v491, %v715
        %v748 = vmul.f32 %v492, %v716
        %v749 = vld [vmem:[%s1] sm:$0x1]
        %v751 = vlaneseq
        %v752 = vshrl.u32 %v751, 7
        %v753 = vsub.s32 0, %v752
        %v754 = vrot.slane %v749, %v753
        %v756 = vmul.f32 %v717, %v754
        %v757 = vmul.f32 %v718, %v754
        %v758 = vmul.f32 %v719, %v754
        %v759 = vmul.f32 %v720, %v754
        %v760 = vmul.f32 %v721, %v754
        %v761 = vmul.f32 %v722, %v754
        %v762 = vmul.f32 %v723, %v754
        %v763 = vmul.f32 %v724, %v754
        %v764 = vmul.f32 %v725, %v754
        %v765 = vmul.f32 %v726, %v754
        %v766 = vmul.f32 %v727, %v754
        %v767 = vmul.f32 %v728, %v754
        %v768 = vmul.f32 %v729, %v754
        %v769 = vmul.f32 %v730, %v754
        %v770 = vmul.f32 %v731, %v754
        %v771 = vmul.f32 %v732, %v754
        %v772 = vmul.f32 %v733, %v754
        %v773 = vmul.f32 %v734, %v754
        %v774 = vmul.f32 %v735, %v754
        %v775 = vmul.f32 %v736, %v754
        %v776 = vmul.f32 %v737, %v754
        %v777 = vmul.f32 %v738, %v754
        %v778 = vmul.f32 %v739, %v754
        %v779 = vmul.f32 %v740, %v754
        %v780 = vmul.f32 %v741, %v754
        %v781 = vmul.f32 %v742, %v754
        %v782 = vmul.f32 %v743, %v754
        %v783 = vmul.f32 %v744, %v754
        %v784 = vmul.f32 %v745, %v754
        %v785 = vmul.f32 %v746, %v754
        %v786 = vmul.f32 %v747, %v754
        %v787 = vmul.f32 %v748, %v754
        %v788 = vld [vmem:[%s2] sm:$0x1]
        %v790 = vlaneseq
        %v791 = vshrl.u32 %v790, 7
        %v792 = vsub.s32 0, %v791
        %v793 = vrot.slane %v788, %v792
        %v795 = vadd.f32 %v756, %v793
        %v796 = vadd.f32 %v757, %v793
        %v797 = vadd.f32 %v758, %v793
        %v798 = vadd.f32 %v759, %v793
        %v799 = vadd.f32 %v760, %v793
        %v800 = vadd.f32 %v761, %v793
        %v801 = vadd.f32 %v762, %v793
        %v802 = vadd.f32 %v763, %v793
        %v803 = vadd.f32 %v764, %v793
        %v804 = vadd.f32 %v765, %v793
        %v805 = vadd.f32 %v766, %v793
        %v806 = vadd.f32 %v767, %v793
        %v807 = vadd.f32 %v768, %v793
        %v808 = vadd.f32 %v769, %v793
        %v809 = vadd.f32 %v770, %v793
        %v810 = vadd.f32 %v771, %v793
        %v811 = vadd.f32 %v772, %v793
        %v812 = vadd.f32 %v773, %v793
        %v813 = vadd.f32 %v774, %v793
        %v814 = vadd.f32 %v775, %v793
        %v815 = vadd.f32 %v776, %v793
        %v816 = vadd.f32 %v777, %v793
        %v817 = vadd.f32 %v778, %v793
        %v818 = vadd.f32 %v779, %v793
        %v819 = vadd.f32 %v780, %v793
        %v820 = vadd.f32 %v781, %v793
        %v821 = vadd.f32 %v782, %v793
        %v822 = vadd.f32 %v783, %v793
        %v823 = vadd.f32 %v784, %v793
        %v824 = vadd.f32 %v785, %v793
        %v825 = vadd.f32 %v786, %v793
        %v826 = vadd.f32 %v787, %v793
        %v827 = vpack.c.bf16 %v796, %v795
        %v828 = vpack.c.bf16 %v798, %v797
        %v829 = vpack.c.bf16 %v800, %v799
        %v830 = vpack.c.bf16 %v802, %v801
        %v831 = vpack.c.bf16 %v804, %v803
        %v832 = vpack.c.bf16 %v806, %v805
        %v833 = vpack.c.bf16 %v808, %v807
        %v834 = vpack.c.bf16 %v810, %v809
        %v835 = vpack.c.bf16 %v812, %v811
        %v836 = vpack.c.bf16 %v814, %v813
        %v837 = vpack.c.bf16 %v816, %v815
        %v838 = vpack.c.bf16 %v818, %v817
        %v839 = vpack.c.bf16 %v820, %v819
        %v840 = vpack.c.bf16 %v822, %v821
        %v841 = vpack.c.bf16 %v824, %v823
        %v842 = vpack.c.bf16 %v826, %v825
        %v843 = vld [vmem:[%s285] sm:$0xf]
        %v844 = vld [vmem:[%s285 + $0x4] sm:$0xf]
        %v845 = vld [vmem:[%s285 + $0x8] sm:$0xf]
        %v846 = vld [vmem:[%s285 + $0xc] sm:$0xf]
        %v847 = vld [vmem:[%s288] sm:$0x1]
        %v849 = vlaneseq
        %v850 = vshrl.u32 %v849, 7
        %v851 = vsub.s32 0, %v850
        %v852 = vrot.slane %v847, %v851
        %v858 = vunpack.c.l.b16 %v843
        %v859 = vunpack.c.l.b16 %v844
        %v860 = vunpack.c.l.b16 %v845
        %v861 = vunpack.c.l.b16 %v846
        %v862 = vpack.c.b16 %v859, %v858
        %v863 = vpack.c.b16 %v861, %v860
        %v867 = vsel %vm331, %v827, 0
        %v870 = vsel %vm331, %v828, 0
        %v873 = vsel %vm331, %v829, 0
        %v876 = vsel %vm331, %v830, 0
        %v879 = vsel %vm331, %v831, 0
        %v882 = vsel %vm331, %v832, 0
        %v885 = vsel %vm331, %v833, 0
        %v888 = vsel %vm331, %v834, 0
        %v891 = vsel %vm331, %v835, 0
        %v894 = vsel %vm331, %v836, 0
        %v897 = vsel %vm331, %v837, 0
        %v900 = vsel %vm331, %v838, 0
        %v903 = vsel %vm331, %v839, 0
        %v906 = vsel %vm331, %v840, 0
        %v909 = vsel %vm331, %v841, 0
        %v912 = vsel %vm331, %v842, 0
        %914 = vmatprep.subr.bf16.mxu0 0
        %915 = vmatpush1.bf16.msra.mxu0 %v862
        %916 = vmatprep.subr.bf16.mxu0 0
        %917 = vmatpush1.bf16.msra.mxu0 %v863
        %918 = vmatprep.subr.bf16.mxu0 0
        %919 = vmatpush1.bf16.msra.mxu0 0
        %920 = vmatprep.subr.bf16.mxu0 0
        %921 = vmatpush1.bf16.msra.mxu0 0
        %922 = vmatprep.subr.bf16.mxu0 0
        %923 = vmatpush1.bf16.msra.mxu0 0
        %924 = vmatprep.subr.bf16.mxu0 0
        %925 = vmatpush1.bf16.msra.mxu0 0
        %926 = vmatprep.subr.bf16.mxu0 0
        %927 = vmatpush1.bf16.msra.mxu0 0
        %928 = vmatprep.subr.bf16.mxu0 0
        %929 = vmatpush1.bf16.msra.mxu0 0
        %930 = vmatprep.subr.bf16.mxu0 0
        %931 = vmatpush1.bf16.msra.mxu0 0
        %932 = vmatprep.subr.bf16.mxu0 0
        %933 = vmatpush1.bf16.msra.mxu0 0
        %934 = vmatprep.subr.bf16.mxu0 0
        %935 = vmatpush1.bf16.msra.mxu0 0
        %936 = vmatprep.subr.bf16.mxu0 0
        %937 = vmatpush1.bf16.msra.mxu0 0
        %938 = vmatprep.subr.bf16.mxu0 0
        %939 = vmatpush1.bf16.msra.mxu0 0
        %940 = vmatprep.subr.bf16.mxu0 0
        %941 = vmatpush1.bf16.msra.mxu0 0
        %942 = vmatprep.subr.bf16.mxu0 0
        %943 = vmatpush1.bf16.msra.mxu0 0
        %944 = vmatprep.subr.bf16.mxu0 0
        %945 = vmatpush1.bf16.msra.mxu0 0
        %946 = vmatprep.mubr.bf16.mxu0 0
        %947 = vmatmul.mubr.bf16.gmra.mrb[0].mxu0 %v867
        %v948 = vpop.f32.mrb[0].mxu0
        %v949 = vadd.f32 %v852, %v948
        %v950 = vpop.f32.mrb[0].mxu0
        %v951 = vpop.f32.mrb[0].mxu0
        %v952 = vadd.f32 %v852, %v951
        %v953 = vpop.f32.mrb[0].mxu0
        %954 = vmatprep.mubr.bf16.mxu0 0
        %955 = vmatmul.mubr.bf16.gmra.mrb[0].mxu0 %v870
        %v956 = vpop.f32.mrb[0].mxu0
        %v957 = vadd.f32 %v852, %v956
        %v958 = vpop.f32.mrb[0].mxu0
        %v959 = vpop.f32.mrb[0].mxu0
        %v960 = vadd.f32 %v852, %v959
        %v961 = vpop.f32.mrb[0].mxu0
        %962 = vmatprep.mubr.bf16.mxu0 0
        %963 = vmatmul.mubr.bf16.gmra.mrb[0].mxu0 %v873
        %v964 = vpop.f32.mrb[0].mxu0
        %v965 = vadd.f32 %v852, %v964
        %v966 = vpop.f32.mrb[0].mxu0
        %v967 = vpop.f32.mrb[0].mxu0
        %v968 = vadd.f32 %v852, %v967
        %v969 = vpop.f32.mrb[0].mxu0
        %970 = vmatprep.mubr.bf16.mxu0 0
        %971 = vmatmul.mubr.bf16.gmra.mrb[0].mxu0 %v876
        %v972 = vpop.f32.mrb[0].mxu0
        %v973 = vadd.f32 %v852, %v972
        %v974 = vpop.f32.mrb[0].mxu0
        %v975 = vpop.f32.mrb[0].mxu0
        %v976 = vadd.f32 %v852, %v975
        %v977 = vpop.f32.mrb[0].mxu0
        %978 = vmatprep.mubr.bf16.mxu0 0
        %979 = vmatmul.mubr.bf16.gmra.mrb[0].mxu0 %v879
        %v980 = vpop.f32.mrb[0].mxu0
        %v981 = vadd.f32 %v852, %v980
        %v982 = vpop.f32.mrb[0].mxu0
        %v983 = vpop.f32.mrb[0].mxu0
        %v984 = vadd.f32 %v852, %v983
        %v985 = vpop.f32.mrb[0].mxu0
        %986 = vmatprep.mubr.bf16.mxu0 0
        %987 = vmatmul.mubr.bf16.gmra.mrb[0].mxu0 %v882
        %v988 = vpop.f32.mrb[0].mxu0
        %v989 = vadd.f32 %v852, %v988
        %v990 = vpop.f32.mrb[0].mxu0
        %v991 = vpop.f32.mrb[0].mxu0
        %v992 = vadd.f32 %v852, %v991
        %v993 = vpop.f32.mrb[0].mxu0
        %994 = vmatprep.mubr.bf16.mxu0 0
        %995 = vmatmul.mubr.bf16.gmra.mrb[0].mxu0 %v885
        %v996 = vpop.f32.mrb[0].mxu0
        %v997 = vadd.f32 %v852, %v996
        %v998 = vpop.f32.mrb[0].mxu0
        %v999 = vpop.f32.mrb[0].mxu0
        %v1000 = vadd.f32 %v852, %v999
        %v1001 = vpop.f32.mrb[0].mxu0
        %1002 = vmatprep.mubr.bf16.mxu0 0
        %1003 = vmatmul.mubr.bf16.gmra.mrb[0].mxu0 %v888
        %v1004 = vpop.f32.mrb[0].mxu0
        %v1005 = vadd.f32 %v852, %v1004
        %v1006 = vpop.f32.mrb[0].mxu0
        %v1007 = vpop.f32.mrb[0].mxu0
        %v1008 = vadd.f32 %v852, %v1007
        %v1009 = vpop.f32.mrb[0].mxu0
        %1010 = vmatprep.mubr.bf16.mxu0 0
        %1011 = vmatmul.mubr.bf16.gmra.mrb[0].mxu0 %v891
        %v1012 = vpop.f32.mrb[0].mxu0
        %v1013 = vadd.f32 %v852, %v1012
        %v1014 = vpop.f32.mrb[0].mxu0
        %v1015 = vpop.f32.mrb[0].mxu0
        %v1016 = vadd.f32 %v852, %v1015
        %v1017 = vpop.f32.mrb[0].mxu0
        %1018 = vmatprep.mubr.bf16.mxu0 0
        %1019 = vmatmul.mubr.bf16.gmra.mrb[0].mxu0 %v894
        %v1020 = vpop.f32.mrb[0].mxu0
        %v1021 = vadd.f32 %v852, %v1020
        %v1022 = vpop.f32.mrb[0].mxu0
        %v1023 = vpop.f32.mrb[0].mxu0
        %v1024 = vadd.f32 %v852, %v1023
        %v1025 = vpop.f32.mrb[0].mxu0
        %1026 = vmatprep.mubr.bf16.mxu0 0
        %1027 = vmatmul.mubr.bf16.gmra.mrb[0].mxu0 %v897
        %v1028 = vpop.f32.mrb[0].mxu0
        %v1029 = vadd.f32 %v852, %v1028
        %v1030 = vpop.f32.mrb[0].mxu0
        %v1031 = vpop.f32.mrb[0].mxu0
        %v1032 = vadd.f32 %v852, %v1031
        %v1033 = vpop.f32.mrb[0].mxu0
        %1034 = vmatprep.mubr.bf16.mxu0 0
        %1035 = vmatmul.mubr.bf16.gmra.mrb[0].mxu0 %v900
        %v1036 = vpop.f32.mrb[0].mxu0
        %v1037 = vadd.f32 %v852, %v1036
        %v1038 = vpop.f32.mrb[0].mxu0
        %v1039 = vpop.f32.mrb[0].mxu0
        %v1040 = vadd.f32 %v852, %v1039
        %v1041 = vpop.f32.mrb[0].mxu0
        %1042 = vmatprep.mubr.bf16.mxu0 0
        %1043 = vmatmul.mubr.bf16.gmra.mrb[0].mxu0 %v903
        %v1044 = vpop.f32.mrb[0].mxu0
        %v1045 = vadd.f32 %v852, %v1044
        %v1046 = vpop.f32.mrb[0].mxu0
        %v1047 = vpop.f32.mrb[0].mxu0
        %v1048 = vadd.f32 %v852, %v1047
        %v1049 = vpop.f32.mrb[0].mxu0
        %1050 = vmatprep.mubr.bf16.mxu0 0
        %1051 = vmatmul.mubr.bf16.gmra.mrb[0].mxu0 %v906
        %v1052 = vpop.f32.mrb[0].mxu0
        %v1053 = vadd.f32 %v852, %v1052
        %v1054 = vpop.f32.mrb[0].mxu0
        %v1055 = vpop.f32.mrb[0].mxu0
        %v1056 = vadd.f32 %v852, %v1055
        %v1057 = vpop.f32.mrb[0].mxu0
        %1058 = vmatprep.mubr.bf16.mxu0 0
        %1059 = vmatmul.mubr.bf16.gmra.mrb[0].mxu0 %v909
        %v1060 = vpop.f32.mrb[0].mxu0
        %v1061 = vadd.f32 %v852, %v1060
        %v1062 = vpop.f32.mrb[0].mxu0
        %v1063 = vpop.f32.mrb[0].mxu0
        %v1064 = vadd.f32 %v852, %v1063
        %v1065 = vpop.f32.mrb[0].mxu0
        %1066 = vmatprep.mubr.bf16.mxu0 0
        %1067 = vmatmul.mubr.bf16.gmra.mrb[0].mxu0 %v912
        %v1068 = vpop.f32.mrb[0].mxu0
        %v1069 = vadd.f32 %v852, %v1068
        %v1070 = vpop.f32.mrb[0].mxu0
        %v1071 = vpop.f32.mrb[0].mxu0
        %v1072 = vadd.f32 %v852, %v1071
        %v1073 = vpop.f32.mrb[0].mxu0
        %1074 = vdwg.mxu0
        %1075 = vst.msk [vmem:[%s296] sm:$0xff] %vm331, %v949
        %1076 = vst.msk [vmem:[%s296 + $0x8] sm:$0xff] %vm331, %v952
        %1077 = vst.msk [vmem:[%s296 + $0x10] sm:$0xff] %vm331, %v957
        %1078 = vst.msk [vmem:[%s296 + $0x18] sm:$0xff] %vm331, %v960
        %1079 = vst.msk [vmem:[%s296 + $0x20] sm:$0xff] %vm331, %v965
        %1080 = vst.msk [vmem:[%s296 + $0x28] sm:$0xff] %vm331, %v968
        %1081 = vst.msk [vmem:[%s296 + $0x30] sm:$0xff] %vm331, %v973
        %1082 = vst.msk [vmem:[%s296 + $0x38] sm:$0xff] %vm331, %v976
        %1083 = vst.msk [vmem:[%s296 + $0x40] sm:$0xff] %vm331, %v981
        %1084 = vst.msk [vmem:[%s296 + $0x48] sm:$0xff] %vm331, %v984
        %1085 = vst.msk [vmem:[%s296 + $0x50] sm:$0xff] %vm331, %v989
        %1086 = vst.msk [vmem:[%s296 + $0x58] sm:$0xff] %vm331, %v992
        %1087 = vst.msk [vmem:[%s296 + $0x60] sm:$0xff] %vm331, %v997
        %1088 = vst.msk [vmem:[%s296 + $0x68] sm:$0xff] %vm331, %v1000
        %1089 = vst.msk [vmem:[%s296 + $0x70] sm:$0xff] %vm331, %v1005
        %1090 = vst.msk [vmem:[%s296 + $0x78] sm:$0xff] %vm331, %v1008
        %1091 = vst.msk [vmem:[%s296 + $0x80] sm:$0xff] %vm331, %v1013
        %1092 = vst.msk [vmem:[%s296 + $0x88] sm:$0xff] %vm331, %v1016
        %1093 = vst.msk [vmem:[%s296 + $0x90] sm:$0xff] %vm331, %v1021
        %1094 = vst.msk [vmem:[%s296 + $0x98] sm:$0xff] %vm331, %v1024
        %1095 = vst.msk [vmem:[%s296 + $0xa0] sm:$0xff] %vm331, %v1029
        %1096 = vst.msk [vmem:[%s296 + $0xa8] sm:$0xff] %vm331, %v1032
        %1097 = vst.msk [vmem:[%s296 + $0xb0] sm:$0xff] %vm331, %v1037
        %1098 = vst.msk [vmem:[%s296 + $0xb8] sm:$0xff] %vm331, %v1040
        %1099 = vst.msk [vmem:[%s296 + $0xc0] sm:$0xff] %vm331, %v1045
        %1100 = vst.msk [vmem:[%s296 + $0xc8] sm:$0xff] %vm331, %v1048
        %1101 = vst.msk [vmem:[%s296 + $0xd0] sm:$0xff] %vm331, %v1053
        %1102 = vst.msk [vmem:[%s296 + $0xd8] sm:$0xff] %vm331, %v1056
        %1103 = vst.msk [vmem:[%s296 + $0xe0] sm:$0xff] %vm331, %v1061
        %1104 = vst.msk [vmem:[%s296 + $0xe8] sm:$0xff] %vm331, %v1064
        %1105 = vst.msk [vmem:[%s296 + $0xf0] sm:$0xff] %vm331, %v1069
        %1106 = vst.msk [vmem:[%s296 + $0xf8] sm:$0xff] %vm331, %v1072
        %s1107 = smul.u32 32, %s23
        %p1108 = scmp.lt.s32.totalorder %s1107, 63
        %s1109 = scalar_select %p1108, %s1107, 63
        %p1110 = scmp.lt.s32.totalorder %s24, 0
        %s1111 = scalar_select %p1110, %s24, 0
        %s1112 = sadd.s32 %s1111, %s1109
        %s1113 = smul.addr %s1112, 8
        %s1114 = scalar_lea.vmem %s5, %s1113
        // Predicated region
        $region45: #{block_forward.7} parent=39 // pred_check
          %p1115 = pneg %p171
        $region46: #{block_forward.7} parent=39 // pred_check_branch
          %1117 = sbr.rel (%p1115) target = $region48
        $region47: #{block_forward.7} parent=39 // pred_region
          %s1118 = smul.u32 32, %s23
        $region48: #{block_forward.7} parent=39 // pred_fallthru
          _
      $region40: #{block_forward.7} parent=5 // pred_fallthru
        _
      %p1119 = scmp.le.s32.totalorder 2, %s14
      // Predicated region
      $region49: #{block_forward.7} parent=5 // pred_check
        %p1120 = pneg %p1119
      $region50: #{block_forward.7} parent=5 // pred_check_branch
        %1122 = sbr.rel (%p1120) target = $region52
      $region51: #{block_forward.7} parent=5 // pred_region
        %s1123 = ssub.s32 %s14, 2
        // Predicated region
        $region53: #{block_forward.7} parent=51 // pred_check
          %p1124 = pneg %p177
        $region54: #{block_forward.7} parent=51 // pred_check_branch
          %1126 = sbr.rel (%p1124) target = $region56
        $region55: #{block_forward.7} parent=51 // pred_region
          %s1127 = smul.u32 32, %s25
          %p1128 = scmp.lt.s32.totalorder %s1127, 63
          %s1129 = scalar_select %p1128, %s1127, 63
          %p1130 = scmp.lt.s32.totalorder %s26, 0
          %s1131 = scalar_select %p1130, %s26, 0
          %s1132 = sadd.s32 %s1131, %s1129
          %s1133 = smul.addr %s1132, 8
          %s1134 = scalar_lea.vmem %s5, %s1133
        $region56: #{block_forward.7} parent=51 // pred_fallthru
          _
      $region52: #{block_forward.7} parent=5 // pred_fallthru
        _
    $region6: #{block_forward.7} parent=1 // loop_footer
      %s18 = sadd.s32 1, %s14
    $region7: #{block_forward.7} parent=1 // loop_footer_branch
      %13 = sbr.rel target = $region3
    $region8: #{block_forward.7} parent=1 // loop_exit
      _
    %1135 = vsyncpa [#allocation3], 1
    %s1136 = scalar_lea.sflag [#allocation3], 1
    %1137 = vsyncpa %s1136, 1

// kernel: block_forward.8
$region0: #{block_forward.8}
  #allocation0 [shape = 'u32[]', space=smem, size = 0x4, offset = 0x4, fixed_abs, tag = 'smem constant byte address 0x4 - core index']
  #allocation1 [shape = 'u32[144,128]{1,0:T(1,128)}', space=vmem, size = 0x12000, scoped, tag = 'internal scratch']
  %s0 = inlined_call_operand.vmem [shape: f32[512,32], index: 0, kind: input, shape index: {}]
  %s1 = inlined_call_operand.vmem [shape: f32[1,32], index: 1, kind: input, shape index: {}]
  %s2 = inlined_call_operand.vmem [shape: f32[1,32], index: 2, kind: input, shape index: {}]
  %s3 = inlined_call_operand.vmem [shape: bf16[32,32], index: 3, kind: input, shape index: {}]
  %s4 = inlined_call_operand.vmem [shape: f32[1,32], index: 4, kind: input, shape index: {}]
  %s5 = inlined_call_operand.vmem [shape: f32[512,32], index: 5, kind: output, shape index: {}]
  %s6 = sld [smem:[#allocation0]]
  $region53: #{block_forward.8} parent=0
    _
  %s8 = ssub.s32 1, %s6
  %s9 = scalar_select 0, %s8, %s6
  loop: start=0, step=1, limit=4
  $region2: #{block_forward.8} parent=0 // loop_pre_header
    _
  $region3: #{block_forward.8} parent=0 // loop_header
    %s11 = sphi 0, %s15
    %p12 = scmp.ge.s32.totalorder %s11, 4
    %s18 = sphi 0, %s30
    %s19 = sphi 0, %s26
    %s20 = sphi 0, %s18
    %s21 = sphi 0, %s19
    %s22 = sphi 0, %s20
    %s23 = sphi 0, %s21
    %s33 = sphi 0, %s35
    %s36 = sphi 0, %s33
    %s37 = sphi 0, %s36
    %s53 = sphi 0, %s37
    %s57 = sphi 0, %s57
    %s59 = sphi 0, %s57
    %s60 = sphi 0, %s59
    %s74 = sphi 0, %s60
    %s78 = sphi 0, %s78
    %s80 = sphi 0, %s78
    %s81 = sphi 0, %s80
    %s95 = sphi 0, %s81
    %s101 = sphi 0, %s103
    %s104 = sphi 0, %s101
    %s105 = sphi 0, %s104
    %s121 = sphi 0, %s105
    %s127 = sphi 0, %s129
    %s130 = sphi 0, %s127
    %s131 = sphi 0, %s130
    %s147 = sphi 0, %s131
    %s155 = sphi 0, %s157
    %s158 = sphi 0, %s155
    %s159 = sphi 0, %s158
    %s175 = sphi 0, %s159
  $region4: #{block_forward.8} parent=0 // loop_header_branch
    %14 = sbr.rel (%p12) target = $region8
  $region5: #{block_forward.8} parent=0 // loop_body
    %s16 = ssub.s32 %s11, 1
    %s17 = ssub.s32 %s11, 2
    %s24 = sadd.s32 1, %s19
    %p25 = scmp.ge.s32.totalorder %s24, 1
    %s26 = scalar_select %p25, 0, %s24
    %s27 = sadd.s32 1, %s18
    %s28 = scalar_select %p25, %s27, %s18
    %p29 = scmp.ge.s32.totalorder %s28, 2
    %s30 = scalar_select %p29, 0, %s28
    %s31 = ssub.s32 %s18, %s30
    %p32 = scmp.eq.s32.totalorder %s31, 0
    %s34 = sadd.s32 %s33, 1
    %s35 = scalar_select %p32, %s33, %s34
    %p38 = pneg %p32
    %p39 = scmp.eq.s32.totalorder %s11, 1
    %p40 = por %p38, %p39
    %p41 = scmp.ne.s32.totalorder %s33, %s36
    %p42 = scmp.eq.s32.totalorder %s11, 0
    %p43 = por %p41, %p42
    %p44 = scmp.ne.s32.totalorder %s33, %s36
    %p45 = scmp.eq.s32.totalorder %s16, 1
    %p46 = por %p44, %p45
    %p47 = scmp.ne.s32.totalorder %s36, %s37
    %p48 = scmp.eq.s32.totalorder %s16, 0
    %p49 = por %p47, %p48
    %p50 = scmp.ne.s32.totalorder %s36, %s37
    %p51 = scmp.eq.s32.totalorder %s17, 1
    %p52 = por %p50, %p51
    %p54 = scmp.ne.s32.totalorder %s37, %s53
    %p55 = scmp.eq.s32.totalorder %s17, 0
    %p56 = por %p54, %p55
    %s58 = sadd.s32 %s57, 1
    %p61 = scmp.eq.s32.totalorder %s11, 1
    %p62 = scmp.ne.s32.totalorder %s57, %s59
    %p63 = scmp.eq.s32.totalorder %s11, 0
    %p64 = por %p62, %p63
    %p65 = scmp.ne.s32.totalorder %s57, %s59
    %p66 = scmp.eq.s32.totalorder %s16, 1
    %p67 = por %p65, %p66
    %p68 = scmp.ne.s32.totalorder %s59, %s60
    %p69 = scmp.eq.s32.totalorder %s16, 0
    %p70 = por %p68, %p69
    %p71 = scmp.ne.s32.totalorder %s59, %s60
    %p72 = scmp.eq.s32.totalorder %s17, 1
    %p73 = por %p71, %p72
    %p75 = scmp.ne.s32.totalorder %s60, %s74
    %p76 = scmp.eq.s32.totalorder %s17, 0
    %p77 = por %p75, %p76
    %s79 = sadd.s32 %s78, 1
    %p82 = scmp.eq.s32.totalorder %s11, 1
    %p83 = scmp.ne.s32.totalorder %s78, %s80
    %p84 = scmp.eq.s32.totalorder %s11, 0
    %p85 = por %p83, %p84
    %p86 = scmp.ne.s32.totalorder %s78, %s80
    %p87 = scmp.eq.s32.totalorder %s16, 1
    %p88 = por %p86, %p87
    %p89 = scmp.ne.s32.totalorder %s80, %s81
    %p90 = scmp.eq.s32.totalorder %s16, 0
    %p91 = por %p89, %p90
    %p92 = scmp.ne.s32.totalorder %s80, %s81
    %p93 = scmp.eq.s32.totalorder %s17, 1
    %p94 = por %p92, %p93
    %p96 = scmp.ne.s32.totalorder %s81, %s95
    %p97 = scmp.eq.s32.totalorder %s17, 0
    %p98 = por %p96, %p97
    %s99 = ssub.s32 %s19, %s26
    %p100 = scmp.eq.s32.totalorder %s99, 0
    %s102 = sadd.s32 %s101, 1
    %s103 = scalar_select %p100, %s101, %s102
    %p106 = pneg %p100
    %p107 = scmp.eq.s32.totalorder %s11, 1
    %p108 = por %p106, %p107
    %p109 = scmp.ne.s32.totalorder %s101, %s104
    %p110 = scmp.eq.s32.totalorder %s11, 0
    %p111 = por %p109, %p110
    %p112 = scmp.ne.s32.totalorder %s101, %s104
    %p113 = scmp.eq.s32.totalorder %s16, 1
    %p114 = por %p112, %p113
    %p115 = scmp.ne.s32.totalorder %s104, %s105
    %p116 = scmp.eq.s32.totalorder %s16, 0
    %p117 = por %p115, %p116
    %p118 = scmp.ne.s32.totalorder %s104, %s105
    %p119 = scmp.eq.s32.totalorder %s17, 1
    %p120 = por %p118, %p119
    %p122 = scmp.ne.s32.totalorder %s105, %s121
    %p123 = scmp.eq.s32.totalorder %s17, 0
    %p124 = por %p122, %p123
    %s125 = ssub.s32 %s19, %s26
    %p126 = scmp.eq.s32.totalorder %s125, 0
    %s128 = sadd.s32 %s127, 1
    %s129 = scalar_select %p126, %s127, %s128
    %p132 = pneg %p126
    %p133 = scmp.eq.s32.totalorder %s11, 1
    %p134 = por %p132, %p133
    %p135 = scmp.ne.s32.totalorder %s127, %s130
    %p136 = scmp.eq.s32.totalorder %s11, 0
    %p137 = por %p135, %p136
    %p138 = scmp.ne.s32.totalorder %s127, %s130
    %p139 = scmp.eq.s32.totalorder %s16, 1
    %p140 = por %p138, %p139
    %p141 = scmp.ne.s32.totalorder %s130, %s131
    %p142 = scmp.eq.s32.totalorder %s16, 0
    %p143 = por %p141, %p142
    %p144 = scmp.ne.s32.totalorder %s130, %s131
    %p145 = scmp.eq.s32.totalorder %s17, 1
    %p146 = por %p144, %p145
    %p148 = scmp.ne.s32.totalorder %s131, %s147
    %p149 = scmp.eq.s32.totalorder %s17, 0
    %p150 = por %p148, %p149
    %s151 = ssub.s32 %s18, %s30
    %s152 = ssub.s32 %s19, %s26
    %s153 = sor.u32 %s151, %s152
    %p154 = scmp.eq.s32.totalorder %s153, 0
    %s156 = sadd.s32 %s155, 1
    %s157 = scalar_select %p154, %s155, %s156
    %p160 = pneg %p154
    %p161 = scmp.eq.s32.totalorder %s11, 1
    %p162 = por %p160, %p161
    %p163 = scmp.ne.s32.totalorder %s155, %s158
    %p164 = scmp.eq.s32.totalorder %s11, 0
    %p165 = por %p163, %p164
    %p166 = scmp.ne.s32.totalorder %s155, %s158
    %p167 = scmp.eq.s32.totalorder %s16, 1
    %p168 = por %p166, %p167
    %p169 = scmp.ne.s32.totalorder %s158, %s159
    %p170 = scmp.eq.s32.totalorder %s16, 0
    %p171 = por %p169, %p170
    %p172 = scmp.ne.s32.totalorder %s158, %s159
    %p173 = scmp.eq.s32.totalorder %s17, 1
    %p174 = por %p172, %p173
    %p176 = scmp.ne.s32.totalorder %s159, %s175
    %p177 = scmp.eq.s32.totalorder %s17, 0
    %p178 = por %p176, %p177
    %p179 = scmp.le.s32.totalorder 1, %s11
    %p180 = scmp.lt.s32.totalorder %s11, 3
    %p181 = pnand %p179, %p180
    %p182 = pneg %p181
    // Predicated region
    $region9: #{block_forward.8} parent=5 // pred_check
      _
    $region10: #{block_forward.8} parent=5 // pred_check_branch
      %184 = sbr.rel (%p181) target = $region12
    $region11: #{block_forward.8} parent=5 // pred_region
      %s185 = ssub.s32 %s11, 1
      // Predicated region
      $region13: #{block_forward.8} parent=11 // pred_check
        %p186 = pneg %p70
      $region14: #{block_forward.8} parent=11 // pred_check_branch
        %188 = sbr.rel (%p186) target = $region16
      $region15: #{block_forward.8} parent=11 // pred_region
        _
      $region16: #{block_forward.8} parent=11 // pred_fallthru
        _
      // Predicated region
      $region17: #{block_forward.8} parent=11 // pred_check
        %p189 = pneg %p91
      $region18: #{block_forward.8} parent=11 // pred_check_branch
        %191 = sbr.rel (%p189) target = $region20
      $region19: #{block_forward.8} parent=11 // pred_region
        _
      $region20: #{block_forward.8} parent=11 // pred_fallthru
        _
      // Predicated region
      $region21: #{block_forward.8} parent=11 // pred_check
        %p192 = pneg %p117
      $region22: #{block_forward.8} parent=11 // pred_check_branch
        %194 = sbr.rel (%p192) target = $region24
      $region23: #{block_forward.8} parent=11 // pred_region
        %p195 = scmp.lt.s32.totalorder %s21, 0
        %s196 = scalar_select %p195, %s21, 0
        %s197 = smul.addr %s196, 4
        %s198 = scalar_lea.vmem %s3, %s197
      $region24: #{block_forward.8} parent=11 // pred_fallthru
        _
      // Predicated region
      $region25: #{block_forward.8} parent=11 // pred_check
        %p199 = pneg %p143
      $region26: #{block_forward.8} parent=11 // pred_check_branch
        %201 = sbr.rel (%p199) target = $region28
      $region27: #{block_forward.8} parent=11 // pred_region
        %p202 = scmp.lt.s32.totalorder %s21, 0
        %s203 = scalar_select %p202, %s21, 0
        %s204 = scalar_lea.vmem %s4, %s203
      $region28: #{block_forward.8} parent=11 // pred_fallthru
        _
    $region12: #{block_forward.8} parent=5 // pred_fallthru
      _
    %p205 = scmp.lt.s32.totalorder %s11, 2
    // Predicated region
    $region29: #{block_forward.8} parent=5 // pred_check
      %p206 = pneg %p205
    $region30: #{block_forward.8} parent=5 // pred_check_branch
      %208 = sbr.rel (%p206) target = $region32
    $region31: #{block_forward.8} parent=5 // pred_region
      // Predicated region
      $region33: #{block_forward.8} parent=31 // pred_check
        %p209 = pneg %p43
      $region34: #{block_forward.8} parent=31 // pred_check_branch
        %211 = sbr.rel (%p209) target = $region36
      $region35: #{block_forward.8} parent=31 // pred_region
        %s212 = smul.u32 32, %s18
        %p213 = scmp.lt.s32.totalorder %s212, 63
        %s214 = scalar_select %p213, %s212, 63
        %s215 = smul.addr %s214, 8
        %s216 = scalar_lea.vmem %s0, %s215
        %s217 = smul.u32 32, %s18
      $region36: #{block_forward.8} parent=31 // pred_fallthru
        _
    $region32: #{block_forward.8} parent=5 // pred_fallthru
      _
    %p218 = scmp.le.s32.totalorder 1, %s11
    %p219 = scmp.lt.s32.totalorder %s11, 3
    %p220 = pnand %p218, %p219
    %p221 = pneg %p220
    // Predicated region
    $region37: #{block_forward.8} parent=5 // pred_check
      _
    $region38: #{block_forward.8} parent=5 // pred_check_branch
      %223 = sbr.rel (%p220) target = $region40
    $region39: #{block_forward.8} parent=5 // pred_region
      %s224 = ssub.s32 %s11, 1
      %s225 = smul.u32 32, %s20
      %p226 = scmp.lt.s32.totalorder %s225, 63
      %s227 = scalar_select %p226, %s225, 63
      %s228 = smul.addr %s227, 8
      %s229 = scalar_lea.vmem %s0, %s228
      %p230 = pneg %p49
      %p231 = pneg %p46
      %p232 = pneg %p70
      %p233 = pneg %p67
      %p234 = pneg %p91
      %p235 = pneg %p88
      %p236 = scmp.lt.s32.totalorder %s21, 0
      %s237 = scalar_select %p236, %s21, 0
      %s238 = smul.addr %s237, 4
      %s239 = scalar_lea.vmem %s3, %s238
      %p240 = pneg %p117
      %p241 = pneg %p114
      %p242 = scmp.lt.s32.totalorder %s21, 0
      %s243 = scalar_select %p242, %s21, 0
      %s244 = scalar_lea.vmem %s4, %s243
      %p245 = pneg %p143
      %p246 = pneg %p140
      %p247 = pneg %p171
      %p248 = pneg %p168
      %s249 = smul.u32 32, %s20
      %p250 = scmp.lt.s32.totalorder %s249, 63
      %s251 = scalar_select %p250, %s249, 63
      %p252 = scmp.lt.s32.totalorder %s21, 0
      %s253 = scalar_select %p252, %s21, 0
      %s254 = sadd.s32 %s253, %s251
      %s255 = smul.addr %s254, 8
      %s256 = scalar_lea.vmem %s5, %s255
      %s257 = smul.u32 32, %s20
      %p258 = scmp.lt.s32.totalorder %s257, 63
      %s259 = scalar_select %p258, %s257, 63
      %s260 = smul.addr %s259, 8
      %s261 = scalar_lea.vmem %s0, %s260
      %s262 = smul.u32 32, %s20
      %p263 = scmp.lt.s32.totalorder %s21, 0
      %s264 = scalar_select %p263, %s21, 0
      %s265 = smul.addr %s264, 4
      %s266 = scalar_lea.vmem %s3, %s265
      %p267 = scmp.lt.s32.totalorder %s21, 0
      %s268 = scalar_select %p267, %s21, 0
      %s269 = scalar_lea.vmem %s4, %s268
      %s270 = smul.u32 32, %s20
      %p271 = scmp.lt.s32.totalorder %s270, 63
      %s272 = scalar_select %p271, %s270, 63
      %p273 = scmp.lt.s32.totalorder %s21, 0
      %s274 = scalar_select %p273, %s21, 0
      %s275 = sadd.s32 %s274, %s272
      %s276 = smul.addr %s275, 8
      %s277 = scalar_lea.vmem %s5, %s276
      %s278 = smul.u32 32, %s20
      %v280 = vld [vmem:[%s261] sm:$0xff]
      %v281 = vld [vmem:[%s261 + $0x8] sm:$0xff]
      %v282 = vld [vmem:[%s261 + $0x10] sm:$0xff]
      %v283 = vld [vmem:[%s261 + $0x18] sm:$0xff]
      %v284 = vld [vmem:[%s261 + $0x20] sm:$0xff]
      %v285 = vld [vmem:[%s261 + $0x28] sm:$0xff]
      %v286 = vld [vmem:[%s261 + $0x30] sm:$0xff]
      %v287 = vld [vmem:[%s261 + $0x38] sm:$0xff]
      %v288 = vld [vmem:[%s261 + $0x40] sm:$0xff]
      %v289 = vld [vmem:[%s261 + $0x48] sm:$0xff]
      %v290 = vld [vmem:[%s261 + $0x50] sm:$0xff]
      %v291 = vld [vmem:[%s261 + $0x58] sm:$0xff]
      %v292 = vld [vmem:[%s261 + $0x60] sm:$0xff]
      %v293 = vld [vmem:[%s261 + $0x68] sm:$0xff]
      %v294 = vld [vmem:[%s261 + $0x70] sm:$0xff]
      %v295 = vld [vmem:[%s261 + $0x78] sm:$0xff]
      %v296 = vld [vmem:[%s261 + $0x80] sm:$0xff]
      %v297 = vld [vmem:[%s261 + $0x88] sm:$0xff]
      %v298 = vld [vmem:[%s261 + $0x90] sm:$0xff]
      %v299 = vld [vmem:[%s261 + $0x98] sm:$0xff]
      %v300 = vld [vmem:[%s261 + $0xa0] sm:$0xff]
      %v301 = vld [vmem:[%s261 + $0xa8] sm:$0xff]
      %v302 = vld [vmem:[%s261 + $0xb0] sm:$0xff]
      %v303 = vld [vmem:[%s261 + $0xb8] sm:$0xff]
      %v304 = vld [vmem:[%s261 + $0xc0] sm:$0xff]
      %v305 = vld [vmem:[%s261 + $0xc8] sm:$0xff]
      %v306 = vld [vmem:[%s261 + $0xd0] sm:$0xff]
      %v307 = vld [vmem:[%s261 + $0xd8] sm:$0xff]
      %v308 = vld [vmem:[%s261 + $0xe0] sm:$0xff]
      %v309 = vld [vmem:[%s261 + $0xe8] sm:$0xff]
      %v310 = vld [vmem:[%s261 + $0xf0] sm:$0xff]
      %v311 = vld [vmem:[%s261 + $0xf8] sm:$0xff]
      %vm312 = vcmask 261120
      %v313 = vsel %vm312, %v280, 0.0
      %314 = vadd.xlane.f32.xlu0 %v313
      %v315 = vpop.xlane.xlu0 %314
      %v316 = vsel %vm312, %v281, 0.0
      %317 = vadd.xlane.f32.xlu0 %v316
      %v318 = vpop.xlane.xlu0 %317
      %v319 = vsel %vm312, %v282, 0.0
      %320 = vadd.xlane.f32.xlu0 %v319
      %v321 = vpop.xlane.xlu0 %320
      %v322 = vsel %vm312, %v283, 0.0
      %323 = vadd.xlane.f32.xlu0 %v322
      %v324 = vpop.xlane.xlu0 %323
      %v325 = vsel %vm312, %v284, 0.0
      %326 = vadd.xlane.f32.xlu0 %v325
      %v327 = vpop.xlane.xlu0 %326
      %v328 = vsel %vm312, %v285, 0.0
      %329 = vadd.xlane.f32.xlu0 %v328
      %v330 = vpop.xlane.xlu0 %329
      %v331 = vsel %vm312, %v286, 0.0
      %332 = vadd.xlane.f32.xlu0 %v331
      %v333 = vpop.xlane.xlu0 %332
      %v334 = vsel %vm312, %v287, 0.0
      %335 = vadd.xlane.f32.xlu0 %v334
      %v336 = vpop.xlane.xlu0 %335
      %v337 = vsel %vm312, %v288, 0.0
      %338 = vadd.xlane.f32.xlu0 %v337
      %v339 = vpop.xlane.xlu0 %338
      %v340 = vsel %vm312, %v289, 0.0
      %341 = vadd.xlane.f32.xlu0 %v340
      %v342 = vpop.xlane.xlu0 %341
      %v343 = vsel %vm312, %v290, 0.0
      %344 = vadd.xlane.f32.xlu0 %v343
      %v345 = vpop.xlane.xlu0 %344
      %v346 = vsel %vm312, %v291, 0.0
      %347 = vadd.xlane.f32.xlu0 %v346
      %v348 = vpop.xlane.xlu0 %347
      %v349 = vsel %vm312, %v292, 0.0
      %350 = vadd.xlane.f32.xlu0 %v349
      %v351 = vpop.xlane.xlu0 %350
      %v352 = vsel %vm312, %v293, 0.0
      %353 = vadd.xlane.f32.xlu0 %v352
      %v354 = vpop.xlane.xlu0 %353
      %v355 = vsel %vm312, %v294, 0.0
      %356 = vadd.xlane.f32.xlu0 %v355
      %v357 = vpop.xlane.xlu0 %356
      %v358 = vsel %vm312, %v295, 0.0
      %359 = vadd.xlane.f32.xlu0 %v358
      %v360 = vpop.xlane.xlu0 %359
      %v361 = vsel %vm312, %v296, 0.0
      %362 = vadd.xlane.f32.xlu0 %v361
      %v363 = vpop.xlane.xlu0 %362
      %v364 = vsel %vm312, %v297, 0.0
      %365 = vadd.xlane.f32.xlu0 %v364
      %v366 = vpop.xlane.xlu0 %365
      %v367 = vsel %vm312, %v298, 0.0
      %368 = vadd.xlane.f32.xlu0 %v367
      %v369 = vpop.xlane.xlu0 %368
      %v370 = vsel %vm312, %v299, 0.0
      %371 = vadd.xlane.f32.xlu0 %v370
      %v372 = vpop.xlane.xlu0 %371
      %v373 = vsel %vm312, %v300, 0.0
      %374 = vadd.xlane.f32.xlu0 %v373
      %v375 = vpop.xlane.xlu0 %374
      %v376 = vsel %vm312, %v301, 0.0
      %377 = vadd.xlane.f32.xlu0 %v376
      %v378 = vpop.xlane.xlu0 %377
      %v379 = vsel %vm312, %v302, 0.0
      %380 = vadd.xlane.f32.xlu0 %v379
      %v381 = vpop.xlane.xlu0 %380
      %v382 = vsel %vm312, %v303, 0.0
      %383 = vadd.xlane.f32.xlu0 %v382
      %v384 = vpop.xlane.xlu0 %383
      %v385 = vsel %vm312, %v304, 0.0
      %386 = vadd.xlane.f32.xlu0 %v385
      %v387 = vpop.xlane.xlu0 %386
      %v388 = vsel %vm312, %v305, 0.0
      %389 = vadd.xlane.f32.xlu0 %v388
      %v390 = vpop.xlane.xlu0 %389
      %v391 = vsel %vm312, %v306, 0.0
      %392 = vadd.xlane.f32.xlu0 %v391
      %v393 = vpop.xlane.xlu0 %392
      %v394 = vsel %vm312, %v307, 0.0
      %395 = vadd.xlane.f32.xlu0 %v394
      %v396 = vpop.xlane.xlu0 %395
      %v397 = vsel %vm312, %v308, 0.0
      %398 = vadd.xlane.f32.xlu0 %v397
      %v399 = vpop.xlane.xlu0 %398
      %v400 = vsel %vm312, %v309, 0.0
      %401 = vadd.xlane.f32.xlu0 %v400
      %v402 = vpop.xlane.xlu0 %401
      %v403 = vsel %vm312, %v310, 0.0
      %404 = vadd.xlane.f32.xlu0 %v403
      %v405 = vpop.xlane.xlu0 %404
      %v406 = vsel %vm312, %v311, 0.0
      %407 = vadd.xlane.f32.xlu0 %v406
      %v408 = vpop.xlane.xlu0 %407
      %v409 = vrcp.pop 32.0
      %v410 = vmul.f32 %v315, %v409
      %v411 = vmul.f32 %v318, %v409
      %v412 = vmul.f32 %v321, %v409
      %v413 = vmul.f32 %v324, %v409
      %v414 = vmul.f32 %v327, %v409
      %v415 = vmul.f32 %v330, %v409
      %v416 = vmul.f32 %v333, %v409
      %v417 = vmul.f32 %v336, %v409
      %v418 = vmul.f32 %v339, %v409
      %v419 = vmul.f32 %v342, %v409
      %v420 = vmul.f32 %v345, %v409
      %v421 = vmul.f32 %v348, %v409
      %v422 = vmul.f32 %v351, %v409
      %v423 = vmul.f32 %v354, %v409
      %v424 = vmul.f32 %v357, %v409
      %v425 = vmul.f32 %v360, %v409
      %v426 = vmul.f32 %v363, %v409
      %v427 = vmul.f32 %v366, %v409
      %v428 = vmul.f32 %v369, %v409
      %v429 = vmul.f32 %v372, %v409
      %v430 = vmul.f32 %v375, %v409
      %v431 = vmul.f32 %v378, %v409
      %v432 = vmul.f32 %v381, %v409
      %v433 = vmul.f32 %v384, %v409
      %v434 = vmul.f32 %v387, %v409
      %v435 = vmul.f32 %v390, %v409
      %v436 = vmul.f32 %v393, %v409
      %v437 = vmul.f32 %v396, %v409
      %v438 = vmul.f32 %v399, %v409
      %v439 = vmul.f32 %v402, %v409
      %v440 = vmul.f32 %v405, %v409
      %v441 = vmul.f32 %v408, %v409
      %v442 = vsub.f32 %v280, %v410
      %v443 = vsub.f32 %v281, %v411
      %v444 = vsub.f32 %v282, %v412
      %v445 = vsub.f32 %v283, %v413
      %v446 = vsub.f32 %v284, %v414
      %v447 = vsub.f32 %v285, %v415
      %v448 = vsub.f32 %v286, %v416
      %v449 = vsub.f32 %v287, %v417
      %v450 = vsub.f32 %v288, %v418
      %v451 = vsub.f32 %v289, %v419
      %v452 = vsub.f32 %v290, %v420
      %v453 = vsub.f32 %v291, %v421
      %v454 = vsub.f32 %v292, %v422
      %v455 = vsub.f32 %v293, %v423
      %v456 = vsub.f32 %v294, %v424
      %v457 = vsub.f32 %v295, %v425
      %v458 = vsub.f32 %v296, %v426
      %v459 = vsub.f32 %v297, %v427
      %v460 = vsub.f32 %v298, %v428
      %v461 = vsub.f32 %v299, %v429
      %v462 = vsub.f32 %v300, %v430
      %v463 = vsub.f32 %v301, %v431
      %v464 = vsub.f32 %v302, %v432
      %v465 = vsub.f32 %v303, %v433
      %v466 = vsub.f32 %v304, %v434
      %v467 = vsub.f32 %v305, %v435
      %v468 = vsub.f32 %v306, %v436
      %v469 = vsub.f32 %v307, %v437
      %v470 = vsub.f32 %v308, %v438
      %v471 = vsub.f32 %v309, %v439
      %v472 = vsub.f32 %v310, %v440
      %v473 = vsub.f32 %v311, %v441
      %v474 = vmul.f32 %v442, %v442
      %v475 = vmul.f32 %v443, %v443
      %v476 = vmul.f32 %v444, %v444
      %v477 = vmul.f32 %v445, %v445
      %v478 = vmul.f32 %v446, %v446
      %v479 = vmul.f32 %v447, %v447
      %v480 = vmul.f32 %v448, %v448
      %v481 = vmul.f32 %v449, %v449
      %v482 = vmul.f32 %v450, %v450
      %v483 = vmul.f32 %v451, %v451
      %v484 = vmul.f32 %v452, %v452
      %v485 = vmul.f32 %v453, %v453
      %v486 = vmul.f32 %v454, %v454
      %v487 = vmul.f32 %v455, %v455
      %v488 = vmul.f32 %v456, %v456
      %v489 = vmul.f32 %v457, %v457
      %v490 = vmul.f32 %v458, %v458
      %v491 = vmul.f32 %v459, %v459
      %v492 = vmul.f32 %v460, %v460
      %v493 = vmul.f32 %v461, %v461
      %v494 = vmul.f32 %v462, %v462
      %v495 = vmul.f32 %v463, %v463
      %v496 = vmul.f32 %v464, %v464
      %v497 = vmul.f32 %v465, %v465
      %v498 = vmul.f32 %v466, %v466
      %v499 = vmul.f32 %v467, %v467
      %v500 = vmul.f32 %v468, %v468
      %v501 = vmul.f32 %v469, %v469
      %v502 = vmul.f32 %v470, %v470
      %v503 = vmul.f32 %v471, %v471
      %v504 = vmul.f32 %v472, %v472
      %v505 = vmul.f32 %v473, %v473
      %v506 = vsel %vm312, %v474, 0.0
      %507 = vadd.xlane.f32.xlu0 %v506
      %v508 = vpop.xlane.xlu0 %507
      %v509 = vsel %vm312, %v475, 0.0
      %510 = vadd.xlane.f32.xlu0 %v509
      %v511 = vpop.xlane.xlu0 %510
      %v512 = vsel %vm312, %v476, 0.0
      %513 = vadd.xlane.f32.xlu0 %v512
      %v514 = vpop.xlane.xlu0 %513
      %v515 = vsel %vm312, %v477, 0.0
      %516 = vadd.xlane.f32.xlu0 %v515
      %v517 = vpop.xlane.xlu0 %516
      %v518 = vsel %vm312, %v478, 0.0
      %519 = vadd.xlane.f32.xlu0 %v518
      %v520 = vpop.xlane.xlu0 %519
      %v521 = vsel %vm312, %v479, 0.0
      %522 = vadd.xlane.f32.xlu0 %v521
      %v523 = vpop.xlane.xlu0 %522
      %v524 = vsel %vm312, %v480, 0.0
      %525 = vadd.xlane.f32.xlu0 %v524
      %v526 = vpop.xlane.xlu0 %525
      %v527 = vsel %vm312, %v481, 0.0
      %528 = vadd.xlane.f32.xlu0 %v527
      %v529 = vpop.xlane.xlu0 %528
      %v530 = vsel %vm312, %v482, 0.0
      %531 = vadd.xlane.f32.xlu0 %v530
      %v532 = vpop.xlane.xlu0 %531
      %v533 = vsel %vm312, %v483, 0.0
      %534 = vadd.xlane.f32.xlu0 %v533
      %v535 = vpop.xlane.xlu0 %534
      %v536 = vsel %vm312, %v484, 0.0
      %537 = vadd.xlane.f32.xlu0 %v536
      %v538 = vpop.xlane.xlu0 %537
      %v539 = vsel %vm312, %v485, 0.0
      %540 = vadd.xlane.f32.xlu0 %v539
      %v541 = vpop.xlane.xlu0 %540
      %v542 = vsel %vm312, %v486, 0.0
      %543 = vadd.xlane.f32.xlu0 %v542
      %v544 = vpop.xlane.xlu0 %543
      %v545 = vsel %vm312, %v487, 0.0
      %546 = vadd.xlane.f32.xlu0 %v545
      %v547 = vpop.xlane.xlu0 %546
      %v548 = vsel %vm312, %v488, 0.0
      %549 = vadd.xlane.f32.xlu0 %v548
      %v550 = vpop.xlane.xlu0 %549
      %v551 = vsel %vm312, %v489, 0.0
      %552 = vadd.xlane.f32.xlu0 %v551
      %v553 = vpop.xlane.xlu0 %552
      %v554 = vsel %vm312, %v490, 0.0
      %555 = vadd.xlane.f32.xlu0 %v554
      %v556 = vpop.xlane.xlu0 %555
      %v557 = vsel %vm312, %v491, 0.0
      %558 = vadd.xlane.f32.xlu0 %v557
      %v559 = vpop.xlane.xlu0 %558
      %v560 = vsel %vm312, %v492, 0.0
      %561 = vadd.xlane.f32.xlu0 %v560
      %v562 = vpop.xlane.xlu0 %561
      %v563 = vsel %vm312, %v493, 0.0
      %564 = vadd.xlane.f32.xlu0 %v563
      %v565 = vpop.xlane.xlu0 %564
      %v566 = vsel %vm312, %v494, 0.0
      %567 = vadd.xlane.f32.xlu0 %v566
      %v568 = vpop.xlane.xlu0 %567
      %v569 = vsel %vm312, %v495, 0.0
      %570 = vadd.xlane.f32.xlu0 %v569
      %v571 = vpop.xlane.xlu0 %570
      %v572 = vsel %vm312, %v496, 0.0
      %573 = vadd.xlane.f32.xlu0 %v572
      %v574 = vpop.xlane.xlu0 %573
      %v575 = vsel %vm312, %v497, 0.0
      %576 = vadd.xlane.f32.xlu0 %v575
      %v577 = vpop.xlane.xlu0 %576
      %v578 = vsel %vm312, %v498, 0.0
      %579 = vadd.xlane.f32.xlu0 %v578
      %v580 = vpop.xlane.xlu0 %579
      %v581 = vsel %vm312, %v499, 0.0
      %582 = vadd.xlane.f32.xlu0 %v581
      %v583 = vpop.xlane.xlu0 %582
      %v584 = vsel %vm312, %v500, 0.0
      %585 = vadd.xlane.f32.xlu0 %v584
      %v586 = vpop.xlane.xlu0 %585
      %v587 = vsel %vm312, %v501, 0.0
      %588 = vadd.xlane.f32.xlu0 %v587
      %v589 = vpop.xlane.xlu0 %588
      %v590 = vsel %vm312, %v502, 0.0
      %591 = vadd.xlane.f32.xlu0 %v590
      %v592 = vpop.xlane.xlu0 %591
      %v593 = vsel %vm312, %v503, 0.0
      %594 = vadd.xlane.f32.xlu0 %v593
      %v595 = vpop.xlane.xlu0 %594
      %v596 = vsel %vm312, %v504, 0.0
      %597 = vadd.xlane.f32.xlu0 %v596
      %v598 = vpop.xlane.xlu0 %597
      %v599 = vsel %vm312, %v505, 0.0
      %600 = vadd.xlane.f32.xlu0 %v599
      %v601 = vpop.xlane.xlu0 %600
      %v602 = vmul.f32 %v508, %v409
      %v603 = vmul.f32 %v511, %v409
      %v604 = vmul.f32 %v514, %v409
      %v605 = vmul.f32 %v517, %v409
      %v606 = vmul.f32 %v520, %v409
      %v607 = vmul.f32 %v523, %v409
      %v608 = vmul.f32 %v526, %v409
      %v609 = vmul.f32 %v529, %v409
      %v610 = vmul.f32 %v532, %v409
      %v611 = vmul.f32 %v535, %v409
      %v612 = vmul.f32 %v538, %v409
      %v613 = vmul.f32 %v541, %v409
      %v614 = vmul.f32 %v544, %v409
      %v615 = vmul.f32 %v547, %v409
      %v616 = vmul.f32 %v550, %v409
      %v617 = vmul.f32 %v553, %v409
      %v618 = vmul.f32 %v556, %v409
      %v619 = vmul.f32 %v559, %v409
      %v620 = vmul.f32 %v562, %v409
      %v621 = vmul.f32 %v565, %v409
      %v622 = vmul.f32 %v568, %v409
      %v623 = vmul.f32 %v571, %v409
      %v624 = vmul.f32 %v574, %v409
      %v625 = vmul.f32 %v577, %v409
      %v626 = vmul.f32 %v580, %v409
      %v627 = vmul.f32 %v583, %v409
      %v628 = vmul.f32 %v586, %v409
      %v629 = vmul.f32 %v589, %v409
      %v630 = vmul.f32 %v592, %v409
      %v631 = vmul.f32 %v595, %v409
      %v632 = vmul.f32 %v598, %v409
      %v633 = vmul.f32 %v601, %v409
      %v634 = vadd.f32 %v602, 1e-06
      %v635 = vadd.f32 %v603, 1e-06
      %v636 = vadd.f32 %v604, 1e-06
      %v637 = vadd.f32 %v605, 1e-06
      %v638 = vadd.f32 %v606, 1e-06
      %v639 = vadd.f32 %v607, 1e-06
      %v640 = vadd.f32 %v608, 1e-06
      %v641 = vadd.f32 %v609, 1e-06
      %v642 = vadd.f32 %v610, 1e-06
      %v643 = vadd.f32 %v611, 1e-06
      %v644 = vadd.f32 %v612, 1e-06
      %v645 = vadd.f32 %v613, 1e-06
      %v646 = vadd.f32 %v614, 1e-06
      %v647 = vadd.f32 %v615, 1e-06
      %v648 = vadd.f32 %v616, 1e-06
      %v649 = vadd.f32 %v617, 1e-06
      %v650 = vadd.f32 %v618, 1e-06
      %v651 = vadd.f32 %v619, 1e-06
      %v652 = vadd.f32 %v620, 1e-06
      %v653 = vadd.f32 %v621, 1e-06
      %v654 = vadd.f32 %v622, 1e-06
      %v655 = vadd.f32 %v623, 1e-06
      %v656 = vadd.f32 %v624, 1e-06
      %v657 = vadd.f32 %v625, 1e-06
      %v658 = vadd.f32 %v626, 1e-06
      %v659 = vadd.f32 %v627, 1e-06
      %v660 = vadd.f32 %v628, 1e-06
      %v661 = vadd.f32 %v629, 1e-06
      %v662 = vadd.f32 %v630, 1e-06
      %v663 = vadd.f32 %v631, 1e-06
      %v664 = vadd.f32 %v632, 1e-06
      %v665 = vadd.f32 %v633, 1e-06
      %v666 = vrsqrt.pop %v634
      %v667 = vrsqrt.pop %v635
      %v668 = vrsqrt.pop %v636
      %v669 = vrsqrt.pop %v637
      %v670 = vrsqrt.pop %v638
      %v671 = vrsqrt.pop %v639
      %v672 = vrsqrt.pop %v640
      %v673 = vrsqrt.pop %v641
      %v674 = vrsqrt.pop %v642
      %v675 = vrsqrt.pop %v643
      %v676 = vrsqrt.pop %v644
      %v677 = vrsqrt.pop %v645
      %v678 = vrsqrt.pop %v646
      %v679 = vrsqrt.pop %v647
      %v680 = vrsqrt.pop %v648
      %v681 = vrsqrt.pop %v649
      %v682 = vrsqrt.pop %v650
      %v683 = vrsqrt.pop %v651
      %v684 = vrsqrt.pop %v652
      %v685 = vrsqrt.pop %v653
      %v686 = vrsqrt.pop %v654
      %v687 = vrsqrt.pop %v655
      %v688 = vrsqrt.pop %v656
      %v689 = vrsqrt.pop %v657
      %v690 = vrsqrt.pop %v658
      %v691 = vrsqrt.pop %v659
      %v692 = vrsqrt.pop %v660
      %v693 = vrsqrt.pop %v661
      %v694 = vrsqrt.pop %v662
      %v695 = vrsqrt.pop %v663
      %v696 = vrsqrt.pop %v664
      %v697 = vrsqrt.pop %v665
      %v698 = vmul.f32 %v442, %v666
      %v699 = vmul.f32 %v443, %v667
      %v700 = vmul.f32 %v444, %v668
      %v701 = vmul.f32 %v445, %v669
      %v702 = vmul.f32 %v446, %v670
      %v703 = vmul.f32 %v447, %v671
      %v704 = vmul.f32 %v448, %v672
      %v705 = vmul.f32 %v449, %v673
      %v706 = vmul.f32 %v450, %v674
      %v707 = vmul.f32 %v451, %v675
      %v708 = vmul.f32 %v452, %v676
      %v709 = vmul.f32 %v453, %v677
      %v710 = vmul.f32 %v454, %v678
      %v711 = vmul.f32 %v455, %v679
      %v712 = vmul.f32 %v456, %v680
      %v713 = vmul.f32 %v457, %v681
      %v714 = vmul.f32 %v458, %v682
      %v715 = vmul.f32 %v459, %v683
      %v716 = vmul.f32 %v460, %v684
      %v717 = vmul.f32 %v461, %v685
      %v718 = vmul.f32 %v462, %v686
      %v719 = vmul.f32 %v463, %v687
      %v720 = vmul.f32 %v464, %v688
      %v721 = vmul.f32 %v465, %v689
      %v722 = vmul.f32 %v466, %v690
      %v723 = vmul.f32 %v467, %v691
      %v724 = vmul.f32 %v468, %v692
      %v725 = vmul.f32 %v469, %v693
      %v726 = vmul.f32 %v470, %v694
      %v727 = vmul.f32 %v471, %v695
      %v728 = vmul.f32 %v472, %v696
      %v729 = vmul.f32 %v473, %v697
      %v730 = vld [vmem:[%s1] sm:$0x1]
      %v732 = vlaneseq
      %v733 = vshrl.u32 %v732, 7
      %v734 = vsub.s32 0, %v733
      %v735 = vrot.slane %v730, %v734
      %v737 = vmul.f32 %v698, %v735
      %v738 = vmul.f32 %v699, %v735
      %v739 = vmul.f32 %v700, %v735
      %v740 = vmul.f32 %v701, %v735
      %v741 = vmul.f32 %v702, %v735
      %v742 = vmul.f32 %v703, %v735
      %v743 = vmul.f32 %v704, %v735
      %v744 = vmul.f32 %v705, %v735
      %v745 = vmul.f32 %v706, %v735
      %v746 = vmul.f32 %v707, %v735
      %v747 = vmul.f32 %v708, %v735
      %v748 = vmul.f32 %v709, %v735
      %v749 = vmul.f32 %v710, %v735
      %v750 = vmul.f32 %v711, %v735
      %v751 = vmul.f32 %v712, %v735
      %v752 = vmul.f32 %v713, %v735
      %v753 = vmul.f32 %v714, %v735
      %v754 = vmul.f32 %v715, %v735
      %v755 = vmul.f32 %v716, %v735
      %v756 = vmul.f32 %v717, %v735
      %v757 = vmul.f32 %v718, %v735
      %v758 = vmul.f32 %v719, %v735
      %v759 = vmul.f32 %v720, %v735
      %v760 = vmul.f32 %v721, %v735
      %v761 = vmul.f32 %v722, %v735
      %v762 = vmul.f32 %v723, %v735
      %v763 = vmul.f32 %v724, %v735
      %v764 = vmul.f32 %v725, %v735
      %v765 = vmul.f32 %v726, %v735
      %v766 = vmul.f32 %v727, %v735
      %v767 = vmul.f32 %v728, %v735
      %v768 = vmul.f32 %v729, %v735
      %v769 = vld [vmem:[%s2] sm:$0x1]
      %v771 = vlaneseq
      %v772 = vshrl.u32 %v771, 7
      %v773 = vsub.s32 0, %v772
      %v774 = vrot.slane %v769, %v773
      %v776 = vadd.f32 %v737, %v774
      %v777 = vadd.f32 %v738, %v774
      %v778 = vadd.f32 %v739, %v774
      %v779 = vadd.f32 %v740, %v774
      %v780 = vadd.f32 %v741, %v774
      %v781 = vadd.f32 %v742, %v774
      %v782 = vadd.f32 %v743, %v774
      %v783 = vadd.f32 %v744, %v774
      %v784 = vadd.f32 %v745, %v774
      %v785 = vadd.f32 %v746, %v774
      %v786 = vadd.f32 %v747, %v774
      %v787 = vadd.f32 %v748, %v774
      %v788 = vadd.f32 %v749, %v774
      %v789 = vadd.f32 %v750, %v774
      %v790 = vadd.f32 %v751, %v774
      %v791 = vadd.f32 %v752, %v774
      %v792 = vadd.f32 %v753, %v774
      %v793 = vadd.f32 %v754, %v774
      %v794 = vadd.f32 %v755, %v774
      %v795 = vadd.f32 %v756, %v774
      %v796 = vadd.f32 %v757, %v774
      %v797 = vadd.f32 %v758, %v774
      %v798 = vadd.f32 %v759, %v774
      %v799 = vadd.f32 %v760, %v774
      %v800 = vadd.f32 %v761, %v774
      %v801 = vadd.f32 %v762, %v774
      %v802 = vadd.f32 %v763, %v774
      %v803 = vadd.f32 %v764, %v774
      %v804 = vadd.f32 %v765, %v774
      %v805 = vadd.f32 %v766, %v774
      %v806 = vadd.f32 %v767, %v774
      %v807 = vadd.f32 %v768, %v774
      %v808 = vpack.c.bf16 %v777, %v776
      %v809 = vpack.c.bf16 %v779, %v778
      %v810 = vpack.c.bf16 %v781, %v780
      %v811 = vpack.c.bf16 %v783, %v782
      %v812 = vpack.c.bf16 %v785, %v784
      %v813 = vpack.c.bf16 %v787, %v786
      %v814 = vpack.c.bf16 %v789, %v788
      %v815 = vpack.c.bf16 %v791, %v790
      %v816 = vpack.c.bf16 %v793, %v792
      %v817 = vpack.c.bf16 %v795, %v794
      %v818 = vpack.c.bf16 %v797, %v796
      %v819 = vpack.c.bf16 %v799, %v798
      %v820 = vpack.c.bf16 %v801, %v800
      %v821 = vpack.c.bf16 %v803, %v802
      %v822 = vpack.c.bf16 %v805, %v804
      %v823 = vpack.c.bf16 %v807, %v806
      %v824 = vld [vmem:[%s266] sm:$0xf]
      %v825 = vld [vmem:[%s266 + $0x4] sm:$0xf]
      %v826 = vld [vmem:[%s266 + $0x8] sm:$0xf]
      %v827 = vld [vmem:[%s266 + $0xc] sm:$0xf]
      %v828 = vld [vmem:[%s269] sm:$0x1]
      %v830 = vlaneseq
      %v831 = vshrl.u32 %v830, 7
      %v832 = vsub.s32 0, %v831
      %v833 = vrot.slane %v828, %v832
      %v839 = vunpack.c.l.b16 %v824
      %v840 = vunpack.c.l.b16 %v825
      %v841 = vunpack.c.l.b16 %v826
      %v842 = vunpack.c.l.b16 %v827
      %v843 = vpack.c.b16 %v840, %v839
      %v844 = vpack.c.b16 %v842, %v841
      %v848 = vsel %vm312, %v808, 0
      %v851 = vsel %vm312, %v809, 0
      %v854 = vsel %vm312, %v810, 0
      %v857 = vsel %vm312, %v811, 0
      %v860 = vsel %vm312, %v812, 0
      %v863 = vsel %vm312, %v813, 0
      %v866 = vsel %vm312, %v814, 0
      %v869 = vsel %vm312, %v815, 0
      %v872 = vsel %vm312, %v816, 0
      %v875 = vsel %vm312, %v817, 0
      %v878 = vsel %vm312, %v818, 0
      %v881 = vsel %vm312, %v819, 0
      %v884 = vsel %vm312, %v820, 0
      %v887 = vsel %vm312, %v821, 0
      %v890 = vsel %vm312, %v822, 0
      %v893 = vsel %vm312, %v823, 0
      %895 = vmatprep.subr.bf16.mxu0 0
      %896 = vmatpush1.bf16.msra.mxu0 %v843
      %897 = vmatprep.subr.bf16.mxu0 0
      %898 = vmatpush1.bf16.msra.mxu0 %v844
      %899 = vmatprep.subr.bf16.mxu0 0
      %900 = vmatpush1.bf16.msra.mxu0 0
      %901 = vmatprep.subr.bf16.mxu0 0
      %902 = vmatpush1.bf16.msra.mxu0 0
      %903 = vmatprep.subr.bf16.mxu0 0
      %904 = vmatpush1.bf16.msra.mxu0 0
      %905 = vmatprep.subr.bf16.mxu0 0
      %906 = vmatpush1.bf16.msra.mxu0 0
      %907 = vmatprep.subr.bf16.mxu0 0
      %908 = vmatpush1.bf16.msra.mxu0 0
      %909 = vmatprep.subr.bf16.mxu0 0
      %910 = vmatpush1.bf16.msra.mxu0 0
      %911 = vmatprep.subr.bf16.mxu0 0
      %912 = vmatpush1.bf16.msra.mxu0 0
      %913 = vmatprep.subr.bf16.mxu0 0
      %914 = vmatpush1.bf16.msra.mxu0 0
      %915 = vmatprep.subr.bf16.mxu0 0
      %916 = vmatpush1.bf16.msra.mxu0 0
      %917 = vmatprep.subr.bf16.mxu0 0
      %918 = vmatpush1.bf16.msra.mxu0 0
      %919 = vmatprep.subr.bf16.mxu0 0
      %920 = vmatpush1.bf16.msra.mxu0 0
      %921 = vmatprep.subr.bf16.mxu0 0
      %922 = vmatpush1.bf16.msra.mxu0 0
      %923 = vmatprep.subr.bf16.mxu0 0
      %924 = vmatpush1.bf16.msra.mxu0 0
      %925 = vmatprep.subr.bf16.mxu0 0
      %926 = vmatpush1.bf16.msra.mxu0 0
      %927 = vmatprep.mubr.bf16.mxu0 0
      %928 = vmatmul.mubr.bf16.gmra.mrb[0].mxu0 %v848
      %v929 = vpop.f32.mrb[0].mxu0
      %v930 = vadd.f32 %v833, %v929
      %v931 = vpop.f32.mrb[0].mxu0
      %v932 = vpop.f32.mrb[0].mxu0
      %v933 = vadd.f32 %v833, %v932
      %v934 = vpop.f32.mrb[0].mxu0
      %935 = vmatprep.mubr.bf16.mxu0 0
      %936 = vmatmul.mubr.bf16.gmra.mrb[0].mxu0 %v851
      %v937 = vpop.f32.mrb[0].mxu0
      %v938 = vadd.f32 %v833, %v937
      %v939 = vpop.f32.mrb[0].mxu0
      %v940 = vpop.f32.mrb[0].mxu0
      %v941 = vadd.f32 %v833, %v940
      %v942 = vpop.f32.mrb[0].mxu0
      %943 = vmatprep.mubr.bf16.mxu0 0
      %944 = vmatmul.mubr.bf16.gmra.mrb[0].mxu0 %v854
      %v945 = vpop.f32.mrb[0].mxu0
      %v946 = vadd.f32 %v833, %v945
      %v947 = vpop.f32.mrb[0].mxu0
      %v948 = vpop.f32.mrb[0].mxu0
      %v949 = vadd.f32 %v833, %v948
      %v950 = vpop.f32.mrb[0].mxu0
      %951 = vmatprep.mubr.bf16.mxu0 0
      %952 = vmatmul.mubr.bf16.gmra.mrb[0].mxu0 %v857
      %v953 = vpop.f32.mrb[0].mxu0
      %v954 = vadd.f32 %v833, %v953
      %v955 = vpop.f32.mrb[0].mxu0
      %v956 = vpop.f32.mrb[0].mxu0
      %v957 = vadd.f32 %v833, %v956
      %v958 = vpop.f32.mrb[0].mxu0
      %959 = vmatprep.mubr.bf16.mxu0 0
      %960 = vmatmul.mubr.bf16.gmra.mrb[0].mxu0 %v860
      %v961 = vpop.f32.mrb[0].mxu0
      %v962 = vadd.f32 %v833, %v961
      %v963 = vpop.f32.mrb[0].mxu0
      %v964 = vpop.f32.mrb[0].mxu0
      %v965 = vadd.f32 %v833, %v964
      %v966 = vpop.f32.mrb[0].mxu0
      %967 = vmatprep.mubr.bf16.mxu0 0
      %968 = vmatmul.mubr.bf16.gmra.mrb[0].mxu0 %v863
      %v969 = vpop.f32.mrb[0].mxu0
      %v970 = vadd.f32 %v833, %v969
      %v971 = vpop.f32.mrb[0].mxu0
      %v972 = vpop.f32.mrb[0].mxu0
      %v973 = vadd.f32 %v833, %v972
      %v974 = vpop.f32.mrb[0].mxu0
      %975 = vmatprep.mubr.bf16.mxu0 0
      %976 = vmatmul.mubr.bf16.gmra.mrb[0].mxu0 %v866
      %v977 = vpop.f32.mrb[0].mxu0
      %v978 = vadd.f32 %v833, %v977
      %v979 = vpop.f32.mrb[0].mxu0
      %v980 = vpop.f32.mrb[0].mxu0
      %v981 = vadd.f32 %v833, %v980
      %v982 = vpop.f32.mrb[0].mxu0
      %983 = vmatprep.mubr.bf16.mxu0 0
      %984 = vmatmul.mubr.bf16.gmra.mrb[0].mxu0 %v869
      %v985 = vpop.f32.mrb[0].mxu0
      %v986 = vadd.f32 %v833, %v985
      %v987 = vpop.f32.mrb[0].mxu0
      %v988 = vpop.f32.mrb[0].mxu0
      %v989 = vadd.f32 %v833, %v988
      %v990 = vpop.f32.mrb[0].mxu0
      %991 = vmatprep.mubr.bf16.mxu0 0
      %992 = vmatmul.mubr.bf16.gmra.mrb[0].mxu0 %v872
      %v993 = vpop.f32.mrb[0].mxu0
      %v994 = vadd.f32 %v833, %v993
      %v995 = vpop.f32.mrb[0].mxu0
      %v996 = vpop.f32.mrb[0].mxu0
      %v997 = vadd.f32 %v833, %v996
      %v998 = vpop.f32.mrb[0].mxu0
      %999 = vmatprep.mubr.bf16.mxu0 0
      %1000 = vmatmul.mubr.bf16.gmra.mrb[0].mxu0 %v875
      %v1001 = vpop.f32.mrb[0].mxu0
      %v1002 = vadd.f32 %v833, %v1001
      %v1003 = vpop.f32.mrb[0].mxu0
      %v1004 = vpop.f32.mrb[0].mxu0
      %v1005 = vadd.f32 %v833, %v1004
      %v1006 = vpop.f32.mrb[0].mxu0
      %1007 = vmatprep.mubr.bf16.mxu0 0
      %1008 = vmatmul.mubr.bf16.gmra.mrb[0].mxu0 %v878
      %v1009 = vpop.f32.mrb[0].mxu0
      %v1010 = vadd.f32 %v833, %v1009
      %v1011 = vpop.f32.mrb[0].mxu0
      %v1012 = vpop.f32.mrb[0].mxu0
      %v1013 = vadd.f32 %v833, %v1012
      %v1014 = vpop.f32.mrb[0].mxu0
      %1015 = vmatprep.mubr.bf16.mxu0 0
      %1016 = vmatmul.mubr.bf16.gmra.mrb[0].mxu0 %v881
      %v1017 = vpop.f32.mrb[0].mxu0
      %v1018 = vadd.f32 %v833, %v1017
      %v1019 = vpop.f32.mrb[0].mxu0
      %v1020 = vpop.f32.mrb[0].mxu0
      %v1021 = vadd.f32 %v833, %v1020
      %v1022 = vpop.f32.mrb[0].mxu0
      %1023 = vmatprep.mubr.bf16.mxu0 0
      %1024 = vmatmul.mubr.bf16.gmra.mrb[0].mxu0 %v884
      %v1025 = vpop.f32.mrb[0].mxu0
      %v1026 = vadd.f32 %v833, %v1025
      %v1027 = vpop.f32.mrb[0].mxu0
      %v1028 = vpop.f32.mrb[0].mxu0
      %v1029 = vadd.f32 %v833, %v1028
      %v1030 = vpop.f32.mrb[0].mxu0
      %1031 = vmatprep.mubr.bf16.mxu0 0
      %1032 = vmatmul.mubr.bf16.gmra.mrb[0].mxu0 %v887
      %v1033 = vpop.f32.mrb[0].mxu0
      %v1034 = vadd.f32 %v833, %v1033
      %v1035 = vpop.f32.mrb[0].mxu0
      %v1036 = vpop.f32.mrb[0].mxu0
      %v1037 = vadd.f32 %v833, %v1036
      %v1038 = vpop.f32.mrb[0].mxu0
      %1039 = vmatprep.mubr.bf16.mxu0 0
      %1040 = vmatmul.mubr.bf16.gmra.mrb[0].mxu0 %v890
      %v1041 = vpop.f32.mrb[0].mxu0
      %v1042 = vadd.f32 %v833, %v1041
      %v1043 = vpop.f32.mrb[0].mxu0
      %v1044 = vpop.f32.mrb[0].mxu0
      %v1045 = vadd.f32 %v833, %v1044
      %v1046 = vpop.f32.mrb[0].mxu0
      %1047 = vmatprep.mubr.bf16.mxu0 0
      %1048 = vmatmul.mubr.bf16.gmra.mrb[0].mxu0 %v893
      %v1049 = vpop.f32.mrb[0].mxu0
      %v1050 = vadd.f32 %v833, %v1049
      %v1051 = vpop.f32.mrb[0].mxu0
      %v1052 = vpop.f32.mrb[0].mxu0
      %v1053 = vadd.f32 %v833, %v1052
      %v1054 = vpop.f32.mrb[0].mxu0
      %1055 = vdwg.mxu0
      %1056 = vst.msk [vmem:[%s277] sm:$0xff] %vm312, %v930
      %1057 = vst.msk [vmem:[%s277 + $0x8] sm:$0xff] %vm312, %v933
      %1058 = vst.msk [vmem:[%s277 + $0x10] sm:$0xff] %vm312, %v938
      %1059 = vst.msk [vmem:[%s277 + $0x18] sm:$0xff] %vm312, %v941
      %1060 = vst.msk [vmem:[%s277 + $0x20] sm:$0xff] %vm312, %v946
      %1061 = vst.msk [vmem:[%s277 + $0x28] sm:$0xff] %vm312, %v949
      %1062 = vst.msk [vmem:[%s277 + $0x30] sm:$0xff] %vm312, %v954
      %1063 = vst.msk [vmem:[%s277 + $0x38] sm:$0xff] %vm312, %v957
      %1064 = vst.msk [vmem:[%s277 + $0x40] sm:$0xff] %vm312, %v962
      %1065 = vst.msk [vmem:[%s277 + $0x48] sm:$0xff] %vm312, %v965
      %1066 = vst.msk [vmem:[%s277 + $0x50] sm:$0xff] %vm312, %v970
      %1067 = vst.msk [vmem:[%s277 + $0x58] sm:$0xff] %vm312, %v973
      %1068 = vst.msk [vmem:[%s277 + $0x60] sm:$0xff] %vm312, %v978
      %1069 = vst.msk [vmem:[%s277 + $0x68] sm:$0xff] %vm312, %v981
      %1070 = vst.msk [vmem:[%s277 + $0x70] sm:$0xff] %vm312, %v986
      %1071 = vst.msk [vmem:[%s277 + $0x78] sm:$0xff] %vm312, %v989
      %1072 = vst.msk [vmem:[%s277 + $0x80] sm:$0xff] %vm312, %v994
      %1073 = vst.msk [vmem:[%s277 + $0x88] sm:$0xff] %vm312, %v997
      %1074 = vst.msk [vmem:[%s277 + $0x90] sm:$0xff] %vm312, %v1002
      %1075 = vst.msk [vmem:[%s277 + $0x98] sm:$0xff] %vm312, %v1005
      %1076 = vst.msk [vmem:[%s277 + $0xa0] sm:$0xff] %vm312, %v1010
      %1077 = vst.msk [vmem:[%s277 + $0xa8] sm:$0xff] %vm312, %v1013
      %1078 = vst.msk [vmem:[%s277 + $0xb0] sm:$0xff] %vm312, %v1018
      %1079 = vst.msk [vmem:[%s277 + $0xb8] sm:$0xff] %vm312, %v1021
      %1080 = vst.msk [vmem:[%s277 + $0xc0] sm:$0xff] %vm312, %v1026
      %1081 = vst.msk [vmem:[%s277 + $0xc8] sm:$0xff] %vm312, %v1029
      %1082 = vst.msk [vmem:[%s277 + $0xd0] sm:$0xff] %vm312, %v1034
      %1083 = vst.msk [vmem:[%s277 + $0xd8] sm:$0xff] %vm312, %v1037
      %1084 = vst.msk [vmem:[%s277 + $0xe0] sm:$0xff] %vm312, %v1042
      %1085 = vst.msk [vmem:[%s277 + $0xe8] sm:$0xff] %vm312, %v1045
      %1086 = vst.msk [vmem:[%s277 + $0xf0] sm:$0xff] %vm312, %v1050
      %1087 = vst.msk [vmem:[%s277 + $0xf8] sm:$0xff] %vm312, %v1053
      %s1088 = smul.u32 32, %s20
      %p1089 = scmp.lt.s32.totalorder %s1088, 63
      %s1090 = scalar_select %p1089, %s1088, 63
      %p1091 = scmp.lt.s32.totalorder %s21, 0
      %s1092 = scalar_select %p1091, %s21, 0
      %s1093 = sadd.s32 %s1092, %s1090
      %s1094 = smul.addr %s1093, 8
      %s1095 = scalar_lea.vmem %s5, %s1094
      // Predicated region
      $region41: #{block_forward.8} parent=39 // pred_check
        %p1096 = pneg %p168
      $region42: #{block_forward.8} parent=39 // pred_check_branch
        %1098 = sbr.rel (%p1096) target = $region44
      $region43: #{block_forward.8} parent=39 // pred_region
        %s1099 = smul.u32 32, %s20
      $region44: #{block_forward.8} parent=39 // pred_fallthru
        _
    $region40: #{block_forward.8} parent=5 // pred_fallthru
      _
    %p1100 = scmp.le.s32.totalorder 2, %s11
    // Predicated region
    $region45: #{block_forward.8} parent=5 // pred_check
      %p1101 = pneg %p1100
    $region46: #{block_forward.8} parent=5 // pred_check_branch
      %1103 = sbr.rel (%p1101) target = $region48
    $region47: #{block_forward.8} parent=5 // pred_region
      %s1104 = ssub.s32 %s11, 2
      // Predicated region
      $region49: #{block_forward.8} parent=47 // pred_check
        %p1105 = pneg %p174
      $region50: #{block_forward.8} parent=47 // pred_check_branch
        %1107 = sbr.rel (%p1105) target = $region52
      $region51: #{block_forward.8} parent=47 // pred_region
        %s1108 = smul.u32 32, %s22
        %p1109 = scmp.lt.s32.totalorder %s1108, 63
        %s1110 = scalar_select %p1109, %s1108, 63
        %p1111 = scmp.lt.s32.totalorder %s23, 0
        %s1112 = scalar_select %p1111, %s23, 0
        %s1113 = sadd.s32 %s1112, %s1110
        %s1114 = smul.addr %s1113, 8
        %s1115 = scalar_lea.vmem %s5, %s1114
      $region52: #{block_forward.8} parent=47 // pred_fallthru
        _
    $region48: #{block_forward.8} parent=5 // pred_fallthru
      _
  $region6: #{block_forward.8} parent=0 // loop_footer
    %s15 = sadd.s32 1, %s11
  $region7: #{block_forward.8} parent=0 // loop_footer_branch
    %10 = sbr.rel target = $region3
  $region8: #{block_forward.8} parent=0 // loop_exit
    _

// kernel: block_forward.11
$region0: #{block_forward.11}
  #allocation0 [shape = 'u32[]', space=smem, size = 0x4, offset = 0x4, fixed_abs, tag = 'smem constant byte address 0x4 - core index']
  #allocation1 [shape = 'u32[144,128]{1,0:T(1,128)}', space=vmem, size = 0x12000, scoped, tag = 'internal scratch']
  #allocation2 [shape = 'f32[256,32]{1,0:T(8,128)}', space=vmem, size = 0x20000, scoped, tag = 'scratch operand']
  %s0 = inlined_call_operand.vmem [shape: f32[512,32], index: 0, kind: input, shape index: {}]
  %s1 = inlined_call_operand.vmem [shape: bf16[32,32], index: 1, kind: input, shape index: {}]
  %s2 = inlined_call_operand.vmem [shape: f32[1,32], index: 2, kind: input, shape index: {}]
  %s3 = inlined_call_operand.vmem [shape: f32[512,32], index: 3, kind: input, shape index: {}]
  %s4 = inlined_call_operand.vmem [shape: f32[512,32], index: 4, kind: output, shape index: {}]
  %s5 = sld [smem:[#allocation0]]
  $region57: #{block_forward.11} parent=0
    _
  %s7 = ssub.s32 1, %s5
  %s8 = scalar_select 0, %s7, %s5
  loop: start=0, step=1, limit=4
  $region2: #{block_forward.11} parent=0 // loop_pre_header
    _
  $region3: #{block_forward.11} parent=0 // loop_header
    %s10 = sphi 0, %s14
    %p11 = scmp.ge.s32.totalorder %s10, 4
    %s17 = sphi 0, %s36
    %s18 = sphi 0, %s32
    %s19 = sphi 0, %s28
    %s20 = sphi 0, %s17
    %s21 = sphi 0, %s18
    %s22 = sphi 0, %s19
    %s23 = sphi 0, %s20
    %s24 = sphi 0, %s21
    %s25 = sphi 0, %s22
    %s41 = sphi 0, %s43
    %s44 = sphi 0, %s41
    %s45 = sphi 0, %s44
    %s61 = sphi 0, %s45
    %s69 = sphi 0, %s71
    %s72 = sphi 0, %s69
    %s73 = sphi 0, %s72
    %s89 = sphi 0, %s73
    %s95 = sphi 0, %s97
    %s98 = sphi 0, %s95
    %s99 = sphi 0, %s98
    %s115 = sphi 0, %s99
    %s123 = sphi 0, %s125
    %s126 = sphi 0, %s123
    %s127 = sphi 0, %s126
    %s143 = sphi 0, %s127
    %s151 = sphi 0, %s153
    %s154 = sphi 0, %s151
    %s155 = sphi 0, %s154
    %s171 = sphi 0, %s155
  $region4: #{block_forward.11} parent=0 // loop_header_branch
    %13 = sbr.rel (%p11) target = $region8
  $region5: #{block_forward.11} parent=0 // loop_body
    %s15 = ssub.s32 %s10, 1
    %s16 = ssub.s32 %s10, 2
    %s26 = sadd.s32 1, %s19
    %p27 = scmp.ge.s32.totalorder %s26, 1
    %s28 = scalar_select %p27, 0, %s26
    %s29 = sadd.s32 1, %s18
    %s30 = scalar_select %p27, %s29, %s18
    %p31 = scmp.ge.s32.totalorder %s30, 1
    %s32 = scalar_select %p31, 0, %s30
    %s33 = sadd.s32 1, %s17
    %s34 = scalar_select %p31, %s33, %s17
    %p35 = scmp.ge.s32.totalorder %s34, 2
    %s36 = scalar_select %p35, 0, %s34
    %s37 = ssub.s32 %s17, %s36
    %s38 = ssub.s32 %s19, %s28
    %s39 = sor.u32 %s37, %s38
    %p40 = scmp.eq.s32.totalorder %s39, 0
    %s42 = sadd.s32 %s41, 1
    %s43 = scalar_select %p40, %s41, %s42
    %p46 = pneg %p40
    %p47 = scmp.eq.s32.totalorder %s10, 1
    %p48 = por %p46, %p47
    %p49 = scmp.ne.s32.totalorder %s41, %s44
    %p50 = scmp.eq.s32.totalorder %s10, 0
    %p51 = por %p49, %p50
    %p52 = scmp.ne.s32.totalorder %s41, %s44
    %p53 = scmp.eq.s32.totalorder %s15, 1
    %p54 = por %p52, %p53
    %p55 = scmp.ne.s32.totalorder %s44, %s45
    %p56 = scmp.eq.s32.totalorder %s15, 0
    %p57 = por %p55, %p56
    %p58 = scmp.ne.s32.totalorder %s44, %s45
    %p59 = scmp.eq.s32.totalorder %s16, 1
    %p60 = por %p58, %p59
    %p62 = scmp.ne.s32.totalorder %s45, %s61
    %p63 = scmp.eq.s32.totalorder %s16, 0
    %p64 = por %p62, %p63
    %s65 = ssub.s32 %s19, %s28
    %s66 = ssub.s32 %s18, %s32
    %s67 = sor.u32 %s65, %s66
    %p68 = scmp.eq.s32.totalorder %s67, 0
    %s70 = sadd.s32 %s69, 1
    %s71 = scalar_select %p68, %s69, %s70
    %p74 = pneg %p68
    %p75 = scmp.eq.s32.totalorder %s10, 1
    %p76 = por %p74, %p75
    %p77 = scmp.ne.s32.totalorder %s69, %s72
    %p78 = scmp.eq.s32.totalorder %s10, 0
    %p79 = por %p77, %p78
    %p80 = scmp.ne.s32.totalorder %s69, %s72
    %p81 = scmp.eq.s32.totalorder %s15, 1
    %p82 = por %p80, %p81
    %p83 = scmp.ne.s32.totalorder %s72, %s73
    %p84 = scmp.eq.s32.totalorder %s15, 0
    %p85 = por %p83, %p84
    %p86 = scmp.ne.s32.totalorder %s72, %s73
    %p87 = scmp.eq.s32.totalorder %s16, 1
    %p88 = por %p86, %p87
    %p90 = scmp.ne.s32.totalorder %s73, %s89
    %p91 = scmp.eq.s32.totalorder %s16, 0
    %p92 = por %p90, %p91
    %s93 = ssub.s32 %s18, %s32
    %p94 = scmp.eq.s32.totalorder %s93, 0
    %s96 = sadd.s32 %s95, 1
    %s97 = scalar_select %p94, %s95, %s96
    %p100 = pneg %p94
    %p101 = scmp.eq.s32.totalorder %s10, 1
    %p102 = por %p100, %p101
    %p103 = scmp.ne.s32.totalorder %s95, %s98
    %p104 = scmp.eq.s32.totalorder %s10, 0
    %p105 = por %p103, %p104
    %p106 = scmp.ne.s32.totalorder %s95, %s98
    %p107 = scmp.eq.s32.totalorder %s15, 1
    %p108 = por %p106, %p107
    %p109 = scmp.ne.s32.totalorder %s98, %s99
    %p110 = scmp.eq.s32.totalorder %s15, 0
    %p111 = por %p109, %p110
    %p112 = scmp.ne.s32.totalorder %s98, %s99
    %p113 = scmp.eq.s32.totalorder %s16, 1
    %p114 = por %p112, %p113
    %p116 = scmp.ne.s32.totalorder %s99, %s115
    %p117 = scmp.eq.s32.totalorder %s16, 0
    %p118 = por %p116, %p117
    %s119 = ssub.s32 %s17, %s36
    %s120 = ssub.s32 %s18, %s32
    %s121 = sor.u32 %s119, %s120
    %p122 = scmp.eq.s32.totalorder %s121, 0
    %s124 = sadd.s32 %s123, 1
    %s125 = scalar_select %p122, %s123, %s124
    %p128 = pneg %p122
    %p129 = scmp.eq.s32.totalorder %s10, 1
    %p130 = por %p128, %p129
    %p131 = scmp.ne.s32.totalorder %s123, %s126
    %p132 = scmp.eq.s32.totalorder %s10, 0
    %p133 = por %p131, %p132
    %p134 = scmp.ne.s32.totalorder %s123, %s126
    %p135 = scmp.eq.s32.totalorder %s15, 1
    %p136 = por %p134, %p135
    %p137 = scmp.ne.s32.totalorder %s126, %s127
    %p138 = scmp.eq.s32.totalorder %s15, 0
    %p139 = por %p137, %p138
    %p140 = scmp.ne.s32.totalorder %s126, %s127
    %p141 = scmp.eq.s32.totalorder %s16, 1
    %p142 = por %p140, %p141
    %p144 = scmp.ne.s32.totalorder %s127, %s143
    %p145 = scmp.eq.s32.totalorder %s16, 0
    %p146 = por %p144, %p145
    %s147 = ssub.s32 %s17, %s36
    %s148 = ssub.s32 %s18, %s32
    %s149 = sor.u32 %s147, %s148
    %p150 = scmp.eq.s32.totalorder %s149, 0
    %s152 = sadd.s32 %s151, 1
    %s153 = scalar_select %p150, %s151, %s152
    %p156 = pneg %p150
    %p157 = scmp.eq.s32.totalorder %s10, 1
    %p158 = por %p156, %p157
    %p159 = scmp.ne.s32.totalorder %s151, %s154
    %p160 = scmp.eq.s32.totalorder %s10, 0
    %p161 = por %p159, %p160
    %p162 = scmp.ne.s32.totalorder %s151, %s154
    %p163 = scmp.eq.s32.totalorder %s15, 1
    %p164 = por %p162, %p163
    %p165 = scmp.ne.s32.totalorder %s154, %s155
    %p166 = scmp.eq.s32.totalorder %s15, 0
    %p167 = por %p165, %p166
    %p168 = scmp.ne.s32.totalorder %s154, %s155
    %p169 = scmp.eq.s32.totalorder %s16, 1
    %p170 = por %p168, %p169
    %p172 = scmp.ne.s32.totalorder %s155, %s171
    %p173 = scmp.eq.s32.totalorder %s16, 0
    %p174 = por %p172, %p173
    %p175 = scmp.le.s32.totalorder 1, %s10
    %p176 = scmp.lt.s32.totalorder %s10, 3
    %p177 = pnand %p175, %p176
    %p178 = pneg %p177
    // Predicated region
    $region9: #{block_forward.11} parent=5 // pred_check
      _
    $region10: #{block_forward.11} parent=5 // pred_check_branch
      %180 = sbr.rel (%p177) target = $region12
    $region11: #{block_forward.11} parent=5 // pred_region
      %s181 = ssub.s32 %s10, 1
      // Predicated region
      $region13: #{block_forward.11} parent=11 // pred_check
        %p182 = pneg %p85
      $region14: #{block_forward.11} parent=11 // pred_check_branch
        %184 = sbr.rel (%p182) target = $region16
      $region15: #{block_forward.11} parent=11 // pred_region
        %s185 = smul.u32 4, %s22
        %p186 = scmp.lt.s32.totalorder %s185, 3
        %s187 = scalar_select %p186, %s185, 3
        %p188 = scmp.lt.s32.totalorder %s21, 0
        %s189 = scalar_select %p188, %s21, 0
        %s190 = sadd.s32 %s189, %s187
        %s191 = smul.addr %s190, 4
        %s192 = scalar_lea.vmem %s1, %s191
        %s193 = smul.u32 4, %s22
      $region16: #{block_forward.11} parent=11 // pred_fallthru
        _
      // Predicated region
      $region17: #{block_forward.11} parent=11 // pred_check
        %p194 = pneg %p111
      $region18: #{block_forward.11} parent=11 // pred_check_branch
        %196 = sbr.rel (%p194) target = $region20
      $region19: #{block_forward.11} parent=11 // pred_region
        %p197 = scmp.lt.s32.totalorder %s21, 0
        %s198 = scalar_select %p197, %s21, 0
        %s199 = scalar_lea.vmem %s2, %s198
      $region20: #{block_forward.11} parent=11 // pred_fallthru
        _
    $region12: #{block_forward.11} parent=5 // pred_fallthru
      _
    %p200 = scmp.lt.s32.totalorder %s10, 2
    // Predicated region
    $region21: #{block_forward.11} parent=5 // pred_check
      %p201 = pneg %p200
    $region22: #{block_forward.11} parent=5 // pred_check_branch
      %203 = sbr.rel (%p201) target = $region24
    $region23: #{block_forward.11} parent=5 // pred_region
      // Predicated region
      $region25: #{block_forward.11} parent=23 // pred_check
        %p204 = pneg %p51
      $region26: #{block_forward.11} parent=23 // pred_check_branch
        %206 = sbr.rel (%p204) target = $region28
      $region27: #{block_forward.11} parent=23 // pred_region
        %s207 = smul.u32 32, %s17
        %p208 = scmp.lt.s32.totalorder %s207, 63
        %s209 = scalar_select %p208, %s207, 63
        %p210 = scmp.lt.s32.totalorder %s19, 0
        %s211 = scalar_select %p210, %s19, 0
        %s212 = sadd.s32 %s211, %s209
        %s213 = smul.addr %s212, 8
        %s214 = scalar_lea.vmem %s0, %s213
        %s215 = smul.u32 32, %s17
      $region28: #{block_forward.11} parent=23 // pred_fallthru
        _
      // Predicated region
      $region29: #{block_forward.11} parent=23 // pred_check
        %p216 = pneg %p133
      $region30: #{block_forward.11} parent=23 // pred_check_branch
        %218 = sbr.rel (%p216) target = $region32
      $region31: #{block_forward.11} parent=23 // pred_region
        %s219 = smul.u32 32, %s17
        %p220 = scmp.lt.s32.totalorder %s219, 63
        %s221 = scalar_select %p220, %s219, 63
        %p222 = scmp.lt.s32.totalorder %s18, 0
        %s223 = scalar_select %p222, %s18, 0
        %s224 = sadd.s32 %s223, %s221
        %s225 = smul.addr %s224, 8
        %s226 = scalar_lea.vmem %s3, %s225
        %s227 = smul.u32 32, %s17
      $region32: #{block_forward.11} parent=23 // pred_fallthru
        _
    $region24: #{block_forward.11} parent=5 // pred_fallthru
      _
    %p228 = scmp.le.s32.totalorder 1, %s10
    %p229 = scmp.lt.s32.totalorder %s10, 3
    %p230 = pnand %p228, %p229
    %p231 = pneg %p230
    // Predicated region
    $region33: #{block_forward.11} parent=5 // pred_check
      _
    $region34: #{block_forward.11} parent=5 // pred_check_branch
      %233 = sbr.rel (%p230) target = $region36
    $region35: #{block_forward.11} parent=5 // pred_region
      %s234 = ssub.s32 %s10, 1
      %s235 = smul.u32 32, %s20
      %p236 = scmp.lt.s32.totalorder %s235, 63
      %s237 = scalar_select %p236, %s235, 63
      %p238 = scmp.lt.s32.totalorder %s22, 0
      %s239 = scalar_select %p238, %s22, 0
      %s240 = sadd.s32 %s239, %s237
      %s241 = smul.addr %s240, 8
      %s242 = scalar_lea.vmem %s0, %s241
      %p243 = pneg %p57
      %p244 = pneg %p54
      %s245 = smul.u32 4, %s22
      %p246 = scmp.lt.s32.totalorder %s245, 3
      %s247 = scalar_select %p246, %s245, 3
      %p248 = scmp.lt.s32.totalorder %s21, 0
      %s249 = scalar_select %p248, %s21, 0
      %s250 = sadd.s32 %s249, %s247
      %s251 = smul.addr %s250, 4
      %s252 = scalar_lea.vmem %s1, %s251
      %p253 = pneg %p85
      %p254 = pneg %p82
      %p255 = scmp.lt.s32.totalorder %s21, 0
      %s256 = scalar_select %p255, %s21, 0
      %s257 = scalar_lea.vmem %s2, %s256
      %p258 = pneg %p111
      %p259 = pneg %p108
      %s260 = smul.u32 32, %s20
      %p261 = scmp.lt.s32.totalorder %s260, 63
      %s262 = scalar_select %p261, %s260, 63
      %p263 = scmp.lt.s32.totalorder %s21, 0
      %s264 = scalar_select %p263, %s21, 0
      %s265 = sadd.s32 %s264, %s262
      %s266 = smul.addr %s265, 8
      %s267 = scalar_lea.vmem %s3, %s266
      %p268 = pneg %p139
      %p269 = pneg %p136
      %p270 = pneg %p167
      %p271 = pneg %p164
      %s272 = smul.u32 32, %s20
      %p273 = scmp.lt.s32.totalorder %s272, 63
      %s274 = scalar_select %p273, %s272, 63
      %p275 = scmp.lt.s32.totalorder %s21, 0
      %s276 = scalar_select %p275, %s21, 0
      %s277 = sadd.s32 %s276, %s274
      %s278 = smul.addr %s277, 8
      %s279 = scalar_lea.vmem %s4, %s278
      %s280 = smul.u32 32, %s20
      %p281 = scmp.lt.s32.totalorder %s280, 63
      %s282 = scalar_select %p281, %s280, 63
      %p283 = scmp.lt.s32.totalorder %s22, 0
      %s284 = scalar_select %p283, %s22, 0
      %s285 = sadd.s32 %s284, %s282
      %s286 = smul.addr %s285, 8
      %s287 = scalar_lea.vmem %s0, %s286
      %s288 = smul.u32 32, %s20
      %s289 = smul.u32 4, %s22
      %p290 = scmp.lt.s32.totalorder %s289, 3
      %s291 = scalar_select %p290, %s289, 3
      %p292 = scmp.lt.s32.totalorder %s21, 0
      %s293 = scalar_select %p292, %s21, 0
      %s294 = sadd.s32 %s293, %s291
      %s295 = smul.addr %s294, 4
      %s296 = scalar_lea.vmem %s1, %s295
      %s297 = smul.u32 4, %s22
      %p298 = scmp.lt.s32.totalorder %s21, 0
      %s299 = scalar_select %p298, %s21, 0
      %s300 = scalar_lea.vmem %s2, %s299
      %s301 = smul.u32 32, %s20
      %p302 = scmp.lt.s32.totalorder %s301, 63
      %s303 = scalar_select %p302, %s301, 63
      %p304 = scmp.lt.s32.totalorder %s21, 0
      %s305 = scalar_select %p304, %s21, 0
      %s306 = sadd.s32 %s305, %s303
      %s307 = smul.addr %s306, 8
      %s308 = scalar_lea.vmem %s3, %s307
      %s309 = smul.u32 32, %s20
      %s310 = smul.u32 32, %s20
      %p311 = scmp.lt.s32.totalorder %s310, 63
      %s312 = scalar_select %p311, %s310, 63
      %p313 = scmp.lt.s32.totalorder %s21, 0
      %s314 = scalar_select %p313, %s21, 0
      %s315 = sadd.s32 %s314, %s312
      %s316 = smul.addr %s315, 8
      %s317 = scalar_lea.vmem %s4, %s316
      %s318 = smul.u32 32, %s20
      %p320 = scmp.eq.s32.totalorder %s22, 0
      // Predicated region
      $region37: #{block_forward.11} parent=35 // pred_check
        %p321 = pneg %p320
      $region38: #{block_forward.11} parent=35 // pred_check_branch
        %323 = sbr.rel (%p321) target = $region40
      $region39: #{block_forward.11} parent=35 // pred_region
        %vm324 = vcmask 261120
        %325 = vst.msk [vmem:[#allocation2] sm:$0xff] %vm324, 0.0
        %326 = vst.msk [vmem:[#allocation2 + $0x8] sm:$0xff] %vm324, 0.0
        %327 = vst.msk [vmem:[#allocation2 + $0x10] sm:$0xff] %vm324, 0.0
        %328 = vst.msk [vmem:[#allocation2 + $0x18] sm:$0xff] %vm324, 0.0
        %329 = vst.msk [vmem:[#allocation2 + $0x20] sm:$0xff] %vm324, 0.0
        %330 = vst.msk [vmem:[#allocation2 + $0x28] sm:$0xff] %vm324, 0.0
        %331 = vst.msk [vmem:[#allocation2 + $0x30] sm:$0xff] %vm324, 0.0
        %332 = vst.msk [vmem:[#allocation2 + $0x38] sm:$0xff] %vm324, 0.0
        %333 = vst.msk [vmem:[#allocation2 + $0x40] sm:$0xff] %vm324, 0.0
        %334 = vst.msk [vmem:[#allocation2 + $0x48] sm:$0xff] %vm324, 0.0
        %335 = vst.msk [vmem:[#allocation2 + $0x50] sm:$0xff] %vm324, 0.0
        %336 = vst.msk [vmem:[#allocation2 + $0x58] sm:$0xff] %vm324, 0.0
        %337 = vst.msk [vmem:[#allocation2 + $0x60] sm:$0xff] %vm324, 0.0
        %338 = vst.msk [vmem:[#allocation2 + $0x68] sm:$0xff] %vm324, 0.0
        %339 = vst.msk [vmem:[#allocation2 + $0x70] sm:$0xff] %vm324, 0.0
        %340 = vst.msk [vmem:[#allocation2 + $0x78] sm:$0xff] %vm324, 0.0
        %341 = vst.msk [vmem:[#allocation2 + $0x80] sm:$0xff] %vm324, 0.0
        %342 = vst.msk [vmem:[#allocation2 + $0x88] sm:$0xff] %vm324, 0.0
        %343 = vst.msk [vmem:[#allocation2 + $0x90] sm:$0xff] %vm324, 0.0
        %344 = vst.msk [vmem:[#allocation2 + $0x98] sm:$0xff] %vm324, 0.0
        %345 = vst.msk [vmem:[#allocation2 + $0xa0] sm:$0xff] %vm324, 0.0
        %346 = vst.msk [vmem:[#allocation2 + $0xa8] sm:$0xff] %vm324, 0.0
        %347 = vst.msk [vmem:[#allocation2 + $0xb0] sm:$0xff] %vm324, 0.0
        %348 = vst.msk [vmem:[#allocation2 + $0xb8] sm:$0xff] %vm324, 0.0
        %349 = vst.msk [vmem:[#allocation2 + $0xc0] sm:$0xff] %vm324, 0.0
        %350 = vst.msk [vmem:[#allocation2 + $0xc8] sm:$0xff] %vm324, 0.0
        %351 = vst.msk [vmem:[#allocation2 + $0xd0] sm:$0xff] %vm324, 0.0
        %352 = vst.msk [vmem:[#allocation2 + $0xd8] sm:$0xff] %vm324, 0.0
        %353 = vst.msk [vmem:[#allocation2 + $0xe0] sm:$0xff] %vm324, 0.0
        %354 = vst.msk [vmem:[#allocation2 + $0xe8] sm:$0xff] %vm324, 0.0
        %355 = vst.msk [vmem:[#allocation2 + $0xf0] sm:$0xff] %vm324, 0.0
        %356 = vst.msk [vmem:[#allocation2 + $0xf8] sm:$0xff] %vm324, 0.0
      $region40: #{block_forward.11} parent=35 // pred_fallthru
        _
      %v357 = vld [vmem:[#allocation2] sm:$0xff]
      %v358 = vld [vmem:[#allocation2 + $0x8] sm:$0xff]
      %v359 = vld [vmem:[#allocation2 + $0x10] sm:$0xff]
      %v360 = vld [vmem:[#allocation2 + $0x18] sm:$0xff]
      %v361 = vld [vmem:[#allocation2 + $0x20] sm:$0xff]
      %v362 = vld [vmem:[#allocation2 + $0x28] sm:$0xff]
      %v363 = vld [vmem:[#allocation2 + $0x30] sm:$0xff]
      %v364 = vld [vmem:[#allocation2 + $0x38] sm:$0xff]
      %v365 = vld [vmem:[#allocation2 + $0x40] sm:$0xff]
      %v366 = vld [vmem:[#allocation2 + $0x48] sm:$0xff]
      %v367 = vld [vmem:[#allocation2 + $0x50] sm:$0xff]
      %v368 = vld [vmem:[#allocation2 + $0x58] sm:$0xff]
      %v369 = vld [vmem:[#allocation2 + $0x60] sm:$0xff]
      %v370 = vld [vmem:[#allocation2 + $0x68] sm:$0xff]
      %v371 = vld [vmem:[#allocation2 + $0x70] sm:$0xff]
      %v372 = vld [vmem:[#allocation2 + $0x78] sm:$0xff]
      %v373 = vld [vmem:[#allocation2 + $0x80] sm:$0xff]
      %v374 = vld [vmem:[#allocation2 + $0x88] sm:$0xff]
      %v375 = vld [vmem:[#allocation2 + $0x90] sm:$0xff]
      %v376 = vld [vmem:[#allocation2 + $0x98] sm:$0xff]
      %v377 = vld [vmem:[#allocation2 + $0xa0] sm:$0xff]
      %v378 = vld [vmem:[#allocation2 + $0xa8] sm:$0xff]
      %v379 = vld [vmem:[#allocation2 + $0xb0] sm:$0xff]
      %v380 = vld [vmem:[#allocation2 + $0xb8] sm:$0xff]
      %v381 = vld [vmem:[#allocation2 + $0xc0] sm:$0xff]
      %v382 = vld [vmem:[#allocation2 + $0xc8] sm:$0xff]
      %v383 = vld [vmem:[#allocation2 + $0xd0] sm:$0xff]
      %v384 = vld [vmem:[#allocation2 + $0xd8] sm:$0xff]
      %v385 = vld [vmem:[#allocation2 + $0xe0] sm:$0xff]
      %v386 = vld [vmem:[#allocation2 + $0xe8] sm:$0xff]
      %v387 = vld [vmem:[#allocation2 + $0xf0] sm:$0xff]
      %v388 = vld [vmem:[#allocation2 + $0xf8] sm:$0xff]
      %v389 = vld [vmem:[%s287] sm:$0xff]
      %v390 = vld [vmem:[%s287 + $0x8] sm:$0xff]
      %v391 = vld [vmem:[%s287 + $0x10] sm:$0xff]
      %v392 = vld [vmem:[%s287 + $0x18] sm:$0xff]
      %v393 = vld [vmem:[%s287 + $0x20] sm:$0xff]
      %v394 = vld [vmem:[%s287 + $0x28] sm:$0xff]
      %v395 = vld [vmem:[%s287 + $0x30] sm:$0xff]
      %v396 = vld [vmem:[%s287 + $0x38] sm:$0xff]
      %v397 = vld [vmem:[%s287 + $0x40] sm:$0xff]
      %v398 = vld [vmem:[%s287 + $0x48] sm:$0xff]
      %v399 = vld [vmem:[%s287 + $0x50] sm:$0xff]
      %v400 = vld [vmem:[%s287 + $0x58] sm:$0xff]
      %v401 = vld [vmem:[%s287 + $0x60] sm:$0xff]
      %v402 = vld [vmem:[%s287 + $0x68] sm:$0xff]
      %v403 = vld [vmem:[%s287 + $0x70] sm:$0xff]
      %v404 = vld [vmem:[%s287 + $0x78] sm:$0xff]
      %v405 = vld [vmem:[%s287 + $0x80] sm:$0xff]
      %v406 = vld [vmem:[%s287 + $0x88] sm:$0xff]
      %v407 = vld [vmem:[%s287 + $0x90] sm:$0xff]
      %v408 = vld [vmem:[%s287 + $0x98] sm:$0xff]
      %v409 = vld [vmem:[%s287 + $0xa0] sm:$0xff]
      %v410 = vld [vmem:[%s287 + $0xa8] sm:$0xff]
      %v411 = vld [vmem:[%s287 + $0xb0] sm:$0xff]
      %v412 = vld [vmem:[%s287 + $0xb8] sm:$0xff]
      %v413 = vld [vmem:[%s287 + $0xc0] sm:$0xff]
      %v414 = vld [vmem:[%s287 + $0xc8] sm:$0xff]
      %v415 = vld [vmem:[%s287 + $0xd0] sm:$0xff]
      %v416 = vld [vmem:[%s287 + $0xd8] sm:$0xff]
      %v417 = vld [vmem:[%s287 + $0xe0] sm:$0xff]
      %v418 = vld [vmem:[%s287 + $0xe8] sm:$0xff]
      %v419 = vld [vmem:[%s287 + $0xf0] sm:$0xff]
      %v420 = vld [vmem:[%s287 + $0xf8] sm:$0xff]
      %v421 = vpack.c.bf16 %v390, %v389
      %v422 = vpack.c.bf16 %v392, %v391
      %v423 = vpack.c.bf16 %v394, %v393
      %v424 = vpack.c.bf16 %v396, %v395
      %v425 = vpack.c.bf16 %v398, %v397
      %v426 = vpack.c.bf16 %v400, %v399
      %v427 = vpack.c.bf16 %v402, %v401
      %v428 = vpack.c.bf16 %v404, %v403
      %v429 = vpack.c.bf16 %v406, %v405
      %v430 = vpack.c.bf16 %v408, %v407
      %v431 = vpack.c.bf16 %v410, %v409
      %v432 = vpack.c.bf16 %v412, %v411
      %v433 = vpack.c.bf16 %v414, %v413
      %v434 = vpack.c.bf16 %v416, %v415
      %v435 = vpack.c.bf16 %v418, %v417
      %v436 = vpack.c.bf16 %v420, %v419
      %v437 = vld [vmem:[%s296] sm:$0xf]
      %v438 = vld [vmem:[%s296 + $0x4] sm:$0xf]
      %v439 = vld [vmem:[%s296 + $0x8] sm:$0xf]
      %v440 = vld [vmem:[%s296 + $0xc] sm:$0xf]
      %v445 = vunpack.c.l.b16 %v437
      %v446 = vunpack.c.l.b16 %v438
      %v447 = vunpack.c.l.b16 %v439
      %v448 = vunpack.c.l.b16 %v440
      %v449 = vpack.c.b16 %v446, %v445
      %v450 = vpack.c.b16 %v448, %v447
      %vm453 = vcmask 261120
      %v455 = vsel %vm453, %v421, 0
      %v458 = vsel %vm453, %v422, 0
      %v461 = vsel %vm453, %v423, 0
      %v464 = vsel %vm453, %v424, 0
      %v467 = vsel %vm453, %v425, 0
      %v470 = vsel %vm453, %v426, 0
      %v473 = vsel %vm453, %v427, 0
      %v476 = vsel %vm453, %v428, 0
      %v479 = vsel %vm453, %v429, 0
      %v482 = vsel %vm453, %v430, 0
      %v485 = vsel %vm453, %v431, 0
      %v488 = vsel %vm453, %v432, 0
      %v491 = vsel %vm453, %v433, 0
      %v494 = vsel %vm453, %v434, 0
      %v497 = vsel %vm453, %v435, 0
      %v500 = vsel %vm453, %v436, 0
      %502 = vmatprep.subr.bf16.mxu0 0
      %503 = vmatpush1.bf16.msra.mxu0 %v449
      %504 = vmatprep.subr.bf16.mxu0 0
      %505 = vmatpush1.bf16.msra.mxu0 %v450
      %506 = vmatprep.subr.bf16.mxu0 0
      %507 = vmatpush1.bf16.msra.mxu0 0
      %508 = vmatprep.subr.bf16.mxu0 0
      %509 = vmatpush1.bf16.msra.mxu0 0
      %510 = vmatprep.subr.bf16.mxu0 0
      %511 = vmatpush1.bf16.msra.mxu0 0
      %512 = vmatprep.subr.bf16.mxu0 0
      %513 = vmatpush1.bf16.msra.mxu0 0
      %514 = vmatprep.subr.bf16.mxu0 0
      %515 = vmatpush1.bf16.msra.mxu0 0
      %516 = vmatprep.subr.bf16.mxu0 0
      %517 = vmatpush1.bf16.msra.mxu0 0
      %518 = vmatprep.subr.bf16.mxu0 0
      %519 = vmatpush1.bf16.msra.mxu0 0
      %520 = vmatprep.subr.bf16.mxu0 0
      %521 = vmatpush1.bf16.msra.mxu0 0
      %522 = vmatprep.subr.bf16.mxu0 0
      %523 = vmatpush1.bf16.msra.mxu0 0
      %524 = vmatprep.subr.bf16.mxu0 0
      %525 = vmatpush1.bf16.msra.mxu0 0
      %526 = vmatprep.subr.bf16.mxu0 0
      %527 = vmatpush1.bf16.msra.mxu0 0
      %528 = vmatprep.subr.bf16.mxu0 0
      %529 = vmatpush1.bf16.msra.mxu0 0
      %530 = vmatprep.subr.bf16.mxu0 0
      %531 = vmatpush1.bf16.msra.mxu0 0
      %532 = vmatprep.subr.bf16.mxu0 0
      %533 = vmatpush1.bf16.msra.mxu0 0
      %534 = vmatprep.mubr.bf16.mxu0 0
      %535 = vmatmul.mubr.bf16.gmra.mrb[0].mxu0 %v455
      %v536 = vpop.f32.mrb[0].mxu0
      %v537 = vadd.f32 0.0, %v536
      %v538 = vpop.f32.mrb[0].mxu0
      %v539 = vpop.f32.mrb[0].mxu0
      %v540 = vadd.f32 0.0, %v539
      %v541 = vpop.f32.mrb[0].mxu0
      %542 = vmatprep.mubr.bf16.mxu0 0
      %543 = vmatmul.mubr.bf16.gmra.mrb[0].mxu0 %v458
      %v544 = vpop.f32.mrb[0].mxu0
      %v545 = vadd.f32 0.0, %v544
      %v546 = vpop.f32.mrb[0].mxu0
      %v547 = vpop.f32.mrb[0].mxu0
      %v548 = vadd.f32 0.0, %v547
      %v549 = vpop.f32.mrb[0].mxu0
      %550 = vmatprep.mubr.bf16.mxu0 0
      %551 = vmatmul.mubr.bf16.gmra.mrb[0].mxu0 %v461
      %v552 = vpop.f32.mrb[0].mxu0
      %v553 = vadd.f32 0.0, %v552
      %v554 = vpop.f32.mrb[0].mxu0
      %v555 = vpop.f32.mrb[0].mxu0
      %v556 = vadd.f32 0.0, %v555
      %v557 = vpop.f32.mrb[0].mxu0
      %558 = vmatprep.mubr.bf16.mxu0 0
      %559 = vmatmul.mubr.bf16.gmra.mrb[0].mxu0 %v464
      %v560 = vpop.f32.mrb[0].mxu0
      %v561 = vadd.f32 0.0, %v560
      %v562 = vpop.f32.mrb[0].mxu0
      %v563 = vpop.f32.mrb[0].mxu0
      %v564 = vadd.f32 0.0, %v563
      %v565 = vpop.f32.mrb[0].mxu0
      %566 = vmatprep.mubr.bf16.mxu0 0
      %567 = vmatmul.mubr.bf16.gmra.mrb[0].mxu0 %v467
      %v568 = vpop.f32.mrb[0].mxu0
      %v569 = vadd.f32 0.0, %v568
      %v570 = vpop.f32.mrb[0].mxu0
      %v571 = vpop.f32.mrb[0].mxu0
      %v572 = vadd.f32 0.0, %v571
      %v573 = vpop.f32.mrb[0].mxu0
      %574 = vmatprep.mubr.bf16.mxu0 0
      %575 = vmatmul.mubr.bf16.gmra.mrb[0].mxu0 %v470
      %v576 = vpop.f32.mrb[0].mxu0
      %v577 = vadd.f32 0.0, %v576
      %v578 = vpop.f32.mrb[0].mxu0
      %v579 = vpop.f32.mrb[0].mxu0
      %v580 = vadd.f32 0.0, %v579
      %v581 = vpop.f32.mrb[0].mxu0
      %582 = vmatprep.mubr.bf16.mxu0 0
      %583 = vmatmul.mubr.bf16.gmra.mrb[0].mxu0 %v473
      %v584 = vpop.f32.mrb[0].mxu0
      %v585 = vadd.f32 0.0, %v584
      %v586 = vpop.f32.mrb[0].mxu0
      %v587 = vpop.f32.mrb[0].mxu0
      %v588 = vadd.f32 0.0, %v587
      %v589 = vpop.f32.mrb[0].mxu0
      %590 = vmatprep.mubr.bf16.mxu0 0
      %591 = vmatmul.mubr.bf16.gmra.mrb[0].mxu0 %v476
      %v592 = vpop.f32.mrb[0].mxu0
      %v593 = vadd.f32 0.0, %v592
      %v594 = vpop.f32.mrb[0].mxu0
      %v595 = vpop.f32.mrb[0].mxu0
      %v596 = vadd.f32 0.0, %v595
      %v597 = vpop.f32.mrb[0].mxu0
      %598 = vmatprep.mubr.bf16.mxu0 0
      %599 = vmatmul.mubr.bf16.gmra.mrb[0].mxu0 %v479
      %v600 = vpop.f32.mrb[0].mxu0
      %v601 = vadd.f32 0.0, %v600
      %v602 = vpop.f32.mrb[0].mxu0
      %v603 = vpop.f32.mrb[0].mxu0
      %v604 = vadd.f32 0.0, %v603
      %v605 = vpop.f32.mrb[0].mxu0
      %606 = vmatprep.mubr.bf16.mxu0 0
      %607 = vmatmul.mubr.bf16.gmra.mrb[0].mxu0 %v482
      %v608 = vpop.f32.mrb[0].mxu0
      %v609 = vadd.f32 0.0, %v608
      %v610 = vpop.f32.mrb[0].mxu0
      %v611 = vpop.f32.mrb[0].mxu0
      %v612 = vadd.f32 0.0, %v611
      %v613 = vpop.f32.mrb[0].mxu0
      %614 = vmatprep.mubr.bf16.mxu0 0
      %615 = vmatmul.mubr.bf16.gmra.mrb[0].mxu0 %v485
      %v616 = vpop.f32.mrb[0].mxu0
      %v617 = vadd.f32 0.0, %v616
      %v618 = vpop.f32.mrb[0].mxu0
      %v619 = vpop.f32.mrb[0].mxu0
      %v620 = vadd.f32 0.0, %v619
      %v621 = vpop.f32.mrb[0].mxu0
      %622 = vmatprep.mubr.bf16.mxu0 0
      %623 = vmatmul.mubr.bf16.gmra.mrb[0].mxu0 %v488
      %v624 = vpop.f32.mrb[0].mxu0
      %v625 = vadd.f32 0.0, %v624
      %v626 = vpop.f32.mrb[0].mxu0
      %v627 = vpop.f32.mrb[0].mxu0
      %v628 = vadd.f32 0.0, %v627
      %v629 = vpop.f32.mrb[0].mxu0
      %630 = vmatprep.mubr.bf16.mxu0 0
      %631 = vmatmul.mubr.bf16.gmra.mrb[0].mxu0 %v491
      %v632 = vpop.f32.mrb[0].mxu0
      %v633 = vadd.f32 0.0, %v632
      %v634 = vpop.f32.mrb[0].mxu0
      %v635 = vpop.f32.mrb[0].mxu0
      %v636 = vadd.f32 0.0, %v635
      %v637 = vpop.f32.mrb[0].mxu0
      %638 = vmatprep.mubr.bf16.mxu0 0
      %639 = vmatmul.mubr.bf16.gmra.mrb[0].mxu0 %v494
      %v640 = vpop.f32.mrb[0].mxu0
      %v641 = vadd.f32 0.0, %v640
      %v642 = vpop.f32.mrb[0].mxu0
      %v643 = vpop.f32.mrb[0].mxu0
      %v644 = vadd.f32 0.0, %v643
      %v645 = vpop.f32.mrb[0].mxu0
      %646 = vmatprep.mubr.bf16.mxu0 0
      %647 = vmatmul.mubr.bf16.gmra.mrb[0].mxu0 %v497
      %v648 = vpop.f32.mrb[0].mxu0
      %v649 = vadd.f32 0.0, %v648
      %v650 = vpop.f32.mrb[0].mxu0
      %v651 = vpop.f32.mrb[0].mxu0
      %v652 = vadd.f32 0.0, %v651
      %v653 = vpop.f32.mrb[0].mxu0
      %654 = vmatprep.mubr.bf16.mxu0 0
      %655 = vmatmul.mubr.bf16.gmra.mrb[0].mxu0 %v500
      %v656 = vpop.f32.mrb[0].mxu0
      %v657 = vadd.f32 0.0, %v656
      %v658 = vpop.f32.mrb[0].mxu0
      %v659 = vpop.f32.mrb[0].mxu0
      %v660 = vadd.f32 0.0, %v659
      %v661 = vpop.f32.mrb[0].mxu0
      %662 = vdwg.mxu0
      %v663 = vadd.f32 %v357, %v537
      %v664 = vadd.f32 %v358, %v540
      %v665 = vadd.f32 %v359, %v545
      %v666 = vadd.f32 %v360, %v548
      %v667 = vadd.f32 %v361, %v553
      %v668 = vadd.f32 %v362, %v556
      %v669 = vadd.f32 %v363, %v561
      %v670 = vadd.f32 %v364, %v564
      %v671 = vadd.f32 %v365, %v569
      %v672 = vadd.f32 %v366, %v572
      %v673 = vadd.f32 %v367, %v577
      %v674 = vadd.f32 %v368, %v580
      %v675 = vadd.f32 %v369, %v585
      %v676 = vadd.f32 %v370, %v588
      %v677 = vadd.f32 %v371, %v593
      %v678 = vadd.f32 %v372, %v596
      %v679 = vadd.f32 %v373, %v601
      %v680 = vadd.f32 %v374, %v604
      %v681 = vadd.f32 %v375, %v609
      %v682 = vadd.f32 %v376, %v612
      %v683 = vadd.f32 %v377, %v617
      %v684 = vadd.f32 %v378, %v620
      %v685 = vadd.f32 %v379, %v625
      %v686 = vadd.f32 %v380, %v628
      %v687 = vadd.f32 %v381, %v633
      %v688 = vadd.f32 %v382, %v636
      %v689 = vadd.f32 %v383, %v641
      %v690 = vadd.f32 %v384, %v644
      %v691 = vadd.f32 %v385, %v649
      %v692 = vadd.f32 %v386, %v652
      %v693 = vadd.f32 %v387, %v657
      %v694 = vadd.f32 %v388, %v660
      %695 = vst.msk [vmem:[#allocation2] sm:$0xff] %vm453, %v663
      %696 = vst.msk [vmem:[#allocation2 + $0x8] sm:$0xff] %vm453, %v664
      %697 = vst.msk [vmem:[#allocation2 + $0x10] sm:$0xff] %vm453, %v665
      %698 = vst.msk [vmem:[#allocation2 + $0x18] sm:$0xff] %vm453, %v666
      %699 = vst.msk [vmem:[#allocation2 + $0x20] sm:$0xff] %vm453, %v667
      %700 = vst.msk [vmem:[#allocation2 + $0x28] sm:$0xff] %vm453, %v668
      %701 = vst.msk [vmem:[#allocation2 + $0x30] sm:$0xff] %vm453, %v669
      %702 = vst.msk [vmem:[#allocation2 + $0x38] sm:$0xff] %vm453, %v670
      %703 = vst.msk [vmem:[#allocation2 + $0x40] sm:$0xff] %vm453, %v671
      %704 = vst.msk [vmem:[#allocation2 + $0x48] sm:$0xff] %vm453, %v672
      %705 = vst.msk [vmem:[#allocation2 + $0x50] sm:$0xff] %vm453, %v673
      %706 = vst.msk [vmem:[#allocation2 + $0x58] sm:$0xff] %vm453, %v674
      %707 = vst.msk [vmem:[#allocation2 + $0x60] sm:$0xff] %vm453, %v675
      %708 = vst.msk [vmem:[#allocation2 + $0x68] sm:$0xff] %vm453, %v676
      %709 = vst.msk [vmem:[#allocation2 + $0x70] sm:$0xff] %vm453, %v677
      %710 = vst.msk [vmem:[#allocation2 + $0x78] sm:$0xff] %vm453, %v678
      %711 = vst.msk [vmem:[#allocation2 + $0x80] sm:$0xff] %vm453, %v679
      %712 = vst.msk [vmem:[#allocation2 + $0x88] sm:$0xff] %vm453, %v680
      %713 = vst.msk [vmem:[#allocation2 + $0x90] sm:$0xff] %vm453, %v681
      %714 = vst.msk [vmem:[#allocation2 + $0x98] sm:$0xff] %vm453, %v682
      %715 = vst.msk [vmem:[#allocation2 + $0xa0] sm:$0xff] %vm453, %v683
      %716 = vst.msk [vmem:[#allocation2 + $0xa8] sm:$0xff] %vm453, %v684
      %717 = vst.msk [vmem:[#allocation2 + $0xb0] sm:$0xff] %vm453, %v685
      %718 = vst.msk [vmem:[#allocation2 + $0xb8] sm:$0xff] %vm453, %v686
      %719 = vst.msk [vmem:[#allocation2 + $0xc0] sm:$0xff] %vm453, %v687
      %720 = vst.msk [vmem:[#allocation2 + $0xc8] sm:$0xff] %vm453, %v688
      %721 = vst.msk [vmem:[#allocation2 + $0xd0] sm:$0xff] %vm453, %v689
      %722 = vst.msk [vmem:[#allocation2 + $0xd8] sm:$0xff] %vm453, %v690
      %723 = vst.msk [vmem:[#allocation2 + $0xe0] sm:$0xff] %vm453, %v691
      %724 = vst.msk [vmem:[#allocation2 + $0xe8] sm:$0xff] %vm453, %v692
      %725 = vst.msk [vmem:[#allocation2 + $0xf0] sm:$0xff] %vm453, %v693
      %726 = vst.msk [vmem:[#allocation2 + $0xf8] sm:$0xff] %vm453, %v694
      // Predicated region
      $region41: #{block_forward.11} parent=35 // pred_check
        %p727 = pneg %p320
      $region42: #{block_forward.11} parent=35 // pred_check_branch
        %729 = sbr.rel (%p727) target = $region44
      $region43: #{block_forward.11} parent=35 // pred_region
        %v730 = vld [vmem:[#allocation2] sm:$0xff]
        %v731 = vld [vmem:[#allocation2 + $0x8] sm:$0xff]
        %v732 = vld [vmem:[#allocation2 + $0x10] sm:$0xff]
        %v733 = vld [vmem:[#allocation2 + $0x18] sm:$0xff]
        %v734 = vld [vmem:[#allocation2 + $0x20] sm:$0xff]
        %v735 = vld [vmem:[#allocation2 + $0x28] sm:$0xff]
        %v736 = vld [vmem:[#allocation2 + $0x30] sm:$0xff]
        %v737 = vld [vmem:[#allocation2 + $0x38] sm:$0xff]
        %v738 = vld [vmem:[#allocation2 + $0x40] sm:$0xff]
        %v739 = vld [vmem:[#allocation2 + $0x48] sm:$0xff]
        %v740 = vld [vmem:[#allocation2 + $0x50] sm:$0xff]
        %v741 = vld [vmem:[#allocation2 + $0x58] sm:$0xff]
        %v742 = vld [vmem:[#allocation2 + $0x60] sm:$0xff]
        %v743 = vld [vmem:[#allocation2 + $0x68] sm:$0xff]
        %v744 = vld [vmem:[#allocation2 + $0x70] sm:$0xff]
        %v745 = vld [vmem:[#allocation2 + $0x78] sm:$0xff]
        %v746 = vld [vmem:[#allocation2 + $0x80] sm:$0xff]
        %v747 = vld [vmem:[#allocation2 + $0x88] sm:$0xff]
        %v748 = vld [vmem:[#allocation2 + $0x90] sm:$0xff]
        %v749 = vld [vmem:[#allocation2 + $0x98] sm:$0xff]
        %v750 = vld [vmem:[#allocation2 + $0xa0] sm:$0xff]
        %v751 = vld [vmem:[#allocation2 + $0xa8] sm:$0xff]
        %v752 = vld [vmem:[#allocation2 + $0xb0] sm:$0xff]
        %v753 = vld [vmem:[#allocation2 + $0xb8] sm:$0xff]
        %v754 = vld [vmem:[#allocation2 + $0xc0] sm:$0xff]
        %v755 = vld [vmem:[#allocation2 + $0xc8] sm:$0xff]
        %v756 = vld [vmem:[#allocation2 + $0xd0] sm:$0xff]
        %v757 = vld [vmem:[#allocation2 + $0xd8] sm:$0xff]
        %v758 = vld [vmem:[#allocation2 + $0xe0] sm:$0xff]
        %v759 = vld [vmem:[#allocation2 + $0xe8] sm:$0xff]
        %v760 = vld [vmem:[#allocation2 + $0xf0] sm:$0xff]
        %v761 = vld [vmem:[#allocation2 + $0xf8] sm:$0xff]
        %v762 = vld [vmem:[%s300] sm:$0x1]
        %v764 = vlaneseq
        %v765 = vshrl.u32 %v764, 7
        %v766 = vsub.s32 0, %v765
        %v767 = vrot.slane %v762, %v766
        %v769 = vadd.f32 %v730, %v767
        %v770 = vadd.f32 %v731, %v767
        %v771 = vadd.f32 %v732, %v767
        %v772 = vadd.f32 %v733, %v767
        %v773 = vadd.f32 %v734, %v767
        %v774 = vadd.f32 %v735, %v767
        %v775 = vadd.f32 %v736, %v767
        %v776 = vadd.f32 %v737, %v767
        %v777 = vadd.f32 %v738, %v767
        %v778 = vadd.f32 %v739, %v767
        %v779 = vadd.f32 %v740, %v767
        %v780 = vadd.f32 %v741, %v767
        %v781 = vadd.f32 %v742, %v767
        %v782 = vadd.f32 %v743, %v767
        %v783 = vadd.f32 %v744, %v767
        %v784 = vadd.f32 %v745, %v767
        %v785 = vadd.f32 %v746, %v767
        %v786 = vadd.f32 %v747, %v767
        %v787 = vadd.f32 %v748, %v767
        %v788 = vadd.f32 %v749, %v767
        %v789 = vadd.f32 %v750, %v767
        %v790 = vadd.f32 %v751, %v767
        %v791 = vadd.f32 %v752, %v767
        %v792 = vadd.f32 %v753, %v767
        %v793 = vadd.f32 %v754, %v767
        %v794 = vadd.f32 %v755, %v767
        %v795 = vadd.f32 %v756, %v767
        %v796 = vadd.f32 %v757, %v767
        %v797 = vadd.f32 %v758, %v767
        %v798 = vadd.f32 %v759, %v767
        %v799 = vadd.f32 %v760, %v767
        %v800 = vadd.f32 %v761, %v767
        %v801 = vld [vmem:[%s308] sm:$0xff]
        %v802 = vld [vmem:[%s308 + $0x8] sm:$0xff]
        %v803 = vld [vmem:[%s308 + $0x10] sm:$0xff]
        %v804 = vld [vmem:[%s308 + $0x18] sm:$0xff]
        %v805 = vld [vmem:[%s308 + $0x20] sm:$0xff]
        %v806 = vld [vmem:[%s308 + $0x28] sm:$0xff]
        %v807 = vld [vmem:[%s308 + $0x30] sm:$0xff]
        %v808 = vld [vmem:[%s308 + $0x38] sm:$0xff]
        %v809 = vld [vmem:[%s308 + $0x40] sm:$0xff]
        %v810 = vld [vmem:[%s308 + $0x48] sm:$0xff]
        %v811 = vld [vmem:[%s308 + $0x50] sm:$0xff]
        %v812 = vld [vmem:[%s308 + $0x58] sm:$0xff]
        %v813 = vld [vmem:[%s308 + $0x60] sm:$0xff]
        %v814 = vld [vmem:[%s308 + $0x68] sm:$0xff]
        %v815 = vld [vmem:[%s308 + $0x70] sm:$0xff]
        %v816 = vld [vmem:[%s308 + $0x78] sm:$0xff]
        %v817 = vld [vmem:[%s308 + $0x80] sm:$0xff]
        %v818 = vld [vmem:[%s308 + $0x88] sm:$0xff]
        %v819 = vld [vmem:[%s308 + $0x90] sm:$0xff]
        %v820 = vld [vmem:[%s308 + $0x98] sm:$0xff]
        %v821 = vld [vmem:[%s308 + $0xa0] sm:$0xff]
        %v822 = vld [vmem:[%s308 + $0xa8] sm:$0xff]
        %v823 = vld [vmem:[%s308 + $0xb0] sm:$0xff]
        %v824 = vld [vmem:[%s308 + $0xb8] sm:$0xff]
        %v825 = vld [vmem:[%s308 + $0xc0] sm:$0xff]
        %v826 = vld [vmem:[%s308 + $0xc8] sm:$0xff]
        %v827 = vld [vmem:[%s308 + $0xd0] sm:$0xff]
        %v828 = vld [vmem:[%s308 + $0xd8] sm:$0xff]
        %v829 = vld [vmem:[%s308 + $0xe0] sm:$0xff]
        %v830 = vld [vmem:[%s308 + $0xe8] sm:$0xff]
        %v831 = vld [vmem:[%s308 + $0xf0] sm:$0xff]
        %v832 = vld [vmem:[%s308 + $0xf8] sm:$0xff]
        %v833 = vadd.f32 %v769, %v801
        %v834 = vadd.f32 %v770, %v802
        %v835 = vadd.f32 %v771, %v803
        %v836 = vadd.f32 %v772, %v804
        %v837 = vadd.f32 %v773, %v805
        %v838 = vadd.f32 %v774, %v806
        %v839 = vadd.f32 %v775, %v807
        %v840 = vadd.f32 %v776, %v808
        %v841 = vadd.f32 %v777, %v809
        %v842 = vadd.f32 %v778, %v810
        %v843 = vadd.f32 %v779, %v811
        %v844 = vadd.f32 %v780, %v812
        %v845 = vadd.f32 %v781, %v813
        %v846 = vadd.f32 %v782, %v814
        %v847 = vadd.f32 %v783, %v815
        %v848 = vadd.f32 %v784, %v816
        %v849 = vadd.f32 %v785, %v817
        %v850 = vadd.f32 %v786, %v818
        %v851 = vadd.f32 %v787, %v819
        %v852 = vadd.f32 %v788, %v820
        %v853 = vadd.f32 %v789, %v821
        %v854 = vadd.f32 %v790, %v822
        %v855 = vadd.f32 %v791, %v823
        %v856 = vadd.f32 %v792, %v824
        %v857 = vadd.f32 %v793, %v825
        %v858 = vadd.f32 %v794, %v826
        %v859 = vadd.f32 %v795, %v827
        %v860 = vadd.f32 %v796, %v828
        %v861 = vadd.f32 %v797, %v829
        %v862 = vadd.f32 %v798, %v830
        %v863 = vadd.f32 %v799, %v831
        %v864 = vadd.f32 %v800, %v832
        %865 = vst.msk [vmem:[%s317] sm:$0xff] %vm453, %v833
        %866 = vst.msk [vmem:[%s317 + $0x8] sm:$0xff] %vm453, %v834
        %867 = vst.msk [vmem:[%s317 + $0x10] sm:$0xff] %vm453, %v835
        %868 = vst.msk [vmem:[%s317 + $0x18] sm:$0xff] %vm453, %v836
        %869 = vst.msk [vmem:[%s317 + $0x20] sm:$0xff] %vm453, %v837
        %870 = vst.msk [vmem:[%s317 + $0x28] sm:$0xff] %vm453, %v838
        %871 = vst.msk [vmem:[%s317 + $0x30] sm:$0xff] %vm453, %v839
        %872 = vst.msk [vmem:[%s317 + $0x38] sm:$0xff] %vm453, %v840
        %873 = vst.msk [vmem:[%s317 + $0x40] sm:$0xff] %vm453, %v841
        %874 = vst.msk [vmem:[%s317 + $0x48] sm:$0xff] %vm453, %v842
        %875 = vst.msk [vmem:[%s317 + $0x50] sm:$0xff] %vm453, %v843
        %876 = vst.msk [vmem:[%s317 + $0x58] sm:$0xff] %vm453, %v844
        %877 = vst.msk [vmem:[%s317 + $0x60] sm:$0xff] %vm453, %v845
        %878 = vst.msk [vmem:[%s317 + $0x68] sm:$0xff] %vm453, %v846
        %879 = vst.msk [vmem:[%s317 + $0x70] sm:$0xff] %vm453, %v847
        %880 = vst.msk [vmem:[%s317 + $0x78] sm:$0xff] %vm453, %v848
        %881 = vst.msk [vmem:[%s317 + $0x80] sm:$0xff] %vm453, %v849
        %882 = vst.msk [vmem:[%s317 + $0x88] sm:$0xff] %vm453, %v850
        %883 = vst.msk [vmem:[%s317 + $0x90] sm:$0xff] %vm453, %v851
        %884 = vst.msk [vmem:[%s317 + $0x98] sm:$0xff] %vm453, %v852
        %885 = vst.msk [vmem:[%s317 + $0xa0] sm:$0xff] %vm453, %v853
        %886 = vst.msk [vmem:[%s317 + $0xa8] sm:$0xff] %vm453, %v854
        %887 = vst.msk [vmem:[%s317 + $0xb0] sm:$0xff] %vm453, %v855
        %888 = vst.msk [vmem:[%s317 + $0xb8] sm:$0xff] %vm453, %v856
        %889 = vst.msk [vmem:[%s317 + $0xc0] sm:$0xff] %vm453, %v857
        %890 = vst.msk [vmem:[%s317 + $0xc8] sm:$0xff] %vm453, %v858
        %891 = vst.msk [vmem:[%s317 + $0xd0] sm:$0xff] %vm453, %v859
        %892 = vst.msk [vmem:[%s317 + $0xd8] sm:$0xff] %vm453, %v860
        %893 = vst.msk [vmem:[%s317 + $0xe0] sm:$0xff] %vm453, %v861
        %894 = vst.msk [vmem:[%s317 + $0xe8] sm:$0xff] %vm453, %v862
        %895 = vst.msk [vmem:[%s317 + $0xf0] sm:$0xff] %vm453, %v863
        %896 = vst.msk [vmem:[%s317 + $0xf8] sm:$0xff] %vm453, %v864
      $region44: #{block_forward.11} parent=35 // pred_fallthru
        _
      %s897 = smul.u32 32, %s20
      %p898 = scmp.lt.s32.totalorder %s897, 63
      %s899 = scalar_select %p898, %s897, 63
      %p900 = scmp.lt.s32.totalorder %s21, 0
      %s901 = scalar_select %p900, %s21, 0
      %s902 = sadd.s32 %s901, %s899
      %s903 = smul.addr %s902, 8
      %s904 = scalar_lea.vmem %s4, %s903
      // Predicated region
      $region45: #{block_forward.11} parent=35 // pred_check
        %p905 = pneg %p164
      $region46: #{block_forward.11} parent=35 // pred_check_branch
        %907 = sbr.rel (%p905) target = $region48
      $region47: #{block_forward.11} parent=35 // pred_region
        %s908 = smul.u32 32, %s20
      $region48: #{block_forward.11} parent=35 // pred_fallthru
        _
    $region36: #{block_forward.11} parent=5 // pred_fallthru
      _
    %p909 = scmp.le.s32.totalorder 2, %s10
    // Predicated region
    $region49: #{block_forward.11} parent=5 // pred_check
      %p910 = pneg %p909
    $region50: #{block_forward.11} parent=5 // pred_check_branch
      %912 = sbr.rel (%p910) target = $region52
    $region51: #{block_forward.11} parent=5 // pred_region
      %s913 = ssub.s32 %s10, 2
      // Predicated region
      $region53: #{block_forward.11} parent=51 // pred_check
        %p914 = pneg %p170
      $region54: #{block_forward.11} parent=51 // pred_check_branch
        %916 = sbr.rel (%p914) target = $region56
      $region55: #{block_forward.11} parent=51 // pred_region
        %s917 = smul.u32 32, %s23
        %p918 = scmp.lt.s32.totalorder %s917, 63
        %s919 = scalar_select %p918, %s917, 63
        %p920 = scmp.lt.s32.totalorder %s24, 0
        %s921 = scalar_select %p920, %s24, 0
        %s922 = sadd.s32 %s921, %s919
        %s923 = smul.addr %s922, 8
        %s924 = scalar_lea.vmem %s4, %s923
      $region56: #{block_forward.11} parent=51 // pred_fallthru
        _
    $region52: #{block_forward.11} parent=5 // pred_fallthru
      _
  $region6: #{block_forward.11} parent=0 // loop_footer
    %s14 = sadd.s32 1, %s10
  $region7: #{block_forward.11} parent=0 // loop_footer_branch
    %9 = sbr.rel target = $region3
  $region8: #{block_forward.11} parent=0 // loop_exit
    _

// kernel: block_forward.12
$region0: #{block_forward.12}
  #allocation0 [shape = 'u32[]', space=smem, size = 0x4, offset = 0x4, fixed_abs, tag = 'smem constant byte address 0x4 - core index']
  #allocation1 [shape = 'u32[144,128]{1,0:T(1,128)}', space=vmem, size = 0x12000, scoped, tag = 'internal scratch']
  %s0 = inlined_call_operand.vmem [shape: f32[512,32], index: 0, kind: input, shape index: {}]
  %s1 = inlined_call_operand.vmem [shape: f32[1,32], index: 1, kind: input, shape index: {}]
  %s2 = inlined_call_operand.vmem [shape: f32[1,32], index: 2, kind: input, shape index: {}]
  %s3 = inlined_call_operand.vmem [shape: bf16[32,128], index: 3, kind: input, shape index: {}]
  %s4 = inlined_call_operand.vmem [shape: f32[1,128], index: 4, kind: input, shape index: {}]
  %s5 = inlined_call_operand.vmem [shape: f32[512,128], index: 5, kind: output, shape index: {}]
  %s6 = sld [smem:[#allocation0]]
  $region53: #{block_forward.12} parent=0
    _
  %s8 = ssub.s32 1, %s6
  %s9 = scalar_select 0, %s8, %s6
  loop: start=0, step=1, limit=4
  $region2: #{block_forward.12} parent=0 // loop_pre_header
    _
  $region3: #{block_forward.12} parent=0 // loop_header
    %s11 = sphi 0, %s15
    %p12 = scmp.ge.s32.totalorder %s11, 4
    %s18 = sphi 0, %s30
    %s19 = sphi 0, %s26
    %s20 = sphi 0, %s18
    %s21 = sphi 0, %s19
    %s22 = sphi 0, %s20
    %s23 = sphi 0, %s21
    %s33 = sphi 0, %s35
    %s36 = sphi 0, %s33
    %s37 = sphi 0, %s36
    %s53 = sphi 0, %s37
    %s57 = sphi 0, %s57
    %s59 = sphi 0, %s57
    %s60 = sphi 0, %s59
    %s74 = sphi 0, %s60
    %s78 = sphi 0, %s78
    %s80 = sphi 0, %s78
    %s81 = sphi 0, %s80
    %s95 = sphi 0, %s81
    %s101 = sphi 0, %s103
    %s104 = sphi 0, %s101
    %s105 = sphi 0, %s104
    %s121 = sphi 0, %s105
    %s127 = sphi 0, %s129
    %s130 = sphi 0, %s127
    %s131 = sphi 0, %s130
    %s147 = sphi 0, %s131
    %s155 = sphi 0, %s157
    %s158 = sphi 0, %s155
    %s159 = sphi 0, %s158
    %s175 = sphi 0, %s159
  $region4: #{block_forward.12} parent=0 // loop_header_branch
    %14 = sbr.rel (%p12) target = $region8
  $region5: #{block_forward.12} parent=0 // loop_body
    %s16 = ssub.s32 %s11, 1
    %s17 = ssub.s32 %s11, 2
    %s24 = sadd.s32 1, %s19
    %p25 = scmp.ge.s32.totalorder %s24, 1
    %s26 = scalar_select %p25, 0, %s24
    %s27 = sadd.s32 1, %s18
    %s28 = scalar_select %p25, %s27, %s18
    %p29 = scmp.ge.s32.totalorder %s28, 2
    %s30 = scalar_select %p29, 0, %s28
    %s31 = ssub.s32 %s18, %s30
    %p32 = scmp.eq.s32.totalorder %s31, 0
    %s34 = sadd.s32 %s33, 1
    %s35 = scalar_select %p32, %s33, %s34
    %p38 = pneg %p32
    %p39 = scmp.eq.s32.totalorder %s11, 1
    %p40 = por %p38, %p39
    %p41 = scmp.ne.s32.totalorder %s33, %s36
    %p42 = scmp.eq.s32.totalorder %s11, 0
    %p43 = por %p41, %p42
    %p44 = scmp.ne.s32.totalorder %s33, %s36
    %p45 = scmp.eq.s32.totalorder %s16, 1
    %p46 = por %p44, %p45
    %p47 = scmp.ne.s32.totalorder %s36, %s37
    %p48 = scmp.eq.s32.totalorder %s16, 0
    %p49 = por %p47, %p48
    %p50 = scmp.ne.s32.totalorder %s36, %s37
    %p51 = scmp.eq.s32.totalorder %s17, 1
    %p52 = por %p50, %p51
    %p54 = scmp.ne.s32.totalorder %s37, %s53
    %p55 = scmp.eq.s32.totalorder %s17, 0
    %p56 = por %p54, %p55
    %s58 = sadd.s32 %s57, 1
    %p61 = scmp.eq.s32.totalorder %s11, 1
    %p62 = scmp.ne.s32.totalorder %s57, %s59
    %p63 = scmp.eq.s32.totalorder %s11, 0
    %p64 = por %p62, %p63
    %p65 = scmp.ne.s32.totalorder %s57, %s59
    %p66 = scmp.eq.s32.totalorder %s16, 1
    %p67 = por %p65, %p66
    %p68 = scmp.ne.s32.totalorder %s59, %s60
    %p69 = scmp.eq.s32.totalorder %s16, 0
    %p70 = por %p68, %p69
    %p71 = scmp.ne.s32.totalorder %s59, %s60
    %p72 = scmp.eq.s32.totalorder %s17, 1
    %p73 = por %p71, %p72
    %p75 = scmp.ne.s32.totalorder %s60, %s74
    %p76 = scmp.eq.s32.totalorder %s17, 0
    %p77 = por %p75, %p76
    %s79 = sadd.s32 %s78, 1
    %p82 = scmp.eq.s32.totalorder %s11, 1
    %p83 = scmp.ne.s32.totalorder %s78, %s80
    %p84 = scmp.eq.s32.totalorder %s11, 0
    %p85 = por %p83, %p84
    %p86 = scmp.ne.s32.totalorder %s78, %s80
    %p87 = scmp.eq.s32.totalorder %s16, 1
    %p88 = por %p86, %p87
    %p89 = scmp.ne.s32.totalorder %s80, %s81
    %p90 = scmp.eq.s32.totalorder %s16, 0
    %p91 = por %p89, %p90
    %p92 = scmp.ne.s32.totalorder %s80, %s81
    %p93 = scmp.eq.s32.totalorder %s17, 1
    %p94 = por %p92, %p93
    %p96 = scmp.ne.s32.totalorder %s81, %s95
    %p97 = scmp.eq.s32.totalorder %s17, 0
    %p98 = por %p96, %p97
    %s99 = ssub.s32 %s19, %s26
    %p100 = scmp.eq.s32.totalorder %s99, 0
    %s102 = sadd.s32 %s101, 1
    %s103 = scalar_select %p100, %s101, %s102
    %p106 = pneg %p100
    %p107 = scmp.eq.s32.totalorder %s11, 1
    %p108 = por %p106, %p107
    %p109 = scmp.ne.s32.totalorder %s101, %s104
    %p110 = scmp.eq.s32.totalorder %s11, 0
    %p111 = por %p109, %p110
    %p112 = scmp.ne.s32.totalorder %s101, %s104
    %p113 = scmp.eq.s32.totalorder %s16, 1
    %p114 = por %p112, %p113
    %p115 = scmp.ne.s32.totalorder %s104, %s105
    %p116 = scmp.eq.s32.totalorder %s16, 0
    %p117 = por %p115, %p116
    %p118 = scmp.ne.s32.totalorder %s104, %s105
    %p119 = scmp.eq.s32.totalorder %s17, 1
    %p120 = por %p118, %p119
    %p122 = scmp.ne.s32.totalorder %s105, %s121
    %p123 = scmp.eq.s32.totalorder %s17, 0
    %p124 = por %p122, %p123
    %s125 = ssub.s32 %s19, %s26
    %p126 = scmp.eq.s32.totalorder %s125, 0
    %s128 = sadd.s32 %s127, 1
    %s129 = scalar_select %p126, %s127, %s128
    %p132 = pneg %p126
    %p133 = scmp.eq.s32.totalorder %s11, 1
    %p134 = por %p132, %p133
    %p135 = scmp.ne.s32.totalorder %s127, %s130
    %p136 = scmp.eq.s32.totalorder %s11, 0
    %p137 = por %p135, %p136
    %p138 = scmp.ne.s32.totalorder %s127, %s130
    %p139 = scmp.eq.s32.totalorder %s16, 1
    %p140 = por %p138, %p139
    %p141 = scmp.ne.s32.totalorder %s130, %s131
    %p142 = scmp.eq.s32.totalorder %s16, 0
    %p143 = por %p141, %p142
    %p144 = scmp.ne.s32.totalorder %s130, %s131
    %p145 = scmp.eq.s32.totalorder %s17, 1
    %p146 = por %p144, %p145
    %p148 = scmp.ne.s32.totalorder %s131, %s147
    %p149 = scmp.eq.s32.totalorder %s17, 0
    %p150 = por %p148, %p149
    %s151 = ssub.s32 %s18, %s30
    %s152 = ssub.s32 %s19, %s26
    %s153 = sor.u32 %s151, %s152
    %p154 = scmp.eq.s32.totalorder %s153, 0
    %s156 = sadd.s32 %s155, 1
    %s157 = scalar_select %p154, %s155, %s156
    %p160 = pneg %p154
    %p161 = scmp.eq.s32.totalorder %s11, 1
    %p162 = por %p160, %p161
    %p163 = scmp.ne.s32.totalorder %s155, %s158
    %p164 = scmp.eq.s32.totalorder %s11, 0
    %p165 = por %p163, %p164
    %p166 = scmp.ne.s32.totalorder %s155, %s158
    %p167 = scmp.eq.s32.totalorder %s16, 1
    %p168 = por %p166, %p167
    %p169 = scmp.ne.s32.totalorder %s158, %s159
    %p170 = scmp.eq.s32.totalorder %s16, 0
    %p171 = por %p169, %p170
    %p172 = scmp.ne.s32.totalorder %s158, %s159
    %p173 = scmp.eq.s32.totalorder %s17, 1
    %p174 = por %p172, %p173
    %p176 = scmp.ne.s32.totalorder %s159, %s175
    %p177 = scmp.eq.s32.totalorder %s17, 0
    %p178 = por %p176, %p177
    %p179 = scmp.le.s32.totalorder 1, %s11
    %p180 = scmp.lt.s32.totalorder %s11, 3
    %p181 = pnand %p179, %p180
    %p182 = pneg %p181
    // Predicated region
    $region9: #{block_forward.12} parent=5 // pred_check
      _
    $region10: #{block_forward.12} parent=5 // pred_check_branch
      %184 = sbr.rel (%p181) target = $region12
    $region11: #{block_forward.12} parent=5 // pred_region
      %s185 = ssub.s32 %s11, 1
      // Predicated region
      $region13: #{block_forward.12} parent=11 // pred_check
        %p186 = pneg %p70
      $region14: #{block_forward.12} parent=11 // pred_check_branch
        %188 = sbr.rel (%p186) target = $region16
      $region15: #{block_forward.12} parent=11 // pred_region
        _
      $region16: #{block_forward.12} parent=11 // pred_fallthru
        _
      // Predicated region
      $region17: #{block_forward.12} parent=11 // pred_check
        %p189 = pneg %p91
      $region18: #{block_forward.12} parent=11 // pred_check_branch
        %191 = sbr.rel (%p189) target = $region20
      $region19: #{block_forward.12} parent=11 // pred_region
        _
      $region20: #{block_forward.12} parent=11 // pred_fallthru
        _
      // Predicated region
      $region21: #{block_forward.12} parent=11 // pred_check
        %p192 = pneg %p117
      $region22: #{block_forward.12} parent=11 // pred_check_branch
        %194 = sbr.rel (%p192) target = $region24
      $region23: #{block_forward.12} parent=11 // pred_region
        %p195 = scmp.lt.s32.totalorder %s21, 0
        %s196 = scalar_select %p195, %s21, 0
        %s197 = smul.addr %s196, 4
        %s198 = scalar_lea.vmem %s3, %s197
      $region24: #{block_forward.12} parent=11 // pred_fallthru
        _
      // Predicated region
      $region25: #{block_forward.12} parent=11 // pred_check
        %p199 = pneg %p143
      $region26: #{block_forward.12} parent=11 // pred_check_branch
        %201 = sbr.rel (%p199) target = $region28
      $region27: #{block_forward.12} parent=11 // pred_region
        %p202 = scmp.lt.s32.totalorder %s21, 0
        %s203 = scalar_select %p202, %s21, 0
        %s204 = scalar_lea.vmem %s4, %s203
      $region28: #{block_forward.12} parent=11 // pred_fallthru
        _
    $region12: #{block_forward.12} parent=5 // pred_fallthru
      _
    %p205 = scmp.lt.s32.totalorder %s11, 2
    // Predicated region
    $region29: #{block_forward.12} parent=5 // pred_check
      %p206 = pneg %p205
    $region30: #{block_forward.12} parent=5 // pred_check_branch
      %208 = sbr.rel (%p206) target = $region32
    $region31: #{block_forward.12} parent=5 // pred_region
      // Predicated region
      $region33: #{block_forward.12} parent=31 // pred_check
        %p209 = pneg %p43
      $region34: #{block_forward.12} parent=31 // pred_check_branch
        %211 = sbr.rel (%p209) target = $region36
      $region35: #{block_forward.12} parent=31 // pred_region
        %s212 = smul.u32 32, %s18
        %p213 = scmp.lt.s32.totalorder %s212, 63
        %s214 = scalar_select %p213, %s212, 63
        %s215 = smul.addr %s214, 8
        %s216 = scalar_lea.vmem %s0, %s215
        %s217 = smul.u32 32, %s18
      $region36: #{block_forward.12} parent=31 // pred_fallthru
        _
    $region32: #{block_forward.12} parent=5 // pred_fallthru
      _
    %p218 = scmp.le.s32.totalorder 1, %s11
    %p219 = scmp.lt.s32.totalorder %s11, 3
    %p220 = pnand %p218, %p219
    %p221 = pneg %p220
    // Predicated region
    $region37: #{block_forward.12} parent=5 // pred_check
      _
    $region38: #{block_forward.12} parent=5 // pred_check_branch
      %223 = sbr.rel (%p220) target = $region40
    $region39: #{block_forward.12} parent=5 // pred_region
      %s224 = ssub.s32 %s11, 1
      %s225 = smul.u32 32, %s20
      %p226 = scmp.lt.s32.totalorder %s225, 63
      %s227 = scalar_select %p226, %s225, 63
      %s228 = smul.addr %s227, 8
      %s229 = scalar_lea.vmem %s0, %s228
      %p230 = pneg %p49
      %p231 = pneg %p46
      %p232 = pneg %p70
      %p233 = pneg %p67
      %p234 = pneg %p91
      %p235 = pneg %p88
      %p236 = scmp.lt.s32.totalorder %s21, 0
      %s237 = scalar_select %p236, %s21, 0
      %s238 = smul.addr %s237, 4
      %s239 = scalar_lea.vmem %s3, %s238
      %p240 = pneg %p117
      %p241 = pneg %p114
      %p242 = scmp.lt.s32.totalorder %s21, 0
      %s243 = scalar_select %p242, %s21, 0
      %s244 = scalar_lea.vmem %s4, %s243
      %p245 = pneg %p143
      %p246 = pneg %p140
      %p247 = pneg %p171
      %p248 = pneg %p168
      %s249 = smul.u32 32, %s20
      %p250 = scmp.lt.s32.totalorder %s249, 63
      %s251 = scalar_select %p250, %s249, 63
      %p252 = scmp.lt.s32.totalorder %s21, 0
      %s253 = scalar_select %p252, %s21, 0
      %s254 = sadd.s32 %s253, %s251
      %s255 = smul.addr %s254, 8
      %s256 = scalar_lea.vmem %s5, %s255
      %s257 = smul.u32 32, %s20
      %p258 = scmp.lt.s32.totalorder %s257, 63
      %s259 = scalar_select %p258, %s257, 63
      %s260 = smul.addr %s259, 8
      %s261 = scalar_lea.vmem %s0, %s260
      %s262 = smul.u32 32, %s20
      %p263 = scmp.lt.s32.totalorder %s21, 0
      %s264 = scalar_select %p263, %s21, 0
      %s265 = smul.addr %s264, 4
      %s266 = scalar_lea.vmem %s3, %s265
      %p267 = scmp.lt.s32.totalorder %s21, 0
      %s268 = scalar_select %p267, %s21, 0
      %s269 = scalar_lea.vmem %s4, %s268
      %s270 = smul.u32 32, %s20
      %p271 = scmp.lt.s32.totalorder %s270, 63
      %s272 = scalar_select %p271, %s270, 63
      %p273 = scmp.lt.s32.totalorder %s21, 0
      %s274 = scalar_select %p273, %s21, 0
      %s275 = sadd.s32 %s274, %s272
      %s276 = smul.addr %s275, 8
      %s277 = scalar_lea.vmem %s5, %s276
      %s278 = smul.u32 32, %s20
      %v280 = vld [vmem:[%s261] sm:$0xff]
      %v281 = vld [vmem:[%s261 + $0x8] sm:$0xff]
      %v282 = vld [vmem:[%s261 + $0x10] sm:$0xff]
      %v283 = vld [vmem:[%s261 + $0x18] sm:$0xff]
      %v284 = vld [vmem:[%s261 + $0x20] sm:$0xff]
      %v285 = vld [vmem:[%s261 + $0x28] sm:$0xff]
      %v286 = vld [vmem:[%s261 + $0x30] sm:$0xff]
      %v287 = vld [vmem:[%s261 + $0x38] sm:$0xff]
      %v288 = vld [vmem:[%s261 + $0x40] sm:$0xff]
      %v289 = vld [vmem:[%s261 + $0x48] sm:$0xff]
      %v290 = vld [vmem:[%s261 + $0x50] sm:$0xff]
      %v291 = vld [vmem:[%s261 + $0x58] sm:$0xff]
      %v292 = vld [vmem:[%s261 + $0x60] sm:$0xff]
      %v293 = vld [vmem:[%s261 + $0x68] sm:$0xff]
      %v294 = vld [vmem:[%s261 + $0x70] sm:$0xff]
      %v295 = vld [vmem:[%s261 + $0x78] sm:$0xff]
      %v296 = vld [vmem:[%s261 + $0x80] sm:$0xff]
      %v297 = vld [vmem:[%s261 + $0x88] sm:$0xff]
      %v298 = vld [vmem:[%s261 + $0x90] sm:$0xff]
      %v299 = vld [vmem:[%s261 + $0x98] sm:$0xff]
      %v300 = vld [vmem:[%s261 + $0xa0] sm:$0xff]
      %v301 = vld [vmem:[%s261 + $0xa8] sm:$0xff]
      %v302 = vld [vmem:[%s261 + $0xb0] sm:$0xff]
      %v303 = vld [vmem:[%s261 + $0xb8] sm:$0xff]
      %v304 = vld [vmem:[%s261 + $0xc0] sm:$0xff]
      %v305 = vld [vmem:[%s261 + $0xc8] sm:$0xff]
      %v306 = vld [vmem:[%s261 + $0xd0] sm:$0xff]
      %v307 = vld [vmem:[%s261 + $0xd8] sm:$0xff]
      %v308 = vld [vmem:[%s261 + $0xe0] sm:$0xff]
      %v309 = vld [vmem:[%s261 + $0xe8] sm:$0xff]
      %v310 = vld [vmem:[%s261 + $0xf0] sm:$0xff]
      %v311 = vld [vmem:[%s261 + $0xf8] sm:$0xff]
      %vm312 = vcmask 261120
      %v313 = vsel %vm312, %v280, 0.0
      %314 = vadd.xlane.f32.xlu0 %v313
      %v315 = vpop.xlane.xlu0 %314
      %v316 = vsel %vm312, %v281, 0.0
      %317 = vadd.xlane.f32.xlu0 %v316
      %v318 = vpop.xlane.xlu0 %317
      %v319 = vsel %vm312, %v282, 0.0
      %320 = vadd.xlane.f32.xlu0 %v319
      %v321 = vpop.xlane.xlu0 %320
      %v322 = vsel %vm312, %v283, 0.0
      %323 = vadd.xlane.f32.xlu0 %v322
      %v324 = vpop.xlane.xlu0 %323
      %v325 = vsel %vm312, %v284, 0.0
      %326 = vadd.xlane.f32.xlu0 %v325
      %v327 = vpop.xlane.xlu0 %326
      %v328 = vsel %vm312, %v285, 0.0
      %329 = vadd.xlane.f32.xlu0 %v328
      %v330 = vpop.xlane.xlu0 %329
      %v331 = vsel %vm312, %v286, 0.0
      %332 = vadd.xlane.f32.xlu0 %v331
      %v333 = vpop.xlane.xlu0 %332
      %v334 = vsel %vm312, %v287, 0.0
      %335 = vadd.xlane.f32.xlu0 %v334
      %v336 = vpop.xlane.xlu0 %335
      %v337 = vsel %vm312, %v288, 0.0
      %338 = vadd.xlane.f32.xlu0 %v337
      %v339 = vpop.xlane.xlu0 %338
      %v340 = vsel %vm312, %v289, 0.0
      %341 = vadd.xlane.f32.xlu0 %v340
      %v342 = vpop.xlane.xlu0 %341
      %v343 = vsel %vm312, %v290, 0.0
      %344 = vadd.xlane.f32.xlu0 %v343
      %v345 = vpop.xlane.xlu0 %344
      %v346 = vsel %vm312, %v291, 0.0
      %347 = vadd.xlane.f32.xlu0 %v346
      %v348 = vpop.xlane.xlu0 %347
      %v349 = vsel %vm312, %v292, 0.0
      %350 = vadd.xlane.f32.xlu0 %v349
      %v351 = vpop.xlane.xlu0 %350
      %v352 = vsel %vm312, %v293, 0.0
      %353 = vadd.xlane.f32.xlu0 %v352
      %v354 = vpop.xlane.xlu0 %353
      %v355 = vsel %vm312, %v294, 0.0
      %356 = vadd.xlane.f32.xlu0 %v355
      %v357 = vpop.xlane.xlu0 %356
      %v358 = vsel %vm312, %v295, 0.0
      %359 = vadd.xlane.f32.xlu0 %v358
      %v360 = vpop.xlane.xlu0 %359
      %v361 = vsel %vm312, %v296, 0.0
      %362 = vadd.xlane.f32.xlu0 %v361
      %v363 = vpop.xlane.xlu0 %362
      %v364 = vsel %vm312, %v297, 0.0
      %365 = vadd.xlane.f32.xlu0 %v364
      %v366 = vpop.xlane.xlu0 %365
      %v367 = vsel %vm312, %v298, 0.0
      %368 = vadd.xlane.f32.xlu0 %v367
      %v369 = vpop.xlane.xlu0 %368
      %v370 = vsel %vm312, %v299, 0.0
      %371 = vadd.xlane.f32.xlu0 %v370
      %v372 = vpop.xlane.xlu0 %371
      %v373 = vsel %vm312, %v300, 0.0
      %374 = vadd.xlane.f32.xlu0 %v373
      %v375 = vpop.xlane.xlu0 %374
      %v376 = vsel %vm312, %v301, 0.0
      %377 = vadd.xlane.f32.xlu0 %v376
      %v378 = vpop.xlane.xlu0 %377
      %v379 = vsel %vm312, %v302, 0.0
      %380 = vadd.xlane.f32.xlu0 %v379
      %v381 = vpop.xlane.xlu0 %380
      %v382 = vsel %vm312, %v303, 0.0
      %383 = vadd.xlane.f32.xlu0 %v382
      %v384 = vpop.xlane.xlu0 %383
      %v385 = vsel %vm312, %v304, 0.0
      %386 = vadd.xlane.f32.xlu0 %v385
      %v387 = vpop.xlane.xlu0 %386
      %v388 = vsel %vm312, %v305, 0.0
      %389 = vadd.xlane.f32.xlu0 %v388
      %v390 = vpop.xlane.xlu0 %389
      %v391 = vsel %vm312, %v306, 0.0
      %392 = vadd.xlane.f32.xlu0 %v391
      %v393 = vpop.xlane.xlu0 %392
      %v394 = vsel %vm312, %v307, 0.0
      %395 = vadd.xlane.f32.xlu0 %v394
      %v396 = vpop.xlane.xlu0 %395
      %v397 = vsel %vm312, %v308, 0.0
      %398 = vadd.xlane.f32.xlu0 %v397
      %v399 = vpop.xlane.xlu0 %398
      %v400 = vsel %vm312, %v309, 0.0
      %401 = vadd.xlane.f32.xlu0 %v400
      %v402 = vpop.xlane.xlu0 %401
      %v403 = vsel %vm312, %v310, 0.0
      %404 = vadd.xlane.f32.xlu0 %v403
      %v405 = vpop.xlane.xlu0 %404
      %v406 = vsel %vm312, %v311, 0.0
      %407 = vadd.xlane.f32.xlu0 %v406
      %v408 = vpop.xlane.xlu0 %407
      %v409 = vrcp.pop 32.0
      %v410 = vmul.f32 %v315, %v409
      %v411 = vmul.f32 %v318, %v409
      %v412 = vmul.f32 %v321, %v409
      %v413 = vmul.f32 %v324, %v409
      %v414 = vmul.f32 %v327, %v409
      %v415 = vmul.f32 %v330, %v409
      %v416 = vmul.f32 %v333, %v409
      %v417 = vmul.f32 %v336, %v409
      %v418 = vmul.f32 %v339, %v409
      %v419 = vmul.f32 %v342, %v409
      %v420 = vmul.f32 %v345, %v409
      %v421 = vmul.f32 %v348, %v409
      %v422 = vmul.f32 %v351, %v409
      %v423 = vmul.f32 %v354, %v409
      %v424 = vmul.f32 %v357, %v409
      %v425 = vmul.f32 %v360, %v409
      %v426 = vmul.f32 %v363, %v409
      %v427 = vmul.f32 %v366, %v409
      %v428 = vmul.f32 %v369, %v409
      %v429 = vmul.f32 %v372, %v409
      %v430 = vmul.f32 %v375, %v409
      %v431 = vmul.f32 %v378, %v409
      %v432 = vmul.f32 %v381, %v409
      %v433 = vmul.f32 %v384, %v409
      %v434 = vmul.f32 %v387, %v409
      %v435 = vmul.f32 %v390, %v409
      %v436 = vmul.f32 %v393, %v409
      %v437 = vmul.f32 %v396, %v409
      %v438 = vmul.f32 %v399, %v409
      %v439 = vmul.f32 %v402, %v409
      %v440 = vmul.f32 %v405, %v409
      %v441 = vmul.f32 %v408, %v409
      %v442 = vsub.f32 %v280, %v410
      %v443 = vsub.f32 %v281, %v411
      %v444 = vsub.f32 %v282, %v412
      %v445 = vsub.f32 %v283, %v413
      %v446 = vsub.f32 %v284, %v414
      %v447 = vsub.f32 %v285, %v415
      %v448 = vsub.f32 %v286, %v416
      %v449 = vsub.f32 %v287, %v417
      %v450 = vsub.f32 %v288, %v418
      %v451 = vsub.f32 %v289, %v419
      %v452 = vsub.f32 %v290, %v420
      %v453 = vsub.f32 %v291, %v421
      %v454 = vsub.f32 %v292, %v422
      %v455 = vsub.f32 %v293, %v423
      %v456 = vsub.f32 %v294, %v424
      %v457 = vsub.f32 %v295, %v425
      %v458 = vsub.f32 %v296, %v426
      %v459 = vsub.f32 %v297, %v427
      %v460 = vsub.f32 %v298, %v428
      %v461 = vsub.f32 %v299, %v429
      %v462 = vsub.f32 %v300, %v430
      %v463 = vsub.f32 %v301, %v431
      %v464 = vsub.f32 %v302, %v432
      %v465 = vsub.f32 %v303, %v433
      %v466 = vsub.f32 %v304, %v434
      %v467 = vsub.f32 %v305, %v435
      %v468 = vsub.f32 %v306, %v436
      %v469 = vsub.f32 %v307, %v437
      %v470 = vsub.f32 %v308, %v438
      %v471 = vsub.f32 %v309, %v439
      %v472 = vsub.f32 %v310, %v440
      %v473 = vsub.f32 %v311, %v441
      %v474 = vmul.f32 %v442, %v442
      %v475 = vmul.f32 %v443, %v443
      %v476 = vmul.f32 %v444, %v444
      %v477 = vmul.f32 %v445, %v445
      %v478 = vmul.f32 %v446, %v446
      %v479 = vmul.f32 %v447, %v447
      %v480 = vmul.f32 %v448, %v448
      %v481 = vmul.f32 %v449, %v449
      %v482 = vmul.f32 %v450, %v450
      %v483 = vmul.f32 %v451, %v451
      %v484 = vmul.f32 %v452, %v452
      %v485 = vmul.f32 %v453, %v453
      %v486 = vmul.f32 %v454, %v454
      %v487 = vmul.f32 %v455, %v455
      %v488 = vmul.f32 %v456, %v456
      %v489 = vmul.f32 %v457, %v457
      %v490 = vmul.f32 %v458, %v458
      %v491 = vmul.f32 %v459, %v459
      %v492 = vmul.f32 %v460, %v460
      %v493 = vmul.f32 %v461, %v461
      %v494 = vmul.f32 %v462, %v462
      %v495 = vmul.f32 %v463, %v463
      %v496 = vmul.f32 %v464, %v464
      %v497 = vmul.f32 %v465, %v465
      %v498 = vmul.f32 %v466, %v466
      %v499 = vmul.f32 %v467, %v467
      %v500 = vmul.f32 %v468, %v468
      %v501 = vmul.f32 %v469, %v469
      %v502 = vmul.f32 %v470, %v470
      %v503 = vmul.f32 %v471, %v471
      %v504 = vmul.f32 %v472, %v472
      %v505 = vmul.f32 %v473, %v473
      %v506 = vsel %vm312, %v474, 0.0
      %507 = vadd.xlane.f32.xlu0 %v506
      %v508 = vpop.xlane.xlu0 %507
      %v509 = vsel %vm312, %v475, 0.0
      %510 = vadd.xlane.f32.xlu0 %v509
      %v511 = vpop.xlane.xlu0 %510
      %v512 = vsel %vm312, %v476, 0.0
      %513 = vadd.xlane.f32.xlu0 %v512
      %v514 = vpop.xlane.xlu0 %513
      %v515 = vsel %vm312, %v477, 0.0
      %516 = vadd.xlane.f32.xlu0 %v515
      %v517 = vpop.xlane.xlu0 %516
      %v518 = vsel %vm312, %v478, 0.0
      %519 = vadd.xlane.f32.xlu0 %v518
      %v520 = vpop.xlane.xlu0 %519
      %v521 = vsel %vm312, %v479, 0.0
      %522 = vadd.xlane.f32.xlu0 %v521
      %v523 = vpop.xlane.xlu0 %522
      %v524 = vsel %vm312, %v480, 0.0
      %525 = vadd.xlane.f32.xlu0 %v524
      %v526 = vpop.xlane.xlu0 %525
      %v527 = vsel %vm312, %v481, 0.0
      %528 = vadd.xlane.f32.xlu0 %v527
      %v529 = vpop.xlane.xlu0 %528
      %v530 = vsel %vm312, %v482, 0.0
      %531 = vadd.xlane.f32.xlu0 %v530
      %v532 = vpop.xlane.xlu0 %531
      %v533 = vsel %vm312, %v483, 0.0
      %534 = vadd.xlane.f32.xlu0 %v533
      %v535 = vpop.xlane.xlu0 %534
      %v536 = vsel %vm312, %v484, 0.0
      %537 = vadd.xlane.f32.xlu0 %v536
      %v538 = vpop.xlane.xlu0 %537
      %v539 = vsel %vm312, %v485, 0.0
      %540 = vadd.xlane.f32.xlu0 %v539
      %v541 = vpop.xlane.xlu0 %540
      %v542 = vsel %vm312, %v486, 0.0
      %543 = vadd.xlane.f32.xlu0 %v542
      %v544 = vpop.xlane.xlu0 %543
      %v545 = vsel %vm312, %v487, 0.0
      %546 = vadd.xlane.f32.xlu0 %v545
      %v547 = vpop.xlane.xlu0 %546
      %v548 = vsel %vm312, %v488, 0.0
      %549 = vadd.xlane.f32.xlu0 %v548
      %v550 = vpop.xlane.xlu0 %549
      %v551 = vsel %vm312, %v489, 0.0
      %552 = vadd.xlane.f32.xlu0 %v551
      %v553 = vpop.xlane.xlu0 %552
      %v554 = vsel %vm312, %v490, 0.0
      %555 = vadd.xlane.f32.xlu0 %v554
      %v556 = vpop.xlane.xlu0 %555
      %v557 = vsel %vm312, %v491, 0.0
      %558 = vadd.xlane.f32.xlu0 %v557
      %v559 = vpop.xlane.xlu0 %558
      %v560 = vsel %vm312, %v492, 0.0
      %561 = vadd.xlane.f32.xlu0 %v560
      %v562 = vpop.xlane.xlu0 %561
      %v563 = vsel %vm312, %v493, 0.0
      %564 = vadd.xlane.f32.xlu0 %v563
      %v565 = vpop.xlane.xlu0 %564
      %v566 = vsel %vm312, %v494, 0.0
      %567 = vadd.xlane.f32.xlu0 %v566
      %v568 = vpop.xlane.xlu0 %567
      %v569 = vsel %vm312, %v495, 0.0
      %570 = vadd.xlane.f32.xlu0 %v569
      %v571 = vpop.xlane.xlu0 %570
      %v572 = vsel %vm312, %v496, 0.0
      %573 = vadd.xlane.f32.xlu0 %v572
      %v574 = vpop.xlane.xlu0 %573
      %v575 = vsel %vm312, %v497, 0.0
      %576 = vadd.xlane.f32.xlu0 %v575
      %v577 = vpop.xlane.xlu0 %576
      %v578 = vsel %vm312, %v498, 0.0
      %579 = vadd.xlane.f32.xlu0 %v578
      %v580 = vpop.xlane.xlu0 %579
      %v581 = vsel %vm312, %v499, 0.0
      %582 = vadd.xlane.f32.xlu0 %v581
      %v583 = vpop.xlane.xlu0 %582
      %v584 = vsel %vm312, %v500, 0.0
      %585 = vadd.xlane.f32.xlu0 %v584
      %v586 = vpop.xlane.xlu0 %585
      %v587 = vsel %vm312, %v501, 0.0
      %588 = vadd.xlane.f32.xlu0 %v587
      %v589 = vpop.xlane.xlu0 %588
      %v590 = vsel %vm312, %v502, 0.0
      %591 = vadd.xlane.f32.xlu0 %v590
      %v592 = vpop.xlane.xlu0 %591
      %v593 = vsel %vm312, %v503, 0.0
      %594 = vadd.xlane.f32.xlu0 %v593
      %v595 = vpop.xlane.xlu0 %594
      %v596 = vsel %vm312, %v504, 0.0
      %597 = vadd.xlane.f32.xlu0 %v596
      %v598 = vpop.xlane.xlu0 %597
      %v599 = vsel %vm312, %v505, 0.0
      %600 = vadd.xlane.f32.xlu0 %v599
      %v601 = vpop.xlane.xlu0 %600
      %v602 = vmul.f32 %v508, %v409
      %v603 = vmul.f32 %v511, %v409
      %v604 = vmul.f32 %v514, %v409
      %v605 = vmul.f32 %v517, %v409
      %v606 = vmul.f32 %v520, %v409
      %v607 = vmul.f32 %v523, %v409
      %v608 = vmul.f32 %v526, %v409
      %v609 = vmul.f32 %v529, %v409
      %v610 = vmul.f32 %v532, %v409
      %v611 = vmul.f32 %v535, %v409
      %v612 = vmul.f32 %v538, %v409
      %v613 = vmul.f32 %v541, %v409
      %v614 = vmul.f32 %v544, %v409
      %v615 = vmul.f32 %v547, %v409
      %v616 = vmul.f32 %v550, %v409
      %v617 = vmul.f32 %v553, %v409
      %v618 = vmul.f32 %v556, %v409
      %v619 = vmul.f32 %v559, %v409
      %v620 = vmul.f32 %v562, %v409
      %v621 = vmul.f32 %v565, %v409
      %v622 = vmul.f32 %v568, %v409
      %v623 = vmul.f32 %v571, %v409
      %v624 = vmul.f32 %v574, %v409
      %v625 = vmul.f32 %v577, %v409
      %v626 = vmul.f32 %v580, %v409
      %v627 = vmul.f32 %v583, %v409
      %v628 = vmul.f32 %v586, %v409
      %v629 = vmul.f32 %v589, %v409
      %v630 = vmul.f32 %v592, %v409
      %v631 = vmul.f32 %v595, %v409
      %v632 = vmul.f32 %v598, %v409
      %v633 = vmul.f32 %v601, %v409
      %v634 = vadd.f32 %v602, 1e-06
      %v635 = vadd.f32 %v603, 1e-06
      %v636 = vadd.f32 %v604, 1e-06
      %v637 = vadd.f32 %v605, 1e-06
      %v638 = vadd.f32 %v606, 1e-06
      %v639 = vadd.f32 %v607, 1e-06
      %v640 = vadd.f32 %v608, 1e-06
      %v641 = vadd.f32 %v609, 1e-06
      %v642 = vadd.f32 %v610, 1e-06
      %v643 = vadd.f32 %v611, 1e-06
      %v644 = vadd.f32 %v612, 1e-06
      %v645 = vadd.f32 %v613, 1e-06
      %v646 = vadd.f32 %v614, 1e-06
      %v647 = vadd.f32 %v615, 1e-06
      %v648 = vadd.f32 %v616, 1e-06
      %v649 = vadd.f32 %v617, 1e-06
      %v650 = vadd.f32 %v618, 1e-06
      %v651 = vadd.f32 %v619, 1e-06
      %v652 = vadd.f32 %v620, 1e-06
      %v653 = vadd.f32 %v621, 1e-06
      %v654 = vadd.f32 %v622, 1e-06
      %v655 = vadd.f32 %v623, 1e-06
      %v656 = vadd.f32 %v624, 1e-06
      %v657 = vadd.f32 %v625, 1e-06
      %v658 = vadd.f32 %v626, 1e-06
      %v659 = vadd.f32 %v627, 1e-06
      %v660 = vadd.f32 %v628, 1e-06
      %v661 = vadd.f32 %v629, 1e-06
      %v662 = vadd.f32 %v630, 1e-06
      %v663 = vadd.f32 %v631, 1e-06
      %v664 = vadd.f32 %v632, 1e-06
      %v665 = vadd.f32 %v633, 1e-06
      %v666 = vrsqrt.pop %v634
      %v667 = vrsqrt.pop %v635
      %v668 = vrsqrt.pop %v636
      %v669 = vrsqrt.pop %v637
      %v670 = vrsqrt.pop %v638
      %v671 = vrsqrt.pop %v639
      %v672 = vrsqrt.pop %v640
      %v673 = vrsqrt.pop %v641
      %v674 = vrsqrt.pop %v642
      %v675 = vrsqrt.pop %v643
      %v676 = vrsqrt.pop %v644
      %v677 = vrsqrt.pop %v645
      %v678 = vrsqrt.pop %v646
      %v679 = vrsqrt.pop %v647
      %v680 = vrsqrt.pop %v648
      %v681 = vrsqrt.pop %v649
      %v682 = vrsqrt.pop %v650
      %v683 = vrsqrt.pop %v651
      %v684 = vrsqrt.pop %v652
      %v685 = vrsqrt.pop %v653
      %v686 = vrsqrt.pop %v654
      %v687 = vrsqrt.pop %v655
      %v688 = vrsqrt.pop %v656
      %v689 = vrsqrt.pop %v657
      %v690 = vrsqrt.pop %v658
      %v691 = vrsqrt.pop %v659
      %v692 = vrsqrt.pop %v660
      %v693 = vrsqrt.pop %v661
      %v694 = vrsqrt.pop %v662
      %v695 = vrsqrt.pop %v663
      %v696 = vrsqrt.pop %v664
      %v697 = vrsqrt.pop %v665
      %v698 = vmul.f32 %v442, %v666
      %v699 = vmul.f32 %v443, %v667
      %v700 = vmul.f32 %v444, %v668
      %v701 = vmul.f32 %v445, %v669
      %v702 = vmul.f32 %v446, %v670
      %v703 = vmul.f32 %v447, %v671
      %v704 = vmul.f32 %v448, %v672
      %v705 = vmul.f32 %v449, %v673
      %v706 = vmul.f32 %v450, %v674
      %v707 = vmul.f32 %v451, %v675
      %v708 = vmul.f32 %v452, %v676
      %v709 = vmul.f32 %v453, %v677
      %v710 = vmul.f32 %v454, %v678
      %v711 = vmul.f32 %v455, %v679
      %v712 = vmul.f32 %v456, %v680
      %v713 = vmul.f32 %v457, %v681
      %v714 = vmul.f32 %v458, %v682
      %v715 = vmul.f32 %v459, %v683
      %v716 = vmul.f32 %v460, %v684
      %v717 = vmul.f32 %v461, %v685
      %v718 = vmul.f32 %v462, %v686
      %v719 = vmul.f32 %v463, %v687
      %v720 = vmul.f32 %v464, %v688
      %v721 = vmul.f32 %v465, %v689
      %v722 = vmul.f32 %v466, %v690
      %v723 = vmul.f32 %v467, %v691
      %v724 = vmul.f32 %v468, %v692
      %v725 = vmul.f32 %v469, %v693
      %v726 = vmul.f32 %v470, %v694
      %v727 = vmul.f32 %v471, %v695
      %v728 = vmul.f32 %v472, %v696
      %v729 = vmul.f32 %v473, %v697
      %v730 = vld [vmem:[%s1] sm:$0x1]
      %v732 = vlaneseq
      %v733 = vshrl.u32 %v732, 7
      %v734 = vsub.s32 0, %v733
      %v735 = vrot.slane %v730, %v734
      %v737 = vmul.f32 %v698, %v735
      %v738 = vmul.f32 %v699, %v735
      %v739 = vmul.f32 %v700, %v735
      %v740 = vmul.f32 %v701, %v735
      %v741 = vmul.f32 %v702, %v735
      %v742 = vmul.f32 %v703, %v735
      %v743 = vmul.f32 %v704, %v735
      %v744 = vmul.f32 %v705, %v735
      %v745 = vmul.f32 %v706, %v735
      %v746 = vmul.f32 %v707, %v735
      %v747 = vmul.f32 %v708, %v735
      %v748 = vmul.f32 %v709, %v735
      %v749 = vmul.f32 %v710, %v735
      %v750 = vmul.f32 %v711, %v735
      %v751 = vmul.f32 %v712, %v735
      %v752 = vmul.f32 %v713, %v735
      %v753 = vmul.f32 %v714, %v735
      %v754 = vmul.f32 %v715, %v735
      %v755 = vmul.f32 %v716, %v735
      %v756 = vmul.f32 %v717, %v735
      %v757 = vmul.f32 %v718, %v735
      %v758 = vmul.f32 %v719, %v735
      %v759 = vmul.f32 %v720, %v735
      %v760 = vmul.f32 %v721, %v735
      %v761 = vmul.f32 %v722, %v735
      %v762 = vmul.f32 %v723, %v735
      %v763 = vmul.f32 %v724, %v735
      %v764 = vmul.f32 %v725, %v735
      %v765 = vmul.f32 %v726, %v735
      %v766 = vmul.f32 %v727, %v735
      %v767 = vmul.f32 %v728, %v735
      %v768 = vmul.f32 %v729, %v735
      %v769 = vld [vmem:[%s2] sm:$0x1]
      %v771 = vlaneseq
      %v772 = vshrl.u32 %v771, 7
      %v773 = vsub.s32 0, %v772
      %v774 = vrot.slane %v769, %v773
      %v776 = vadd.f32 %v737, %v774
      %v777 = vadd.f32 %v738, %v774
      %v778 = vadd.f32 %v739, %v774
      %v779 = vadd.f32 %v740, %v774
      %v780 = vadd.f32 %v741, %v774
      %v781 = vadd.f32 %v742, %v774
      %v782 = vadd.f32 %v743, %v774
      %v783 = vadd.f32 %v744, %v774
      %v784 = vadd.f32 %v745, %v774
      %v785 = vadd.f32 %v746, %v774
      %v786 = vadd.f32 %v747, %v774
      %v787 = vadd.f32 %v748, %v774
      %v788 = vadd.f32 %v749, %v774
      %v789 = vadd.f32 %v750, %v774
      %v790 = vadd.f32 %v751, %v774
      %v791 = vadd.f32 %v752, %v774
      %v792 = vadd.f32 %v753, %v774
      %v793 = vadd.f32 %v754, %v774
      %v794 = vadd.f32 %v755, %v774
      %v795 = vadd.f32 %v756, %v774
      %v796 = vadd.f32 %v757, %v774
      %v797 = vadd.f32 %v758, %v774
      %v798 = vadd.f32 %v759, %v774
      %v799 = vadd.f32 %v760, %v774
      %v800 = vadd.f32 %v761, %v774
      %v801 = vadd.f32 %v762, %v774
      %v802 = vadd.f32 %v763, %v774
      %v803 = vadd.f32 %v764, %v774
      %v804 = vadd.f32 %v765, %v774
      %v805 = vadd.f32 %v766, %v774
      %v806 = vadd.f32 %v767, %v774
      %v807 = vadd.f32 %v768, %v774
      %v808 = vpack.c.bf16 %v777, %v776
      %v809 = vpack.c.bf16 %v779, %v778
      %v810 = vpack.c.bf16 %v781, %v780
      %v811 = vpack.c.bf16 %v783, %v782
      %v812 = vpack.c.bf16 %v785, %v784
      %v813 = vpack.c.bf16 %v787, %v786
      %v814 = vpack.c.bf16 %v789, %v788
      %v815 = vpack.c.bf16 %v791, %v790
      %v816 = vpack.c.bf16 %v793, %v792
      %v817 = vpack.c.bf16 %v795, %v794
      %v818 = vpack.c.bf16 %v797, %v796
      %v819 = vpack.c.bf16 %v799, %v798
      %v820 = vpack.c.bf16 %v801, %v800
      %v821 = vpack.c.bf16 %v803, %v802
      %v822 = vpack.c.bf16 %v805, %v804
      %v823 = vpack.c.bf16 %v807, %v806
      %v824 = vld [vmem:[%s266] sm:$0xf]
      %v825 = vld [vmem:[%s266 + $0x4] sm:$0xf]
      %v826 = vld [vmem:[%s266 + $0x8] sm:$0xf]
      %v827 = vld [vmem:[%s266 + $0xc] sm:$0xf]
      %v828 = vld [vmem:[%s269] sm:$0x1]
      %v830 = vlaneseq
      %v831 = vshrl.u32 %v830, 7
      %v832 = vsub.s32 0, %v831
      %v833 = vrot.slane %v828, %v832
      %v839 = vunpack.c.l.b16 %v824
      %v840 = vunpack.c.l.b16 %v825
      %v841 = vunpack.c.l.b16 %v826
      %v842 = vunpack.c.l.b16 %v827
      %v843 = vpack.c.b16 %v840, %v839
      %v844 = vpack.c.b16 %v842, %v841
      %v848 = vsel %vm312, %v808, 0
      %v851 = vsel %vm312, %v809, 0
      %v854 = vsel %vm312, %v810, 0
      %v857 = vsel %vm312, %v811, 0
      %v860 = vsel %vm312, %v812, 0
      %v863 = vsel %vm312, %v813, 0
      %v866 = vsel %vm312, %v814, 0
      %v869 = vsel %vm312, %v815, 0
      %v872 = vsel %vm312, %v816, 0
      %v875 = vsel %vm312, %v817, 0
      %v878 = vsel %vm312, %v818, 0
      %v881 = vsel %vm312, %v819, 0
      %v884 = vsel %vm312, %v820, 0
      %v887 = vsel %vm312, %v821, 0
      %v890 = vsel %vm312, %v822, 0
      %v893 = vsel %vm312, %v823, 0
      %895 = vmatprep.subr.bf16.mxu0 0
      %896 = vmatpush1.bf16.msra.mxu0 %v843
      %897 = vmatprep.subr.bf16.mxu0 0
      %898 = vmatpush1.bf16.msra.mxu0 %v844
      %899 = vmatprep.subr.bf16.mxu0 0
      %900 = vmatpush1.bf16.msra.mxu0 0
      %901 = vmatprep.subr.bf16.mxu0 0
      %902 = vmatpush1.bf16.msra.mxu0 0
      %903 = vmatprep.subr.bf16.mxu0 0
      %904 = vmatpush1.bf16.msra.mxu0 0
      %905 = vmatprep.subr.bf16.mxu0 0
      %906 = vmatpush1.bf16.msra.mxu0 0
      %907 = vmatprep.subr.bf16.mxu0 0
      %908 = vmatpush1.bf16.msra.mxu0 0
      %909 = vmatprep.subr.bf16.mxu0 0
      %910 = vmatpush1.bf16.msra.mxu0 0
      %911 = vmatprep.subr.bf16.mxu0 0
      %912 = vmatpush1.bf16.msra.mxu0 0
      %913 = vmatprep.subr.bf16.mxu0 0
      %914 = vmatpush1.bf16.msra.mxu0 0
      %915 = vmatprep.subr.bf16.mxu0 0
      %916 = vmatpush1.bf16.msra.mxu0 0
      %917 = vmatprep.subr.bf16.mxu0 0
      %918 = vmatpush1.bf16.msra.mxu0 0
      %919 = vmatprep.subr.bf16.mxu0 0
      %920 = vmatpush1.bf16.msra.mxu0 0
      %921 = vmatprep.subr.bf16.mxu0 0
      %922 = vmatpush1.bf16.msra.mxu0 0
      %923 = vmatprep.subr.bf16.mxu0 0
      %924 = vmatpush1.bf16.msra.mxu0 0
      %925 = vmatprep.subr.bf16.mxu0 0
      %926 = vmatpush1.bf16.msra.mxu0 0
      %927 = vmatprep.mubr.bf16.mxu0 0
      %928 = vmatmul.mubr.bf16.gmra.mrb[0].mxu0 %v848
      %v929 = vpop.f32.mrb[0].mxu0
      %v930 = vadd.f32 %v833, %v929
      %v931 = vpop.f32.mrb[0].mxu0
      %v932 = vpop.f32.mrb[0].mxu0
      %v933 = vadd.f32 %v833, %v932
      %v934 = vpop.f32.mrb[0].mxu0
      %935 = vmatprep.mubr.bf16.mxu0 0
      %936 = vmatmul.mubr.bf16.gmra.mrb[0].mxu0 %v851
      %v937 = vpop.f32.mrb[0].mxu0
      %v938 = vadd.f32 %v833, %v937
      %v939 = vpop.f32.mrb[0].mxu0
      %v940 = vpop.f32.mrb[0].mxu0
      %v941 = vadd.f32 %v833, %v940
      %v942 = vpop.f32.mrb[0].mxu0
      %943 = vmatprep.mubr.bf16.mxu0 0
      %944 = vmatmul.mubr.bf16.gmra.mrb[0].mxu0 %v854
      %v945 = vpop.f32.mrb[0].mxu0
      %v946 = vadd.f32 %v833, %v945
      %v947 = vpop.f32.mrb[0].mxu0
      %v948 = vpop.f32.mrb[0].mxu0
      %v949 = vadd.f32 %v833, %v948
      %v950 = vpop.f32.mrb[0].mxu0
      %951 = vmatprep.mubr.bf16.mxu0 0
      %952 = vmatmul.mubr.bf16.gmra.mrb[0].mxu0 %v857
      %v953 = vpop.f32.mrb[0].mxu0
      %v954 = vadd.f32 %v833, %v953
      %v955 = vpop.f32.mrb[0].mxu0
      %v956 = vpop.f32.mrb[0].mxu0
      %v957 = vadd.f32 %v833, %v956
      %v958 = vpop.f32.mrb[0].mxu0
      %959 = vmatprep.mubr.bf16.mxu0 0
      %960 = vmatmul.mubr.bf16.gmra.mrb[0].mxu0 %v860
      %v961 = vpop.f32.mrb[0].mxu0
      %v962 = vadd.f32 %v833, %v961
      %v963 = vpop.f32.mrb[0].mxu0
      %v964 = vpop.f32.mrb[0].mxu0
      %v965 = vadd.f32 %v833, %v964
      %v966 = vpop.f32.mrb[0].mxu0
      %967 = vmatprep.mubr.bf16.mxu0 0
      %968 = vmatmul.mubr.bf16.gmra.mrb[0].mxu0 %v863
      %v969 = vpop.f32.mrb[0].mxu0
      %v970 = vadd.f32 %v833, %v969
      %v971 = vpop.f32.mrb[0].mxu0
      %v972 = vpop.f32.mrb[0].mxu0
      %v973 = vadd.f32 %v833, %v972
      %v974 = vpop.f32.mrb[0].mxu0
      %975 = vmatprep.mubr.bf16.mxu0 0
      %976 = vmatmul.mubr.bf16.gmra.mrb[0].mxu0 %v866
      %v977 = vpop.f32.mrb[0].mxu0
      %v978 = vadd.f32 %v833, %v977
      %v979 = vpop.f32.mrb[0].mxu0
      %v980 = vpop.f32.mrb[0].mxu0
      %v981 = vadd.f32 %v833, %v980
      %v982 = vpop.f32.mrb[0].mxu0
      %983 = vmatprep.mubr.bf16.mxu0 0
      %984 = vmatmul.mubr.bf16.gmra.mrb[0].mxu0 %v869
      %v985 = vpop.f32.mrb[0].mxu0
      %v986 = vadd.f32 %v833, %v985
      %v987 = vpop.f32.mrb[0].mxu0
      %v988 = vpop.f32.mrb[0].mxu0
      %v989 = vadd.f32 %v833, %v988
      %v990 = vpop.f32.mrb[0].mxu0
      %991 = vmatprep.mubr.bf16.mxu0 0
      %992 = vmatmul.mubr.bf16.gmra.mrb[0].mxu0 %v872
      %v993 = vpop.f32.mrb[0].mxu0
      %v994 = vadd.f32 %v833, %v993
      %v995 = vpop.f32.mrb[0].mxu0
      %v996 = vpop.f32.mrb[0].mxu0
      %v997 = vadd.f32 %v833, %v996
      %v998 = vpop.f32.mrb[0].mxu0
      %999 = vmatprep.mubr.bf16.mxu0 0
      %1000 = vmatmul.mubr.bf16.gmra.mrb[0].mxu0 %v875
      %v1001 = vpop.f32.mrb[0].mxu0
      %v1002 = vadd.f32 %v833, %v1001
      %v1003 = vpop.f32.mrb[0].mxu0
      %v1004 = vpop.f32.mrb[0].mxu0
      %v1005 = vadd.f32 %v833, %v1004
      %v1006 = vpop.f32.mrb[0].mxu0
      %1007 = vmatprep.mubr.bf16.mxu0 0
      %1008 = vmatmul.mubr.bf16.gmra.mrb[0].mxu0 %v878
      %v1009 = vpop.f32.mrb[0].mxu0
      %v1010 = vadd.f32 %v833, %v1009
      %v1011 = vpop.f32.mrb[0].mxu0
      %v1012 = vpop.f32.mrb[0].mxu0
      %v1013 = vadd.f32 %v833, %v1012
      %v1014 = vpop.f32.mrb[0].mxu0
      %1015 = vmatprep.mubr.bf16.mxu0 0
      %1016 = vmatmul.mubr.bf16.gmra.mrb[0].mxu0 %v881
      %v1017 = vpop.f32.mrb[0].mxu0
      %v1018 = vadd.f32 %v833, %v1017
      %v1019 = vpop.f32.mrb[0].mxu0
      %v1020 = vpop.f32.mrb[0].mxu0
      %v1021 = vadd.f32 %v833, %v1020
      %v1022 = vpop.f32.mrb[0].mxu0
      %1023 = vmatprep.mubr.bf16.mxu0 0
      %1024 = vmatmul.mubr.bf16.gmra.mrb[0].mxu0 %v884
      %v1025 = vpop.f32.mrb[0].mxu0
      %v1026 = vadd.f32 %v833, %v1025
      %v1027 = vpop.f32.mrb[0].mxu0
      %v1028 = vpop.f32.mrb[0].mxu0
      %v1029 = vadd.f32 %v833, %v1028
      %v1030 = vpop.f32.mrb[0].mxu0
      %1031 = vmatprep.mubr.bf16.mxu0 0
      %1032 = vmatmul.mubr.bf16.gmra.mrb[0].mxu0 %v887
      %v1033 = vpop.f32.mrb[0].mxu0
      %v1034 = vadd.f32 %v833, %v1033
      %v1035 = vpop.f32.mrb[0].mxu0
      %v1036 = vpop.f32.mrb[0].mxu0
      %v1037 = vadd.f32 %v833, %v1036
      %v1038 = vpop.f32.mrb[0].mxu0
      %1039 = vmatprep.mubr.bf16.mxu0 0
      %1040 = vmatmul.mubr.bf16.gmra.mrb[0].mxu0 %v890
      %v1041 = vpop.f32.mrb[0].mxu0
      %v1042 = vadd.f32 %v833, %v1041
      %v1043 = vpop.f32.mrb[0].mxu0
      %v1044 = vpop.f32.mrb[0].mxu0
      %v1045 = vadd.f32 %v833, %v1044
      %v1046 = vpop.f32.mrb[0].mxu0
      %1047 = vmatprep.mubr.bf16.mxu0 0
      %1048 = vmatmul.mubr.bf16.gmra.mrb[0].mxu0 %v893
      %v1049 = vpop.f32.mrb[0].mxu0
      %v1050 = vadd.f32 %v833, %v1049
      %v1051 = vpop.f32.mrb[0].mxu0
      %v1052 = vpop.f32.mrb[0].mxu0
      %v1053 = vadd.f32 %v833, %v1052
      %v1054 = vpop.f32.mrb[0].mxu0
      %1055 = vdwg.mxu0
      %v1056 = vmul.f32 %v930, 0.5
      %v1057 = vmul.f32 %v933, 0.5
      %v1058 = vmul.f32 %v938, 0.5
      %v1059 = vmul.f32 %v941, 0.5
      %v1060 = vmul.f32 %v946, 0.5
      %v1061 = vmul.f32 %v949, 0.5
      %v1062 = vmul.f32 %v954, 0.5
      %v1063 = vmul.f32 %v957, 0.5
      %v1064 = vmul.f32 %v962, 0.5
      %v1065 = vmul.f32 %v965, 0.5
      %v1066 = vmul.f32 %v970, 0.5
      %v1067 = vmul.f32 %v973, 0.5
      %v1068 = vmul.f32 %v978, 0.5
      %v1069 = vmul.f32 %v981, 0.5
      %v1070 = vmul.f32 %v986, 0.5
      %v1071 = vmul.f32 %v989, 0.5
      %v1072 = vmul.f32 %v994, 0.5
      %v1073 = vmul.f32 %v997, 0.5
      %v1074 = vmul.f32 %v1002, 0.5
      %v1075 = vmul.f32 %v1005, 0.5
      %v1076 = vmul.f32 %v1010, 0.5
      %v1077 = vmul.f32 %v1013, 0.5
      %v1078 = vmul.f32 %v1018, 0.5
      %v1079 = vmul.f32 %v1021, 0.5
      %v1080 = vmul.f32 %v1026, 0.5
      %v1081 = vmul.f32 %v1029, 0.5
      %v1082 = vmul.f32 %v1034, 0.5
      %v1083 = vmul.f32 %v1037, 0.5
      %v1084 = vmul.f32 %v1042, 0.5
      %v1085 = vmul.f32 %v1045, 0.5
      %v1086 = vmul.f32 %v1050, 0.5
      %v1087 = vmul.f32 %v1053, 0.5
      %v1088 = vmul.f32 %v930, %v930
      %v1089 = vmul.f32 %v933, %v933
      %v1090 = vmul.f32 %v938, %v938
      %v1091 = vmul.f32 %v941, %v941
      %v1092 = vmul.f32 %v946, %v946
      %v1093 = vmul.f32 %v949, %v949
      %v1094 = vmul.f32 %v954, %v954
      %v1095 = vmul.f32 %v957, %v957
      %v1096 = vmul.f32 %v962, %v962
      %v1097 = vmul.f32 %v965, %v965
      %v1098 = vmul.f32 %v970, %v970
      %v1099 = vmul.f32 %v973, %v973
      %v1100 = vmul.f32 %v978, %v978
      %v1101 = vmul.f32 %v981, %v981
      %v1102 = vmul.f32 %v986, %v986
      %v1103 = vmul.f32 %v989, %v989
      %v1104 = vmul.f32 %v994, %v994
      %v1105 = vmul.f32 %v997, %v997
      %v1106 = vmul.f32 %v1002, %v1002
      %v1107 = vmul.f32 %v1005, %v1005
      %v1108 = vmul.f32 %v1010, %v1010
      %v1109 = vmul.f32 %v1013, %v1013
      %v1110 = vmul.f32 %v1018, %v1018
      %v1111 = vmul.f32 %v1021, %v1021
      %v1112 = vmul.f32 %v1026, %v1026
      %v1113 = vmul.f32 %v1029, %v1029
      %v1114 = vmul.f32 %v1034, %v1034
      %v1115 = vmul.f32 %v1037, %v1037
      %v1116 = vmul.f32 %v1042, %v1042
      %v1117 = vmul.f32 %v1045, %v1045
      %v1118 = vmul.f32 %v1050, %v1050
      %v1119 = vmul.f32 %v1053, %v1053
      %v1120 = vmul.f32 %v1088, %v930
      %v1121 = vmul.f32 %v1089, %v933
      %v1122 = vmul.f32 %v1090, %v938
      %v1123 = vmul.f32 %v1091, %v941
      %v1124 = vmul.f32 %v1092, %v946
      %v1125 = vmul.f32 %v1093, %v949
      %v1126 = vmul.f32 %v1094, %v954
      %v1127 = vmul.f32 %v1095, %v957
      %v1128 = vmul.f32 %v1096, %v962
      %v1129 = vmul.f32 %v1097, %v965
      %v1130 = vmul.f32 %v1098, %v970
      %v1131 = vmul.f32 %v1099, %v973
      %v1132 = vmul.f32 %v1100, %v978
      %v1133 = vmul.f32 %v1101, %v981
      %v1134 = vmul.f32 %v1102, %v986
      %v1135 = vmul.f32 %v1103, %v989
      %v1136 = vmul.f32 %v1104, %v994
      %v1137 = vmul.f32 %v1105, %v997
      %v1138 = vmul.f32 %v1106, %v1002
      %v1139 = vmul.f32 %v1107, %v1005
      %v1140 = vmul.f32 %v1108, %v1010
      %v1141 = vmul.f32 %v1109, %v1013
      %v1142 = vmul.f32 %v1110, %v1018
      %v1143 = vmul.f32 %v1111, %v1021
      %v1144 = vmul.f32 %v1112, %v1026
      %v1145 = vmul.f32 %v1113, %v1029
      %v1146 = vmul.f32 %v1114, %v1034
      %v1147 = vmul.f32 %v1115, %v1037
      %v1148 = vmul.f32 %v1116, %v1042
      %v1149 = vmul.f32 %v1117, %v1045
      %v1150 = vmul.f32 %v1118, %v1050
      %v1151 = vmul.f32 %v1119, %v1053
      %v1152 = vmul.f32 %v1120, 0.044715
      %v1153 = vmul.f32 %v1121, 0.044715
      %v1154 = vmul.f32 %v1122, 0.044715
      %v1155 = vmul.f32 %v1123, 0.044715
      %v1156 = vmul.f32 %v1124, 0.044715
      %v1157 = vmul.f32 %v1125, 0.044715
      %v1158 = vmul.f32 %v1126, 0.044715
      %v1159 = vmul.f32 %v1127, 0.044715
      %v1160 = vmul.f32 %v1128, 0.044715
      %v1161 = vmul.f32 %v1129, 0.044715
      %v1162 = vmul.f32 %v1130, 0.044715
      %v1163 = vmul.f32 %v1131, 0.044715
      %v1164 = vmul.f32 %v1132, 0.044715
      %v1165 = vmul.f32 %v1133, 0.044715
      %v1166 = vmul.f32 %v1134, 0.044715
      %v1167 = vmul.f32 %v1135, 0.044715
      %v1168 = vmul.f32 %v1136, 0.044715
      %v1169 = vmul.f32 %v1137, 0.044715
      %v1170 = vmul.f32 %v1138, 0.044715
      %v1171 = vmul.f32 %v1139, 0.044715
      %v1172 = vmul.f32 %v1140, 0.044715
      %v1173 = vmul.f32 %v1141, 0.044715
      %v1174 = vmul.f32 %v1142, 0.044715
      %v1175 = vmul.f32 %v1143, 0.044715
      %v1176 = vmul.f32 %v1144, 0.044715
      %v1177 = vmul.f32 %v1145, 0.044715
      %v1178 = vmul.f32 %v1146, 0.044715
      %v1179 = vmul.f32 %v1147, 0.044715
      %v1180 = vmul.f32 %v1148, 0.044715
      %v1181 = vmul.f32 %v1149, 0.044715
      %v1182 = vmul.f32 %v1150, 0.044715
      %v1183 = vmul.f32 %v1151, 0.044715
      %v1184 = vadd.f32 %v930, %v1152
      %v1185 = vadd.f32 %v933, %v1153
      %v1186 = vadd.f32 %v938, %v1154
      %v1187 = vadd.f32 %v941, %v1155
      %v1188 = vadd.f32 %v946, %v1156
      %v1189 = vadd.f32 %v949, %v1157
      %v1190 = vadd.f32 %v954, %v1158
      %v1191 = vadd.f32 %v957, %v1159
      %v1192 = vadd.f32 %v962, %v1160
      %v1193 = vadd.f32 %v965, %v1161
      %v1194 = vadd.f32 %v970, %v1162
      %v1195 = vadd.f32 %v973, %v1163
      %v1196 = vadd.f32 %v978, %v1164
      %v1197 = vadd.f32 %v981, %v1165
      %v1198 = vadd.f32 %v986, %v1166
      %v1199 = vadd.f32 %v989, %v1167
      %v1200 = vadd.f32 %v994, %v1168
      %v1201 = vadd.f32 %v997, %v1169
      %v1202 = vadd.f32 %v1002, %v1170
      %v1203 = vadd.f32 %v1005, %v1171
      %v1204 = vadd.f32 %v1010, %v1172
      %v1205 = vadd.f32 %v1013, %v1173
      %v1206 = vadd.f32 %v1018, %v1174
      %v1207 = vadd.f32 %v1021, %v1175
      %v1208 = vadd.f32 %v1026, %v1176
      %v1209 = vadd.f32 %v1029, %v1177
      %v1210 = vadd.f32 %v1034, %v1178
      %v1211 = vadd.f32 %v1037, %v1179
      %v1212 = vadd.f32 %v1042, %v1180
      %v1213 = vadd.f32 %v1045, %v1181
      %v1214 = vadd.f32 %v1050, %v1182
      %v1215 = vadd.f32 %v1053, %v1183
      %v1216 = vmul.f32 %v1184, 0.7978846
      %v1217 = vmul.f32 %v1185, 0.7978846
      %v1218 = vmul.f32 %v1186, 0.7978846
      %v1219 = vmul.f32 %v1187, 0.7978846
      %v1220 = vmul.f32 %v1188, 0.7978846
      %v1221 = vmul.f32 %v1189, 0.7978846
      %v1222 = vmul.f32 %v1190, 0.7978846
      %v1223 = vmul.f32 %v1191, 0.7978846
      %v1224 = vmul.f32 %v1192, 0.7978846
      %v1225 = vmul.f32 %v1193, 0.7978846
      %v1226 = vmul.f32 %v1194, 0.7978846
      %v1227 = vmul.f32 %v1195, 0.7978846
      %v1228 = vmul.f32 %v1196, 0.7978846
      %v1229 = vmul.f32 %v1197, 0.7978846
      %v1230 = vmul.f32 %v1198, 0.7978846
      %v1231 = vmul.f32 %v1199, 0.7978846
      %v1232 = vmul.f32 %v1200, 0.7978846
      %v1233 = vmul.f32 %v1201, 0.7978846
      %v1234 = vmul.f32 %v1202, 0.7978846
      %v1235 = vmul.f32 %v1203, 0.7978846
      %v1236 = vmul.f32 %v1204, 0.7978846
      %v1237 = vmul.f32 %v1205, 0.7978846
      %v1238 = vmul.f32 %v1206, 0.7978846
      %v1239 = vmul.f32 %v1207, 0.7978846
      %v1240 = vmul.f32 %v1208, 0.7978846
      %v1241 = vmul.f32 %v1209, 0.7978846
      %v1242 = vmul.f32 %v1210, 0.7978846
      %v1243 = vmul.f32 %v1211, 0.7978846
      %v1244 = vmul.f32 %v1212, 0.7978846
      %v1245 = vmul.f32 %v1213, 0.7978846
      %v1246 = vmul.f32 %v1214, 0.7978846
      %v1247 = vmul.f32 %v1215, 0.7978846
      %v1248 = vtanh.pop %v1216
      %v1249 = vtanh.pop %v1217
      %v1250 = vtanh.pop %v1218
      %v1251 = vtanh.pop %v1219
      %v1252 = vtanh.pop %v1220
      %v1253 = vtanh.pop %v1221
      %v1254 = vtanh.pop %v1222
      %v1255 = vtanh.pop %v1223
      %v1256 = vtanh.pop %v1224
      %v1257 = vtanh.pop %v1225
      %v1258 = vtanh.pop %v1226
      %v1259 = vtanh.pop %v1227
      %v1260 = vtanh.pop %v1228
      %v1261 = vtanh.pop %v1229
      %v1262 = vtanh.pop %v1230
      %v1263 = vtanh.pop %v1231
      %v1264 = vtanh.pop %v1232
      %v1265 = vtanh.pop %v1233
      %v1266 = vtanh.pop %v1234
      %v1267 = vtanh.pop %v1235
      %v1268 = vtanh.pop %v1236
      %v1269 = vtanh.pop %v1237
      %v1270 = vtanh.pop %v1238
      %v1271 = vtanh.pop %v1239
      %v1272 = vtanh.pop %v1240
      %v1273 = vtanh.pop %v1241
      %v1274 = vtanh.pop %v1242
      %v1275 = vtanh.pop %v1243
      %v1276 = vtanh.pop %v1244
      %v1277 = vtanh.pop %v1245
      %v1278 = vtanh.pop %v1246
      %v1279 = vtanh.pop %v1247
      %v1280 = vadd.f32 %v1248, 1.0
      %v1281 = vadd.f32 %v1249, 1.0
      %v1282 = vadd.f32 %v1250, 1.0
      %v1283 = vadd.f32 %v1251, 1.0
      %v1284 = vadd.f32 %v1252, 1.0
      %v1285 = vadd.f32 %v1253, 1.0
      %v1286 = vadd.f32 %v1254, 1.0
      %v1287 = vadd.f32 %v1255, 1.0
      %v1288 = vadd.f32 %v1256, 1.0
      %v1289 = vadd.f32 %v1257, 1.0
      %v1290 = vadd.f32 %v1258, 1.0
      %v1291 = vadd.f32 %v1259, 1.0
      %v1292 = vadd.f32 %v1260, 1.0
      %v1293 = vadd.f32 %v1261, 1.0
      %v1294 = vadd.f32 %v1262, 1.0
      %v1295 = vadd.f32 %v1263, 1.0
      %v1296 = vadd.f32 %v1264, 1.0
      %v1297 = vadd.f32 %v1265, 1.0
      %v1298 = vadd.f32 %v1266, 1.0
      %v1299 = vadd.f32 %v1267, 1.0
      %v1300 = vadd.f32 %v1268, 1.0
      %v1301 = vadd.f32 %v1269, 1.0
      %v1302 = vadd.f32 %v1270, 1.0
      %v1303 = vadd.f32 %v1271, 1.0
      %v1304 = vadd.f32 %v1272, 1.0
      %v1305 = vadd.f32 %v1273, 1.0
      %v1306 = vadd.f32 %v1274, 1.0
      %v1307 = vadd.f32 %v1275, 1.0
      %v1308 = vadd.f32 %v1276, 1.0
      %v1309 = vadd.f32 %v1277, 1.0
      %v1310 = vadd.f32 %v1278, 1.0
      %v1311 = vadd.f32 %v1279, 1.0
      %v1312 = vmul.f32 %v1056, %v1280
      %v1313 = vmul.f32 %v1057, %v1281
      %v1314 = vmul.f32 %v1058, %v1282
      %v1315 = vmul.f32 %v1059, %v1283
      %v1316 = vmul.f32 %v1060, %v1284
      %v1317 = vmul.f32 %v1061, %v1285
      %v1318 = vmul.f32 %v1062, %v1286
      %v1319 = vmul.f32 %v1063, %v1287
      %v1320 = vmul.f32 %v1064, %v1288
      %v1321 = vmul.f32 %v1065, %v1289
      %v1322 = vmul.f32 %v1066, %v1290
      %v1323 = vmul.f32 %v1067, %v1291
      %v1324 = vmul.f32 %v1068, %v1292
      %v1325 = vmul.f32 %v1069, %v1293
      %v1326 = vmul.f32 %v1070, %v1294
      %v1327 = vmul.f32 %v1071, %v1295
      %v1328 = vmul.f32 %v1072, %v1296
      %v1329 = vmul.f32 %v1073, %v1297
      %v1330 = vmul.f32 %v1074, %v1298
      %v1331 = vmul.f32 %v1075, %v1299
      %v1332 = vmul.f32 %v1076, %v1300
      %v1333 = vmul.f32 %v1077, %v1301
      %v1334 = vmul.f32 %v1078, %v1302
      %v1335 = vmul.f32 %v1079, %v1303
      %v1336 = vmul.f32 %v1080, %v1304
      %v1337 = vmul.f32 %v1081, %v1305
      %v1338 = vmul.f32 %v1082, %v1306
      %v1339 = vmul.f32 %v1083, %v1307
      %v1340 = vmul.f32 %v1084, %v1308
      %v1341 = vmul.f32 %v1085, %v1309
      %v1342 = vmul.f32 %v1086, %v1310
      %v1343 = vmul.f32 %v1087, %v1311
      %1344 = vst [vmem:[%s277] sm:$0xff] %v1312
      %1345 = vst [vmem:[%s277 + $0x8] sm:$0xff] %v1313
      %1346 = vst [vmem:[%s277 + $0x10] sm:$0xff] %v1314
      %1347 = vst [vmem:[%s277 + $0x18] sm:$0xff] %v1315
      %1348 = vst [vmem:[%s277 + $0x20] sm:$0xff] %v1316
      %1349 = vst [vmem:[%s277 + $0x28] sm:$0xff] %v1317
      %1350 = vst [vmem:[%s277 + $0x30] sm:$0xff] %v1318
      %1351 = vst [vmem:[%s277 + $0x38] sm:$0xff] %v1319
      %1352 = vst [vmem:[%s277 + $0x40] sm:$0xff] %v1320
      %1353 = vst [vmem:[%s277 + $0x48] sm:$0xff] %v1321
      %1354 = vst [vmem:[%s277 + $0x50] sm:$0xff] %v1322
      %1355 = vst [vmem:[%s277 + $0x58] sm:$0xff] %v1323
      %1356 = vst [vmem:[%s277 + $0x60] sm:$0xff] %v1324
      %1357 = vst [vmem:[%s277 + $0x68] sm:$0xff] %v1325
      %1358 = vst [vmem:[%s277 + $0x70] sm:$0xff] %v1326
      %1359 = vst [vmem:[%s277 + $0x78] sm:$0xff] %v1327
      %1360 = vst [vmem:[%s277 + $0x80] sm:$0xff] %v1328
      %1361 = vst [vmem:[%s277 + $0x88] sm:$0xff] %v1329
      %1362 = vst [vmem:[%s277 + $0x90] sm:$0xff] %v1330
      %1363 = vst [vmem:[%s277 + $0x98] sm:$0xff] %v1331
      %1364 = vst [vmem:[%s277 + $0xa0] sm:$0xff] %v1332
      %1365 = vst [vmem:[%s277 + $0xa8] sm:$0xff] %v1333
      %1366 = vst [vmem:[%s277 + $0xb0] sm:$0xff] %v1334
      %1367 = vst [vmem:[%s277 + $0xb8] sm:$0xff] %v1335
      %1368 = vst [vmem:[%s277 + $0xc0] sm:$0xff] %v1336
      %1369 = vst [vmem:[%s277 + $0xc8] sm:$0xff] %v1337
      %1370 = vst [vmem:[%s277 + $0xd0] sm:$0xff] %v1338
      %1371 = vst [vmem:[%s277 + $0xd8] sm:$0xff] %v1339
      %1372 = vst [vmem:[%s277 + $0xe0] sm:$0xff] %v1340
      %1373 = vst [vmem:[%s277 + $0xe8] sm:$0xff] %v1341
      %1374 = vst [vmem:[%s277 + $0xf0] sm:$0xff] %v1342
      %1375 = vst [vmem:[%s277 + $0xf8] sm:$0xff] %v1343
      %s1376 = smul.u32 32, %s20
      %p1377 = scmp.lt.s32.totalorder %s1376, 63
      %s1378 = scalar_select %p1377, %s1376, 63
      %p1379 = scmp.lt.s32.totalorder %s21, 0
      %s1380 = scalar_select %p1379, %s21, 0
      %s1381 = sadd.s32 %s1380, %s1378
      %s1382 = smul.addr %s1381, 8
      %s1383 = scalar_lea.vmem %s5, %s1382
      // Predicated region
      $region41: #{block_forward.12} parent=39 // pred_check
        %p1384 = pneg %p168
      $region42: #{block_forward.12} parent=39 // pred_check_branch
        %1386 = sbr.rel (%p1384) target = $region44
      $region43: #{block_forward.12} parent=39 // pred_region
        %s1387 = smul.u32 32, %s20
      $region44: #{block_forward.12} parent=39 // pred_fallthru
        _
    $region40: #{block_forward.12} parent=5 // pred_fallthru
      _
    %p1388 = scmp.le.s32.totalorder 2, %s11
    // Predicated region
    $region45: #{block_forward.12} parent=5 // pred_check
      %p1389 = pneg %p1388
    $region46: #{block_forward.12} parent=5 // pred_check_branch
      %1391 = sbr.rel (%p1389) target = $region48
    $region47: #{block_forward.12} parent=5 // pred_region
      %s1392 = ssub.s32 %s11, 2
      // Predicated region
      $region49: #{block_forward.12} parent=47 // pred_check
        %p1393 = pneg %p174
      $region50: #{block_forward.12} parent=47 // pred_check_branch
        %1395 = sbr.rel (%p1393) target = $region52
      $region51: #{block_forward.12} parent=47 // pred_region
        %s1396 = smul.u32 32, %s22
        %p1397 = scmp.lt.s32.totalorder %s1396, 63
        %s1398 = scalar_select %p1397, %s1396, 63
        %p1399 = scmp.lt.s32.totalorder %s23, 0
        %s1400 = scalar_select %p1399, %s23, 0
        %s1401 = sadd.s32 %s1400, %s1398
        %s1402 = smul.addr %s1401, 8
        %s1403 = scalar_lea.vmem %s5, %s1402
      $region52: #{block_forward.12} parent=47 // pred_fallthru
        _
    $region48: #{block_forward.12} parent=5 // pred_fallthru
      _
  $region6: #{block_forward.12} parent=0 // loop_footer
    %s15 = sadd.s32 1, %s11
  $region7: #{block_forward.12} parent=0 // loop_footer_branch
    %10 = sbr.rel target = $region3
  $region8: #{block_forward.12} parent=0 // loop_exit
    _

// kernel: block_forward.13
$region0: #{block_forward.13}
  #allocation0 [shape = 'u32[]', space=smem, size = 0x4, offset = 0x4, fixed_abs, tag = 'smem constant byte address 0x4 - core index']
  #allocation1 [shape = 'u32[144,128]{1,0:T(1,128)}', space=vmem, size = 0x12000, scoped, tag = 'internal scratch']
  #allocation2 [shape = 'f32[256,32]{1,0:T(8,128)}', space=vmem, size = 0x20000, scoped, tag = 'scratch operand']
  %s0 = inlined_call_operand.vmem [shape: f32[512,128], index: 0, kind: input, shape index: {}]
  %s1 = inlined_call_operand.vmem [shape: bf16[128,32], index: 1, kind: input, shape index: {}]
  %s2 = inlined_call_operand.vmem [shape: f32[1,32], index: 2, kind: input, shape index: {}]
  %s3 = inlined_call_operand.vmem [shape: f32[512,32], index: 3, kind: input, shape index: {}]
  %s4 = inlined_call_operand.hbm [shape: f32[512,32], index: 4, kind: output, shape index: {}]
  %s5 = sld [smem:[#allocation0]]
  $region57: #{block_forward.13} parent=0
    _
  %s7 = ssub.s32 1, %s5
  %s8 = scalar_select 0, %s7, %s5
  $region1: #{block_forward.13} parent=0
    #allocation3 [shape = 'u8[262144]{0}', space=vmem, size = 0x40000, scoped, tag = 'output window, operand 0']
    #allocation4 [shape = 's32[2]{0}', space=sflag, size = 0x8, scoped, tag = 'scoped memory for block_forward.13']
    %9 = vsyncpa [#allocation4], 0
    %s10 = scalar_lea.sflag [#allocation4], 1
    %11 = vsyncpa %s10, 0
    loop: start=0, step=1, limit=4
    $region2: #{block_forward.13} parent=1 // loop_pre_header
      _
    $region3: #{block_forward.13} parent=1 // loop_header
      %s13 = sphi 0, %s17
      %p14 = scmp.ge.s32.totalorder %s13, 4
      %s20 = sphi 0, %s39
      %s21 = sphi 0, %s35
      %s22 = sphi 0, %s31
      %s23 = sphi 0, %s20
      %s24 = sphi 0, %s21
      %s25 = sphi 0, %s22
      %s26 = sphi 0, %s23
      %s27 = sphi 0, %s24
      %s28 = sphi 0, %s25
      %s44 = sphi 0, %s46
      %s47 = sphi 0, %s44
      %s48 = sphi 0, %s47
      %s64 = sphi 0, %s48
      %s72 = sphi 0, %s74
      %s75 = sphi 0, %s72
      %s76 = sphi 0, %s75
      %s92 = sphi 0, %s76
      %s98 = sphi 0, %s100
      %s101 = sphi 0, %s98
      %s102 = sphi 0, %s101
      %s118 = sphi 0, %s102
      %s126 = sphi 0, %s128
      %s129 = sphi 0, %s126
      %s130 = sphi 0, %s129
      %s146 = sphi 0, %s130
      %s154 = sphi 0, %s156
      %s157 = sphi 0, %s154
      %s158 = sphi 0, %s157
      %s174 = sphi 0, %s158
    $region4: #{block_forward.13} parent=1 // loop_header_branch
      %16 = sbr.rel (%p14) target = $region8
    $region5: #{block_forward.13} parent=1 // loop_body
      %s18 = ssub.s32 %s13, 1
      %s19 = ssub.s32 %s13, 2
      %s29 = sadd.s32 1, %s22
      %p30 = scmp.ge.s32.totalorder %s29, 1
      %s31 = scalar_select %p30, 0, %s29
      %s32 = sadd.s32 1, %s21
      %s33 = scalar_select %p30, %s32, %s21
      %p34 = scmp.ge.s32.totalorder %s33, 1
      %s35 = scalar_select %p34, 0, %s33
      %s36 = sadd.s32 1, %s20
      %s37 = scalar_select %p34, %s36, %s20
      %p38 = scmp.ge.s32.totalorder %s37, 2
      %s39 = scalar_select %p38, 0, %s37
      %s40 = ssub.s32 %s20, %s39
      %s41 = ssub.s32 %s22, %s31
      %s42 = sor.u32 %s40, %s41
      %p43 = scmp.eq.s32.totalorder %s42, 0
      %s45 = sadd.s32 %s44, 1
      %s46 = scalar_select %p43, %s44, %s45
      %p49 = pneg %p43
      %p50 = scmp.eq.s32.totalorder %s13, 1
      %p51 = por %p49, %p50
      %p52 = scmp.ne.s32.totalorder %s44, %s47
      %p53 = scmp.eq.s32.totalorder %s13, 0
      %p54 = por %p52, %p53
      %p55 = scmp.ne.s32.totalorder %s44, %s47
      %p56 = scmp.eq.s32.totalorder %s18, 1
      %p57 = por %p55, %p56
      %p58 = scmp.ne.s32.totalorder %s47, %s48
      %p59 = scmp.eq.s32.totalorder %s18, 0
      %p60 = por %p58, %p59
      %p61 = scmp.ne.s32.totalorder %s47, %s48
      %p62 = scmp.eq.s32.totalorder %s19, 1
      %p63 = por %p61, %p62
      %p65 = scmp.ne.s32.totalorder %s48, %s64
      %p66 = scmp.eq.s32.totalorder %s19, 0
      %p67 = por %p65, %p66
      %s68 = ssub.s32 %s22, %s31
      %s69 = ssub.s32 %s21, %s35
      %s70 = sor.u32 %s68, %s69
      %p71 = scmp.eq.s32.totalorder %s70, 0
      %s73 = sadd.s32 %s72, 1
      %s74 = scalar_select %p71, %s72, %s73
      %p77 = pneg %p71
      %p78 = scmp.eq.s32.totalorder %s13, 1
      %p79 = por %p77, %p78
      %p80 = scmp.ne.s32.totalorder %s72, %s75
      %p81 = scmp.eq.s32.totalorder %s13, 0
      %p82 = por %p80, %p81
      %p83 = scmp.ne.s32.totalorder %s72, %s75
      %p84 = scmp.eq.s32.totalorder %s18, 1
      %p85 = por %p83, %p84
      %p86 = scmp.ne.s32.totalorder %s75, %s76
      %p87 = scmp.eq.s32.totalorder %s18, 0
      %p88 = por %p86, %p87
      %p89 = scmp.ne.s32.totalorder %s75, %s76
      %p90 = scmp.eq.s32.totalorder %s19, 1
      %p91 = por %p89, %p90
      %p93 = scmp.ne.s32.totalorder %s76, %s92
      %p94 = scmp.eq.s32.totalorder %s19, 0
      %p95 = por %p93, %p94
      %s96 = ssub.s32 %s21, %s35
      %p97 = scmp.eq.s32.totalorder %s96, 0
      %s99 = sadd.s32 %s98, 1
      %s100 = scalar_select %p97, %s98, %s99
      %p103 = pneg %p97
      %p104 = scmp.eq.s32.totalorder %s13, 1
      %p105 = por %p103, %p104
      %p106 = scmp.ne.s32.totalorder %s98, %s101
      %p107 = scmp.eq.s32.totalorder %s13, 0
      %p108 = por %p106, %p107
      %p109 = scmp.ne.s32.totalorder %s98, %s101
      %p110 = scmp.eq.s32.totalorder %s18, 1
      %p111 = por %p109, %p110
      %p112 = scmp.ne.s32.totalorder %s101, %s102
      %p113 = scmp.eq.s32.totalorder %s18, 0
      %p114 = por %p112, %p113
      %p115 = scmp.ne.s32.totalorder %s101, %s102
      %p116 = scmp.eq.s32.totalorder %s19, 1
      %p117 = por %p115, %p116
      %p119 = scmp.ne.s32.totalorder %s102, %s118
      %p120 = scmp.eq.s32.totalorder %s19, 0
      %p121 = por %p119, %p120
      %s122 = ssub.s32 %s20, %s39
      %s123 = ssub.s32 %s21, %s35
      %s124 = sor.u32 %s122, %s123
      %p125 = scmp.eq.s32.totalorder %s124, 0
      %s127 = sadd.s32 %s126, 1
      %s128 = scalar_select %p125, %s126, %s127
      %p131 = pneg %p125
      %p132 = scmp.eq.s32.totalorder %s13, 1
      %p133 = por %p131, %p132
      %p134 = scmp.ne.s32.totalorder %s126, %s129
      %p135 = scmp.eq.s32.totalorder %s13, 0
      %p136 = por %p134, %p135
      %p137 = scmp.ne.s32.totalorder %s126, %s129
      %p138 = scmp.eq.s32.totalorder %s18, 1
      %p139 = por %p137, %p138
      %p140 = scmp.ne.s32.totalorder %s129, %s130
      %p141 = scmp.eq.s32.totalorder %s18, 0
      %p142 = por %p140, %p141
      %p143 = scmp.ne.s32.totalorder %s129, %s130
      %p144 = scmp.eq.s32.totalorder %s19, 1
      %p145 = por %p143, %p144
      %p147 = scmp.ne.s32.totalorder %s130, %s146
      %p148 = scmp.eq.s32.totalorder %s19, 0
      %p149 = por %p147, %p148
      %s150 = ssub.s32 %s20, %s39
      %s151 = ssub.s32 %s21, %s35
      %s152 = sor.u32 %s150, %s151
      %p153 = scmp.eq.s32.totalorder %s152, 0
      %s155 = sadd.s32 %s154, 1
      %s156 = scalar_select %p153, %s154, %s155
      %p159 = pneg %p153
      %p160 = scmp.eq.s32.totalorder %s13, 1
      %p161 = por %p159, %p160
      %p162 = scmp.ne.s32.totalorder %s154, %s157
      %p163 = scmp.eq.s32.totalorder %s13, 0
      %p164 = por %p162, %p163
      %p165 = scmp.ne.s32.totalorder %s154, %s157
      %p166 = scmp.eq.s32.totalorder %s18, 1
      %p167 = por %p165, %p166
      %p168 = scmp.ne.s32.totalorder %s157, %s158
      %p169 = scmp.eq.s32.totalorder %s18, 0
      %p170 = por %p168, %p169
      %p171 = scmp.ne.s32.totalorder %s157, %s158
      %p172 = scmp.eq.s32.totalorder %s19, 1
      %p173 = por %p171, %p172
      %p175 = scmp.ne.s32.totalorder %s158, %s174
      %p176 = scmp.eq.s32.totalorder %s19, 0
      %p177 = por %p175, %p176
      %p178 = scmp.le.s32.totalorder 1, %s13
      %p179 = scmp.lt.s32.totalorder %s13, 3
      %p180 = pnand %p178, %p179
      %p181 = pneg %p180
      // Predicated region
      $region9: #{block_forward.13} parent=5 // pred_check
        _
      $region10: #{block_forward.13} parent=5 // pred_check_branch
        %183 = sbr.rel (%p180) target = $region12
      $region11: #{block_forward.13} parent=5 // pred_region
        %s184 = ssub.s32 %s13, 1
        // Predicated region
        $region13: #{block_forward.13} parent=11 // pred_check
          %p185 = pneg %p88
        $region14: #{block_forward.13} parent=11 // pred_check_branch
          %187 = sbr.rel (%p185) target = $region16
        $region15: #{block_forward.13} parent=11 // pred_region
          %s188 = smul.u32 16, %s25
          %p189 = scmp.lt.s32.totalorder %s188, 15
          %s190 = scalar_select %p189, %s188, 15
          %p191 = scmp.lt.s32.totalorder %s24, 0
          %s192 = scalar_select %p191, %s24, 0
          %s193 = sadd.s32 %s192, %s190
          %s194 = smul.addr %s193, 4
          %s195 = scalar_lea.vmem %s1, %s194
          %s196 = smul.u32 16, %s25
        $region16: #{block_forward.13} parent=11 // pred_fallthru
          _
        // Predicated region
        $region17: #{block_forward.13} parent=11 // pred_check
          %p197 = pneg %p114
        $region18: #{block_forward.13} parent=11 // pred_check_branch
          %199 = sbr.rel (%p197) target = $region20
        $region19: #{block_forward.13} parent=11 // pred_region
          %p200 = scmp.lt.s32.totalorder %s24, 0
          %s201 = scalar_select %p200, %s24, 0
          %s202 = scalar_lea.vmem %s2, %s201
        $region20: #{block_forward.13} parent=11 // pred_fallthru
          _
      $region12: #{block_forward.13} parent=5 // pred_fallthru
        _
      %p203 = scmp.lt.s32.totalorder %s13, 2
      // Predicated region
      $region21: #{block_forward.13} parent=5 // pred_check
        %p204 = pneg %p203
      $region22: #{block_forward.13} parent=5 // pred_check_branch
        %206 = sbr.rel (%p204) target = $region24
      $region23: #{block_forward.13} parent=5 // pred_region
        // Predicated region
        $region25: #{block_forward.13} parent=23 // pred_check
          %p207 = pneg %p54
        $region26: #{block_forward.13} parent=23 // pred_check_branch
          %209 = sbr.rel (%p207) target = $region28
        $region27: #{block_forward.13} parent=23 // pred_region
          %s210 = smul.u32 32, %s20
          %p211 = scmp.lt.s32.totalorder %s210, 63
          %s212 = scalar_select %p211, %s210, 63
          %p213 = scmp.lt.s32.totalorder %s22, 0
          %s214 = scalar_select %p213, %s22, 0
          %s215 = sadd.s32 %s214, %s212
          %s216 = smul.addr %s215, 8
          %s217 = scalar_lea.vmem %s0, %s216
          %s218 = smul.u32 32, %s20
        $region28: #{block_forward.13} parent=23 // pred_fallthru
          _
        // Predicated region
        $region29: #{block_forward.13} parent=23 // pred_check
          %p219 = pneg %p136
        $region30: #{block_forward.13} parent=23 // pred_check_branch
          %221 = sbr.rel (%p219) target = $region32
        $region31: #{block_forward.13} parent=23 // pred_region
          %s222 = smul.u32 32, %s20
          %p223 = scmp.lt.s32.totalorder %s222, 63
          %s224 = scalar_select %p223, %s222, 63
          %p225 = scmp.lt.s32.totalorder %s21, 0
          %s226 = scalar_select %p225, %s21, 0
          %s227 = sadd.s32 %s226, %s224
          %s228 = smul.addr %s227, 8
          %s229 = scalar_lea.vmem %s3, %s228
          %s230 = smul.u32 32, %s20
        $region32: #{block_forward.13} parent=23 // pred_fallthru
          _
      $region24: #{block_forward.13} parent=5 // pred_fallthru
        _
      %p231 = scmp.le.s32.totalorder 1, %s13
      %p232 = scmp.lt.s32.totalorder %s13, 3
      %p233 = pnand %p231, %p232
      %p234 = pneg %p233
      // Predicated region
      $region33: #{block_forward.13} parent=5 // pred_check
        _
      $region34: #{block_forward.13} parent=5 // pred_check_branch
        %236 = sbr.rel (%p233) target = $region36
      $region35: #{block_forward.13} parent=5 // pred_region
        %s237 = ssub.s32 %s13, 1
        %s238 = smul.u32 32, %s23
        %p239 = scmp.lt.s32.totalorder %s238, 63
        %s240 = scalar_select %p239, %s238, 63
        %p241 = scmp.lt.s32.totalorder %s25, 0
        %s242 = scalar_select %p241, %s25, 0
        %s243 = sadd.s32 %s242, %s240
        %s244 = smul.addr %s243, 8
        %s245 = scalar_lea.vmem %s0, %s244
        %p246 = pneg %p60
        %p247 = pneg %p57
        %s248 = smul.u32 16, %s25
        %p249 = scmp.lt.s32.totalorder %s248, 15
        %s250 = scalar_select %p249, %s248, 15
        %p251 = scmp.lt.s32.totalorder %s24, 0
        %s252 = scalar_select %p251, %s24, 0
        %s253 = sadd.s32 %s252, %s250
        %s254 = smul.addr %s253, 4
        %s255 = scalar_lea.vmem %s1, %s254
        %p256 = pneg %p88
        %p257 = pneg %p85
        %p258 = scmp.lt.s32.totalorder %s24, 0
        %s259 = scalar_select %p258, %s24, 0
        %s260 = scalar_lea.vmem %s2, %s259
        %p261 = pneg %p114
        %p262 = pneg %p111
        %s263 = smul.u32 32, %s23
        %p264 = scmp.lt.s32.totalorder %s263, 63
        %s265 = scalar_select %p264, %s263, 63
        %p266 = scmp.lt.s32.totalorder %s24, 0
        %s267 = scalar_select %p266, %s24, 0
        %s268 = sadd.s32 %s267, %s265
        %s269 = smul.addr %s268, 8
        %s270 = scalar_lea.vmem %s3, %s269
        %p271 = pneg %p142
        %p272 = pneg %p139
        %p273 = pneg %p170
        %p274 = pneg %p167
        %s275 = sand.u32 %s157, 1
        %s276 = scalar_lea.sflag [#allocation4], %s275
        %s277 = sand.u32 %s157, 1
        %s278 = smul.addr %s277, 256
        %s279 = scalar_lea.vmem [#allocation3], %s278
        %s280 = smul.u32 32, %s23
        %p281 = scmp.lt.s32.totalorder %s280, 63
        %s282 = scalar_select %p281, %s280, 63
        %p283 = scmp.lt.s32.totalorder %s25, 0
        %s284 = scalar_select %p283, %s25, 0
        %s285 = sadd.s32 %s284, %s282
        %s286 = smul.addr %s285, 8
        %s287 = scalar_lea.vmem %s0, %s286
        %s288 = smul.u32 32, %s23
        %s289 = smul.u32 16, %s25
        %p290 = scmp.lt.s32.totalorder %s289, 15
        %s291 = scalar_select %p290, %s289, 15
        %p292 = scmp.lt.s32.totalorder %s24, 0
        %s293 = scalar_select %p292, %s24, 0
        %s294 = sadd.s32 %s293, %s291
        %s295 = smul.addr %s294, 4
        %s296 = scalar_lea.vmem %s1, %s295
        %s297 = smul.u32 16, %s25
        %p298 = scmp.lt.s32.totalorder %s24, 0
        %s299 = scalar_select %p298, %s24, 0
        %s300 = scalar_lea.vmem %s2, %s299
        %s301 = smul.u32 32, %s23
        %p302 = scmp.lt.s32.totalorder %s301, 63
        %s303 = scalar_select %p302, %s301, 63
        %p304 = scmp.lt.s32.totalorder %s24, 0
        %s305 = scalar_select %p304, %s24, 0
        %s306 = sadd.s32 %s305, %s303
        %s307 = smul.addr %s306, 8
        %s308 = scalar_lea.vmem %s3, %s307
        %s309 = smul.u32 32, %s23
        %s310 = smul.u32 32, %s23
        %p312 = scmp.eq.s32.totalorder %s25, 0
        // Predicated region
        $region37: #{block_forward.13} parent=35 // pred_check
          %p313 = pneg %p312
        $region38: #{block_forward.13} parent=35 // pred_check_branch
          %315 = sbr.rel (%p313) target = $region40
        $region39: #{block_forward.13} parent=35 // pred_region
          %vm316 = vcmask 261120
          %317 = vst.msk [vmem:[#allocation2] sm:$0xff] %vm316, 0.0
          %318 = vst.msk [vmem:[#allocation2 + $0x8] sm:$0xff] %vm316, 0.0
          %319 = vst.msk [vmem:[#allocation2 + $0x10] sm:$0xff] %vm316, 0.0
          %320 = vst.msk [vmem:[#allocation2 + $0x18] sm:$0xff] %vm316, 0.0
          %321 = vst.msk [vmem:[#allocation2 + $0x20] sm:$0xff] %vm316, 0.0
          %322 = vst.msk [vmem:[#allocation2 + $0x28] sm:$0xff] %vm316, 0.0
          %323 = vst.msk [vmem:[#allocation2 + $0x30] sm:$0xff] %vm316, 0.0
          %324 = vst.msk [vmem:[#allocation2 + $0x38] sm:$0xff] %vm316, 0.0
          %325 = vst.msk [vmem:[#allocation2 + $0x40] sm:$0xff] %vm316, 0.0
          %326 = vst.msk [vmem:[#allocation2 + $0x48] sm:$0xff] %vm316, 0.0
          %327 = vst.msk [vmem:[#allocation2 + $0x50] sm:$0xff] %vm316, 0.0
          %328 = vst.msk [vmem:[#allocation2 + $0x58] sm:$0xff] %vm316, 0.0
          %329 = vst.msk [vmem:[#allocation2 + $0x60] sm:$0xff] %vm316, 0.0
          %330 = vst.msk [vmem:[#allocation2 + $0x68] sm:$0xff] %vm316, 0.0
          %331 = vst.msk [vmem:[#allocation2 + $0x70] sm:$0xff] %vm316, 0.0
          %332 = vst.msk [vmem:[#allocation2 + $0x78] sm:$0xff] %vm316, 0.0
          %333 = vst.msk [vmem:[#allocation2 + $0x80] sm:$0xff] %vm316, 0.0
          %334 = vst.msk [vmem:[#allocation2 + $0x88] sm:$0xff] %vm316, 0.0
          %335 = vst.msk [vmem:[#allocation2 + $0x90] sm:$0xff] %vm316, 0.0
          %336 = vst.msk [vmem:[#allocation2 + $0x98] sm:$0xff] %vm316, 0.0
          %337 = vst.msk [vmem:[#allocation2 + $0xa0] sm:$0xff] %vm316, 0.0
          %338 = vst.msk [vmem:[#allocation2 + $0xa8] sm:$0xff] %vm316, 0.0
          %339 = vst.msk [vmem:[#allocation2 + $0xb0] sm:$0xff] %vm316, 0.0
          %340 = vst.msk [vmem:[#allocation2 + $0xb8] sm:$0xff] %vm316, 0.0
          %341 = vst.msk [vmem:[#allocation2 + $0xc0] sm:$0xff] %vm316, 0.0
          %342 = vst.msk [vmem:[#allocation2 + $0xc8] sm:$0xff] %vm316, 0.0
          %343 = vst.msk [vmem:[#allocation2 + $0xd0] sm:$0xff] %vm316, 0.0
          %344 = vst.msk [vmem:[#allocation2 + $0xd8] sm:$0xff] %vm316, 0.0
          %345 = vst.msk [vmem:[#allocation2 + $0xe0] sm:$0xff] %vm316, 0.0
          %346 = vst.msk [vmem:[#allocation2 + $0xe8] sm:$0xff] %vm316, 0.0
          %347 = vst.msk [vmem:[#allocation2 + $0xf0] sm:$0xff] %vm316, 0.0
          %348 = vst.msk [vmem:[#allocation2 + $0xf8] sm:$0xff] %vm316, 0.0
        $region40: #{block_forward.13} parent=35 // pred_fallthru
          _
        %v349 = vld [vmem:[#allocation2] sm:$0xff]
        %v350 = vld [vmem:[#allocation2 + $0x8] sm:$0xff]
        %v351 = vld [vmem:[#allocation2 + $0x10] sm:$0xff]
        %v352 = vld [vmem:[#allocation2 + $0x18] sm:$0xff]
        %v353 = vld [vmem:[#allocation2 + $0x20] sm:$0xff]
        %v354 = vld [vmem:[#allocation2 + $0x28] sm:$0xff]
        %v355 = vld [vmem:[#allocation2 + $0x30] sm:$0xff]
        %v356 = vld [vmem:[#allocation2 + $0x38] sm:$0xff]
        %v357 = vld [vmem:[#allocation2 + $0x40] sm:$0xff]
        %v358 = vld [vmem:[#allocation2 + $0x48] sm:$0xff]
        %v359 = vld [vmem:[#allocation2 + $0x50] sm:$0xff]
        %v360 = vld [vmem:[#allocation2 + $0x58] sm:$0xff]
        %v361 = vld [vmem:[#allocation2 + $0x60] sm:$0xff]
        %v362 = vld [vmem:[#allocation2 + $0x68] sm:$0xff]
        %v363 = vld [vmem:[#allocation2 + $0x70] sm:$0xff]
        %v364 = vld [vmem:[#allocation2 + $0x78] sm:$0xff]
        %v365 = vld [vmem:[#allocation2 + $0x80] sm:$0xff]
        %v366 = vld [vmem:[#allocation2 + $0x88] sm:$0xff]
        %v367 = vld [vmem:[#allocation2 + $0x90] sm:$0xff]
        %v368 = vld [vmem:[#allocation2 + $0x98] sm:$0xff]
        %v369 = vld [vmem:[#allocation2 + $0xa0] sm:$0xff]
        %v370 = vld [vmem:[#allocation2 + $0xa8] sm:$0xff]
        %v371 = vld [vmem:[#allocation2 + $0xb0] sm:$0xff]
        %v372 = vld [vmem:[#allocation2 + $0xb8] sm:$0xff]
        %v373 = vld [vmem:[#allocation2 + $0xc0] sm:$0xff]
        %v374 = vld [vmem:[#allocation2 + $0xc8] sm:$0xff]
        %v375 = vld [vmem:[#allocation2 + $0xd0] sm:$0xff]
        %v376 = vld [vmem:[#allocation2 + $0xd8] sm:$0xff]
        %v377 = vld [vmem:[#allocation2 + $0xe0] sm:$0xff]
        %v378 = vld [vmem:[#allocation2 + $0xe8] sm:$0xff]
        %v379 = vld [vmem:[#allocation2 + $0xf0] sm:$0xff]
        %v380 = vld [vmem:[#allocation2 + $0xf8] sm:$0xff]
        %v381 = vld [vmem:[%s287] sm:$0xff]
        %v382 = vld [vmem:[%s287 + $0x8] sm:$0xff]
        %v383 = vld [vmem:[%s287 + $0x10] sm:$0xff]
        %v384 = vld [vmem:[%s287 + $0x18] sm:$0xff]
        %v385 = vld [vmem:[%s287 + $0x20] sm:$0xff]
        %v386 = vld [vmem:[%s287 + $0x28] sm:$0xff]
        %v387 = vld [vmem:[%s287 + $0x30] sm:$0xff]
        %v388 = vld [vmem:[%s287 + $0x38] sm:$0xff]
        %v389 = vld [vmem:[%s287 + $0x40] sm:$0xff]
        %v390 = vld [vmem:[%s287 + $0x48] sm:$0xff]
        %v391 = vld [vmem:[%s287 + $0x50] sm:$0xff]
        %v392 = vld [vmem:[%s287 + $0x58] sm:$0xff]
        %v393 = vld [vmem:[%s287 + $0x60] sm:$0xff]
        %v394 = vld [vmem:[%s287 + $0x68] sm:$0xff]
        %v395 = vld [vmem:[%s287 + $0x70] sm:$0xff]
        %v396 = vld [vmem:[%s287 + $0x78] sm:$0xff]
        %v397 = vld [vmem:[%s287 + $0x80] sm:$0xff]
        %v398 = vld [vmem:[%s287 + $0x88] sm:$0xff]
        %v399 = vld [vmem:[%s287 + $0x90] sm:$0xff]
        %v400 = vld [vmem:[%s287 + $0x98] sm:$0xff]
        %v401 = vld [vmem:[%s287 + $0xa0] sm:$0xff]
        %v402 = vld [vmem:[%s287 + $0xa8] sm:$0xff]
        %v403 = vld [vmem:[%s287 + $0xb0] sm:$0xff]
        %v404 = vld [vmem:[%s287 + $0xb8] sm:$0xff]
        %v405 = vld [vmem:[%s287 + $0xc0] sm:$0xff]
        %v406 = vld [vmem:[%s287 + $0xc8] sm:$0xff]
        %v407 = vld [vmem:[%s287 + $0xd0] sm:$0xff]
        %v408 = vld [vmem:[%s287 + $0xd8] sm:$0xff]
        %v409 = vld [vmem:[%s287 + $0xe0] sm:$0xff]
        %v410 = vld [vmem:[%s287 + $0xe8] sm:$0xff]
        %v411 = vld [vmem:[%s287 + $0xf0] sm:$0xff]
        %v412 = vld [vmem:[%s287 + $0xf8] sm:$0xff]
        %v413 = vpack.c.bf16 %v382, %v381
        %v414 = vpack.c.bf16 %v384, %v383
        %v415 = vpack.c.bf16 %v386, %v385
        %v416 = vpack.c.bf16 %v388, %v387
        %v417 = vpack.c.bf16 %v390, %v389
        %v418 = vpack.c.bf16 %v392, %v391
        %v419 = vpack.c.bf16 %v394, %v393
        %v420 = vpack.c.bf16 %v396, %v395
        %v421 = vpack.c.bf16 %v398, %v397
        %v422 = vpack.c.bf16 %v400, %v399
        %v423 = vpack.c.bf16 %v402, %v401
        %v424 = vpack.c.bf16 %v404, %v403
        %v425 = vpack.c.bf16 %v406, %v405
        %v426 = vpack.c.bf16 %v408, %v407
        %v427 = vpack.c.bf16 %v410, %v409
        %v428 = vpack.c.bf16 %v412, %v411
        %v429 = vld [vmem:[%s296] sm:$0xf]
        %v430 = vld [vmem:[%s296 + $0x4] sm:$0xf]
        %v431 = vld [vmem:[%s296 + $0x8] sm:$0xf]
        %v432 = vld [vmem:[%s296 + $0xc] sm:$0xf]
        %v433 = vld [vmem:[%s296 + $0x10] sm:$0xf]
        %v434 = vld [vmem:[%s296 + $0x14] sm:$0xf]
        %v435 = vld [vmem:[%s296 + $0x18] sm:$0xf]
        %v436 = vld [vmem:[%s296 + $0x1c] sm:$0xf]
        %v437 = vld [vmem:[%s296 + $0x20] sm:$0xf]
        %v438 = vld [vmem:[%s296 + $0x24] sm:$0xf]
        %v439 = vld [vmem:[%s296 + $0x28] sm:$0xf]
        %v440 = vld [vmem:[%s296 + $0x2c] sm:$0xf]
        %v441 = vld [vmem:[%s296 + $0x30] sm:$0xf]
        %v442 = vld [vmem:[%s296 + $0x34] sm:$0xf]
        %v443 = vld [vmem:[%s296 + $0x38] sm:$0xf]
        %v444 = vld [vmem:[%s296 + $0x3c] sm:$0xf]
        %v461 = vunpack.c.l.b16 %v429
        %v462 = vunpack.c.l.b16 %v430
        %v463 = vunpack.c.l.b16 %v431
        %v464 = vunpack.c.l.b16 %v432
        %v465 = vunpack.c.l.b16 %v433
        %v466 = vunpack.c.l.b16 %v434
        %v467 = vunpack.c.l.b16 %v435
        %v468 = vunpack.c.l.b16 %v436
        %v469 = vunpack.c.l.b16 %v437
        %v470 = vunpack.c.l.b16 %v438
        %v471 = vunpack.c.l.b16 %v439
        %v472 = vunpack.c.l.b16 %v440
        %v473 = vunpack.c.l.b16 %v441
        %v474 = vunpack.c.l.b16 %v442
        %v475 = vunpack.c.l.b16 %v443
        %v476 = vunpack.c.l.b16 %v444
        %v477 = vpack.c.b16 %v462, %v461
        %v478 = vpack.c.b16 %v464, %v463
        %v479 = vpack.c.b16 %v466, %v465
        %v480 = vpack.c.b16 %v468, %v467
        %v481 = vpack.c.b16 %v470, %v469
        %v482 = vpack.c.b16 %v472, %v471
        %v483 = vpack.c.b16 %v474, %v473
        %v484 = vpack.c.b16 %v476, %v475
        %493 = vmatprep.subr.bf16.mxu0 0
        %494 = vmatpush1.bf16.msra.mxu0 %v477
        %495 = vmatprep.subr.bf16.mxu0 0
        %496 = vmatpush1.bf16.msra.mxu0 %v478
        %497 = vmatprep.subr.bf16.mxu0 0
        %498 = vmatpush1.bf16.msra.mxu0 %v479
        %499 = vmatprep.subr.bf16.mxu0 0
        %500 = vmatpush1.bf16.msra.mxu0 %v480
        %501 = vmatprep.subr.bf16.mxu0 0
        %502 = vmatpush1.bf16.msra.mxu0 %v481
        %503 = vmatprep.subr.bf16.mxu0 0
        %504 = vmatpush1.bf16.msra.mxu0 %v482
        %505 = vmatprep.subr.bf16.mxu0 0
        %506 = vmatpush1.bf16.msra.mxu0 %v483
        %507 = vmatprep.subr.bf16.mxu0 0
        %508 = vmatpush1.bf16.msra.mxu0 %v484
        %509 = vmatprep.subr.bf16.mxu0 0
        %510 = vmatpush1.bf16.msra.mxu0 0
        %511 = vmatprep.subr.bf16.mxu0 0
        %512 = vmatpush1.bf16.msra.mxu0 0
        %513 = vmatprep.subr.bf16.mxu0 0
        %514 = vmatpush1.bf16.msra.mxu0 0
        %515 = vmatprep.subr.bf16.mxu0 0
        %516 = vmatpush1.bf16.msra.mxu0 0
        %517 = vmatprep.subr.bf16.mxu0 0
        %518 = vmatpush1.bf16.msra.mxu0 0
        %519 = vmatprep.subr.bf16.mxu0 0
        %520 = vmatpush1.bf16.msra.mxu0 0
        %521 = vmatprep.subr.bf16.mxu0 0
        %522 = vmatpush1.bf16.msra.mxu0 0
        %523 = vmatprep.subr.bf16.mxu0 0
        %524 = vmatpush1.bf16.msra.mxu0 0
        %525 = vmatprep.mubr.bf16.mxu0 0
        %526 = vmatmul.mubr.bf16.gmra.mrb[0].mxu0 %v413
        %v527 = vpop.f32.mrb[0].mxu0
        %v528 = vadd.f32 0.0, %v527
        %v529 = vpop.f32.mrb[0].mxu0
        %v530 = vpop.f32.mrb[0].mxu0
        %v531 = vadd.f32 0.0, %v530
        %v532 = vpop.f32.mrb[0].mxu0
        %533 = vmatprep.mubr.bf16.mxu0 0
        %534 = vmatmul.mubr.bf16.gmra.mrb[0].mxu0 %v414
        %v535 = vpop.f32.mrb[0].mxu0
        %v536 = vadd.f32 0.0, %v535
        %v537 = vpop.f32.mrb[0].mxu0
        %v538 = vpop.f32.mrb[0].mxu0
        %v539 = vadd.f32 0.0, %v538
        %v540 = vpop.f32.mrb[0].mxu0
        %541 = vmatprep.mubr.bf16.mxu0 0
        %542 = vmatmul.mubr.bf16.gmra.mrb[0].mxu0 %v415
        %v543 = vpop.f32.mrb[0].mxu0
        %v544 = vadd.f32 0.0, %v543
        %v545 = vpop.f32.mrb[0].mxu0
        %v546 = vpop.f32.mrb[0].mxu0
        %v547 = vadd.f32 0.0, %v546
        %v548 = vpop.f32.mrb[0].mxu0
        %549 = vmatprep.mubr.bf16.mxu0 0
        %550 = vmatmul.mubr.bf16.gmra.mrb[0].mxu0 %v416
        %v551 = vpop.f32.mrb[0].mxu0
        %v552 = vadd.f32 0.0, %v551
        %v553 = vpop.f32.mrb[0].mxu0
        %v554 = vpop.f32.mrb[0].mxu0
        %v555 = vadd.f32 0.0, %v554
        %v556 = vpop.f32.mrb[0].mxu0
        %557 = vmatprep.mubr.bf16.mxu0 0
        %558 = vmatmul.mubr.bf16.gmra.mrb[0].mxu0 %v417
        %v559 = vpop.f32.mrb[0].mxu0
        %v560 = vadd.f32 0.0, %v559
        %v561 = vpop.f32.mrb[0].mxu0
        %v562 = vpop.f32.mrb[0].mxu0
        %v563 = vadd.f32 0.0, %v562
        %v564 = vpop.f32.mrb[0].mxu0
        %565 = vmatprep.mubr.bf16.mxu0 0
        %566 = vmatmul.mubr.bf16.gmra.mrb[0].mxu0 %v418
        %v567 = vpop.f32.mrb[0].mxu0
        %v568 = vadd.f32 0.0, %v567
        %v569 = vpop.f32.mrb[0].mxu0
        %v570 = vpop.f32.mrb[0].mxu0
        %v571 = vadd.f32 0.0, %v570
        %v572 = vpop.f32.mrb[0].mxu0
        %573 = vmatprep.mubr.bf16.mxu0 0
        %574 = vmatmul.mubr.bf16.gmra.mrb[0].mxu0 %v419
        %v575 = vpop.f32.mrb[0].mxu0
        %v576 = vadd.f32 0.0, %v575
        %v577 = vpop.f32.mrb[0].mxu0
        %v578 = vpop.f32.mrb[0].mxu0
        %v579 = vadd.f32 0.0, %v578
        %v580 = vpop.f32.mrb[0].mxu0
        %581 = vmatprep.mubr.bf16.mxu0 0
        %582 = vmatmul.mubr.bf16.gmra.mrb[0].mxu0 %v420
        %v583 = vpop.f32.mrb[0].mxu0
        %v584 = vadd.f32 0.0, %v583
        %v585 = vpop.f32.mrb[0].mxu0
        %v586 = vpop.f32.mrb[0].mxu0
        %v587 = vadd.f32 0.0, %v586
        %v588 = vpop.f32.mrb[0].mxu0
        %589 = vmatprep.mubr.bf16.mxu0 0
        %590 = vmatmul.mubr.bf16.gmra.mrb[0].mxu0 %v421
        %v591 = vpop.f32.mrb[0].mxu0
        %v592 = vadd.f32 0.0, %v591
        %v593 = vpop.f32.mrb[0].mxu0
        %v594 = vpop.f32.mrb[0].mxu0
        %v595 = vadd.f32 0.0, %v594
        %v596 = vpop.f32.mrb[0].mxu0
        %597 = vmatprep.mubr.bf16.mxu0 0
        %598 = vmatmul.mubr.bf16.gmra.mrb[0].mxu0 %v422
        %v599 = vpop.f32.mrb[0].mxu0
        %v600 = vadd.f32 0.0, %v599
        %v601 = vpop.f32.mrb[0].mxu0
        %v602 = vpop.f32.mrb[0].mxu0
        %v603 = vadd.f32 0.0, %v602
        %v604 = vpop.f32.mrb[0].mxu0
        %605 = vmatprep.mubr.bf16.mxu0 0
        %606 = vmatmul.mubr.bf16.gmra.mrb[0].mxu0 %v423
        %v607 = vpop.f32.mrb[0].mxu0
        %v608 = vadd.f32 0.0, %v607
        %v609 = vpop.f32.mrb[0].mxu0
        %v610 = vpop.f32.mrb[0].mxu0
        %v611 = vadd.f32 0.0, %v610
        %v612 = vpop.f32.mrb[0].mxu0
        %613 = vmatprep.mubr.bf16.mxu0 0
        %614 = vmatmul.mubr.bf16.gmra.mrb[0].mxu0 %v424
        %v615 = vpop.f32.mrb[0].mxu0
        %v616 = vadd.f32 0.0, %v615
        %v617 = vpop.f32.mrb[0].mxu0
        %v618 = vpop.f32.mrb[0].mxu0
        %v619 = vadd.f32 0.0, %v618
        %v620 = vpop.f32.mrb[0].mxu0
        %621 = vmatprep.mubr.bf16.mxu0 0
        %622 = vmatmul.mubr.bf16.gmra.mrb[0].mxu0 %v425
        %v623 = vpop.f32.mrb[0].mxu0
        %v624 = vadd.f32 0.0, %v623
        %v625 = vpop.f32.mrb[0].mxu0
        %v626 = vpop.f32.mrb[0].mxu0
        %v627 = vadd.f32 0.0, %v626
        %v628 = vpop.f32.mrb[0].mxu0
        %629 = vmatprep.mubr.bf16.mxu0 0
        %630 = vmatmul.mubr.bf16.gmra.mrb[0].mxu0 %v426
        %v631 = vpop.f32.mrb[0].mxu0
        %v632 = vadd.f32 0.0, %v631
        %v633 = vpop.f32.mrb[0].mxu0
        %v634 = vpop.f32.mrb[0].mxu0
        %v635 = vadd.f32 0.0, %v634
        %v636 = vpop.f32.mrb[0].mxu0
        %637 = vmatprep.mubr.bf16.mxu0 0
        %638 = vmatmul.mubr.bf16.gmra.mrb[0].mxu0 %v427
        %v639 = vpop.f32.mrb[0].mxu0
        %v640 = vadd.f32 0.0, %v639
        %v641 = vpop.f32.mrb[0].mxu0
        %v642 = vpop.f32.mrb[0].mxu0
        %v643 = vadd.f32 0.0, %v642
        %v644 = vpop.f32.mrb[0].mxu0
        %645 = vmatprep.mubr.bf16.mxu0 0
        %646 = vmatmul.mubr.bf16.gmra.mrb[0].mxu0 %v428
        %v647 = vpop.f32.mrb[0].mxu0
        %v648 = vadd.f32 0.0, %v647
        %v649 = vpop.f32.mrb[0].mxu0
        %v650 = vpop.f32.mrb[0].mxu0
        %v651 = vadd.f32 0.0, %v650
        %v652 = vpop.f32.mrb[0].mxu0
        %653 = vdwg.mxu0
        %v654 = vadd.f32 %v349, %v528
        %v655 = vadd.f32 %v350, %v531
        %v656 = vadd.f32 %v351, %v536
        %v657 = vadd.f32 %v352, %v539
        %v658 = vadd.f32 %v353, %v544
        %v659 = vadd.f32 %v354, %v547
        %v660 = vadd.f32 %v355, %v552
        %v661 = vadd.f32 %v356, %v555
        %v662 = vadd.f32 %v357, %v560
        %v663 = vadd.f32 %v358, %v563
        %v664 = vadd.f32 %v359, %v568
        %v665 = vadd.f32 %v360, %v571
        %v666 = vadd.f32 %v361, %v576
        %v667 = vadd.f32 %v362, %v579
        %v668 = vadd.f32 %v363, %v584
        %v669 = vadd.f32 %v364, %v587
        %v670 = vadd.f32 %v365, %v592
        %v671 = vadd.f32 %v366, %v595
        %v672 = vadd.f32 %v367, %v600
        %v673 = vadd.f32 %v368, %v603
        %v674 = vadd.f32 %v369, %v608
        %v675 = vadd.f32 %v370, %v611
        %v676 = vadd.f32 %v371, %v616
        %v677 = vadd.f32 %v372, %v619
        %v678 = vadd.f32 %v373, %v624
        %v679 = vadd.f32 %v374, %v627
        %v680 = vadd.f32 %v375, %v632
        %v681 = vadd.f32 %v376, %v635
        %v682 = vadd.f32 %v377, %v640
        %v683 = vadd.f32 %v378, %v643
        %v684 = vadd.f32 %v379, %v648
        %v685 = vadd.f32 %v380, %v651
        %vm686 = vcmask 261120
        %687 = vst.msk [vmem:[#allocation2] sm:$0xff] %vm686, %v654
        %688 = vst.msk [vmem:[#allocation2 + $0x8] sm:$0xff] %vm686, %v655
        %689 = vst.msk [vmem:[#allocation2 + $0x10] sm:$0xff] %vm686, %v656
        %690 = vst.msk [vmem:[#allocation2 + $0x18] sm:$0xff] %vm686, %v657
        %691 = vst.msk [vmem:[#allocation2 + $0x20] sm:$0xff] %vm686, %v658
        %692 = vst.msk [vmem:[#allocation2 + $0x28] sm:$0xff] %vm686, %v659
        %693 = vst.msk [vmem:[#allocation2 + $0x30] sm:$0xff] %vm686, %v660
        %694 = vst.msk [vmem:[#allocation2 + $0x38] sm:$0xff] %vm686, %v661
        %695 = vst.msk [vmem:[#allocation2 + $0x40] sm:$0xff] %vm686, %v662
        %696 = vst.msk [vmem:[#allocation2 + $0x48] sm:$0xff] %vm686, %v663
        %697 = vst.msk [vmem:[#allocation2 + $0x50] sm:$0xff] %vm686, %v664
        %698 = vst.msk [vmem:[#allocation2 + $0x58] sm:$0xff] %vm686, %v665
        %699 = vst.msk [vmem:[#allocation2 + $0x60] sm:$0xff] %vm686, %v666
        %700 = vst.msk [vmem:[#allocation2 + $0x68] sm:$0xff] %vm686, %v667
        %701 = vst.msk [vmem:[#allocation2 + $0x70] sm:$0xff] %vm686, %v668
        %702 = vst.msk [vmem:[#allocation2 + $0x78] sm:$0xff] %vm686, %v669
        %703 = vst.msk [vmem:[#allocation2 + $0x80] sm:$0xff] %vm686, %v670
        %704 = vst.msk [vmem:[#allocation2 + $0x88] sm:$0xff] %vm686, %v671
        %705 = vst.msk [vmem:[#allocation2 + $0x90] sm:$0xff] %vm686, %v672
        %706 = vst.msk [vmem:[#allocation2 + $0x98] sm:$0xff] %vm686, %v673
        %707 = vst.msk [vmem:[#allocation2 + $0xa0] sm:$0xff] %vm686, %v674
        %708 = vst.msk [vmem:[#allocation2 + $0xa8] sm:$0xff] %vm686, %v675
        %709 = vst.msk [vmem:[#allocation2 + $0xb0] sm:$0xff] %vm686, %v676
        %710 = vst.msk [vmem:[#allocation2 + $0xb8] sm:$0xff] %vm686, %v677
        %711 = vst.msk [vmem:[#allocation2 + $0xc0] sm:$0xff] %vm686, %v678
        %712 = vst.msk [vmem:[#allocation2 + $0xc8] sm:$0xff] %vm686, %v679
        %713 = vst.msk [vmem:[#allocation2 + $0xd0] sm:$0xff] %vm686, %v680
        %714 = vst.msk [vmem:[#allocation2 + $0xd8] sm:$0xff] %vm686, %v681
        %715 = vst.msk [vmem:[#allocation2 + $0xe0] sm:$0xff] %vm686, %v682
        %716 = vst.msk [vmem:[#allocation2 + $0xe8] sm:$0xff] %vm686, %v683
        %717 = vst.msk [vmem:[#allocation2 + $0xf0] sm:$0xff] %vm686, %v684
        %718 = vst.msk [vmem:[#allocation2 + $0xf8] sm:$0xff] %vm686, %v685
        // Predicated region
        $region41: #{block_forward.13} parent=35 // pred_check
          %p719 = pneg %p312
        $region42: #{block_forward.13} parent=35 // pred_check_branch
          %721 = sbr.rel (%p719) target = $region44
        $region43: #{block_forward.13} parent=35 // pred_region
          %v722 = vld [vmem:[#allocation2] sm:$0xff]
          %v723 = vld [vmem:[#allocation2 + $0x8] sm:$0xff]
          %v724 = vld [vmem:[#allocation2 + $0x10] sm:$0xff]
          %v725 = vld [vmem:[#allocation2 + $0x18] sm:$0xff]
          %v726 = vld [vmem:[#allocation2 + $0x20] sm:$0xff]
          %v727 = vld [vmem:[#allocation2 + $0x28] sm:$0xff]
          %v728 = vld [vmem:[#allocation2 + $0x30] sm:$0xff]
          %v729 = vld [vmem:[#allocation2 + $0x38] sm:$0xff]
          %v730 = vld [vmem:[#allocation2 + $0x40] sm:$0xff]
          %v731 = vld [vmem:[#allocation2 + $0x48] sm:$0xff]
          %v732 = vld [vmem:[#allocation2 + $0x50] sm:$0xff]
          %v733 = vld [vmem:[#allocation2 + $0x58] sm:$0xff]
          %v734 = vld [vmem:[#allocation2 + $0x60] sm:$0xff]
          %v735 = vld [vmem:[#allocation2 + $0x68] sm:$0xff]
          %v736 = vld [vmem:[#allocation2 + $0x70] sm:$0xff]
          %v737 = vld [vmem:[#allocation2 + $0x78] sm:$0xff]
          %v738 = vld [vmem:[#allocation2 + $0x80] sm:$0xff]
          %v739 = vld [vmem:[#allocation2 + $0x88] sm:$0xff]
          %v740 = vld [vmem:[#allocation2 + $0x90] sm:$0xff]
          %v741 = vld [vmem:[#allocation2 + $0x98] sm:$0xff]
          %v742 = vld [vmem:[#allocation2 + $0xa0] sm:$0xff]
          %v743 = vld [vmem:[#allocation2 + $0xa8] sm:$0xff]
          %v744 = vld [vmem:[#allocation2 + $0xb0] sm:$0xff]
          %v745 = vld [vmem:[#allocation2 + $0xb8] sm:$0xff]
          %v746 = vld [vmem:[#allocation2 + $0xc0] sm:$0xff]
          %v747 = vld [vmem:[#allocation2 + $0xc8] sm:$0xff]
          %v748 = vld [vmem:[#allocation2 + $0xd0] sm:$0xff]
          %v749 = vld [vmem:[#allocation2 + $0xd8] sm:$0xff]
          %v750 = vld [vmem:[#allocation2 + $0xe0] sm:$0xff]
          %v751 = vld [vmem:[#allocation2 + $0xe8] sm:$0xff]
          %v752 = vld [vmem:[#allocation2 + $0xf0] sm:$0xff]
          %v753 = vld [vmem:[#allocation2 + $0xf8] sm:$0xff]
          %v754 = vld [vmem:[%s300] sm:$0x1]
          %v756 = vlaneseq
          %v757 = vshrl.u32 %v756, 7
          %v758 = vsub.s32 0, %v757
          %v759 = vrot.slane %v754, %v758
          %v761 = vadd.f32 %v722, %v759
          %v762 = vadd.f32 %v723, %v759
          %v763 = vadd.f32 %v724, %v759
          %v764 = vadd.f32 %v725, %v759
          %v765 = vadd.f32 %v726, %v759
          %v766 = vadd.f32 %v727, %v759
          %v767 = vadd.f32 %v728, %v759
          %v768 = vadd.f32 %v729, %v759
          %v769 = vadd.f32 %v730, %v759
          %v770 = vadd.f32 %v731, %v759
          %v771 = vadd.f32 %v732, %v759
          %v772 = vadd.f32 %v733, %v759
          %v773 = vadd.f32 %v734, %v759
          %v774 = vadd.f32 %v735, %v759
          %v775 = vadd.f32 %v736, %v759
          %v776 = vadd.f32 %v737, %v759
          %v777 = vadd.f32 %v738, %v759
          %v778 = vadd.f32 %v739, %v759
          %v779 = vadd.f32 %v740, %v759
          %v780 = vadd.f32 %v741, %v759
          %v781 = vadd.f32 %v742, %v759
          %v782 = vadd.f32 %v743, %v759
          %v783 = vadd.f32 %v744, %v759
          %v784 = vadd.f32 %v745, %v759
          %v785 = vadd.f32 %v746, %v759
          %v786 = vadd.f32 %v747, %v759
          %v787 = vadd.f32 %v748, %v759
          %v788 = vadd.f32 %v749, %v759
          %v789 = vadd.f32 %v750, %v759
          %v790 = vadd.f32 %v751, %v759
          %v791 = vadd.f32 %v752, %v759
          %v792 = vadd.f32 %v753, %v759
          %v793 = vld [vmem:[%s308] sm:$0xff]
          %v794 = vld [vmem:[%s308 + $0x8] sm:$0xff]
          %v795 = vld [vmem:[%s308 + $0x10] sm:$0xff]
          %v796 = vld [vmem:[%s308 + $0x18] sm:$0xff]
          %v797 = vld [vmem:[%s308 + $0x20] sm:$0xff]
          %v798 = vld [vmem:[%s308 + $0x28] sm:$0xff]
          %v799 = vld [vmem:[%s308 + $0x30] sm:$0xff]
          %v800 = vld [vmem:[%s308 + $0x38] sm:$0xff]
          %v801 = vld [vmem:[%s308 + $0x40] sm:$0xff]
          %v802 = vld [vmem:[%s308 + $0x48] sm:$0xff]
          %v803 = vld [vmem:[%s308 + $0x50] sm:$0xff]
          %v804 = vld [vmem:[%s308 + $0x58] sm:$0xff]
          %v805 = vld [vmem:[%s308 + $0x60] sm:$0xff]
          %v806 = vld [vmem:[%s308 + $0x68] sm:$0xff]
          %v807 = vld [vmem:[%s308 + $0x70] sm:$0xff]
          %v808 = vld [vmem:[%s308 + $0x78] sm:$0xff]
          %v809 = vld [vmem:[%s308 + $0x80] sm:$0xff]
          %v810 = vld [vmem:[%s308 + $0x88] sm:$0xff]
          %v811 = vld [vmem:[%s308 + $0x90] sm:$0xff]
          %v812 = vld [vmem:[%s308 + $0x98] sm:$0xff]
          %v813 = vld [vmem:[%s308 + $0xa0] sm:$0xff]
          %v814 = vld [vmem:[%s308 + $0xa8] sm:$0xff]
          %v815 = vld [vmem:[%s308 + $0xb0] sm:$0xff]
          %v816 = vld [vmem:[%s308 + $0xb8] sm:$0xff]
          %v817 = vld [vmem:[%s308 + $0xc0] sm:$0xff]
          %v818 = vld [vmem:[%s308 + $0xc8] sm:$0xff]
          %v819 = vld [vmem:[%s308 + $0xd0] sm:$0xff]
          %v820 = vld [vmem:[%s308 + $0xd8] sm:$0xff]
          %v821 = vld [vmem:[%s308 + $0xe0] sm:$0xff]
          %v822 = vld [vmem:[%s308 + $0xe8] sm:$0xff]
          %v823 = vld [vmem:[%s308 + $0xf0] sm:$0xff]
          %v824 = vld [vmem:[%s308 + $0xf8] sm:$0xff]
          %v825 = vadd.f32 %v761, %v793
          %v826 = vadd.f32 %v762, %v794
          %v827 = vadd.f32 %v763, %v795
          %v828 = vadd.f32 %v764, %v796
          %v829 = vadd.f32 %v765, %v797
          %v830 = vadd.f32 %v766, %v798
          %v831 = vadd.f32 %v767, %v799
          %v832 = vadd.f32 %v768, %v800
          %v833 = vadd.f32 %v769, %v801
          %v834 = vadd.f32 %v770, %v802
          %v835 = vadd.f32 %v771, %v803
          %v836 = vadd.f32 %v772, %v804
          %v837 = vadd.f32 %v773, %v805
          %v838 = vadd.f32 %v774, %v806
          %v839 = vadd.f32 %v775, %v807
          %v840 = vadd.f32 %v776, %v808
          %v841 = vadd.f32 %v777, %v809
          %v842 = vadd.f32 %v778, %v810
          %v843 = vadd.f32 %v779, %v811
          %v844 = vadd.f32 %v780, %v812
          %v845 = vadd.f32 %v781, %v813
          %v846 = vadd.f32 %v782, %v814
          %v847 = vadd.f32 %v783, %v815
          %v848 = vadd.f32 %v784, %v816
          %v849 = vadd.f32 %v785, %v817
          %v850 = vadd.f32 %v786, %v818
          %v851 = vadd.f32 %v787, %v819
          %v852 = vadd.f32 %v788, %v820
          %v853 = vadd.f32 %v789, %v821
          %v854 = vadd.f32 %v790, %v822
          %v855 = vadd.f32 %v791, %v823
          %v856 = vadd.f32 %v792, %v824
          %857 = vst.msk [vmem:[%s279] sm:$0xff] %vm686, %v825
          %858 = vst.msk [vmem:[%s279 + $0x8] sm:$0xff] %vm686, %v826
          %859 = vst.msk [vmem:[%s279 + $0x10] sm:$0xff] %vm686, %v827
          %860 = vst.msk [vmem:[%s279 + $0x18] sm:$0xff] %vm686, %v828
          %861 = vst.msk [vmem:[%s279 + $0x20] sm:$0xff] %vm686, %v829
          %862 = vst.msk [vmem:[%s279 + $0x28] sm:$0xff] %vm686, %v830
          %863 = vst.msk [vmem:[%s279 + $0x30] sm:$0xff] %vm686, %v831
          %864 = vst.msk [vmem:[%s279 + $0x38] sm:$0xff] %vm686, %v832
          %865 = vst.msk [vmem:[%s279 + $0x40] sm:$0xff] %vm686, %v833
          %866 = vst.msk [vmem:[%s279 + $0x48] sm:$0xff] %vm686, %v834
          %867 = vst.msk [vmem:[%s279 + $0x50] sm:$0xff] %vm686, %v835
          %868 = vst.msk [vmem:[%s279 + $0x58] sm:$0xff] %vm686, %v836
          %869 = vst.msk [vmem:[%s279 + $0x60] sm:$0xff] %vm686, %v837
          %870 = vst.msk [vmem:[%s279 + $0x68] sm:$0xff] %vm686, %v838
          %871 = vst.msk [vmem:[%s279 + $0x70] sm:$0xff] %vm686, %v839
          %872 = vst.msk [vmem:[%s279 + $0x78] sm:$0xff] %vm686, %v840
          %873 = vst.msk [vmem:[%s279 + $0x80] sm:$0xff] %vm686, %v841
          %874 = vst.msk [vmem:[%s279 + $0x88] sm:$0xff] %vm686, %v842
          %875 = vst.msk [vmem:[%s279 + $0x90] sm:$0xff] %vm686, %v843
          %876 = vst.msk [vmem:[%s279 + $0x98] sm:$0xff] %vm686, %v844
          %877 = vst.msk [vmem:[%s279 + $0xa0] sm:$0xff] %vm686, %v845
          %878 = vst.msk [vmem:[%s279 + $0xa8] sm:$0xff] %vm686, %v846
          %879 = vst.msk [vmem:[%s279 + $0xb0] sm:$0xff] %vm686, %v847
          %880 = vst.msk [vmem:[%s279 + $0xb8] sm:$0xff] %vm686, %v848
          %881 = vst.msk [vmem:[%s279 + $0xc0] sm:$0xff] %vm686, %v849
          %882 = vst.msk [vmem:[%s279 + $0xc8] sm:$0xff] %vm686, %v850
          %883 = vst.msk [vmem:[%s279 + $0xd0] sm:$0xff] %vm686, %v851
          %884 = vst.msk [vmem:[%s279 + $0xd8] sm:$0xff] %vm686, %v852
          %885 = vst.msk [vmem:[%s279 + $0xe0] sm:$0xff] %vm686, %v853
          %886 = vst.msk [vmem:[%s279 + $0xe8] sm:$0xff] %vm686, %v854
          %887 = vst.msk [vmem:[%s279 + $0xf0] sm:$0xff] %vm686, %v855
          %888 = vst.msk [vmem:[%s279 + $0xf8] sm:$0xff] %vm686, %v856
        $region44: #{block_forward.13} parent=35 // pred_fallthru
          _
        %s889 = sand.u32 %s157, 1
        %s890 = scalar_lea.sflag [#allocation4], %s889
        %s891 = sand.u32 %s157, 1
        %s892 = smul.addr %s891, 256
        %s893 = scalar_lea.vmem [#allocation3], %s892
        // Predicated region
        $region45: #{block_forward.13} parent=35 // pred_check
          %p894 = pneg %p167
        $region46: #{block_forward.13} parent=35 // pred_check_branch
          %896 = sbr.rel (%p894) target = $region48
        $region47: #{block_forward.13} parent=35 // pred_region
          %s897 = smul.u32 32, %s23
          %s899 = ssub.s32 4096, 4096
          %900 = vsyncadd %s890, %s899
          %s901 = sadd.s32 %s24, %s897
          %s902 = smul.addr %s901, 128
          %s903 = scalar_lea.hbm %s4, %s902
          %s904 = sshll.u32 %s893, 4
          %s905 = int_to_ptr.vmem [resolvable:$true] %s904
          %910 = dma.vmem_to_hbm [thread:$0]  %s905, 4096, %s903, %s890, 128, 128, 8
        $region48: #{block_forward.13} parent=35 // pred_fallthru
          _
      $region36: #{block_forward.13} parent=5 // pred_fallthru
        _
      %p911 = scmp.le.s32.totalorder 2, %s13
      // Predicated region
      $region49: #{block_forward.13} parent=5 // pred_check
        %p912 = pneg %p911
      $region50: #{block_forward.13} parent=5 // pred_check_branch
        %914 = sbr.rel (%p912) target = $region52
      $region51: #{block_forward.13} parent=5 // pred_region
        %s915 = ssub.s32 %s13, 2
        // Predicated region
        $region53: #{block_forward.13} parent=51 // pred_check
          %p916 = pneg %p173
        $region54: #{block_forward.13} parent=51 // pred_check_branch
          %918 = sbr.rel (%p916) target = $region56
        $region55: #{block_forward.13} parent=51 // pred_region
          %s919 = sand.u32 %s158, 1
          %s920 = scalar_lea.sflag [#allocation4], %s919
          %s921 = sand.u32 %s158, 1
          %s922 = smul.addr %s921, 256
          %s923 = scalar_lea.vmem [#allocation3], %s922
          %924 = dma.done %s920, 4096
        $region56: #{block_forward.13} parent=51 // pred_fallthru
          _
      $region52: #{block_forward.13} parent=5 // pred_fallthru
        _
    $region6: #{block_forward.13} parent=1 // loop_footer
      %s17 = sadd.s32 1, %s13
    $region7: #{block_forward.13} parent=1 // loop_footer_branch
      %12 = sbr.rel target = $region3
    $region8: #{block_forward.13} parent=1 // loop_exit
      _
    %925 = vsyncpa [#allocation4], 1
    %s926 = scalar_lea.sflag [#allocation4], 1
    %927 = vsyncpa %s926, 1

// kernel: block_forward.10
$region0: #{block_forward.10}
  #allocation0 [shape = 'u32[]', space=smem, size = 0x4, offset = 0x4, fixed_abs, tag = 'smem constant byte address 0x4 - core index']
  #allocation1 [shape = 'u32[144,128]{1,0:T(1,128)}', space=vmem, size = 0x12000, scoped, tag = 'internal scratch']
  #allocation2 [shape = 'f32[4,128,1]{2,1,0:T(8,128)}', space=vmem, size = 0x40000, scoped, tag = 'scratch operand']
  #allocation3 [shape = 'f32[4,128,1]{2,1,0:T(8,128)}', space=vmem, size = 0x40000, scoped, tag = 'scratch operand']
  #allocation4 [shape = 'f32[4,128,8]{2,1,0:T(8,128)}', space=vmem, size = 0x40000, scoped, tag = 'scratch operand']
  %s0 = inlined_call_operand.vmem [shape: f32[2,256,32], index: 0, kind: input, shape index: {}]
  %s1 = inlined_call_operand.vmem [shape: f32[2,256,32], index: 1, kind: input, shape index: {}]
  %s2 = inlined_call_operand.vmem [shape: f32[2,256,32], index: 2, kind: input, shape index: {}]
  %s3 = inlined_call_operand.vmem [shape: f32[2,256,32], index: 3, kind: output, shape index: {}]
  %s4 = sld [smem:[#allocation0]]
  $region53: #{block_forward.10} parent=0
    _
  %s6 = ssub.s32 1, %s4
  %s7 = scalar_select 0, %s6, %s4
  loop: start=0, step=1, limit=10
  $region2: #{block_forward.10} parent=0 // loop_pre_header
    _
  $region3: #{block_forward.10} parent=0 // loop_header
    %s9 = sphi 0, %s13
    %p10 = scmp.ge.s32.totalorder %s9, 10
    %s16 = sphi 0, %s35
    %s17 = sphi 0, %s31
    %s18 = sphi 0, %s27
    %s19 = sphi 0, %s16
    %s20 = sphi 0, %s17
    %s21 = sphi 0, %s18
    %s22 = sphi 0, %s19
    %s23 = sphi 0, %s20
    %s24 = sphi 0, %s21
    %s40 = sphi 0, %s42
    %s43 = sphi 0, %s40
    %s44 = sphi 0, %s43
    %s60 = sphi 0, %s44
    %s68 = sphi 0, %s70
    %s71 = sphi 0, %s68
    %s72 = sphi 0, %s71
    %s88 = sphi 0, %s72
    %s96 = sphi 0, %s98
    %s99 = sphi 0, %s96
    %s100 = sphi 0, %s99
    %s116 = sphi 0, %s100
    %s124 = sphi 0, %s126
    %s127 = sphi 0, %s124
    %s128 = sphi 0, %s127
    %s144 = sphi 0, %s128
  $region4: #{block_forward.10} parent=0 // loop_header_branch
    %12 = sbr.rel (%p10) target = $region8
  $region5: #{block_forward.10} parent=0 // loop_body
    %s14 = ssub.s32 %s9, 1
    %s15 = ssub.s32 %s9, 2
    %s25 = sadd.s32 1, %s18
    %p26 = scmp.ge.s32.totalorder %s25, 2
    %s27 = scalar_select %p26, 0, %s25
    %s28 = sadd.s32 1, %s17
    %s29 = scalar_select %p26, %s28, %s17
    %p30 = scmp.ge.s32.totalorder %s29, 2
    %s31 = scalar_select %p30, 0, %s29
    %s32 = sadd.s32 1, %s16
    %s33 = scalar_select %p30, %s32, %s16
    %p34 = scmp.ge.s32.totalorder %s33, 2
    %s35 = scalar_select %p34, 0, %s33
    %s36 = ssub.s32 %s16, %s35
    %s37 = ssub.s32 %s17, %s31
    %s38 = sor.u32 %s36, %s37
    %p39 = scmp.eq.s32.totalorder %s38, 0
    %s41 = sadd.s32 %s40, 1
    %s42 = scalar_select %p39, %s40, %s41
    %p45 = pneg %p39
    %p46 = scmp.eq.s32.totalorder %s9, 7
    %p47 = por %p45, %p46
    %p48 = scmp.ne.s32.totalorder %s40, %s43
    %p49 = scmp.eq.s32.totalorder %s9, 0
    %p50 = por %p48, %p49
    %p51 = scmp.ne.s32.totalorder %s40, %s43
    %p52 = scmp.eq.s32.totalorder %s14, 7
    %p53 = por %p51, %p52
    %p54 = scmp.ne.s32.totalorder %s43, %s44
    %p55 = scmp.eq.s32.totalorder %s14, 0
    %p56 = por %p54, %p55
    %p57 = scmp.ne.s32.totalorder %s43, %s44
    %p58 = scmp.eq.s32.totalorder %s15, 7
    %p59 = por %p57, %p58
    %p61 = scmp.ne.s32.totalorder %s44, %s60
    %p62 = scmp.eq.s32.totalorder %s15, 0
    %p63 = por %p61, %p62
    %s64 = ssub.s32 %s16, %s35
    %s65 = ssub.s32 %s18, %s27
    %s66 = sor.u32 %s64, %s65
    %p67 = scmp.eq.s32.totalorder %s66, 0
    %s69 = sadd.s32 %s68, 1
    %s70 = scalar_select %p67, %s68, %s69
    %p73 = pneg %p67
    %p74 = scmp.eq.s32.totalorder %s9, 7
    %p75 = por %p73, %p74
    %p76 = scmp.ne.s32.totalorder %s68, %s71
    %p77 = scmp.eq.s32.totalorder %s9, 0
    %p78 = por %p76, %p77
    %p79 = scmp.ne.s32.totalorder %s68, %s71
    %p80 = scmp.eq.s32.totalorder %s14, 7
    %p81 = por %p79, %p80
    %p82 = scmp.ne.s32.totalorder %s71, %s72
    %p83 = scmp.eq.s32.totalorder %s14, 0
    %p84 = por %p82, %p83
    %p85 = scmp.ne.s32.totalorder %s71, %s72
    %p86 = scmp.eq.s32.totalorder %s15, 7
    %p87 = por %p85, %p86
    %p89 = scmp.ne.s32.totalorder %s72, %s88
    %p90 = scmp.eq.s32.totalorder %s15, 0
    %p91 = por %p89, %p90
    %s92 = ssub.s32 %s16, %s35
    %s93 = ssub.s32 %s18, %s27
    %s94 = sor.u32 %s92, %s93
    %p95 = scmp.eq.s32.totalorder %s94, 0
    %s97 = sadd.s32 %s96, 1
    %s98 = scalar_select %p95, %s96, %s97
    %p101 = pneg %p95
    %p102 = scmp.eq.s32.totalorder %s9, 7
    %p103 = por %p101, %p102
    %p104 = scmp.ne.s32.totalorder %s96, %s99
    %p105 = scmp.eq.s32.totalorder %s9, 0
    %p106 = por %p104, %p105
    %p107 = scmp.ne.s32.totalorder %s96, %s99
    %p108 = scmp.eq.s32.totalorder %s14, 7
    %p109 = por %p107, %p108
    %p110 = scmp.ne.s32.totalorder %s99, %s100
    %p111 = scmp.eq.s32.totalorder %s14, 0
    %p112 = por %p110, %p111
    %p113 = scmp.ne.s32.totalorder %s99, %s100
    %p114 = scmp.eq.s32.totalorder %s15, 7
    %p115 = por %p113, %p114
    %p117 = scmp.ne.s32.totalorder %s100, %s116
    %p118 = scmp.eq.s32.totalorder %s15, 0
    %p119 = por %p117, %p118
    %s120 = ssub.s32 %s16, %s35
    %s121 = ssub.s32 %s17, %s31
    %s122 = sor.u32 %s120, %s121
    %p123 = scmp.eq.s32.totalorder %s122, 0
    %s125 = sadd.s32 %s124, 1
    %s126 = scalar_select %p123, %s124, %s125
    %p129 = pneg %p123
    %p130 = scmp.eq.s32.totalorder %s9, 7
    %p131 = por %p129, %p130
    %p132 = scmp.ne.s32.totalorder %s124, %s127
    %p133 = scmp.eq.s32.totalorder %s9, 0
    %p134 = por %p132, %p133
    %p135 = scmp.ne.s32.totalorder %s124, %s127
    %p136 = scmp.eq.s32.totalorder %s14, 7
    %p137 = por %p135, %p136
    %p138 = scmp.ne.s32.totalorder %s127, %s128
    %p139 = scmp.eq.s32.totalorder %s14, 0
    %p140 = por %p138, %p139
    %p141 = scmp.ne.s32.totalorder %s127, %s128
    %p142 = scmp.eq.s32.totalorder %s15, 7
    %p143 = por %p141, %p142
    %p145 = scmp.ne.s32.totalorder %s128, %s144
    %p146 = scmp.eq.s32.totalorder %s15, 0
    %p147 = por %p145, %p146
    %p148 = scmp.le.s32.totalorder 1, %s9
    %p149 = scmp.lt.s32.totalorder %s9, 9
    %p150 = pnand %p148, %p149
    %p151 = pneg %p150
    // Predicated region
    $region9: #{block_forward.10} parent=5 // pred_check
      _
    $region10: #{block_forward.10} parent=5 // pred_check_branch
      %153 = sbr.rel (%p150) target = $region12
    $region11: #{block_forward.10} parent=5 // pred_region
      %s154 = ssub.s32 %s9, 1
    $region12: #{block_forward.10} parent=5 // pred_fallthru
      _
    %p155 = scmp.lt.s32.totalorder %s9, 8
    // Predicated region
    $region13: #{block_forward.10} parent=5 // pred_check
      %p156 = pneg %p155
    $region14: #{block_forward.10} parent=5 // pred_check_branch
      %158 = sbr.rel (%p156) target = $region16
    $region15: #{block_forward.10} parent=5 // pred_region
      // Predicated region
      $region17: #{block_forward.10} parent=15 // pred_check
        %p159 = pneg %p50
      $region18: #{block_forward.10} parent=15 // pred_check_branch
        %161 = sbr.rel (%p159) target = $region20
      $region19: #{block_forward.10} parent=15 // pred_region
        %s162 = smul.u32 16, %s17
        %p163 = scmp.lt.s32.totalorder %s16, 1
        %s164 = scalar_select %p163, %s16, 1
        %p165 = scmp.lt.s32.totalorder %s162, 31
        %s166 = scalar_select %p165, %s162, 31
        %s167 = smul.addr %s164, 32
        %s168 = sadd.s32 %s166, %s167
        %s169 = smul.addr %s168, 8
        %s170 = scalar_lea.vmem %s0, %s169
        %s171 = smul.u32 16, %s17
      $region20: #{block_forward.10} parent=15 // pred_fallthru
        _
      // Predicated region
      $region21: #{block_forward.10} parent=15 // pred_check
        %p172 = pneg %p78
      $region22: #{block_forward.10} parent=15 // pred_check_branch
        %174 = sbr.rel (%p172) target = $region24
      $region23: #{block_forward.10} parent=15 // pred_region
        %s175 = smul.u32 16, %s18
        %p176 = scmp.lt.s32.totalorder %s16, 1
        %s177 = scalar_select %p176, %s16, 1
        %p178 = scmp.lt.s32.totalorder %s175, 31
        %s179 = scalar_select %p178, %s175, 31
        %s180 = smul.addr %s177, 32
        %s181 = sadd.s32 %s179, %s180
        %s182 = smul.addr %s181, 8
        %s183 = scalar_lea.vmem %s1, %s182
        %s184 = smul.u32 16, %s18
      $region24: #{block_forward.10} parent=15 // pred_fallthru
        _
      // Predicated region
      $region25: #{block_forward.10} parent=15 // pred_check
        %p185 = pneg %p106
      $region26: #{block_forward.10} parent=15 // pred_check_branch
        %187 = sbr.rel (%p185) target = $region28
      $region27: #{block_forward.10} parent=15 // pred_region
        %s188 = smul.u32 16, %s18
        %p189 = scmp.lt.s32.totalorder %s16, 1
        %s190 = scalar_select %p189, %s16, 1
        %p191 = scmp.lt.s32.totalorder %s188, 31
        %s192 = scalar_select %p191, %s188, 31
        %s193 = smul.addr %s190, 32
        %s194 = sadd.s32 %s192, %s193
        %s195 = smul.addr %s194, 8
        %s196 = scalar_lea.vmem %s2, %s195
        %s197 = smul.u32 16, %s18
      $region28: #{block_forward.10} parent=15 // pred_fallthru
        _
    $region16: #{block_forward.10} parent=5 // pred_fallthru
      _
    %p198 = scmp.le.s32.totalorder 1, %s9
    %p199 = scmp.lt.s32.totalorder %s9, 9
    %p200 = pnand %p198, %p199
    %p201 = pneg %p200
    // Predicated region
    $region29: #{block_forward.10} parent=5 // pred_check
      _
    $region30: #{block_forward.10} parent=5 // pred_check_branch
      %203 = sbr.rel (%p200) target = $region32
    $region31: #{block_forward.10} parent=5 // pred_region
      %s204 = ssub.s32 %s9, 1
      %s205 = smul.u32 16, %s20
      %p206 = scmp.lt.s32.totalorder %s19, 1
      %s207 = scalar_select %p206, %s19, 1
      %p208 = scmp.lt.s32.totalorder %s205, 31
      %s209 = scalar_select %p208, %s205, 31
      %s210 = smul.addr %s207, 32
      %s211 = sadd.s32 %s209, %s210
      %s212 = smul.addr %s211, 8
      %s213 = scalar_lea.vmem %s0, %s212
      %p214 = pneg %p56
      %p215 = pneg %p53
      %s216 = smul.u32 16, %s21
      %p217 = scmp.lt.s32.totalorder %s19, 1
      %s218 = scalar_select %p217, %s19, 1
      %p219 = scmp.lt.s32.totalorder %s216, 31
      %s220 = scalar_select %p219, %s216, 31
      %s221 = smul.addr %s218, 32
      %s222 = sadd.s32 %s220, %s221
      %s223 = smul.addr %s222, 8
      %s224 = scalar_lea.vmem %s1, %s223
      %p225 = pneg %p84
      %p226 = pneg %p81
      %s227 = smul.u32 16, %s21
      %p228 = scmp.lt.s32.totalorder %s19, 1
      %s229 = scalar_select %p228, %s19, 1
      %p230 = scmp.lt.s32.totalorder %s227, 31
      %s231 = scalar_select %p230, %s227, 31
      %s232 = smul.addr %s229, 32
      %s233 = sadd.s32 %s231, %s232
      %s234 = smul.addr %s233, 8
      %s235 = scalar_lea.vmem %s2, %s234
      %p236 = pneg %p112
      %p237 = pneg %p109
      %p238 = pneg %p140
      %p239 = pneg %p137
      %s240 = smul.u32 16, %s20
      %p241 = scmp.lt.s32.totalorder %s19, 1
      %s242 = scalar_select %p241, %s19, 1
      %p243 = scmp.lt.s32.totalorder %s240, 31
      %s244 = scalar_select %p243, %s240, 31
      %s245 = smul.addr %s242, 32
      %s246 = sadd.s32 %s244, %s245
      %s247 = smul.addr %s246, 8
      %s248 = scalar_lea.vmem %s3, %s247
      %s249 = smul.u32 16, %s20
      %p250 = scmp.lt.s32.totalorder %s19, 1
      %s251 = scalar_select %p250, %s19, 1
      %p252 = scmp.lt.s32.totalorder %s249, 31
      %s253 = scalar_select %p252, %s249, 31
      %s254 = smul.addr %s251, 32
      %s255 = sadd.s32 %s253, %s254
      %s256 = smul.addr %s255, 8
      %s257 = scalar_lea.vmem %s0, %s256
      %s258 = smul.u32 16, %s20
      %s259 = smul.u32 16, %s21
      %p260 = scmp.lt.s32.totalorder %s19, 1
      %s261 = scalar_select %p260, %s19, 1
      %p262 = scmp.lt.s32.totalorder %s259, 31
      %s263 = scalar_select %p262, %s259, 31
      %s264 = smul.addr %s261, 32
      %s265 = sadd.s32 %s263, %s264
      %s266 = smul.addr %s265, 8
      %s267 = scalar_lea.vmem %s1, %s266
      %s268 = smul.u32 16, %s21
      %s269 = smul.u32 16, %s21
      %p270 = scmp.lt.s32.totalorder %s19, 1
      %s271 = scalar_select %p270, %s19, 1
      %p272 = scmp.lt.s32.totalorder %s269, 31
      %s273 = scalar_select %p272, %s269, 31
      %s274 = smul.addr %s271, 32
      %s275 = sadd.s32 %s273, %s274
      %s276 = smul.addr %s275, 8
      %s277 = scalar_lea.vmem %s2, %s276
      %s278 = smul.u32 16, %s21
      %s279 = smul.u32 16, %s20
      %p280 = scmp.lt.s32.totalorder %s19, 1
      %s281 = scalar_select %p280, %s19, 1
      %p282 = scmp.lt.s32.totalorder %s279, 31
      %s283 = scalar_select %p282, %s279, 31
      %s284 = smul.addr %s281, 32
      %s285 = sadd.s32 %s283, %s284
      %s286 = smul.addr %s285, 8
      %s287 = scalar_lea.vmem %s3, %s286
      %s288 = smul.u32 16, %s20
      %p290 = scmp.eq.s32.totalorder %s21, 0
      // Predicated region
      $region33: #{block_forward.10} parent=31 // pred_check
        %p291 = pneg %p290
      $region34: #{block_forward.10} parent=31 // pred_check_branch
        %293 = sbr.rel (%p291) target = $region36
      $region35: #{block_forward.10} parent=31 // pred_region
        %vm294 = vcmask 7168
        %295 = vst.msk [vmem:[#allocation2] sm:$0xff] %vm294, -inf
        %296 = vst.msk [vmem:[#allocation2 + $0x8] sm:$0xff] %vm294, -inf
        %297 = vst.msk [vmem:[#allocation2 + $0x10] sm:$0xff] %vm294, -inf
        %298 = vst.msk [vmem:[#allocation2 + $0x18] sm:$0xff] %vm294, -inf
        %299 = vst.msk [vmem:[#allocation2 + $0x20] sm:$0xff] %vm294, -inf
        %300 = vst.msk [vmem:[#allocation2 + $0x28] sm:$0xff] %vm294, -inf
        %301 = vst.msk [vmem:[#allocation2 + $0x30] sm:$0xff] %vm294, -inf
        %302 = vst.msk [vmem:[#allocation2 + $0x38] sm:$0xff] %vm294, -inf
        %303 = vst.msk [vmem:[#allocation2 + $0x40] sm:$0xff] %vm294, -inf
        %304 = vst.msk [vmem:[#allocation2 + $0x48] sm:$0xff] %vm294, -inf
        %305 = vst.msk [vmem:[#allocation2 + $0x50] sm:$0xff] %vm294, -inf
        %306 = vst.msk [vmem:[#allocation2 + $0x58] sm:$0xff] %vm294, -inf
        %307 = vst.msk [vmem:[#allocation2 + $0x60] sm:$0xff] %vm294, -inf
        %308 = vst.msk [vmem:[#allocation2 + $0x68] sm:$0xff] %vm294, -inf
        %309 = vst.msk [vmem:[#allocation2 + $0x70] sm:$0xff] %vm294, -inf
        %310 = vst.msk [vmem:[#allocation2 + $0x78] sm:$0xff] %vm294, -inf
        %311 = vst.msk [vmem:[#allocation2 + $0x80] sm:$0xff] %vm294, -inf
        %312 = vst.msk [vmem:[#allocation2 + $0x88] sm:$0xff] %vm294, -inf
        %313 = vst.msk [vmem:[#allocation2 + $0x90] sm:$0xff] %vm294, -inf
        %314 = vst.msk [vmem:[#allocation2 + $0x98] sm:$0xff] %vm294, -inf
        %315 = vst.msk [vmem:[#allocation2 + $0xa0] sm:$0xff] %vm294, -inf
        %316 = vst.msk [vmem:[#allocation2 + $0xa8] sm:$0xff] %vm294, -inf
        %317 = vst.msk [vmem:[#allocation2 + $0xb0] sm:$0xff] %vm294, -inf
        %318 = vst.msk [vmem:[#allocation2 + $0xb8] sm:$0xff] %vm294, -inf
        %319 = vst.msk [vmem:[#allocation2 + $0xc0] sm:$0xff] %vm294, -inf
        %320 = vst.msk [vmem:[#allocation2 + $0xc8] sm:$0xff] %vm294, -inf
        %321 = vst.msk [vmem:[#allocation2 + $0xd0] sm:$0xff] %vm294, -inf
        %322 = vst.msk [vmem:[#allocation2 + $0xd8] sm:$0xff] %vm294, -inf
        %323 = vst.msk [vmem:[#allocation2 + $0xe0] sm:$0xff] %vm294, -inf
        %324 = vst.msk [vmem:[#allocation2 + $0xe8] sm:$0xff] %vm294, -inf
        %325 = vst.msk [vmem:[#allocation2 + $0xf0] sm:$0xff] %vm294, -inf
        %326 = vst.msk [vmem:[#allocation2 + $0xf8] sm:$0xff] %vm294, -inf
        %327 = vst.msk [vmem:[#allocation2 + $0x100] sm:$0xff] %vm294, -inf
        %328 = vst.msk [vmem:[#allocation2 + $0x108] sm:$0xff] %vm294, -inf
        %329 = vst.msk [vmem:[#allocation2 + $0x110] sm:$0xff] %vm294, -inf
        %330 = vst.msk [vmem:[#allocation2 + $0x118] sm:$0xff] %vm294, -inf
        %331 = vst.msk [vmem:[#allocation2 + $0x120] sm:$0xff] %vm294, -inf
        %332 = vst.msk [vmem:[#allocation2 + $0x128] sm:$0xff] %vm294, -inf
        %333 = vst.msk [vmem:[#allocation2 + $0x130] sm:$0xff] %vm294, -inf
        %334 = vst.msk [vmem:[#allocation2 + $0x138] sm:$0xff] %vm294, -inf
        %335 = vst.msk [vmem:[#allocation2 + $0x140] sm:$0xff] %vm294, -inf
        %336 = vst.msk [vmem:[#allocation2 + $0x148] sm:$0xff] %vm294, -inf
        %337 = vst.msk [vmem:[#allocation2 + $0x150] sm:$0xff] %vm294, -inf
        %338 = vst.msk [vmem:[#allocation2 + $0x158] sm:$0xff] %vm294, -inf
        %339 = vst.msk [vmem:[#allocation2 + $0x160] sm:$0xff] %vm294, -inf
        %340 = vst.msk [vmem:[#allocation2 + $0x168] sm:$0xff] %vm294, -inf
        %341 = vst.msk [vmem:[#allocation2 + $0x170] sm:$0xff] %vm294, -inf
        %342 = vst.msk [vmem:[#allocation2 + $0x178] sm:$0xff] %vm294, -inf
        %343 = vst.msk [vmem:[#allocation2 + $0x180] sm:$0xff] %vm294, -inf
        %344 = vst.msk [vmem:[#allocation2 + $0x188] sm:$0xff] %vm294, -inf
        %345 = vst.msk [vmem:[#allocation2 + $0x190] sm:$0xff] %vm294, -inf
        %346 = vst.msk [vmem:[#allocation2 + $0x198] sm:$0xff] %vm294, -inf
        %347 = vst.msk [vmem:[#allocation2 + $0x1a0] sm:$0xff] %vm294, -inf
        %348 = vst.msk [vmem:[#allocation2 + $0x1a8] sm:$0xff] %vm294, -inf
        %349 = vst.msk [vmem:[#allocation2 + $0x1b0] sm:$0xff] %vm294, -inf
        %350 = vst.msk [vmem:[#allocation2 + $0x1b8] sm:$0xff] %vm294, -inf
        %351 = vst.msk [vmem:[#allocation2 + $0x1c0] sm:$0xff] %vm294, -inf
        %352 = vst.msk [vmem:[#allocation2 + $0x1c8] sm:$0xff] %vm294, -inf
        %353 = vst.msk [vmem:[#allocation2 + $0x1d0] sm:$0xff] %vm294, -inf
        %354 = vst.msk [vmem:[#allocation2 + $0x1d8] sm:$0xff] %vm294, -inf
        %355 = vst.msk [vmem:[#allocation2 + $0x1e0] sm:$0xff] %vm294, -inf
        %356 = vst.msk [vmem:[#allocation2 + $0x1e8] sm:$0xff] %vm294, -inf
        %357 = vst.msk [vmem:[#allocation2 + $0x1f0] sm:$0xff] %vm294, -inf
        %358 = vst.msk [vmem:[#allocation2 + $0x1f8] sm:$0xff] %vm294, -inf
        %359 = vst.msk [vmem:[#allocation3] sm:$0xff] %vm294, 0.0
        %360 = vst.msk [vmem:[#allocation3 + $0x8] sm:$0xff] %vm294, 0.0
        %361 = vst.msk [vmem:[#allocation3 + $0x10] sm:$0xff] %vm294, 0.0
        %362 = vst.msk [vmem:[#allocation3 + $0x18] sm:$0xff] %vm294, 0.0
        %363 = vst.msk [vmem:[#allocation3 + $0x20] sm:$0xff] %vm294, 0.0
        %364 = vst.msk [vmem:[#allocation3 + $0x28] sm:$0xff] %vm294, 0.0
        %365 = vst.msk [vmem:[#allocation3 + $0x30] sm:$0xff] %vm294, 0.0
        %366 = vst.msk [vmem:[#allocation3 + $0x38] sm:$0xff] %vm294, 0.0
        %367 = vst.msk [vmem:[#allocation3 + $0x40] sm:$0xff] %vm294, 0.0
        %368 = vst.msk [vmem:[#allocation3 + $0x48] sm:$0xff] %vm294, 0.0
        %369 = vst.msk [vmem:[#allocation3 + $0x50] sm:$0xff] %vm294, 0.0
        %370 = vst.msk [vmem:[#allocation3 + $0x58] sm:$0xff] %vm294, 0.0
        %371 = vst.msk [vmem:[#allocation3 + $0x60] sm:$0xff] %vm294, 0.0
        %372 = vst.msk [vmem:[#allocation3 + $0x68] sm:$0xff] %vm294, 0.0
        %373 = vst.msk [vmem:[#allocation3 + $0x70] sm:$0xff] %vm294, 0.0
        %374 = vst.msk [vmem:[#allocation3 + $0x78] sm:$0xff] %vm294, 0.0
        %375 = vst.msk [vmem:[#allocation3 + $0x80] sm:$0xff] %vm294, 0.0
        %376 = vst.msk [vmem:[#allocation3 + $0x88] sm:$0xff] %vm294, 0.0
        %377 = vst.msk [vmem:[#allocation3 + $0x90] sm:$0xff] %vm294, 0.0
        %378 = vst.msk [vmem:[#allocation3 + $0x98] sm:$0xff] %vm294, 0.0
        %379 = vst.msk [vmem:[#allocation3 + $0xa0] sm:$0xff] %vm294, 0.0
        %380 = vst.msk [vmem:[#allocation3 + $0xa8] sm:$0xff] %vm294, 0.0
        %381 = vst.msk [vmem:[#allocation3 + $0xb0] sm:$0xff] %vm294, 0.0
        %382 = vst.msk [vmem:[#allocation3 + $0xb8] sm:$0xff] %vm294, 0.0
        %383 = vst.msk [vmem:[#allocation3 + $0xc0] sm:$0xff] %vm294, 0.0
        %384 = vst.msk [vmem:[#allocation3 + $0xc8] sm:$0xff] %vm294, 0.0
        %385 = vst.msk [vmem:[#allocation3 + $0xd0] sm:$0xff] %vm294, 0.0
        %386 = vst.msk [vmem:[#allocation3 + $0xd8] sm:$0xff] %vm294, 0.0
        %387 = vst.msk [vmem:[#allocation3 + $0xe0] sm:$0xff] %vm294, 0.0
        %388 = vst.msk [vmem:[#allocation3 + $0xe8] sm:$0xff] %vm294, 0.0
        %389 = vst.msk [vmem:[#allocation3 + $0xf0] sm:$0xff] %vm294, 0.0
        %390 = vst.msk [vmem:[#allocation3 + $0xf8] sm:$0xff] %vm294, 0.0
        %391 = vst.msk [vmem:[#allocation3 + $0x100] sm:$0xff] %vm294, 0.0
        %392 = vst.msk [vmem:[#allocation3 + $0x108] sm:$0xff] %vm294, 0.0
        %393 = vst.msk [vmem:[#allocation3 + $0x110] sm:$0xff] %vm294, 0.0
        %394 = vst.msk [vmem:[#allocation3 + $0x118] sm:$0xff] %vm294, 0.0
        %395 = vst.msk [vmem:[#allocation3 + $0x120] sm:$0xff] %vm294, 0.0
        %396 = vst.msk [vmem:[#allocation3 + $0x128] sm:$0xff] %vm294, 0.0
        %397 = vst.msk [vmem:[#allocation3 + $0x130] sm:$0xff] %vm294, 0.0
        %398 = vst.msk [vmem:[#allocation3 + $0x138] sm:$0xff] %vm294, 0.0
        %399 = vst.msk [vmem:[#allocation3 + $0x140] sm:$0xff] %vm294, 0.0
        %400 = vst.msk [vmem:[#allocation3 + $0x148] sm:$0xff] %vm294, 0.0
        %401 = vst.msk [vmem:[#allocation3 + $0x150] sm:$0xff] %vm294, 0.0
        %402 = vst.msk [vmem:[#allocation3 + $0x158] sm:$0xff] %vm294, 0.0
        %403 = vst.msk [vmem:[#allocation3 + $0x160] sm:$0xff] %vm294, 0.0
        %404 = vst.msk [vmem:[#allocation3 + $0x168] sm:$0xff] %vm294, 0.0
        %405 = vst.msk [vmem:[#allocation3 + $0x170] sm:$0xff] %vm294, 0.0
        %406 = vst.msk [vmem:[#allocation3 + $0x178] sm:$0xff] %vm294, 0.0
        %407 = vst.msk [vmem:[#allocation3 + $0x180] sm:$0xff] %vm294, 0.0
        %408 = vst.msk [vmem:[#allocation3 + $0x188] sm:$0xff] %vm294, 0.0
        %409 = vst.msk [vmem:[#allocation3 + $0x190] sm:$0xff] %vm294, 0.0
        %410 = vst.msk [vmem:[#allocation3 + $0x198] sm:$0xff] %vm294, 0.0
        %411 = vst.msk [vmem:[#allocation3 + $0x1a0] sm:$0xff] %vm294, 0.0
        %412 = vst.msk [vmem:[#allocation3 + $0x1a8] sm:$0xff] %vm294, 0.0
        %413 = vst.msk [vmem:[#allocation3 + $0x1b0] sm:$0xff] %vm294, 0.0
        %414 = vst.msk [vmem:[#allocation3 + $0x1b8] sm:$0xff] %vm294, 0.0
        %415 = vst.msk [vmem:[#allocation3 + $0x1c0] sm:$0xff] %vm294, 0.0
        %416 = vst.msk [vmem:[#allocation3 + $0x1c8] sm:$0xff] %vm294, 0.0
        %417 = vst.msk [vmem:[#allocation3 + $0x1d0] sm:$0xff] %vm294, 0.0
        %418 = vst.msk [vmem:[#allocation3 + $0x1d8] sm:$0xff] %vm294, 0.0
        %419 = vst.msk [vmem:[#allocation3 + $0x1e0] sm:$0xff] %vm294, 0.0
        %420 = vst.msk [vmem:[#allocation3 + $0x1e8] sm:$0xff] %vm294, 0.0
        %421 = vst.msk [vmem:[#allocation3 + $0x1f0] sm:$0xff] %vm294, 0.0
        %422 = vst.msk [vmem:[#allocation3 + $0x1f8] sm:$0xff] %vm294, 0.0
        %vm423 = vcmask 64512
        %424 = vst.msk [vmem:[#allocation4] sm:$0xff] %vm423, 0.0
        %425 = vst.msk [vmem:[#allocation4 + $0x8] sm:$0xff] %vm423, 0.0
        %426 = vst.msk [vmem:[#allocation4 + $0x10] sm:$0xff] %vm423, 0.0
        %427 = vst.msk [vmem:[#allocation4 + $0x18] sm:$0xff] %vm423, 0.0
        %428 = vst.msk [vmem:[#allocation4 + $0x20] sm:$0xff] %vm423, 0.0
        %429 = vst.msk [vmem:[#allocation4 + $0x28] sm:$0xff] %vm423, 0.0
        %430 = vst.msk [vmem:[#allocation4 + $0x30] sm:$0xff] %vm423, 0.0
        %431 = vst.msk [vmem:[#allocation4 + $0x38] sm:$0xff] %vm423, 0.0
        %432 = vst.msk [vmem:[#allocation4 + $0x40] sm:$0xff] %vm423, 0.0
        %433 = vst.msk [vmem:[#allocation4 + $0x48] sm:$0xff] %vm423, 0.0
        %434 = vst.msk [vmem:[#allocation4 + $0x50] sm:$0xff] %vm423, 0.0
        %435 = vst.msk [vmem:[#allocation4 + $0x58] sm:$0xff] %vm423, 0.0
        %436 = vst.msk [vmem:[#allocation4 + $0x60] sm:$0xff] %vm423, 0.0
        %437 = vst.msk [vmem:[#allocation4 + $0x68] sm:$0xff] %vm423, 0.0
        %438 = vst.msk [vmem:[#allocation4 + $0x70] sm:$0xff] %vm423, 0.0
        %439 = vst.msk [vmem:[#allocation4 + $0x78] sm:$0xff] %vm423, 0.0
        %440 = vst.msk [vmem:[#allocation4 + $0x80] sm:$0xff] %vm423, 0.0
        %441 = vst.msk [vmem:[#allocation4 + $0x88] sm:$0xff] %vm423, 0.0
        %442 = vst.msk [vmem:[#allocation4 + $0x90] sm:$0xff] %vm423, 0.0
        %443 = vst.msk [vmem:[#allocation4 + $0x98] sm:$0xff] %vm423, 0.0
        %444 = vst.msk [vmem:[#allocation4 + $0xa0] sm:$0xff] %vm423, 0.0
        %445 = vst.msk [vmem:[#allocation4 + $0xa8] sm:$0xff] %vm423, 0.0
        %446 = vst.msk [vmem:[#allocation4 + $0xb0] sm:$0xff] %vm423, 0.0
        %447 = vst.msk [vmem:[#allocation4 + $0xb8] sm:$0xff] %vm423, 0.0
        %448 = vst.msk [vmem:[#allocation4 + $0xc0] sm:$0xff] %vm423, 0.0
        %449 = vst.msk [vmem:[#allocation4 + $0xc8] sm:$0xff] %vm423, 0.0
        %450 = vst.msk [vmem:[#allocation4 + $0xd0] sm:$0xff] %vm423, 0.0
        %451 = vst.msk [vmem:[#allocation4 + $0xd8] sm:$0xff] %vm423, 0.0
        %452 = vst.msk [vmem:[#allocation4 + $0xe0] sm:$0xff] %vm423, 0.0
        %453 = vst.msk [vmem:[#allocation4 + $0xe8] sm:$0xff] %vm423, 0.0
        %454 = vst.msk [vmem:[#allocation4 + $0xf0] sm:$0xff] %vm423, 0.0
        %455 = vst.msk [vmem:[#allocation4 + $0xf8] sm:$0xff] %vm423, 0.0
        %456 = vst.msk [vmem:[#allocation4 + $0x100] sm:$0xff] %vm423, 0.0
        %457 = vst.msk [vmem:[#allocation4 + $0x108] sm:$0xff] %vm423, 0.0
        %458 = vst.msk [vmem:[#allocation4 + $0x110] sm:$0xff] %vm423, 0.0
        %459 = vst.msk [vmem:[#allocation4 + $0x118] sm:$0xff] %vm423, 0.0
        %460 = vst.msk [vmem:[#allocation4 + $0x120] sm:$0xff] %vm423, 0.0
        %461 = vst.msk [vmem:[#allocation4 + $0x128] sm:$0xff] %vm423, 0.0
        %462 = vst.msk [vmem:[#allocation4 + $0x130] sm:$0xff] %vm423, 0.0
        %463 = vst.msk [vmem:[#allocation4 + $0x138] sm:$0xff] %vm423, 0.0
        %464 = vst.msk [vmem:[#allocation4 + $0x140] sm:$0xff] %vm423, 0.0
        %465 = vst.msk [vmem:[#allocation4 + $0x148] sm:$0xff] %vm423, 0.0
        %466 = vst.msk [vmem:[#allocation4 + $0x150] sm:$0xff] %vm423, 0.0
        %467 = vst.msk [vmem:[#allocation4 + $0x158] sm:$0xff] %vm423, 0.0
        %468 = vst.msk [vmem:[#allocation4 + $0x160] sm:$0xff] %vm423, 0.0
        %469 = vst.msk [vmem:[#allocation4 + $0x168] sm:$0xff] %vm423, 0.0
        %470 = vst.msk [vmem:[#allocation4 + $0x170] sm:$0xff] %vm423, 0.0
        %471 = vst.msk [vmem:[#allocation4 + $0x178] sm:$0xff] %vm423, 0.0
        %472 = vst.msk [vmem:[#allocation4 + $0x180] sm:$0xff] %vm423, 0.0
        %473 = vst.msk [vmem:[#allocation4 + $0x188] sm:$0xff] %vm423, 0.0
        %474 = vst.msk [vmem:[#allocation4 + $0x190] sm:$0xff] %vm423, 0.0
        %475 = vst.msk [vmem:[#allocation4 + $0x198] sm:$0xff] %vm423, 0.0
        %476 = vst.msk [vmem:[#allocation4 + $0x1a0] sm:$0xff] %vm423, 0.0
        %477 = vst.msk [vmem:[#allocation4 + $0x1a8] sm:$0xff] %vm423, 0.0
        %478 = vst.msk [vmem:[#allocation4 + $0x1b0] sm:$0xff] %vm423, 0.0
        %479 = vst.msk [vmem:[#allocation4 + $0x1b8] sm:$0xff] %vm423, 0.0
        %480 = vst.msk [vmem:[#allocation4 + $0x1c0] sm:$0xff] %vm423, 0.0
        %481 = vst.msk [vmem:[#allocation4 + $0x1c8] sm:$0xff] %vm423, 0.0
        %482 = vst.msk [vmem:[#allocation4 + $0x1d0] sm:$0xff] %vm423, 0.0
        %483 = vst.msk [vmem:[#allocation4 + $0x1d8] sm:$0xff] %vm423, 0.0
        %484 = vst.msk [vmem:[#allocation4 + $0x1e0] sm:$0xff] %vm423, 0.0
        %485 = vst.msk [vmem:[#allocation4 + $0x1e8] sm:$0xff] %vm423, 0.0
        %486 = vst.msk [vmem:[#allocation4 + $0x1f0] sm:$0xff] %vm423, 0.0
        %487 = vst.msk [vmem:[#allocation4 + $0x1f8] sm:$0xff] %vm423, 0.0
      $region36: #{block_forward.10} parent=31 // pred_fallthru
        _
      %v488 = vld [vmem:[%s257] sm:$0xff]
      %v489 = vld [vmem:[%s257 + $0x8] sm:$0xff]
      %v490 = vld [vmem:[%s257 + $0x10] sm:$0xff]
      %v491 = vld [vmem:[%s257 + $0x18] sm:$0xff]
      %v492 = vld [vmem:[%s257 + $0x20] sm:$0xff]
      %v493 = vld [vmem:[%s257 + $0x28] sm:$0xff]
      %v494 = vld [vmem:[%s257 + $0x30] sm:$0xff]
      %v495 = vld [vmem:[%s257 + $0x38] sm:$0xff]
      %v496 = vld [vmem:[%s257 + $0x40] sm:$0xff]
      %v497 = vld [vmem:[%s257 + $0x48] sm:$0xff]
      %v498 = vld [vmem:[%s257 + $0x50] sm:$0xff]
      %v499 = vld [vmem:[%s257 + $0x58] sm:$0xff]
      %v500 = vld [vmem:[%s257 + $0x60] sm:$0xff]
      %v501 = vld [vmem:[%s257 + $0x68] sm:$0xff]
      %v502 = vld [vmem:[%s257 + $0x70] sm:$0xff]
      %v503 = vld [vmem:[%s257 + $0x78] sm:$0xff]
      %v504 = vld [vmem:[%s267] sm:$0xff]
      %v505 = vld [vmem:[%s267 + $0x8] sm:$0xff]
      %v506 = vld [vmem:[%s267 + $0x10] sm:$0xff]
      %v507 = vld [vmem:[%s267 + $0x18] sm:$0xff]
      %v508 = vld [vmem:[%s267 + $0x20] sm:$0xff]
      %v509 = vld [vmem:[%s267 + $0x28] sm:$0xff]
      %v510 = vld [vmem:[%s267 + $0x30] sm:$0xff]
      %v511 = vld [vmem:[%s267 + $0x38] sm:$0xff]
      %v512 = vld [vmem:[%s267 + $0x40] sm:$0xff]
      %v513 = vld [vmem:[%s267 + $0x48] sm:$0xff]
      %v514 = vld [vmem:[%s267 + $0x50] sm:$0xff]
      %v515 = vld [vmem:[%s267 + $0x58] sm:$0xff]
      %v516 = vld [vmem:[%s267 + $0x60] sm:$0xff]
      %v517 = vld [vmem:[%s267 + $0x68] sm:$0xff]
      %v518 = vld [vmem:[%s267 + $0x70] sm:$0xff]
      %v519 = vld [vmem:[%s267 + $0x78] sm:$0xff]
      %v520 = vld [vmem:[%s277] sm:$0xff]
      %v521 = vld [vmem:[%s277 + $0x8] sm:$0xff]
      %v522 = vld [vmem:[%s277 + $0x10] sm:$0xff]
      %v523 = vld [vmem:[%s277 + $0x18] sm:$0xff]
      %v524 = vld [vmem:[%s277 + $0x20] sm:$0xff]
      %v525 = vld [vmem:[%s277 + $0x28] sm:$0xff]
      %v526 = vld [vmem:[%s277 + $0x30] sm:$0xff]
      %v527 = vld [vmem:[%s277 + $0x38] sm:$0xff]
      %v528 = vld [vmem:[%s277 + $0x40] sm:$0xff]
      %v529 = vld [vmem:[%s277 + $0x48] sm:$0xff]
      %v530 = vld [vmem:[%s277 + $0x50] sm:$0xff]
      %v531 = vld [vmem:[%s277 + $0x58] sm:$0xff]
      %v532 = vld [vmem:[%s277 + $0x60] sm:$0xff]
      %v533 = vld [vmem:[%s277 + $0x68] sm:$0xff]
      %v534 = vld [vmem:[%s277 + $0x70] sm:$0xff]
      %v535 = vld [vmem:[%s277 + $0x78] sm:$0xff]
      %v536 = vpack.c.bf16 %v489, %v488
      %v537 = vpack.c.bf16 %v491, %v490
      %v538 = vpack.c.bf16 %v493, %v492
      %v539 = vpack.c.bf16 %v495, %v494
      %v540 = vpack.c.bf16 %v497, %v496
      %v541 = vpack.c.bf16 %v499, %v498
      %v542 = vpack.c.bf16 %v501, %v500
      %v543 = vpack.c.bf16 %v503, %v502
      %v544 = vpack.c.bf16 %v505, %v504
      %v545 = vpack.c.bf16 %v507, %v506
      %v546 = vpack.c.bf16 %v509, %v508
      %v547 = vpack.c.bf16 %v511, %v510
      %v548 = vpack.c.bf16 %v513, %v512
      %v549 = vpack.c.bf16 %v515, %v514
      %v550 = vpack.c.bf16 %v517, %v516
      %v551 = vpack.c.bf16 %v519, %v518
      %v552 = vpack.c.bf16 %v521, %v520
      %v553 = vpack.c.bf16 %v523, %v522
      %v554 = vpack.c.bf16 %v525, %v524
      %v555 = vpack.c.bf16 %v527, %v526
      %v556 = vpack.c.bf16 %v529, %v528
      %v557 = vpack.c.bf16 %v531, %v530
      %v558 = vpack.c.bf16 %v533, %v532
      %v559 = vpack.c.bf16 %v535, %v534
      %vm560 = vcmask 64512
      %v562 = vsel %vm560, %v536, 0
      %v565 = vsel %vm560, %v537, 0
      %v568 = vsel %vm560, %v538, 0
      %v571 = vsel %vm560, %v539, 0
      %v574 = vsel %vm560, %v540, 0
      %v577 = vsel %vm560, %v541, 0
      %v580 = vsel %vm560, %v542, 0
      %v583 = vsel %vm560, %v543, 0
      %v586 = vsel %vm560, %v544, 0
      %v589 = vsel %vm560, %v545, 0
      %v592 = vsel %vm560, %v546, 0
      %v595 = vsel %vm560, %v547, 0
      %v598 = vsel %vm560, %v548, 0
      %v601 = vsel %vm560, %v549, 0
      %v604 = vsel %vm560, %v550, 0
      %v607 = vsel %vm560, %v551, 0
      %609 = vmatprep.subr.bf16.mxu0 0
      %610 = vmatpush1.bf16.xpose.msra.mxu0 %v586
      %611 = vmatprep.subr.bf16.mxu0 0
      %612 = vmatpush1.bf16.xpose.msra.mxu0 %v589
      %613 = vmatprep.subr.bf16.mxu0 0
      %614 = vmatpush1.bf16.xpose.msra.mxu0 %v592
      %615 = vmatprep.subr.bf16.mxu0 0
      %616 = vmatpush1.bf16.xpose.msra.mxu0 %v595
      %617 = vmatprep.subr.bf16.mxu0 0
      %618 = vmatpush1.bf16.xpose.msra.mxu0 %v598
      %619 = vmatprep.subr.bf16.mxu0 0
      %620 = vmatpush1.bf16.xpose.msra.mxu0 %v601
      %621 = vmatprep.subr.bf16.mxu0 0
      %622 = vmatpush1.bf16.xpose.msra.mxu0 %v604
      %623 = vmatprep.subr.bf16.mxu0 0
      %624 = vmatpush1.bf16.xpose.msra.mxu0 %v607
      %625 = vmatprep.subr.bf16.mxu0 0
      %626 = vmatpush1.bf16.xpose.msra.mxu0 0
      %627 = vmatprep.subr.bf16.mxu0 0
      %628 = vmatpush1.bf16.xpose.msra.mxu0 0
      %629 = vmatprep.subr.bf16.mxu0 0
      %630 = vmatpush1.bf16.xpose.msra.mxu0 0
      %631 = vmatprep.subr.bf16.mxu0 0
      %632 = vmatpush1.bf16.xpose.msra.mxu0 0
      %633 = vmatprep.subr.bf16.mxu0 0
      %634 = vmatpush1.bf16.xpose.msra.mxu0 0
      %635 = vmatprep.subr.bf16.mxu0 0
      %636 = vmatpush1.bf16.xpose.msra.mxu0 0
      %637 = vmatprep.subr.bf16.mxu0 0
      %638 = vmatpush1.bf16.xpose.msra.mxu0 0
      %639 = vmatprep.subr.bf16.mxu0 0
      %640 = vmatpush1.bf16.xpose.msra.mxu0 0
      %641 = vmatprep.mubr.bf16.mxu0 0
      %642 = vmatmul.mubr.bf16.gmra.mrb[0].mxu0 %v562
      %v643 = vpop.f32.mrb[0].mxu0
      %v644 = vadd.f32 0.0, %v643
      %v645 = vpop.f32.mrb[0].mxu0
      %v646 = vpop.f32.mrb[0].mxu0
      %v647 = vadd.f32 0.0, %v646
      %v648 = vpop.f32.mrb[0].mxu0
      %649 = vmatprep.mubr.bf16.mxu0 0
      %650 = vmatmul.mubr.bf16.gmra.mrb[0].mxu0 %v565
      %v651 = vpop.f32.mrb[0].mxu0
      %v652 = vadd.f32 0.0, %v651
      %v653 = vpop.f32.mrb[0].mxu0
      %v654 = vpop.f32.mrb[0].mxu0
      %v655 = vadd.f32 0.0, %v654
      %v656 = vpop.f32.mrb[0].mxu0
      %657 = vmatprep.mubr.bf16.mxu0 0
      %658 = vmatmul.mubr.bf16.gmra.mrb[0].mxu0 %v568
      %v659 = vpop.f32.mrb[0].mxu0
      %v660 = vadd.f32 0.0, %v659
      %v661 = vpop.f32.mrb[0].mxu0
      %v662 = vpop.f32.mrb[0].mxu0
      %v663 = vadd.f32 0.0, %v662
      %v664 = vpop.f32.mrb[0].mxu0
      %665 = vmatprep.mubr.bf16.mxu0 0
      %666 = vmatmul.mubr.bf16.gmra.mrb[0].mxu0 %v571
      %v667 = vpop.f32.mrb[0].mxu0
      %v668 = vadd.f32 0.0, %v667
      %v669 = vpop.f32.mrb[0].mxu0
      %v670 = vpop.f32.mrb[0].mxu0
      %v671 = vadd.f32 0.0, %v670
      %v672 = vpop.f32.mrb[0].mxu0
      %673 = vmatprep.mubr.bf16.mxu0 0
      %674 = vmatmul.mubr.bf16.gmra.mrb[0].mxu0 %v574
      %v675 = vpop.f32.mrb[0].mxu0
      %v676 = vadd.f32 0.0, %v675
      %v677 = vpop.f32.mrb[0].mxu0
      %v678 = vpop.f32.mrb[0].mxu0
      %v679 = vadd.f32 0.0, %v678
      %v680 = vpop.f32.mrb[0].mxu0
      %681 = vmatprep.mubr.bf16.mxu0 0
      %682 = vmatmul.mubr.bf16.gmra.mrb[0].mxu0 %v577
      %v683 = vpop.f32.mrb[0].mxu0
      %v684 = vadd.f32 0.0, %v683
      %v685 = vpop.f32.mrb[0].mxu0
      %v686 = vpop.f32.mrb[0].mxu0
      %v687 = vadd.f32 0.0, %v686
      %v688 = vpop.f32.mrb[0].mxu0
      %689 = vmatprep.mubr.bf16.mxu0 0
      %690 = vmatmul.mubr.bf16.gmra.mrb[0].mxu0 %v580
      %v691 = vpop.f32.mrb[0].mxu0
      %v692 = vadd.f32 0.0, %v691
      %v693 = vpop.f32.mrb[0].mxu0
      %v694 = vpop.f32.mrb[0].mxu0
      %v695 = vadd.f32 0.0, %v694
      %v696 = vpop.f32.mrb[0].mxu0
      %697 = vmatprep.mubr.bf16.mxu0 0
      %698 = vmatmul.mubr.bf16.gmra.mrb[0].mxu0 %v583
      %v699 = vpop.f32.mrb[0].mxu0
      %v700 = vadd.f32 0.0, %v699
      %v701 = vpop.f32.mrb[0].mxu0
      %v702 = vpop.f32.mrb[0].mxu0
      %v703 = vadd.f32 0.0, %v702
      %v704 = vpop.f32.mrb[0].mxu0
      %705 = vdwg.mxu0
      %v706 = vmul.f32 %v644, 0.35355338
      %v707 = vmul.f32 %v647, 0.35355338
      %v708 = vmul.f32 %v652, 0.35355338
      %v709 = vmul.f32 %v655, 0.35355338
      %v710 = vmul.f32 %v660, 0.35355338
      %v711 = vmul.f32 %v663, 0.35355338
      %v712 = vmul.f32 %v668, 0.35355338
      %v713 = vmul.f32 %v671, 0.35355338
      %v714 = vmul.f32 %v676, 0.35355338
      %v715 = vmul.f32 %v679, 0.35355338
      %v716 = vmul.f32 %v684, 0.35355338
      %v717 = vmul.f32 %v687, 0.35355338
      %v718 = vmul.f32 %v692, 0.35355338
      %v719 = vmul.f32 %v695, 0.35355338
      %v720 = vmul.f32 %v700, 0.35355338
      %v721 = vmul.f32 %v703, 0.35355338
      %v722 = vld [vmem:[#allocation2] sm:$0xff]
      %v723 = vld [vmem:[#allocation2 + $0x8] sm:$0xff]
      %v724 = vld [vmem:[#allocation2 + $0x10] sm:$0xff]
      %v725 = vld [vmem:[#allocation2 + $0x18] sm:$0xff]
      %v726 = vld [vmem:[#allocation2 + $0x20] sm:$0xff]
      %v727 = vld [vmem:[#allocation2 + $0x28] sm:$0xff]
      %v728 = vld [vmem:[#allocation2 + $0x30] sm:$0xff]
      %v729 = vld [vmem:[#allocation2 + $0x38] sm:$0xff]
      %v730 = vld [vmem:[#allocation2 + $0x40] sm:$0xff]
      %v731 = vld [vmem:[#allocation2 + $0x48] sm:$0xff]
      %v732 = vld [vmem:[#allocation2 + $0x50] sm:$0xff]
      %v733 = vld [vmem:[#allocation2 + $0x58] sm:$0xff]
      %v734 = vld [vmem:[#allocation2 + $0x60] sm:$0xff]
      %v735 = vld [vmem:[#allocation2 + $0x68] sm:$0xff]
      %v736 = vld [vmem:[#allocation2 + $0x70] sm:$0xff]
      %v737 = vld [vmem:[#allocation2 + $0x78] sm:$0xff]
      %738 = vmax.xlane.f32.xlu0 %v706
      %v739 = vpop.xlane.xlu0 %738
      %740 = vmax.xlane.f32.xlu0 %v707
      %v741 = vpop.xlane.xlu0 %740
      %742 = vmax.xlane.f32.xlu0 %v708
      %v743 = vpop.xlane.xlu0 %742
      %744 = vmax.xlane.f32.xlu0 %v709
      %v745 = vpop.xlane.xlu0 %744
      %746 = vmax.xlane.f32.xlu0 %v710
      %v747 = vpop.xlane.xlu0 %746
      %748 = vmax.xlane.f32.xlu0 %v711
      %v749 = vpop.xlane.xlu0 %748
      %750 = vmax.xlane.f32.xlu0 %v712
      %v751 = vpop.xlane.xlu0 %750
      %752 = vmax.xlane.f32.xlu0 %v713
      %v753 = vpop.xlane.xlu0 %752
      %754 = vmax.xlane.f32.xlu0 %v714
      %v755 = vpop.xlane.xlu0 %754
      %756 = vmax.xlane.f32.xlu0 %v715
      %v757 = vpop.xlane.xlu0 %756
      %758 = vmax.xlane.f32.xlu0 %v716
      %v759 = vpop.xlane.xlu0 %758
      %760 = vmax.xlane.f32.xlu0 %v717
      %v761 = vpop.xlane.xlu0 %760
      %762 = vmax.xlane.f32.xlu0 %v718
      %v763 = vpop.xlane.xlu0 %762
      %764 = vmax.xlane.f32.xlu0 %v719
      %v765 = vpop.xlane.xlu0 %764
      %766 = vmax.xlane.f32.xlu0 %v720
      %v767 = vpop.xlane.xlu0 %766
      %768 = vmax.xlane.f32.xlu0 %v721
      %v769 = vpop.xlane.xlu0 %768
      %v770 = vmax.f32 %v722, %v739
      %v771 = vmax.f32 %v723, %v741
      %v772 = vmax.f32 %v724, %v743
      %v773 = vmax.f32 %v725, %v745
      %v774 = vmax.f32 %v726, %v747
      %v775 = vmax.f32 %v727, %v749
      %v776 = vmax.f32 %v728, %v751
      %v777 = vmax.f32 %v729, %v753
      %v778 = vmax.f32 %v730, %v755
      %v779 = vmax.f32 %v731, %v757
      %v780 = vmax.f32 %v732, %v759
      %v781 = vmax.f32 %v733, %v761
      %v782 = vmax.f32 %v734, %v763
      %v783 = vmax.f32 %v735, %v765
      %v784 = vmax.f32 %v736, %v767
      %v785 = vmax.f32 %v737, %v769
      %v786 = vsub.f32 %v722, %v770
      %v787 = vsub.f32 %v723, %v771
      %v788 = vsub.f32 %v724, %v772
      %v789 = vsub.f32 %v725, %v773
      %v790 = vsub.f32 %v726, %v774
      %v791 = vsub.f32 %v727, %v775
      %v792 = vsub.f32 %v728, %v776
      %v793 = vsub.f32 %v729, %v777
      %v794 = vsub.f32 %v730, %v778
      %v795 = vsub.f32 %v731, %v779
      %v796 = vsub.f32 %v732, %v780
      %v797 = vsub.f32 %v733, %v781
      %v798 = vsub.f32 %v734, %v782
      %v799 = vsub.f32 %v735, %v783
      %v800 = vsub.f32 %v736, %v784
      %v801 = vsub.f32 %v737, %v785
      %v802 = vmul.f32 %v786, 1.442695
      %v803 = vpow.pop %v802
      %v804 = vmul.f32 %v787, 1.442695
      %v805 = vpow.pop %v804
      %v806 = vmul.f32 %v788, 1.442695
      %v807 = vpow.pop %v806
      %v808 = vmul.f32 %v789, 1.442695
      %v809 = vpow.pop %v808
      %v810 = vmul.f32 %v790, 1.442695
      %v811 = vpow.pop %v810
      %v812 = vmul.f32 %v791, 1.442695
      %v813 = vpow.pop %v812
      %v814 = vmul.f32 %v792, 1.442695
      %v815 = vpow.pop %v814
      %v816 = vmul.f32 %v793, 1.442695
      %v817 = vpow.pop %v816
      %v818 = vmul.f32 %v794, 1.442695
      %v819 = vpow.pop %v818
      %v820 = vmul.f32 %v795, 1.442695
      %v821 = vpow.pop %v820
      %v822 = vmul.f32 %v796, 1.442695
      %v823 = vpow.pop %v822
      %v824 = vmul.f32 %v797, 1.442695
      %v825 = vpow.pop %v824
      %v826 = vmul.f32 %v798, 1.442695
      %v827 = vpow.pop %v826
      %v828 = vmul.f32 %v799, 1.442695
      %v829 = vpow.pop %v828
      %v830 = vmul.f32 %v800, 1.442695
      %v831 = vpow.pop %v830
      %v832 = vmul.f32 %v801, 1.442695
      %v833 = vpow.pop %v832
      %835 = vset.pattern.permute.xlu0 0
      %836 = vperm.xlu0 %835, %v770
      %v837 = vpop.permute.xlu0 %836
      %840 = vset.pattern.permute.xlu0 0
      %841 = vperm.xlu0 %840, %v771
      %v842 = vpop.permute.xlu0 %841
      %845 = vset.pattern.permute.xlu0 0
      %846 = vperm.xlu0 %845, %v772
      %v847 = vpop.permute.xlu0 %846
      %850 = vset.pattern.permute.xlu0 0
      %851 = vperm.xlu0 %850, %v773
      %v852 = vpop.permute.xlu0 %851
      %855 = vset.pattern.permute.xlu0 0
      %856 = vperm.xlu0 %855, %v774
      %v857 = vpop.permute.xlu0 %856
      %860 = vset.pattern.permute.xlu0 0
      %861 = vperm.xlu0 %860, %v775
      %v862 = vpop.permute.xlu0 %861
      %865 = vset.pattern.permute.xlu0 0
      %866 = vperm.xlu0 %865, %v776
      %v867 = vpop.permute.xlu0 %866
      %870 = vset.pattern.permute.xlu0 0
      %871 = vperm.xlu0 %870, %v777
      %v872 = vpop.permute.xlu0 %871
      %875 = vset.pattern.permute.xlu0 0
      %876 = vperm.xlu0 %875, %v778
      %v877 = vpop.permute.xlu0 %876
      %880 = vset.pattern.permute.xlu0 0
      %881 = vperm.xlu0 %880, %v779
      %v882 = vpop.permute.xlu0 %881
      %885 = vset.pattern.permute.xlu0 0
      %886 = vperm.xlu0 %885, %v780
      %v887 = vpop.permute.xlu0 %886
      %890 = vset.pattern.permute.xlu0 0
      %891 = vperm.xlu0 %890, %v781
      %v892 = vpop.permute.xlu0 %891
      %895 = vset.pattern.permute.xlu0 0
      %896 = vperm.xlu0 %895, %v782
      %v897 = vpop.permute.xlu0 %896
      %900 = vset.pattern.permute.xlu0 0
      %901 = vperm.xlu0 %900, %v783
      %v902 = vpop.permute.xlu0 %901
      %905 = vset.pattern.permute.xlu0 0
      %906 = vperm.xlu0 %905, %v784
      %v907 = vpop.permute.xlu0 %906
      %910 = vset.pattern.permute.xlu0 0
      %911 = vperm.xlu0 %910, %v785
      %v912 = vpop.permute.xlu0 %911
      %v914 = vsub.f32 %v706, %v837
      %v915 = vsub.f32 %v707, %v842
      %v916 = vsub.f32 %v708, %v847
      %v917 = vsub.f32 %v709, %v852
      %v918 = vsub.f32 %v710, %v857
      %v919 = vsub.f32 %v711, %v862
      %v920 = vsub.f32 %v712, %v867
      %v921 = vsub.f32 %v713, %v872
      %v922 = vsub.f32 %v714, %v877
      %v923 = vsub.f32 %v715, %v882
      %v924 = vsub.f32 %v716, %v887
      %v925 = vsub.f32 %v717, %v892
      %v926 = vsub.f32 %v718, %v897
      %v927 = vsub.f32 %v719, %v902
      %v928 = vsub.f32 %v720, %v907
      %v929 = vsub.f32 %v721, %v912
      %v930 = vmul.f32 %v914, 1.442695
      %v931 = vpow.pop %v930
      %v932 = vmul.f32 %v915, 1.442695
      %v933 = vpow.pop %v932
      %v934 = vmul.f32 %v916, 1.442695
      %v935 = vpow.pop %v934
      %v936 = vmul.f32 %v917, 1.442695
      %v937 = vpow.pop %v936
      %v938 = vmul.f32 %v918, 1.442695
      %v939 = vpow.pop %v938
      %v940 = vmul.f32 %v919, 1.442695
      %v941 = vpow.pop %v940
      %v942 = vmul.f32 %v920, 1.442695
      %v943 = vpow.pop %v942
      %v944 = vmul.f32 %v921, 1.442695
      %v945 = vpow.pop %v944
      %v946 = vmul.f32 %v922, 1.442695
      %v947 = vpow.pop %v946
      %v948 = vmul.f32 %v923, 1.442695
      %v949 = vpow.pop %v948
      %v950 = vmul.f32 %v924, 1.442695
      %v951 = vpow.pop %v950
      %v952 = vmul.f32 %v925, 1.442695
      %v953 = vpow.pop %v952
      %v954 = vmul.f32 %v926, 1.442695
      %v955 = vpow.pop %v954
      %v956 = vmul.f32 %v927, 1.442695
      %v957 = vpow.pop %v956
      %v958 = vmul.f32 %v928, 1.442695
      %v959 = vpow.pop %v958
      %v960 = vmul.f32 %v929, 1.442695
      %v961 = vpow.pop %v960
      %v962 = vld [vmem:[#allocation3] sm:$0xff]
      %v963 = vld [vmem:[#allocation3 + $0x8] sm:$0xff]
      %v964 = vld [vmem:[#allocation3 + $0x10] sm:$0xff]
      %v965 = vld [vmem:[#allocation3 + $0x18] sm:$0xff]
      %v966 = vld [vmem:[#allocation3 + $0x20] sm:$0xff]
      %v967 = vld [vmem:[#allocation3 + $0x28] sm:$0xff]
      %v968 = vld [vmem:[#allocation3 + $0x30] sm:$0xff]
      %v969 = vld [vmem:[#allocation3 + $0x38] sm:$0xff]
      %v970 = vld [vmem:[#allocation3 + $0x40] sm:$0xff]
      %v971 = vld [vmem:[#allocation3 + $0x48] sm:$0xff]
      %v972 = vld [vmem:[#allocation3 + $0x50] sm:$0xff]
      %v973 = vld [vmem:[#allocation3 + $0x58] sm:$0xff]
      %v974 = vld [vmem:[#allocation3 + $0x60] sm:$0xff]
      %v975 = vld [vmem:[#allocation3 + $0x68] sm:$0xff]
      %v976 = vld [vmem:[#allocation3 + $0x70] sm:$0xff]
      %v977 = vld [vmem:[#allocation3 + $0x78] sm:$0xff]
      %v978 = vmul.f32 %v803, %v962
      %v979 = vmul.f32 %v805, %v963
      %v980 = vmul.f32 %v807, %v964
      %v981 = vmul.f32 %v809, %v965
      %v982 = vmul.f32 %v811, %v966
      %v983 = vmul.f32 %v813, %v967
      %v984 = vmul.f32 %v815, %v968
      %v985 = vmul.f32 %v817, %v969
      %v986 = vmul.f32 %v819, %v970
      %v987 = vmul.f32 %v821, %v971
      %v988 = vmul.f32 %v823, %v972
      %v989 = vmul.f32 %v825, %v973
      %v990 = vmul.f32 %v827, %v974
      %v991 = vmul.f32 %v829, %v975
      %v992 = vmul.f32 %v831, %v976
      %v993 = vmul.f32 %v833, %v977
      %994 = vadd.xlane.f32.xlu0 %v931
      %v995 = vpop.xlane.xlu0 %994
      %996 = vadd.xlane.f32.xlu0 %v933
      %v997 = vpop.xlane.xlu0 %996
      %998 = vadd.xlane.f32.xlu0 %v935
      %v999 = vpop.xlane.xlu0 %998
      %1000 = vadd.xlane.f32.xlu0 %v937
      %v1001 = vpop.xlane.xlu0 %1000
      %1002 = vadd.xlane.f32.xlu0 %v939
      %v1003 = vpop.xlane.xlu0 %1002
      %1004 = vadd.xlane.f32.xlu0 %v941
      %v1005 = vpop.xlane.xlu0 %1004
      %1006 = vadd.xlane.f32.xlu0 %v943
      %v1007 = vpop.xlane.xlu0 %1006
      %1008 = vadd.xlane.f32.xlu0 %v945
      %v1009 = vpop.xlane.xlu0 %1008
      %1010 = vadd.xlane.f32.xlu0 %v947
      %v1011 = vpop.xlane.xlu0 %1010
      %1012 = vadd.xlane.f32.xlu0 %v949
      %v1013 = vpop.xlane.xlu0 %1012
      %1014 = vadd.xlane.f32.xlu0 %v951
      %v1015 = vpop.xlane.xlu0 %1014
      %1016 = vadd.xlane.f32.xlu0 %v953
      %v1017 = vpop.xlane.xlu0 %1016
      %1018 = vadd.xlane.f32.xlu0 %v955
      %v1019 = vpop.xlane.xlu0 %1018
      %1020 = vadd.xlane.f32.xlu0 %v957
      %v1021 = vpop.xlane.xlu0 %1020
      %1022 = vadd.xlane.f32.xlu0 %v959
      %v1023 = vpop.xlane.xlu0 %1022
      %1024 = vadd.xlane.f32.xlu0 %v961
      %v1025 = vpop.xlane.xlu0 %1024
      %v1026 = vadd.f32 %v978, %v995
      %v1027 = vadd.f32 %v979, %v997
      %v1028 = vadd.f32 %v980, %v999
      %v1029 = vadd.f32 %v981, %v1001
      %v1030 = vadd.f32 %v982, %v1003
      %v1031 = vadd.f32 %v983, %v1005
      %v1032 = vadd.f32 %v984, %v1007
      %v1033 = vadd.f32 %v985, %v1009
      %v1034 = vadd.f32 %v986, %v1011
      %v1035 = vadd.f32 %v987, %v1013
      %v1036 = vadd.f32 %v988, %v1015
      %v1037 = vadd.f32 %v989, %v1017
      %v1038 = vadd.f32 %v990, %v1019
      %v1039 = vadd.f32 %v991, %v1021
      %v1040 = vadd.f32 %v992, %v1023
      %v1041 = vadd.f32 %v993, %v1025
      %vm1042 = vcmask 7168
      %1043 = vst.msk [vmem:[#allocation3] sm:$0xff] %vm1042, %v1026
      %1044 = vst.msk [vmem:[#allocation3 + $0x8] sm:$0xff] %vm1042, %v1027
      %1045 = vst.msk [vmem:[#allocation3 + $0x10] sm:$0xff] %vm1042, %v1028
      %1046 = vst.msk [vmem:[#allocation3 + $0x18] sm:$0xff] %vm1042, %v1029
      %1047 = vst.msk [vmem:[#allocation3 + $0x20] sm:$0xff] %vm1042, %v1030
      %1048 = vst.msk [vmem:[#allocation3 + $0x28] sm:$0xff] %vm1042, %v1031
      %1049 = vst.msk [vmem:[#allocation3 + $0x30] sm:$0xff] %vm1042, %v1032
      %1050 = vst.msk [vmem:[#allocation3 + $0x38] sm:$0xff] %vm1042, %v1033
      %1051 = vst.msk [vmem:[#allocation3 + $0x40] sm:$0xff] %vm1042, %v1034
      %1052 = vst.msk [vmem:[#allocation3 + $0x48] sm:$0xff] %vm1042, %v1035
      %1053 = vst.msk [vmem:[#allocation3 + $0x50] sm:$0xff] %vm1042, %v1036
      %1054 = vst.msk [vmem:[#allocation3 + $0x58] sm:$0xff] %vm1042, %v1037
      %1055 = vst.msk [vmem:[#allocation3 + $0x60] sm:$0xff] %vm1042, %v1038
      %1056 = vst.msk [vmem:[#allocation3 + $0x68] sm:$0xff] %vm1042, %v1039
      %1057 = vst.msk [vmem:[#allocation3 + $0x70] sm:$0xff] %vm1042, %v1040
      %1058 = vst.msk [vmem:[#allocation3 + $0x78] sm:$0xff] %vm1042, %v1041
      %v1059 = vld [vmem:[#allocation4] sm:$0xff]
      %v1060 = vld [vmem:[#allocation4 + $0x8] sm:$0xff]
      %v1061 = vld [vmem:[#allocation4 + $0x10] sm:$0xff]
      %v1062 = vld [vmem:[#allocation4 + $0x18] sm:$0xff]
      %v1063 = vld [vmem:[#allocation4 + $0x20] sm:$0xff]
      %v1064 = vld [vmem:[#allocation4 + $0x28] sm:$0xff]
      %v1065 = vld [vmem:[#allocation4 + $0x30] sm:$0xff]
      %v1066 = vld [vmem:[#allocation4 + $0x38] sm:$0xff]
      %v1067 = vld [vmem:[#allocation4 + $0x40] sm:$0xff]
      %v1068 = vld [vmem:[#allocation4 + $0x48] sm:$0xff]
      %v1069 = vld [vmem:[#allocation4 + $0x50] sm:$0xff]
      %v1070 = vld [vmem:[#allocation4 + $0x58] sm:$0xff]
      %v1071 = vld [vmem:[#allocation4 + $0x60] sm:$0xff]
      %v1072 = vld [vmem:[#allocation4 + $0x68] sm:$0xff]
      %v1073 = vld [vmem:[#allocation4 + $0x70] sm:$0xff]
      %v1074 = vld [vmem:[#allocation4 + $0x78] sm:$0xff]
      %1076 = vset.pattern.permute.xlu0 0
      %1077 = vperm.xlu0 %1076, %v803
      %v1078 = vpop.permute.xlu0 %1077
      %1081 = vset.pattern.permute.xlu0 0
      %1082 = vperm.xlu0 %1081, %v805
      %v1083 = vpop.permute.xlu0 %1082
      %1086 = vset.pattern.permute.xlu0 0
      %1087 = vperm.xlu0 %1086, %v807
      %v1088 = vpop.permute.xlu0 %1087
      %1091 = vset.pattern.permute.xlu0 0
      %1092 = vperm.xlu0 %1091, %v809
      %v1093 = vpop.permute.xlu0 %1092
      %1096 = vset.pattern.permute.xlu0 0
      %1097 = vperm.xlu0 %1096, %v811
      %v1098 = vpop.permute.xlu0 %1097
      %1101 = vset.pattern.permute.xlu0 0
      %1102 = vperm.xlu0 %1101, %v813
      %v1103 = vpop.permute.xlu0 %1102
      %1106 = vset.pattern.permute.xlu0 0
      %1107 = vperm.xlu0 %1106, %v815
      %v1108 = vpop.permute.xlu0 %1107
      %1111 = vset.pattern.permute.xlu0 0
      %1112 = vperm.xlu0 %1111, %v817
      %v1113 = vpop.permute.xlu0 %1112
      %1116 = vset.pattern.permute.xlu0 0
      %1117 = vperm.xlu0 %1116, %v819
      %v1118 = vpop.permute.xlu0 %1117
      %1121 = vset.pattern.permute.xlu0 0
      %1122 = vperm.xlu0 %1121, %v821
      %v1123 = vpop.permute.xlu0 %1122
      %1126 = vset.pattern.permute.xlu0 0
      %1127 = vperm.xlu0 %1126, %v823
      %v1128 = vpop.permute.xlu0 %1127
      %1131 = vset.pattern.permute.xlu0 0
      %1132 = vperm.xlu0 %1131, %v825
      %v1133 = vpop.permute.xlu0 %1132
      %1136 = vset.pattern.permute.xlu0 0
      %1137 = vperm.xlu0 %1136, %v827
      %v1138 = vpop.permute.xlu0 %1137
      %1141 = vset.pattern.permute.xlu0 0
      %1142 = vperm.xlu0 %1141, %v829
      %v1143 = vpop.permute.xlu0 %1142
      %1146 = vset.pattern.permute.xlu0 0
      %1147 = vperm.xlu0 %1146, %v831
      %v1148 = vpop.permute.xlu0 %1147
      %1151 = vset.pattern.permute.xlu0 0
      %1152 = vperm.xlu0 %1151, %v833
      %v1153 = vpop.permute.xlu0 %1152
      %v1155 = vmul.f32 %v1078, %v1059
      %v1156 = vmul.f32 %v1083, %v1060
      %v1157 = vmul.f32 %v1088, %v1061
      %v1158 = vmul.f32 %v1093, %v1062
      %v1159 = vmul.f32 %v1098, %v1063
      %v1160 = vmul.f32 %v1103, %v1064
      %v1161 = vmul.f32 %v1108, %v1065
      %v1162 = vmul.f32 %v1113, %v1066
      %v1163 = vmul.f32 %v1118, %v1067
      %v1164 = vmul.f32 %v1123, %v1068
      %v1165 = vmul.f32 %v1128, %v1069
      %v1166 = vmul.f32 %v1133, %v1070
      %v1167 = vmul.f32 %v1138, %v1071
      %v1168 = vmul.f32 %v1143, %v1072
      %v1169 = vmul.f32 %v1148, %v1073
      %v1170 = vmul.f32 %v1153, %v1074
      %v1171 = vpack.c.bf16 %v933, %v931
      %v1172 = vpack.c.bf16 %v937, %v935
      %v1173 = vpack.c.bf16 %v941, %v939
      %v1174 = vpack.c.bf16 %v945, %v943
      %v1175 = vpack.c.bf16 %v949, %v947
      %v1176 = vpack.c.bf16 %v953, %v951
      %v1177 = vpack.c.bf16 %v957, %v955
      %v1178 = vpack.c.bf16 %v961, %v959
      %1179 = vmatprep.subr.bf16.mxu0 0
      %1180 = vmatpush1.bf16.msra.mxu0 %v552
      %1181 = vmatprep.subr.bf16.mxu0 0
      %1182 = vmatpush1.bf16.msra.mxu0 %v553
      %1183 = vmatprep.subr.bf16.mxu0 0
      %1184 = vmatpush1.bf16.msra.mxu0 %v554
      %1185 = vmatprep.subr.bf16.mxu0 0
      %1186 = vmatpush1.bf16.msra.mxu0 %v555
      %1187 = vmatprep.subr.bf16.mxu0 0
      %1188 = vmatpush1.bf16.msra.mxu0 %v556
      %1189 = vmatprep.subr.bf16.mxu0 0
      %1190 = vmatpush1.bf16.msra.mxu0 %v557
      %1191 = vmatprep.subr.bf16.mxu0 0
      %1192 = vmatpush1.bf16.msra.mxu0 %v558
      %1193 = vmatprep.subr.bf16.mxu0 0
      %1194 = vmatpush1.bf16.msra.mxu0 %v559
      %1195 = vmatprep.subr.bf16.mxu0 0
      %1196 = vmatpush1.bf16.msra.mxu0 0
      %1197 = vmatprep.subr.bf16.mxu0 0
      %1198 = vmatpush1.bf16.msra.mxu0 0
      %1199 = vmatprep.subr.bf16.mxu0 0
      %1200 = vmatpush1.bf16.msra.mxu0 0
      %1201 = vmatprep.subr.bf16.mxu0 0
      %1202 = vmatpush1.bf16.msra.mxu0 0
      %1203 = vmatprep.subr.bf16.mxu0 0
      %1204 = vmatpush1.bf16.msra.mxu0 0
      %1205 = vmatprep.subr.bf16.mxu0 0
      %1206 = vmatpush1.bf16.msra.mxu0 0
      %1207 = vmatprep.subr.bf16.mxu0 0
      %1208 = vmatpush1.bf16.msra.mxu0 0
      %1209 = vmatprep.subr.bf16.mxu0 0
      %1210 = vmatpush1.bf16.msra.mxu0 0
      %1211 = vmatprep.mubr.bf16.mxu0 0
      %1212 = vmatmul.mubr.bf16.gmra.mrb[0].mxu0 %v1171
      %v1213 = vpop.f32.mrb[0].mxu0
      %v1214 = vadd.f32 0.0, %v1213
      %v1215 = vpop.f32.mrb[0].mxu0
      %v1216 = vpop.f32.mrb[0].mxu0
      %v1217 = vadd.f32 0.0, %v1216
      %v1218 = vpop.f32.mrb[0].mxu0
      %1219 = vmatprep.mubr.bf16.mxu0 0
      %1220 = vmatmul.mubr.bf16.gmra.mrb[0].mxu0 %v1172
      %v1221 = vpop.f32.mrb[0].mxu0
      %v1222 = vadd.f32 0.0, %v1221
      %v1223 = vpop.f32.mrb[0].mxu0
      %v1224 = vpop.f32.mrb[0].mxu0
      %v1225 = vadd.f32 0.0, %v1224
      %v1226 = vpop.f32.mrb[0].mxu0
      %1227 = vmatprep.mubr.bf16.mxu0 0
      %1228 = vmatmul.mubr.bf16.gmra.mrb[0].mxu0 %v1173
      %v1229 = vpop.f32.mrb[0].mxu0
      %v1230 = vadd.f32 0.0, %v1229
      %v1231 = vpop.f32.mrb[0].mxu0
      %v1232 = vpop.f32.mrb[0].mxu0
      %v1233 = vadd.f32 0.0, %v1232
      %v1234 = vpop.f32.mrb[0].mxu0
      %1235 = vmatprep.mubr.bf16.mxu0 0
      %1236 = vmatmul.mubr.bf16.gmra.mrb[0].mxu0 %v1174
      %v1237 = vpop.f32.mrb[0].mxu0
      %v1238 = vadd.f32 0.0, %v1237
      %v1239 = vpop.f32.mrb[0].mxu0
      %v1240 = vpop.f32.mrb[0].mxu0
      %v1241 = vadd.f32 0.0, %v1240
      %v1242 = vpop.f32.mrb[0].mxu0
      %1243 = vmatprep.mubr.bf16.mxu0 0
      %1244 = vmatmul.mubr.bf16.gmra.mrb[0].mxu0 %v1175
      %v1245 = vpop.f32.mrb[0].mxu0
      %v1246 = vadd.f32 0.0, %v1245
      %v1247 = vpop.f32.mrb[0].mxu0
      %v1248 = vpop.f32.mrb[0].mxu0
      %v1249 = vadd.f32 0.0, %v1248
      %v1250 = vpop.f32.mrb[0].mxu0
      %1251 = vmatprep.mubr.bf16.mxu0 0
      %1252 = vmatmul.mubr.bf16.gmra.mrb[0].mxu0 %v1176
      %v1253 = vpop.f32.mrb[0].mxu0
      %v1254 = vadd.f32 0.0, %v1253
      %v1255 = vpop.f32.mrb[0].mxu0
      %v1256 = vpop.f32.mrb[0].mxu0
      %v1257 = vadd.f32 0.0, %v1256
      %v1258 = vpop.f32.mrb[0].mxu0
      %1259 = vmatprep.mubr.bf16.mxu0 0
      %1260 = vmatmul.mubr.bf16.gmra.mrb[0].mxu0 %v1177
      %v1261 = vpop.f32.mrb[0].mxu0
      %v1262 = vadd.f32 0.0, %v1261
      %v1263 = vpop.f32.mrb[0].mxu0
      %v1264 = vpop.f32.mrb[0].mxu0
      %v1265 = vadd.f32 0.0, %v1264
      %v1266 = vpop.f32.mrb[0].mxu0
      %1267 = vmatprep.mubr.bf16.mxu0 0
      %1268 = vmatmul.mubr.bf16.gmra.mrb[0].mxu0 %v1178
      %v1269 = vpop.f32.mrb[0].mxu0
      %v1270 = vadd.f32 0.0, %v1269
      %v1271 = vpop.f32.mrb[0].mxu0
      %v1272 = vpop.f32.mrb[0].mxu0
      %v1273 = vadd.f32 0.0, %v1272
      %v1274 = vpop.f32.mrb[0].mxu0
      %1275 = vdwg.mxu0
      %v1276 = vadd.f32 %v1155, %v1214
      %v1277 = vadd.f32 %v1156, %v1217
      %v1278 = vadd.f32 %v1157, %v1222
      %v1279 = vadd.f32 %v1158, %v1225
      %v1280 = vadd.f32 %v1159, %v1230
      %v1281 = vadd.f32 %v1160, %v1233
      %v1282 = vadd.f32 %v1161, %v1238
      %v1283 = vadd.f32 %v1162, %v1241
      %v1284 = vadd.f32 %v1163, %v1246
      %v1285 = vadd.f32 %v1164, %v1249
      %v1286 = vadd.f32 %v1165, %v1254
      %v1287 = vadd.f32 %v1166, %v1257
      %v1288 = vadd.f32 %v1167, %v1262
      %v1289 = vadd.f32 %v1168, %v1265
      %v1290 = vadd.f32 %v1169, %v1270
      %v1291 = vadd.f32 %v1170, %v1273
      %1292 = vst.msk [vmem:[#allocation4] sm:$0xff] %vm560, %v1276
      %1293 = vst.msk [vmem:[#allocation4 + $0x8] sm:$0xff] %vm560, %v1277
      %1294 = vst.msk [vmem:[#allocation4 + $0x10] sm:$0xff] %vm560, %v1278
      %1295 = vst.msk [vmem:[#allocation4 + $0x18] sm:$0xff] %vm560, %v1279
      %1296 = vst.msk [vmem:[#allocation4 + $0x20] sm:$0xff] %vm560, %v1280
      %1297 = vst.msk [vmem:[#allocation4 + $0x28] sm:$0xff] %vm560, %v1281
      %1298 = vst.msk [vmem:[#allocation4 + $0x30] sm:$0xff] %vm560, %v1282
      %1299 = vst.msk [vmem:[#allocation4 + $0x38] sm:$0xff] %vm560, %v1283
      %1300 = vst.msk [vmem:[#allocation4 + $0x40] sm:$0xff] %vm560, %v1284
      %1301 = vst.msk [vmem:[#allocation4 + $0x48] sm:$0xff] %vm560, %v1285
      %1302 = vst.msk [vmem:[#allocation4 + $0x50] sm:$0xff] %vm560, %v1286
      %1303 = vst.msk [vmem:[#allocation4 + $0x58] sm:$0xff] %vm560, %v1287
      %1304 = vst.msk [vmem:[#allocation4 + $0x60] sm:$0xff] %vm560, %v1288
      %1305 = vst.msk [vmem:[#allocation4 + $0x68] sm:$0xff] %vm560, %v1289
      %1306 = vst.msk [vmem:[#allocation4 + $0x70] sm:$0xff] %vm560, %v1290
      %1307 = vst.msk [vmem:[#allocation4 + $0x78] sm:$0xff] %vm560, %v1291
      %1308 = vst.msk [vmem:[#allocation2] sm:$0xff] %vm1042, %v770
      %1309 = vst.msk [vmem:[#allocation2 + $0x8] sm:$0xff] %vm1042, %v771
      %1310 = vst.msk [vmem:[#allocation2 + $0x10] sm:$0xff] %vm1042, %v772
      %1311 = vst.msk [vmem:[#allocation2 + $0x18] sm:$0xff] %vm1042, %v773
      %1312 = vst.msk [vmem:[#allocation2 + $0x20] sm:$0xff] %vm1042, %v774
      %1313 = vst.msk [vmem:[#allocation2 + $0x28] sm:$0xff] %vm1042, %v775
      %1314 = vst.msk [vmem:[#allocation2 + $0x30] sm:$0xff] %vm1042, %v776
      %1315 = vst.msk [vmem:[#allocation2 + $0x38] sm:$0xff] %vm1042, %v777
      %1316 = vst.msk [vmem:[#allocation2 + $0x40] sm:$0xff] %vm1042, %v778
      %1317 = vst.msk [vmem:[#allocation2 + $0x48] sm:$0xff] %vm1042, %v779
      %1318 = vst.msk [vmem:[#allocation2 + $0x50] sm:$0xff] %vm1042, %v780
      %1319 = vst.msk [vmem:[#allocation2 + $0x58] sm:$0xff] %vm1042, %v781
      %1320 = vst.msk [vmem:[#allocation2 + $0x60] sm:$0xff] %vm1042, %v782
      %1321 = vst.msk [vmem:[#allocation2 + $0x68] sm:$0xff] %vm1042, %v783
      %1322 = vst.msk [vmem:[#allocation2 + $0x70] sm:$0xff] %vm1042, %v784
      %1323 = vst.msk [vmem:[#allocation2 + $0x78] sm:$0xff] %vm1042, %v785
      %1332 = vrot.lane.b32.xlu0 %v536, 120
      %v1333 = vpop.permute.xlu0 %1332
      %1334 = vrot.lane.b32.xlu0 %v537, 120
      %v1335 = vpop.permute.xlu0 %1334
      %1336 = vrot.lane.b32.xlu0 %v538, 120
      %v1337 = vpop.permute.xlu0 %1336
      %1338 = vrot.lane.b32.xlu0 %v539, 120
      %v1339 = vpop.permute.xlu0 %1338
      %1340 = vrot.lane.b32.xlu0 %v540, 120
      %v1341 = vpop.permute.xlu0 %1340
      %1342 = vrot.lane.b32.xlu0 %v541, 120
      %v1343 = vpop.permute.xlu0 %1342
      %1344 = vrot.lane.b32.xlu0 %v542, 120
      %v1345 = vpop.permute.xlu0 %1344
      %1346 = vrot.lane.b32.xlu0 %v543, 120
      %v1347 = vpop.permute.xlu0 %1346
      %1356 = vrot.lane.b32.xlu0 %v544, 120
      %v1357 = vpop.permute.xlu0 %1356
      %1358 = vrot.lane.b32.xlu0 %v545, 120
      %v1359 = vpop.permute.xlu0 %1358
      %1360 = vrot.lane.b32.xlu0 %v546, 120
      %v1361 = vpop.permute.xlu0 %1360
      %1362 = vrot.lane.b32.xlu0 %v547, 120
      %v1363 = vpop.permute.xlu0 %1362
      %1364 = vrot.lane.b32.xlu0 %v548, 120
      %v1365 = vpop.permute.xlu0 %1364
      %1366 = vrot.lane.b32.xlu0 %v549, 120
      %v1367 = vpop.permute.xlu0 %1366
      %1368 = vrot.lane.b32.xlu0 %v550, 120
      %v1369 = vpop.permute.xlu0 %1368
      %1370 = vrot.lane.b32.xlu0 %v551, 120
      %v1371 = vpop.permute.xlu0 %1370
      %v1373 = vsel %vm560, %v1333, 0
      %v1376 = vsel %vm560, %v1335, 0
      %v1379 = vsel %vm560, %v1337, 0
      %v1382 = vsel %vm560, %v1339, 0
      %v1385 = vsel %vm560, %v1341, 0
      %v1388 = vsel %vm560, %v1343, 0
      %v1391 = vsel %vm560, %v1345, 0
      %v1394 = vsel %vm560, %v1347, 0
      %v1397 = vsel %vm560, %v1357, 0
      %v1400 = vsel %vm560, %v1359, 0
      %v1403 = vsel %vm560, %v1361, 0
      %v1406 = vsel %vm560, %v1363, 0
      %v1409 = vsel %vm560, %v1365, 0
      %v1412 = vsel %vm560, %v1367, 0
      %v1415 = vsel %vm560, %v1369, 0
      %v1418 = vsel %vm560, %v1371, 0
      %1420 = vmatprep.subr.bf16.mxu0 0
      %1421 = vmatpush1.bf16.xpose.msra.mxu0 %v1397
      %1422 = vmatprep.subr.bf16.mxu0 0
      %1423 = vmatpush1.bf16.xpose.msra.mxu0 %v1400
      %1424 = vmatprep.subr.bf16.mxu0 0
      %1425 = vmatpush1.bf16.xpose.msra.mxu0 %v1403
      %1426 = vmatprep.subr.bf16.mxu0 0
      %1427 = vmatpush1.bf16.xpose.msra.mxu0 %v1406
      %1428 = vmatprep.subr.bf16.mxu0 0
      %1429 = vmatpush1.bf16.xpose.msra.mxu0 %v1409
      %1430 = vmatprep.subr.bf16.mxu0 0
      %1431 = vmatpush1.bf16.xpose.msra.mxu0 %v1412
      %1432 = vmatprep.subr.bf16.mxu0 0
      %1433 = vmatpush1.bf16.xpose.msra.mxu0 %v1415
      %1434 = vmatprep.subr.bf16.mxu0 0
      %1435 = vmatpush1.bf16.xpose.msra.mxu0 %v1418
      %1436 = vmatprep.subr.bf16.mxu0 0
      %1437 = vmatpush1.bf16.xpose.msra.mxu0 0
      %1438 = vmatprep.subr.bf16.mxu0 0
      %1439 = vmatpush1.bf16.xpose.msra.mxu0 0
      %1440 = vmatprep.subr.bf16.mxu0 0
      %1441 = vmatpush1.bf16.xpose.msra.mxu0 0
      %1442 = vmatprep.subr.bf16.mxu0 0
      %1443 = vmatpush1.bf16.xpose.msra.mxu0 0
      %1444 = vmatprep.subr.bf16.mxu0 0
      %1445 = vmatpush1.bf16.xpose.msra.mxu0 0
      %1446 = vmatprep.subr.bf16.mxu0 0
      %1447 = vmatpush1.bf16.xpose.msra.mxu0 0
      %1448 = vmatprep.subr.bf16.mxu0 0
      %1449 = vmatpush1.bf16.xpose.msra.mxu0 0
      %1450 = vmatprep.subr.bf16.mxu0 0
      %1451 = vmatpush1.bf16.xpose.msra.mxu0 0
      %1452 = vmatprep.mubr.bf16.mxu0 0
      %1453 = vmatmul.mubr.bf16.gmra.mrb[0].mxu0 %v1373
      %v1454 = vpop.f32.mrb[0].mxu0
      %v1455 = vadd.f32 0.0, %v1454
      %v1456 = vpop.f32.mrb[0].mxu0
      %v1457 = vpop.f32.mrb[0].mxu0
      %v1458 = vadd.f32 0.0, %v1457
      %v1459 = vpop.f32.mrb[0].mxu0
      %1460 = vmatprep.mubr.bf16.mxu0 0
      %1461 = vmatmul.mubr.bf16.gmra.mrb[0].mxu0 %v1376
      %v1462 = vpop.f32.mrb[0].mxu0
      %v1463 = vadd.f32 0.0, %v1462
      %v1464 = vpop.f32.mrb[0].mxu0
      %v1465 = vpop.f32.mrb[0].mxu0
      %v1466 = vadd.f32 0.0, %v1465
      %v1467 = vpop.f32.mrb[0].mxu0
      %1468 = vmatprep.mubr.bf16.mxu0 0
      %1469 = vmatmul.mubr.bf16.gmra.mrb[0].mxu0 %v1379
      %v1470 = vpop.f32.mrb[0].mxu0
      %v1471 = vadd.f32 0.0, %v1470
      %v1472 = vpop.f32.mrb[0].mxu0
      %v1473 = vpop.f32.mrb[0].mxu0
      %v1474 = vadd.f32 0.0, %v1473
      %v1475 = vpop.f32.mrb[0].mxu0
      %1476 = vmatprep.mubr.bf16.mxu0 0
      %1477 = vmatmul.mubr.bf16.gmra.mrb[0].mxu0 %v1382
      %v1478 = vpop.f32.mrb[0].mxu0
      %v1479 = vadd.f32 0.0, %v1478
      %v1480 = vpop.f32.mrb[0].mxu0
      %v1481 = vpop.f32.mrb[0].mxu0
      %v1482 = vadd.f32 0.0, %v1481
      %v1483 = vpop.f32.mrb[0].mxu0
      %1484 = vmatprep.mubr.bf16.mxu0 0
      %1485 = vmatmul.mubr.bf16.gmra.mrb[0].mxu0 %v1385
      %v1486 = vpop.f32.mrb[0].mxu0
      %v1487 = vadd.f32 0.0, %v1486
      %v1488 = vpop.f32.mrb[0].mxu0
      %v1489 = vpop.f32.mrb[0].mxu0
      %v1490 = vadd.f32 0.0, %v1489
      %v1491 = vpop.f32.mrb[0].mxu0
      %1492 = vmatprep.mubr.bf16.mxu0 0
      %1493 = vmatmul.mubr.bf16.gmra.mrb[0].mxu0 %v1388
      %v1494 = vpop.f32.mrb[0].mxu0
      %v1495 = vadd.f32 0.0, %v1494
      %v1496 = vpop.f32.mrb[0].mxu0
      %v1497 = vpop.f32.mrb[0].mxu0
      %v1498 = vadd.f32 0.0, %v1497
      %v1499 = vpop.f32.mrb[0].mxu0
      %1500 = vmatprep.mubr.bf16.mxu0 0
      %1501 = vmatmul.mubr.bf16.gmra.mrb[0].mxu0 %v1391
      %v1502 = vpop.f32.mrb[0].mxu0
      %v1503 = vadd.f32 0.0, %v1502
      %v1504 = vpop.f32.mrb[0].mxu0
      %v1505 = vpop.f32.mrb[0].mxu0
      %v1506 = vadd.f32 0.0, %v1505
      %v1507 = vpop.f32.mrb[0].mxu0
      %1508 = vmatprep.mubr.bf16.mxu0 0
      %1509 = vmatmul.mubr.bf16.gmra.mrb[0].mxu0 %v1394
      %v1510 = vpop.f32.mrb[0].mxu0
      %v1511 = vadd.f32 0.0, %v1510
      %v1512 = vpop.f32.mrb[0].mxu0
      %v1513 = vpop.f32.mrb[0].mxu0
      %v1514 = vadd.f32 0.0, %v1513
      %v1515 = vpop.f32.mrb[0].mxu0
      %1516 = vdwg.mxu0
      %v1517 = vmul.f32 %v1455, 0.35355338
      %v1518 = vmul.f32 %v1458, 0.35355338
      %v1519 = vmul.f32 %v1463, 0.35355338
      %v1520 = vmul.f32 %v1466, 0.35355338
      %v1521 = vmul.f32 %v1471, 0.35355338
      %v1522 = vmul.f32 %v1474, 0.35355338
      %v1523 = vmul.f32 %v1479, 0.35355338
      %v1524 = vmul.f32 %v1482, 0.35355338
      %v1525 = vmul.f32 %v1487, 0.35355338
      %v1526 = vmul.f32 %v1490, 0.35355338
      %v1527 = vmul.f32 %v1495, 0.35355338
      %v1528 = vmul.f32 %v1498, 0.35355338
      %v1529 = vmul.f32 %v1503, 0.35355338
      %v1530 = vmul.f32 %v1506, 0.35355338
      %v1531 = vmul.f32 %v1511, 0.35355338
      %v1532 = vmul.f32 %v1514, 0.35355338
      %s1533 = scalar_lea.vmem [#allocation2], 128
      %v1534 = vld [vmem:[%s1533] sm:$0xff]
      %v1535 = vld [vmem:[%s1533 + $0x8] sm:$0xff]
      %v1536 = vld [vmem:[%s1533 + $0x10] sm:$0xff]
      %v1537 = vld [vmem:[%s1533 + $0x18] sm:$0xff]
      %v1538 = vld [vmem:[%s1533 + $0x20] sm:$0xff]
      %v1539 = vld [vmem:[%s1533 + $0x28] sm:$0xff]
      %v1540 = vld [vmem:[%s1533 + $0x30] sm:$0xff]
      %v1541 = vld [vmem:[%s1533 + $0x38] sm:$0xff]
      %v1542 = vld [vmem:[%s1533 + $0x40] sm:$0xff]
      %v1543 = vld [vmem:[%s1533 + $0x48] sm:$0xff]
      %v1544 = vld [vmem:[%s1533 + $0x50] sm:$0xff]
      %v1545 = vld [vmem:[%s1533 + $0x58] sm:$0xff]
      %v1546 = vld [vmem:[%s1533 + $0x60] sm:$0xff]
      %v1547 = vld [vmem:[%s1533 + $0x68] sm:$0xff]
      %v1548 = vld [vmem:[%s1533 + $0x70] sm:$0xff]
      %v1549 = vld [vmem:[%s1533 + $0x78] sm:$0xff]
      %1550 = vmax.xlane.f32.xlu0 %v1517
      %v1551 = vpop.xlane.xlu0 %1550
      %1552 = vmax.xlane.f32.xlu0 %v1518
      %v1553 = vpop.xlane.xlu0 %1552
      %1554 = vmax.xlane.f32.xlu0 %v1519
      %v1555 = vpop.xlane.xlu0 %1554
      %1556 = vmax.xlane.f32.xlu0 %v1520
      %v1557 = vpop.xlane.xlu0 %1556
      %1558 = vmax.xlane.f32.xlu0 %v1521
      %v1559 = vpop.xlane.xlu0 %1558
      %1560 = vmax.xlane.f32.xlu0 %v1522
      %v1561 = vpop.xlane.xlu0 %1560
      %1562 = vmax.xlane.f32.xlu0 %v1523
      %v1563 = vpop.xlane.xlu0 %1562
      %1564 = vmax.xlane.f32.xlu0 %v1524
      %v1565 = vpop.xlane.xlu0 %1564
      %1566 = vmax.xlane.f32.xlu0 %v1525
      %v1567 = vpop.xlane.xlu0 %1566
      %1568 = vmax.xlane.f32.xlu0 %v1526
      %v1569 = vpop.xlane.xlu0 %1568
      %1570 = vmax.xlane.f32.xlu0 %v1527
      %v1571 = vpop.xlane.xlu0 %1570
      %1572 = vmax.xlane.f32.xlu0 %v1528
      %v1573 = vpop.xlane.xlu0 %1572
      %1574 = vmax.xlane.f32.xlu0 %v1529
      %v1575 = vpop.xlane.xlu0 %1574
      %1576 = vmax.xlane.f32.xlu0 %v1530
      %v1577 = vpop.xlane.xlu0 %1576
      %1578 = vmax.xlane.f32.xlu0 %v1531
      %v1579 = vpop.xlane.xlu0 %1578
      %1580 = vmax.xlane.f32.xlu0 %v1532
      %v1581 = vpop.xlane.xlu0 %1580
      %v1582 = vmax.f32 %v1534, %v1551
      %v1583 = vmax.f32 %v1535, %v1553
      %v1584 = vmax.f32 %v1536, %v1555
      %v1585 = vmax.f32 %v1537, %v1557
      %v1586 = vmax.f32 %v1538, %v1559
      %v1587 = vmax.f32 %v1539, %v1561
      %v1588 = vmax.f32 %v1540, %v1563
      %v1589 = vmax.f32 %v1541, %v1565
      %v1590 = vmax.f32 %v1542, %v1567
      %v1591 = vmax.f32 %v1543, %v1569
      %v1592 = vmax.f32 %v1544, %v1571
      %v1593 = vmax.f32 %v1545, %v1573
      %v1594 = vmax.f32 %v1546, %v1575
      %v1595 = vmax.f32 %v1547, %v1577
      %v1596 = vmax.f32 %v1548, %v1579
      %v1597 = vmax.f32 %v1549, %v1581
      %v1598 = vsub.f32 %v1534, %v1582
      %v1599 = vsub.f32 %v1535, %v1583
      %v1600 = vsub.f32 %v1536, %v1584
      %v1601 = vsub.f32 %v1537, %v1585
      %v1602 = vsub.f32 %v1538, %v1586
      %v1603 = vsub.f32 %v1539, %v1587
      %v1604 = vsub.f32 %v1540, %v1588
      %v1605 = vsub.f32 %v1541, %v1589
      %v1606 = vsub.f32 %v1542, %v1590
      %v1607 = vsub.f32 %v1543, %v1591
      %v1608 = vsub.f32 %v1544, %v1592
      %v1609 = vsub.f32 %v1545, %v1593
      %v1610 = vsub.f32 %v1546, %v1594
      %v1611 = vsub.f32 %v1547, %v1595
      %v1612 = vsub.f32 %v1548, %v1596
      %v1613 = vsub.f32 %v1549, %v1597
      %v1614 = vmul.f32 %v1598, 1.442695
      %v1615 = vpow.pop %v1614
      %v1616 = vmul.f32 %v1599, 1.442695
      %v1617 = vpow.pop %v1616
      %v1618 = vmul.f32 %v1600, 1.442695
      %v1619 = vpow.pop %v1618
      %v1620 = vmul.f32 %v1601, 1.442695
      %v1621 = vpow.pop %v1620
      %v1622 = vmul.f32 %v1602, 1.442695
      %v1623 = vpow.pop %v1622
      %v1624 = vmul.f32 %v1603, 1.442695
      %v1625 = vpow.pop %v1624
      %v1626 = vmul.f32 %v1604, 1.442695
      %v1627 = vpow.pop %v1626
      %v1628 = vmul.f32 %v1605, 1.442695
      %v1629 = vpow.pop %v1628
      %v1630 = vmul.f32 %v1606, 1.442695
      %v1631 = vpow.pop %v1630
      %v1632 = vmul.f32 %v1607, 1.442695
      %v1633 = vpow.pop %v1632
      %v1634 = vmul.f32 %v1608, 1.442695
      %v1635 = vpow.pop %v1634
      %v1636 = vmul.f32 %v1609, 1.442695
      %v1637 = vpow.pop %v1636
      %v1638 = vmul.f32 %v1610, 1.442695
      %v1639 = vpow.pop %v1638
      %v1640 = vmul.f32 %v1611, 1.442695
      %v1641 = vpow.pop %v1640
      %v1642 = vmul.f32 %v1612, 1.442695
      %v1643 = vpow.pop %v1642
      %v1644 = vmul.f32 %v1613, 1.442695
      %v1645 = vpow.pop %v1644
      %1647 = vset.pattern.permute.xlu0 0
      %1648 = vperm.xlu0 %1647, %v1582
      %v1649 = vpop.permute.xlu0 %1648
      %1652 = vset.pattern.permute.xlu0 0
      %1653 = vperm.xlu0 %1652, %v1583
      %v1654 = vpop.permute.xlu0 %1653
      %1657 = vset.pattern.permute.xlu0 0
      %1658 = vperm.xlu0 %1657, %v1584
      %v1659 = vpop.permute.xlu0 %1658
      %1662 = vset.pattern.permute.xlu0 0
      %1663 = vperm.xlu0 %1662, %v1585
      %v1664 = vpop.permute.xlu0 %1663
      %1667 = vset.pattern.permute.xlu0 0
      %1668 = vperm.xlu0 %1667, %v1586
      %v1669 = vpop.permute.xlu0 %1668
      %1672 = vset.pattern.permute.xlu0 0
      %1673 = vperm.xlu0 %1672, %v1587
      %v1674 = vpop.permute.xlu0 %1673
      %1677 = vset.pattern.permute.xlu0 0
      %1678 = vperm.xlu0 %1677, %v1588
      %v1679 = vpop.permute.xlu0 %1678
      %1682 = vset.pattern.permute.xlu0 0
      %1683 = vperm.xlu0 %1682, %v1589
      %v1684 = vpop.permute.xlu0 %1683
      %1687 = vset.pattern.permute.xlu0 0
      %1688 = vperm.xlu0 %1687, %v1590
      %v1689 = vpop.permute.xlu0 %1688
      %1692 = vset.pattern.permute.xlu0 0
      %1693 = vperm.xlu0 %1692, %v1591
      %v1694 = vpop.permute.xlu0 %1693
      %1697 = vset.pattern.permute.xlu0 0
      %1698 = vperm.xlu0 %1697, %v1592
      %v1699 = vpop.permute.xlu0 %1698
      %1702 = vset.pattern.permute.xlu0 0
      %1703 = vperm.xlu0 %1702, %v1593
      %v1704 = vpop.permute.xlu0 %1703
      %1707 = vset.pattern.permute.xlu0 0
      %1708 = vperm.xlu0 %1707, %v1594
      %v1709 = vpop.permute.xlu0 %1708
      %1712 = vset.pattern.permute.xlu0 0
      %1713 = vperm.xlu0 %1712, %v1595
      %v1714 = vpop.permute.xlu0 %1713
      %1717 = vset.pattern.permute.xlu0 0
      %1718 = vperm.xlu0 %1717, %v1596
      %v1719 = vpop.permute.xlu0 %1718
      %1722 = vset.pattern.permute.xlu0 0
      %1723 = vperm.xlu0 %1722, %v1597
      %v1724 = vpop.permute.xlu0 %1723
      %v1726 = vsub.f32 %v1517, %v1649
      %v1727 = vsub.f32 %v1518, %v1654
      %v1728 = vsub.f32 %v1519, %v1659
      %v1729 = vsub.f32 %v1520, %v1664
      %v1730 = vsub.f32 %v1521, %v1669
      %v1731 = vsub.f32 %v1522, %v1674
      %v1732 = vsub.f32 %v1523, %v1679
      %v1733 = vsub.f32 %v1524, %v1684
      %v1734 = vsub.f32 %v1525, %v1689
      %v1735 = vsub.f32 %v1526, %v1694
      %v1736 = vsub.f32 %v1527, %v1699
      %v1737 = vsub.f32 %v1528, %v1704
      %v1738 = vsub.f32 %v1529, %v1709
      %v1739 = vsub.f32 %v1530, %v1714
      %v1740 = vsub.f32 %v1531, %v1719
      %v1741 = vsub.f32 %v1532, %v1724
      %v1742 = vmul.f32 %v1726, 1.442695
      %v1743 = vpow.pop %v1742
      %v1744 = vmul.f32 %v1727, 1.442695
      %v1745 = vpow.pop %v1744
      %v1746 = vmul.f32 %v1728, 1.442695
      %v1747 = vpow.pop %v1746
      %v1748 = vmul.f32 %v1729, 1.442695
      %v1749 = vpow.pop %v1748
      %v1750 = vmul.f32 %v1730, 1.442695
      %v1751 = vpow.pop %v1750
      %v1752 = vmul.f32 %v1731, 1.442695
      %v1753 = vpow.pop %v1752
      %v1754 = vmul.f32 %v1732, 1.442695
      %v1755 = vpow.pop %v1754
      %v1756 = vmul.f32 %v1733, 1.442695
      %v1757 = vpow.pop %v1756
      %v1758 = vmul.f32 %v1734, 1.442695
      %v1759 = vpow.pop %v1758
      %v1760 = vmul.f32 %v1735, 1.442695
      %v1761 = vpow.pop %v1760
      %v1762 = vmul.f32 %v1736, 1.442695
      %v1763 = vpow.pop %v1762
      %v1764 = vmul.f32 %v1737, 1.442695
      %v1765 = vpow.pop %v1764
      %v1766 = vmul.f32 %v1738, 1.442695
      %v1767 = vpow.pop %v1766
      %v1768 = vmul.f32 %v1739, 1.442695
      %v1769 = vpow.pop %v1768
      %v1770 = vmul.f32 %v1740, 1.442695
      %v1771 = vpow.pop %v1770
      %v1772 = vmul.f32 %v1741, 1.442695
      %v1773 = vpow.pop %v1772
      %s1774 = scalar_lea.vmem [#allocation3], 128
      %v1775 = vld [vmem:[%s1774] sm:$0xff]
      %v1776 = vld [vmem:[%s1774 + $0x8] sm:$0xff]
      %v1777 = vld [vmem:[%s1774 + $0x10] sm:$0xff]
      %v1778 = vld [vmem:[%s1774 + $0x18] sm:$0xff]
      %v1779 = vld [vmem:[%s1774 + $0x20] sm:$0xff]
      %v1780 = vld [vmem:[%s1774 + $0x28] sm:$0xff]
      %v1781 = vld [vmem:[%s1774 + $0x30] sm:$0xff]
      %v1782 = vld [vmem:[%s1774 + $0x38] sm:$0xff]
      %v1783 = vld [vmem:[%s1774 + $0x40] sm:$0xff]
      %v1784 = vld [vmem:[%s1774 + $0x48] sm:$0xff]
      %v1785 = vld [vmem:[%s1774 + $0x50] sm:$0xff]
      %v1786 = vld [vmem:[%s1774 + $0x58] sm:$0xff]
      %v1787 = vld [vmem:[%s1774 + $0x60] sm:$0xff]
      %v1788 = vld [vmem:[%s1774 + $0x68] sm:$0xff]
      %v1789 = vld [vmem:[%s1774 + $0x70] sm:$0xff]
      %v1790 = vld [vmem:[%s1774 + $0x78] sm:$0xff]
      %v1791 = vmul.f32 %v1615, %v1775
      %v1792 = vmul.f32 %v1617, %v1776
      %v1793 = vmul.f32 %v1619, %v1777
      %v1794 = vmul.f32 %v1621, %v1778
      %v1795 = vmul.f32 %v1623, %v1779
      %v1796 = vmul.f32 %v1625, %v1780
      %v1797 = vmul.f32 %v1627, %v1781
      %v1798 = vmul.f32 %v1629, %v1782
      %v1799 = vmul.f32 %v1631, %v1783
      %v1800 = vmul.f32 %v1633, %v1784
      %v1801 = vmul.f32 %v1635, %v1785
      %v1802 = vmul.f32 %v1637, %v1786
      %v1803 = vmul.f32 %v1639, %v1787
      %v1804 = vmul.f32 %v1641, %v1788
      %v1805 = vmul.f32 %v1643, %v1789
      %v1806 = vmul.f32 %v1645, %v1790
      %1807 = vadd.xlane.f32.xlu0 %v1743
      %v1808 = vpop.xlane.xlu0 %1807
      %1809 = vadd.xlane.f32.xlu0 %v1745
      %v1810 = vpop.xlane.xlu0 %1809
      %1811 = vadd.xlane.f32.xlu0 %v1747
      %v1812 = vpop.xlane.xlu0 %1811
      %1813 = vadd.xlane.f32.xlu0 %v1749
      %v1814 = vpop.xlane.xlu0 %1813
      %1815 = vadd.xlane.f32.xlu0 %v1751
      %v1816 = vpop.xlane.xlu0 %1815
      %1817 = vadd.xlane.f32.xlu0 %v1753
      %v1818 = vpop.xlane.xlu0 %1817
      %1819 = vadd.xlane.f32.xlu0 %v1755
      %v1820 = vpop.xlane.xlu0 %1819
      %1821 = vadd.xlane.f32.xlu0 %v1757
      %v1822 = vpop.xlane.xlu0 %1821
      %1823 = vadd.xlane.f32.xlu0 %v1759
      %v1824 = vpop.xlane.xlu0 %1823
      %1825 = vadd.xlane.f32.xlu0 %v1761
      %v1826 = vpop.xlane.xlu0 %1825
      %1827 = vadd.xlane.f32.xlu0 %v1763
      %v1828 = vpop.xlane.xlu0 %1827
      %1829 = vadd.xlane.f32.xlu0 %v1765
      %v1830 = vpop.xlane.xlu0 %1829
      %1831 = vadd.xlane.f32.xlu0 %v1767
      %v1832 = vpop.xlane.xlu0 %1831
      %1833 = vadd.xlane.f32.xlu0 %v1769
      %v1834 = vpop.xlane.xlu0 %1833
      %1835 = vadd.xlane.f32.xlu0 %v1771
      %v1836 = vpop.xlane.xlu0 %1835
      %1837 = vadd.xlane.f32.xlu0 %v1773
      %v1838 = vpop.xlane.xlu0 %1837
      %v1839 = vadd.f32 %v1791, %v1808
      %v1840 = vadd.f32 %v1792, %v1810
      %v1841 = vadd.f32 %v1793, %v1812
      %v1842 = vadd.f32 %v1794, %v1814
      %v1843 = vadd.f32 %v1795, %v1816
      %v1844 = vadd.f32 %v1796, %v1818
      %v1845 = vadd.f32 %v1797, %v1820
      %v1846 = vadd.f32 %v1798, %v1822
      %v1847 = vadd.f32 %v1799, %v1824
      %v1848 = vadd.f32 %v1800, %v1826
      %v1849 = vadd.f32 %v1801, %v1828
      %v1850 = vadd.f32 %v1802, %v1830
      %v1851 = vadd.f32 %v1803, %v1832
      %v1852 = vadd.f32 %v1804, %v1834
      %v1853 = vadd.f32 %v1805, %v1836
      %v1854 = vadd.f32 %v1806, %v1838
      %1855 = vst.msk [vmem:[%s1774] sm:$0xff] %vm1042, %v1839
      %1856 = vst.msk [vmem:[%s1774 + $0x8] sm:$0xff] %vm1042, %v1840
      %1857 = vst.msk [vmem:[%s1774 + $0x10] sm:$0xff] %vm1042, %v1841
      %1858 = vst.msk [vmem:[%s1774 + $0x18] sm:$0xff] %vm1042, %v1842
      %1859 = vst.msk [vmem:[%s1774 + $0x20] sm:$0xff] %vm1042, %v1843
      %1860 = vst.msk [vmem:[%s1774 + $0x28] sm:$0xff] %vm1042, %v1844
      %1861 = vst.msk [vmem:[%s1774 + $0x30] sm:$0xff] %vm1042, %v1845
      %1862 = vst.msk [vmem:[%s1774 + $0x38] sm:$0xff] %vm1042, %v1846
      %1863 = vst.msk [vmem:[%s1774 + $0x40] sm:$0xff] %vm1042, %v1847
      %1864 = vst.msk [vmem:[%s1774 + $0x48] sm:$0xff] %vm1042, %v1848
      %1865 = vst.msk [vmem:[%s1774 + $0x50] sm:$0xff] %vm1042, %v1849
      %1866 = vst.msk [vmem:[%s1774 + $0x58] sm:$0xff] %vm1042, %v1850
      %1867 = vst.msk [vmem:[%s1774 + $0x60] sm:$0xff] %vm1042, %v1851
      %1868 = vst.msk [vmem:[%s1774 + $0x68] sm:$0xff] %vm1042, %v1852
      %1869 = vst.msk [vmem:[%s1774 + $0x70] sm:$0xff] %vm1042, %v1853
      %1870 = vst.msk [vmem:[%s1774 + $0x78] sm:$0xff] %vm1042, %v1854
      %s1871 = scalar_lea.vmem [#allocation4], 128
      %v1872 = vld [vmem:[%s1871] sm:$0xff]
      %v1873 = vld [vmem:[%s1871 + $0x8] sm:$0xff]
      %v1874 = vld [vmem:[%s1871 + $0x10] sm:$0xff]
      %v1875 = vld [vmem:[%s1871 + $0x18] sm:$0xff]
      %v1876 = vld [vmem:[%s1871 + $0x20] sm:$0xff]
      %v1877 = vld [vmem:[%s1871 + $0x28] sm:$0xff]
      %v1878 = vld [vmem:[%s1871 + $0x30] sm:$0xff]
      %v1879 = vld [vmem:[%s1871 + $0x38] sm:$0xff]
      %v1880 = vld [vmem:[%s1871 + $0x40] sm:$0xff]
      %v1881 = vld [vmem:[%s1871 + $0x48] sm:$0xff]
      %v1882 = vld [vmem:[%s1871 + $0x50] sm:$0xff]
      %v1883 = vld [vmem:[%s1871 + $0x58] sm:$0xff]
      %v1884 = vld [vmem:[%s1871 + $0x60] sm:$0xff]
      %v1885 = vld [vmem:[%s1871 + $0x68] sm:$0xff]
      %v1886 = vld [vmem:[%s1871 + $0x70] sm:$0xff]
      %v1887 = vld [vmem:[%s1871 + $0x78] sm:$0xff]
      %1889 = vset.pattern.permute.xlu0 0
      %1890 = vperm.xlu0 %1889, %v1615
      %v1891 = vpop.permute.xlu0 %1890
      %1894 = vset.pattern.permute.xlu0 0
      %1895 = vperm.xlu0 %1894, %v1617
      %v1896 = vpop.permute.xlu0 %1895
      %1899 = vset.pattern.permute.xlu0 0
      %1900 = vperm.xlu0 %1899, %v1619
      %v1901 = vpop.permute.xlu0 %1900
      %1904 = vset.pattern.permute.xlu0 0
      %1905 = vperm.xlu0 %1904, %v1621
      %v1906 = vpop.permute.xlu0 %1905
      %1909 = vset.pattern.permute.xlu0 0
      %1910 = vperm.xlu0 %1909, %v1623
      %v1911 = vpop.permute.xlu0 %1910
      %1914 = vset.pattern.permute.xlu0 0
      %1915 = vperm.xlu0 %1914, %v1625
      %v1916 = vpop.permute.xlu0 %1915
      %1919 = vset.pattern.permute.xlu0 0
      %1920 = vperm.xlu0 %1919, %v1627
      %v1921 = vpop.permute.xlu0 %1920
      %1924 = vset.pattern.permute.xlu0 0
      %1925 = vperm.xlu0 %1924, %v1629
      %v1926 = vpop.permute.xlu0 %1925
      %1929 = vset.pattern.permute.xlu0 0
      %1930 = vperm.xlu0 %1929, %v1631
      %v1931 = vpop.permute.xlu0 %1930
      %1934 = vset.pattern.permute.xlu0 0
      %1935 = vperm.xlu0 %1934, %v1633
      %v1936 = vpop.permute.xlu0 %1935
      %1939 = vset.pattern.permute.xlu0 0
      %1940 = vperm.xlu0 %1939, %v1635
      %v1941 = vpop.permute.xlu0 %1940
      %1944 = vset.pattern.permute.xlu0 0
      %1945 = vperm.xlu0 %1944, %v1637
      %v1946 = vpop.permute.xlu0 %1945
      %1949 = vset.pattern.permute.xlu0 0
      %1950 = vperm.xlu0 %1949, %v1639
      %v1951 = vpop.permute.xlu0 %1950
      %1954 = vset.pattern.permute.xlu0 0
      %1955 = vperm.xlu0 %1954, %v1641
      %v1956 = vpop.permute.xlu0 %1955
      %1959 = vset.pattern.permute.xlu0 0
      %1960 = vperm.xlu0 %1959, %v1643
      %v1961 = vpop.permute.xlu0 %1960
      %1964 = vset.pattern.permute.xlu0 0
      %1965 = vperm.xlu0 %1964, %v1645
      %v1966 = vpop.permute.xlu0 %1965
      %v1968 = vmul.f32 %v1891, %v1872
      %v1969 = vmul.f32 %v1896, %v1873
      %v1970 = vmul.f32 %v1901, %v1874
      %v1971 = vmul.f32 %v1906, %v1875
      %v1972 = vmul.f32 %v1911, %v1876
      %v1973 = vmul.f32 %v1916, %v1877
      %v1974 = vmul.f32 %v1921, %v1878
      %v1975 = vmul.f32 %v1926, %v1879
      %v1976 = vmul.f32 %v1931, %v1880
      %v1977 = vmul.f32 %v1936, %v1881
      %v1978 = vmul.f32 %v1941, %v1882
      %v1979 = vmul.f32 %v1946, %v1883
      %v1980 = vmul.f32 %v1951, %v1884
      %v1981 = vmul.f32 %v1956, %v1885
      %v1982 = vmul.f32 %v1961, %v1886
      %v1983 = vmul.f32 %v1966, %v1887
      %v1984 = vpack.c.bf16 %v1745, %v1743
      %v1985 = vpack.c.bf16 %v1749, %v1747
      %v1986 = vpack.c.bf16 %v1753, %v1751
      %v1987 = vpack.c.bf16 %v1757, %v1755
      %v1988 = vpack.c.bf16 %v1761, %v1759
      %v1989 = vpack.c.bf16 %v1765, %v1763
      %v1990 = vpack.c.bf16 %v1769, %v1767
      %v1991 = vpack.c.bf16 %v1773, %v1771
      %2000 = vrot.lane.b32.xlu0 %v552, 120
      %v2001 = vpop.permute.xlu0 %2000
      %2002 = vrot.lane.b32.xlu0 %v553, 120
      %v2003 = vpop.permute.xlu0 %2002
      %2004 = vrot.lane.b32.xlu0 %v554, 120
      %v2005 = vpop.permute.xlu0 %2004
      %2006 = vrot.lane.b32.xlu0 %v555, 120
      %v2007 = vpop.permute.xlu0 %2006
      %2008 = vrot.lane.b32.xlu0 %v556, 120
      %v2009 = vpop.permute.xlu0 %2008
      %2010 = vrot.lane.b32.xlu0 %v557, 120
      %v2011 = vpop.permute.xlu0 %2010
      %2012 = vrot.lane.b32.xlu0 %v558, 120
      %v2013 = vpop.permute.xlu0 %2012
      %2014 = vrot.lane.b32.xlu0 %v559, 120
      %v2015 = vpop.permute.xlu0 %2014
      %2024 = vmatprep.subr.bf16.mxu0 0
      %2025 = vmatpush1.bf16.msra.mxu0 %v2001
      %2026 = vmatprep.subr.bf16.mxu0 0
      %2027 = vmatpush1.bf16.msra.mxu0 %v2003
      %2028 = vmatprep.subr.bf16.mxu0 0
      %2029 = vmatpush1.bf16.msra.mxu0 %v2005
      %2030 = vmatprep.subr.bf16.mxu0 0
      %2031 = vmatpush1.bf16.msra.mxu0 %v2007
      %2032 = vmatprep.subr.bf16.mxu0 0
      %2033 = vmatpush1.bf16.msra.mxu0 %v2009
      %2034 = vmatprep.subr.bf16.mxu0 0
      %2035 = vmatpush1.bf16.msra.mxu0 %v2011
      %2036 = vmatprep.subr.bf16.mxu0 0
      %2037 = vmatpush1.bf16.msra.mxu0 %v2013
      %2038 = vmatprep.subr.bf16.mxu0 0
      %2039 = vmatpush1.bf16.msra.mxu0 %v2015
      %2040 = vmatprep.subr.bf16.mxu0 0
      %2041 = vmatpush1.bf16.msra.mxu0 0
      %2042 = vmatprep.subr.bf16.mxu0 0
      %2043 = vmatpush1.bf16.msra.mxu0 0
      %2044 = vmatprep.subr.bf16.mxu0 0
      %2045 = vmatpush1.bf16.msra.mxu0 0
      %2046 = vmatprep.subr.bf16.mxu0 0
      %2047 = vmatpush1.bf16.msra.mxu0 0
      %2048 = vmatprep.subr.bf16.mxu0 0
      %2049 = vmatpush1.bf16.msra.mxu0 0
      %2050 = vmatprep.subr.bf16.mxu0 0
      %2051 = vmatpush1.bf16.msra.mxu0 0
      %2052 = vmatprep.subr.bf16.mxu0 0
      %2053 = vmatpush1.bf16.msra.mxu0 0
      %2054 = vmatprep.subr.bf16.mxu0 0
      %2055 = vmatpush1.bf16.msra.mxu0 0
      %2056 = vmatprep.mubr.bf16.mxu0 0
      %2057 = vmatmul.mubr.bf16.gmra.mrb[0].mxu0 %v1984
      %v2058 = vpop.f32.mrb[0].mxu0
      %v2059 = vadd.f32 0.0, %v2058
      %v2060 = vpop.f32.mrb[0].mxu0
      %v2061 = vpop.f32.mrb[0].mxu0
      %v2062 = vadd.f32 0.0, %v2061
      %v2063 = vpop.f32.mrb[0].mxu0
      %2064 = vmatprep.mubr.bf16.mxu0 0
      %2065 = vmatmul.mubr.bf16.gmra.mrb[0].mxu0 %v1985
      %v2066 = vpop.f32.mrb[0].mxu0
      %v2067 = vadd.f32 0.0, %v2066
      %v2068 = vpop.f32.mrb[0].mxu0
      %v2069 = vpop.f32.mrb[0].mxu0
      %v2070 = vadd.f32 0.0, %v2069
      %v2071 = vpop.f32.mrb[0].mxu0
      %2072 = vmatprep.mubr.bf16.mxu0 0
      %2073 = vmatmul.mubr.bf16.gmra.mrb[0].mxu0 %v1986
      %v2074 = vpop.f32.mrb[0].mxu0
      %v2075 = vadd.f32 0.0, %v2074
      %v2076 = vpop.f32.mrb[0].mxu0
      %v2077 = vpop.f32.mrb[0].mxu0
      %v2078 = vadd.f32 0.0, %v2077
      %v2079 = vpop.f32.mrb[0].mxu0
      %2080 = vmatprep.mubr.bf16.mxu0 0
      %2081 = vmatmul.mubr.bf16.gmra.mrb[0].mxu0 %v1987
      %v2082 = vpop.f32.mrb[0].mxu0
      %v2083 = vadd.f32 0.0, %v2082
      %v2084 = vpop.f32.mrb[0].mxu0
      %v2085 = vpop.f32.mrb[0].mxu0
      %v2086 = vadd.f32 0.0, %v2085
      %v2087 = vpop.f32.mrb[0].mxu0
      %2088 = vmatprep.mubr.bf16.mxu0 0
      %2089 = vmatmul.mubr.bf16.gmra.mrb[0].mxu0 %v1988
      %v2090 = vpop.f32.mrb[0].mxu0
      %v2091 = vadd.f32 0.0, %v2090
      %v2092 = vpop.f32.mrb[0].mxu0
      %v2093 = vpop.f32.mrb[0].mxu0
      %v2094 = vadd.f32 0.0, %v2093
      %v2095 = vpop.f32.mrb[0].mxu0
      %2096 = vmatprep.mubr.bf16.mxu0 0
      %2097 = vmatmul.mubr.bf16.gmra.mrb[0].mxu0 %v1989
      %v2098 = vpop.f32.mrb[0].mxu0
      %v2099 = vadd.f32 0.0, %v2098
      %v2100 = vpop.f32.mrb[0].mxu0
      %v2101 = vpop.f32.mrb[0].mxu0
      %v2102 = vadd.f32 0.0, %v2101
      %v2103 = vpop.f32.mrb[0].mxu0
      %2104 = vmatprep.mubr.bf16.mxu0 0
      %2105 = vmatmul.mubr.bf16.gmra.mrb[0].mxu0 %v1990
      %v2106 = vpop.f32.mrb[0].mxu0
      %v2107 = vadd.f32 0.0, %v2106
      %v2108 = vpop.f32.mrb[0].mxu0
      %v2109 = vpop.f32.mrb[0].mxu0
      %v2110 = vadd.f32 0.0, %v2109
      %v2111 = vpop.f32.mrb[0].mxu0
      %2112 = vmatprep.mubr.bf16.mxu0 0
      %2113 = vmatmul.mubr.bf16.gmra.mrb[0].mxu0 %v1991
      %v2114 = vpop.f32.mrb[0].mxu0
      %v2115 = vadd.f32 0.0, %v2114
      %v2116 = vpop.f32.mrb[0].mxu0
      %v2117 = vpop.f32.mrb[0].mxu0
      %v2118 = vadd.f32 0.0, %v2117
      %v2119 = vpop.f32.mrb[0].mxu0
      %2120 = vdwg.mxu0
      %v2121 = vadd.f32 %v1968, %v2059
      %v2122 = vadd.f32 %v1969, %v2062
      %v2123 = vadd.f32 %v1970, %v2067
      %v2124 = vadd.f32 %v1971, %v2070
      %v2125 = vadd.f32 %v1972, %v2075
      %v2126 = vadd.f32 %v1973, %v2078
      %v2127 = vadd.f32 %v1974, %v2083
      %v2128 = vadd.f32 %v1975, %v2086
      %v2129 = vadd.f32 %v1976, %v2091
      %v2130 = vadd.f32 %v1977, %v2094
      %v2131 = vadd.f32 %v1978, %v2099
      %v2132 = vadd.f32 %v1979, %v2102
      %v2133 = vadd.f32 %v1980, %v2107
      %v2134 = vadd.f32 %v1981, %v2110
      %v2135 = vadd.f32 %v1982, %v2115
      %v2136 = vadd.f32 %v1983, %v2118
      %2137 = vst.msk [vmem:[%s1871] sm:$0xff] %vm560, %v2121
      %2138 = vst.msk [vmem:[%s1871 + $0x8] sm:$0xff] %vm560, %v2122
      %2139 = vst.msk [vmem:[%s1871 + $0x10] sm:$0xff] %vm560, %v2123
      %2140 = vst.msk [vmem:[%s1871 + $0x18] sm:$0xff] %vm560, %v2124
      %2141 = vst.msk [vmem:[%s1871 + $0x20] sm:$0xff] %vm560, %v2125
      %2142 = vst.msk [vmem:[%s1871 + $0x28] sm:$0xff] %vm560, %v2126
      %2143 = vst.msk [vmem:[%s1871 + $0x30] sm:$0xff] %vm560, %v2127
      %2144 = vst.msk [vmem:[%s1871 + $0x38] sm:$0xff] %vm560, %v2128
      %2145 = vst.msk [vmem:[%s1871 + $0x40] sm:$0xff] %vm560, %v2129
      %2146 = vst.msk [vmem:[%s1871 + $0x48] sm:$0xff] %vm560, %v2130
      %2147 = vst.msk [vmem:[%s1871 + $0x50] sm:$0xff] %vm560, %v2131
      %2148 = vst.msk [vmem:[%s1871 + $0x58] sm:$0xff] %vm560, %v2132
      %2149 = vst.msk [vmem:[%s1871 + $0x60] sm:$0xff] %vm560, %v2133
      %2150 = vst.msk [vmem:[%s1871 + $0x68] sm:$0xff] %vm560, %v2134
      %2151 = vst.msk [vmem:[%s1871 + $0x70] sm:$0xff] %vm560, %v2135
      %2152 = vst.msk [vmem:[%s1871 + $0x78] sm:$0xff] %vm560, %v2136
      %2153 = vst.msk [vmem:[%s1533] sm:$0xff] %vm1042, %v1582
      %2154 = vst.msk [vmem:[%s1533 + $0x8] sm:$0xff] %vm1042, %v1583
      %2155 = vst.msk [vmem:[%s1533 + $0x10] sm:$0xff] %vm1042, %v1584
      %2156 = vst.msk [vmem:[%s1533 + $0x18] sm:$0xff] %vm1042, %v1585
      %2157 = vst.msk [vmem:[%s1533 + $0x20] sm:$0xff] %vm1042, %v1586
      %2158 = vst.msk [vmem:[%s1533 + $0x28] sm:$0xff] %vm1042, %v1587
      %2159 = vst.msk [vmem:[%s1533 + $0x30] sm:$0xff] %vm1042, %v1588
      %2160 = vst.msk [vmem:[%s1533 + $0x38] sm:$0xff] %vm1042, %v1589
      %2161 = vst.msk [vmem:[%s1533 + $0x40] sm:$0xff] %vm1042, %v1590
      %2162 = vst.msk [vmem:[%s1533 + $0x48] sm:$0xff] %vm1042, %v1591
      %2163 = vst.msk [vmem:[%s1533 + $0x50] sm:$0xff] %vm1042, %v1592
      %2164 = vst.msk [vmem:[%s1533 + $0x58] sm:$0xff] %vm1042, %v1593
      %2165 = vst.msk [vmem:[%s1533 + $0x60] sm:$0xff] %vm1042, %v1594
      %2166 = vst.msk [vmem:[%s1533 + $0x68] sm:$0xff] %vm1042, %v1595
      %2167 = vst.msk [vmem:[%s1533 + $0x70] sm:$0xff] %vm1042, %v1596
      %2168 = vst.msk [vmem:[%s1533 + $0x78] sm:$0xff] %vm1042, %v1597
      %2169 = vrot.lane.b32.xlu0 %v536, 112
      %v2170 = vpop.permute.xlu0 %2169
      %2171 = vrot.lane.b32.xlu0 %v537, 112
      %v2172 = vpop.permute.xlu0 %2171
      %2173 = vrot.lane.b32.xlu0 %v538, 112
      %v2174 = vpop.permute.xlu0 %2173
      %2175 = vrot.lane.b32.xlu0 %v539, 112
      %v2176 = vpop.permute.xlu0 %2175
      %2177 = vrot.lane.b32.xlu0 %v540, 112
      %v2178 = vpop.permute.xlu0 %2177
      %2179 = vrot.lane.b32.xlu0 %v541, 112
      %v2180 = vpop.permute.xlu0 %2179
      %2181 = vrot.lane.b32.xlu0 %v542, 112
      %v2182 = vpop.permute.xlu0 %2181
      %2183 = vrot.lane.b32.xlu0 %v543, 112
      %v2184 = vpop.permute.xlu0 %2183
      %2185 = vrot.lane.b32.xlu0 %v544, 112
      %v2186 = vpop.permute.xlu0 %2185
      %2187 = vrot.lane.b32.xlu0 %v545, 112
      %v2188 = vpop.permute.xlu0 %2187
      %2189 = vrot.lane.b32.xlu0 %v546, 112
      %v2190 = vpop.permute.xlu0 %2189
      %2191 = vrot.lane.b32.xlu0 %v547, 112
      %v2192 = vpop.permute.xlu0 %2191
      %2193 = vrot.lane.b32.xlu0 %v548, 112
      %v2194 = vpop.permute.xlu0 %2193
      %2195 = vrot.lane.b32.xlu0 %v549, 112
      %v2196 = vpop.permute.xlu0 %2195
      %2197 = vrot.lane.b32.xlu0 %v550, 112
      %v2198 = vpop.permute.xlu0 %2197
      %2199 = vrot.lane.b32.xlu0 %v551, 112
      %v2200 = vpop.permute.xlu0 %2199
      %v2202 = vsel %vm560, %v2170, 0
      %v2205 = vsel %vm560, %v2172, 0
      %v2208 = vsel %vm560, %v2174, 0
      %v2211 = vsel %vm560, %v2176, 0
      %v2214 = vsel %vm560, %v2178, 0
      %v2217 = vsel %vm560, %v2180, 0
      %v2220 = vsel %vm560, %v2182, 0
      %v2223 = vsel %vm560, %v2184, 0
      %v2226 = vsel %vm560, %v2186, 0
      %v2229 = vsel %vm560, %v2188, 0
      %v2232 = vsel %vm560, %v2190, 0
      %v2235 = vsel %vm560, %v2192, 0
      %v2238 = vsel %vm560, %v2194, 0
      %v2241 = vsel %vm560, %v2196, 0
      %v2244 = vsel %vm560, %v2198, 0
      %v2247 = vsel %vm560, %v2200, 0
      %2249 = vmatprep.subr.bf16.mxu0 0
      %2250 = vmatpush1.bf16.xpose.msra.mxu0 %v2226
      %2251 = vmatprep.subr.bf16.mxu0 0
      %2252 = vmatpush1.bf16.xpose.msra.mxu0 %v2229
      %2253 = vmatprep.subr.bf16.mxu0 0
      %2254 = vmatpush1.bf16.xpose.msra.mxu0 %v2232
      %2255 = vmatprep.subr.bf16.mxu0 0
      %2256 = vmatpush1.bf16.xpose.msra.mxu0 %v2235
      %2257 = vmatprep.subr.bf16.mxu0 0
      %2258 = vmatpush1.bf16.xpose.msra.mxu0 %v2238
      %2259 = vmatprep.subr.bf16.mxu0 0
      %2260 = vmatpush1.bf16.xpose.msra.mxu0 %v2241
      %2261 = vmatprep.subr.bf16.mxu0 0
      %2262 = vmatpush1.bf16.xpose.msra.mxu0 %v2244
      %2263 = vmatprep.subr.bf16.mxu0 0
      %2264 = vmatpush1.bf16.xpose.msra.mxu0 %v2247
      %2265 = vmatprep.subr.bf16.mxu0 0
      %2266 = vmatpush1.bf16.xpose.msra.mxu0 0
      %2267 = vmatprep.subr.bf16.mxu0 0
      %2268 = vmatpush1.bf16.xpose.msra.mxu0 0
      %2269 = vmatprep.subr.bf16.mxu0 0
      %2270 = vmatpush1.bf16.xpose.msra.mxu0 0
      %2271 = vmatprep.subr.bf16.mxu0 0
      %2272 = vmatpush1.bf16.xpose.msra.mxu0 0
      %2273 = vmatprep.subr.bf16.mxu0 0
      %2274 = vmatpush1.bf16.xpose.msra.mxu0 0
      %2275 = vmatprep.subr.bf16.mxu0 0
      %2276 = vmatpush1.bf16.xpose.msra.mxu0 0
      %2277 = vmatprep.subr.bf16.mxu0 0
      %2278 = vmatpush1.bf16.xpose.msra.mxu0 0
      %2279 = vmatprep.subr.bf16.mxu0 0
      %2280 = vmatpush1.bf16.xpose.msra.mxu0 0
      %2281 = vmatprep.mubr.bf16.mxu0 0
      %2282 = vmatmul.mubr.bf16.gmra.mrb[0].mxu0 %v2202
      %v2283 = vpop.f32.mrb[0].mxu0
      %v2284 = vadd.f32 0.0, %v2283
      %v2285 = vpop.f32.mrb[0].mxu0
      %v2286 = vpop.f32.mrb[0].mxu0
      %v2287 = vadd.f32 0.0, %v2286
      %v2288 = vpop.f32.mrb[0].mxu0
      %2289 = vmatprep.mubr.bf16.mxu0 0
      %2290 = vmatmul.mubr.bf16.gmra.mrb[0].mxu0 %v2205
      %v2291 = vpop.f32.mrb[0].mxu0
      %v2292 = vadd.f32 0.0, %v2291
      %v2293 = vpop.f32.mrb[0].mxu0
      %v2294 = vpop.f32.mrb[0].mxu0
      %v2295 = vadd.f32 0.0, %v2294
      %v2296 = vpop.f32.mrb[0].mxu0
      %2297 = vmatprep.mubr.bf16.mxu0 0
      %2298 = vmatmul.mubr.bf16.gmra.mrb[0].mxu0 %v2208
      %v2299 = vpop.f32.mrb[0].mxu0
      %v2300 = vadd.f32 0.0, %v2299
      %v2301 = vpop.f32.mrb[0].mxu0
      %v2302 = vpop.f32.mrb[0].mxu0
      %v2303 = vadd.f32 0.0, %v2302
      %v2304 = vpop.f32.mrb[0].mxu0
      %2305 = vmatprep.mubr.bf16.mxu0 0
      %2306 = vmatmul.mubr.bf16.gmra.mrb[0].mxu0 %v2211
      %v2307 = vpop.f32.mrb[0].mxu0
      %v2308 = vadd.f32 0.0, %v2307
      %v2309 = vpop.f32.mrb[0].mxu0
      %v2310 = vpop.f32.mrb[0].mxu0
      %v2311 = vadd.f32 0.0, %v2310
      %v2312 = vpop.f32.mrb[0].mxu0
      %2313 = vmatprep.mubr.bf16.mxu0 0
      %2314 = vmatmul.mubr.bf16.gmra.mrb[0].mxu0 %v2214
      %v2315 = vpop.f32.mrb[0].mxu0
      %v2316 = vadd.f32 0.0, %v2315
      %v2317 = vpop.f32.mrb[0].mxu0
      %v2318 = vpop.f32.mrb[0].mxu0
      %v2319 = vadd.f32 0.0, %v2318
      %v2320 = vpop.f32.mrb[0].mxu0
      %2321 = vmatprep.mubr.bf16.mxu0 0
      %2322 = vmatmul.mubr.bf16.gmra.mrb[0].mxu0 %v2217
      %v2323 = vpop.f32.mrb[0].mxu0
      %v2324 = vadd.f32 0.0, %v2323
      %v2325 = vpop.f32.mrb[0].mxu0
      %v2326 = vpop.f32.mrb[0].mxu0
      %v2327 = vadd.f32 0.0, %v2326
      %v2328 = vpop.f32.mrb[0].mxu0
      %2329 = vmatprep.mubr.bf16.mxu0 0
      %2330 = vmatmul.mubr.bf16.gmra.mrb[0].mxu0 %v2220
      %v2331 = vpop.f32.mrb[0].mxu0
      %v2332 = vadd.f32 0.0, %v2331
      %v2333 = vpop.f32.mrb[0].mxu0
      %v2334 = vpop.f32.mrb[0].mxu0
      %v2335 = vadd.f32 0.0, %v2334
      %v2336 = vpop.f32.mrb[0].mxu0
      %2337 = vmatprep.mubr.bf16.mxu0 0
      %2338 = vmatmul.mubr.bf16.gmra.mrb[0].mxu0 %v2223
      %v2339 = vpop.f32.mrb[0].mxu0
      %v2340 = vadd.f32 0.0, %v2339
      %v2341 = vpop.f32.mrb[0].mxu0
      %v2342 = vpop.f32.mrb[0].mxu0
      %v2343 = vadd.f32 0.0, %v2342
      %v2344 = vpop.f32.mrb[0].mxu0
      %2345 = vdwg.mxu0
      %v2346 = vmul.f32 %v2284, 0.35355338
      %v2347 = vmul.f32 %v2287, 0.35355338
      %v2348 = vmul.f32 %v2292, 0.35355338
      %v2349 = vmul.f32 %v2295, 0.35355338
      %v2350 = vmul.f32 %v2300, 0.35355338
      %v2351 = vmul.f32 %v2303, 0.35355338
      %v2352 = vmul.f32 %v2308, 0.35355338
      %v2353 = vmul.f32 %v2311, 0.35355338
      %v2354 = vmul.f32 %v2316, 0.35355338
      %v2355 = vmul.f32 %v2319, 0.35355338
      %v2356 = vmul.f32 %v2324, 0.35355338
      %v2357 = vmul.f32 %v2327, 0.35355338
      %v2358 = vmul.f32 %v2332, 0.35355338
      %v2359 = vmul.f32 %v2335, 0.35355338
      %v2360 = vmul.f32 %v2340, 0.35355338
      %v2361 = vmul.f32 %v2343, 0.35355338
      %s2362 = scalar_lea.vmem [#allocation2], 256
      %v2363 = vld [vmem:[%s2362] sm:$0xff]
      %v2364 = vld [vmem:[%s2362 + $0x8] sm:$0xff]
      %v2365 = vld [vmem:[%s2362 + $0x10] sm:$0xff]
      %v2366 = vld [vmem:[%s2362 + $0x18] sm:$0xff]
      %v2367 = vld [vmem:[%s2362 + $0x20] sm:$0xff]
      %v2368 = vld [vmem:[%s2362 + $0x28] sm:$0xff]
      %v2369 = vld [vmem:[%s2362 + $0x30] sm:$0xff]
      %v2370 = vld [vmem:[%s2362 + $0x38] sm:$0xff]
      %v2371 = vld [vmem:[%s2362 + $0x40] sm:$0xff]
      %v2372 = vld [vmem:[%s2362 + $0x48] sm:$0xff]
      %v2373 = vld [vmem:[%s2362 + $0x50] sm:$0xff]
      %v2374 = vld [vmem:[%s2362 + $0x58] sm:$0xff]
      %v2375 = vld [vmem:[%s2362 + $0x60] sm:$0xff]
      %v2376 = vld [vmem:[%s2362 + $0x68] sm:$0xff]
      %v2377 = vld [vmem:[%s2362 + $0x70] sm:$0xff]
      %v2378 = vld [vmem:[%s2362 + $0x78] sm:$0xff]
      %2379 = vmax.xlane.f32.xlu0 %v2346
      %v2380 = vpop.xlane.xlu0 %2379
      %2381 = vmax.xlane.f32.xlu0 %v2347
      %v2382 = vpop.xlane.xlu0 %2381
      %2383 = vmax.xlane.f32.xlu0 %v2348
      %v2384 = vpop.xlane.xlu0 %2383
      %2385 = vmax.xlane.f32.xlu0 %v2349
      %v2386 = vpop.xlane.xlu0 %2385
      %2387 = vmax.xlane.f32.xlu0 %v2350
      %v2388 = vpop.xlane.xlu0 %2387
      %2389 = vmax.xlane.f32.xlu0 %v2351
      %v2390 = vpop.xlane.xlu0 %2389
      %2391 = vmax.xlane.f32.xlu0 %v2352
      %v2392 = vpop.xlane.xlu0 %2391
      %2393 = vmax.xlane.f32.xlu0 %v2353
      %v2394 = vpop.xlane.xlu0 %2393
      %2395 = vmax.xlane.f32.xlu0 %v2354
      %v2396 = vpop.xlane.xlu0 %2395
      %2397 = vmax.xlane.f32.xlu0 %v2355
      %v2398 = vpop.xlane.xlu0 %2397
      %2399 = vmax.xlane.f32.xlu0 %v2356
      %v2400 = vpop.xlane.xlu0 %2399
      %2401 = vmax.xlane.f32.xlu0 %v2357
      %v2402 = vpop.xlane.xlu0 %2401
      %2403 = vmax.xlane.f32.xlu0 %v2358
      %v2404 = vpop.xlane.xlu0 %2403
      %2405 = vmax.xlane.f32.xlu0 %v2359
      %v2406 = vpop.xlane.xlu0 %2405
      %2407 = vmax.xlane.f32.xlu0 %v2360
      %v2408 = vpop.xlane.xlu0 %2407
      %2409 = vmax.xlane.f32.xlu0 %v2361
      %v2410 = vpop.xlane.xlu0 %2409
      %v2411 = vmax.f32 %v2363, %v2380
      %v2412 = vmax.f32 %v2364, %v2382
      %v2413 = vmax.f32 %v2365, %v2384
      %v2414 = vmax.f32 %v2366, %v2386
      %v2415 = vmax.f32 %v2367, %v2388
      %v2416 = vmax.f32 %v2368, %v2390
      %v2417 = vmax.f32 %v2369, %v2392
      %v2418 = vmax.f32 %v2370, %v2394
      %v2419 = vmax.f32 %v2371, %v2396
      %v2420 = vmax.f32 %v2372, %v2398
      %v2421 = vmax.f32 %v2373, %v2400
      %v2422 = vmax.f32 %v2374, %v2402
      %v2423 = vmax.f32 %v2375, %v2404
      %v2424 = vmax.f32 %v2376, %v2406
      %v2425 = vmax.f32 %v2377, %v2408
      %v2426 = vmax.f32 %v2378, %v2410
      %v2427 = vsub.f32 %v2363, %v2411
      %v2428 = vsub.f32 %v2364, %v2412
      %v2429 = vsub.f32 %v2365, %v2413
      %v2430 = vsub.f32 %v2366, %v2414
      %v2431 = vsub.f32 %v2367, %v2415
      %v2432 = vsub.f32 %v2368, %v2416
      %v2433 = vsub.f32 %v2369, %v2417
      %v2434 = vsub.f32 %v2370, %v2418
      %v2435 = vsub.f32 %v2371, %v2419
      %v2436 = vsub.f32 %v2372, %v2420
      %v2437 = vsub.f32 %v2373, %v2421
      %v2438 = vsub.f32 %v2374, %v2422
      %v2439 = vsub.f32 %v2375, %v2423
      %v2440 = vsub.f32 %v2376, %v2424
      %v2441 = vsub.f32 %v2377, %v2425
      %v2442 = vsub.f32 %v2378, %v2426
      %v2443 = vmul.f32 %v2427, 1.442695
      %v2444 = vpow.pop %v2443
      %v2445 = vmul.f32 %v2428, 1.442695
      %v2446 = vpow.pop %v2445
      %v2447 = vmul.f32 %v2429, 1.442695
      %v2448 = vpow.pop %v2447
      %v2449 = vmul.f32 %v2430, 1.442695
      %v2450 = vpow.pop %v2449
      %v2451 = vmul.f32 %v2431, 1.442695
      %v2452 = vpow.pop %v2451
      %v2453 = vmul.f32 %v2432, 1.442695
      %v2454 = vpow.pop %v2453
      %v2455 = vmul.f32 %v2433, 1.442695
      %v2456 = vpow.pop %v2455
      %v2457 = vmul.f32 %v2434, 1.442695
      %v2458 = vpow.pop %v2457
      %v2459 = vmul.f32 %v2435, 1.442695
      %v2460 = vpow.pop %v2459
      %v2461 = vmul.f32 %v2436, 1.442695
      %v2462 = vpow.pop %v2461
      %v2463 = vmul.f32 %v2437, 1.442695
      %v2464 = vpow.pop %v2463
      %v2465 = vmul.f32 %v2438, 1.442695
      %v2466 = vpow.pop %v2465
      %v2467 = vmul.f32 %v2439, 1.442695
      %v2468 = vpow.pop %v2467
      %v2469 = vmul.f32 %v2440, 1.442695
      %v2470 = vpow.pop %v2469
      %v2471 = vmul.f32 %v2441, 1.442695
      %v2472 = vpow.pop %v2471
      %v2473 = vmul.f32 %v2442, 1.442695
      %v2474 = vpow.pop %v2473
      %2476 = vset.pattern.permute.xlu0 0
      %2477 = vperm.xlu0 %2476, %v2411
      %v2478 = vpop.permute.xlu0 %2477
      %2481 = vset.pattern.permute.xlu0 0
      %2482 = vperm.xlu0 %2481, %v2412
      %v2483 = vpop.permute.xlu0 %2482
      %2486 = vset.pattern.permute.xlu0 0
      %2487 = vperm.xlu0 %2486, %v2413
      %v2488 = vpop.permute.xlu0 %2487
      %2491 = vset.pattern.permute.xlu0 0
      %2492 = vperm.xlu0 %2491, %v2414
      %v2493 = vpop.permute.xlu0 %2492
      %2496 = vset.pattern.permute.xlu0 0
      %2497 = vperm.xlu0 %2496, %v2415
      %v2498 = vpop.permute.xlu0 %2497
      %2501 = vset.pattern.permute.xlu0 0
      %2502 = vperm.xlu0 %2501, %v2416
      %v2503 = vpop.permute.xlu0 %2502
      %2506 = vset.pattern.permute.xlu0 0
      %2507 = vperm.xlu0 %2506, %v2417
      %v2508 = vpop.permute.xlu0 %2507
      %2511 = vset.pattern.permute.xlu0 0
      %2512 = vperm.xlu0 %2511, %v2418
      %v2513 = vpop.permute.xlu0 %2512
      %2516 = vset.pattern.permute.xlu0 0
      %2517 = vperm.xlu0 %2516, %v2419
      %v2518 = vpop.permute.xlu0 %2517
      %2521 = vset.pattern.permute.xlu0 0
      %2522 = vperm.xlu0 %2521, %v2420
      %v2523 = vpop.permute.xlu0 %2522
      %2526 = vset.pattern.permute.xlu0 0
      %2527 = vperm.xlu0 %2526, %v2421
      %v2528 = vpop.permute.xlu0 %2527
      %2531 = vset.pattern.permute.xlu0 0
      %2532 = vperm.xlu0 %2531, %v2422
      %v2533 = vpop.permute.xlu0 %2532
      %2536 = vset.pattern.permute.xlu0 0
      %2537 = vperm.xlu0 %2536, %v2423
      %v2538 = vpop.permute.xlu0 %2537
      %2541 = vset.pattern.permute.xlu0 0
      %2542 = vperm.xlu0 %2541, %v2424
      %v2543 = vpop.permute.xlu0 %2542
      %2546 = vset.pattern.permute.xlu0 0
      %2547 = vperm.xlu0 %2546, %v2425
      %v2548 = vpop.permute.xlu0 %2547
      %2551 = vset.pattern.permute.xlu0 0
      %2552 = vperm.xlu0 %2551, %v2426
      %v2553 = vpop.permute.xlu0 %2552
      %v2555 = vsub.f32 %v2346, %v2478
      %v2556 = vsub.f32 %v2347, %v2483
      %v2557 = vsub.f32 %v2348, %v2488
      %v2558 = vsub.f32 %v2349, %v2493
      %v2559 = vsub.f32 %v2350, %v2498
      %v2560 = vsub.f32 %v2351, %v2503
      %v2561 = vsub.f32 %v2352, %v2508
      %v2562 = vsub.f32 %v2353, %v2513
      %v2563 = vsub.f32 %v2354, %v2518
      %v2564 = vsub.f32 %v2355, %v2523
      %v2565 = vsub.f32 %v2356, %v2528
      %v2566 = vsub.f32 %v2357, %v2533
      %v2567 = vsub.f32 %v2358, %v2538
      %v2568 = vsub.f32 %v2359, %v2543
      %v2569 = vsub.f32 %v2360, %v2548
      %v2570 = vsub.f32 %v2361, %v2553
      %v2571 = vmul.f32 %v2555, 1.442695
      %v2572 = vpow.pop %v2571
      %v2573 = vmul.f32 %v2556, 1.442695
      %v2574 = vpow.pop %v2573
      %v2575 = vmul.f32 %v2557, 1.442695
      %v2576 = vpow.pop %v2575
      %v2577 = vmul.f32 %v2558, 1.442695
      %v2578 = vpow.pop %v2577
      %v2579 = vmul.f32 %v2559, 1.442695
      %v2580 = vpow.pop %v2579
      %v2581 = vmul.f32 %v2560, 1.442695
      %v2582 = vpow.pop %v2581
      %v2583 = vmul.f32 %v2561, 1.442695
      %v2584 = vpow.pop %v2583
      %v2585 = vmul.f32 %v2562, 1.442695
      %v2586 = vpow.pop %v2585
      %v2587 = vmul.f32 %v2563, 1.442695
      %v2588 = vpow.pop %v2587
      %v2589 = vmul.f32 %v2564, 1.442695
      %v2590 = vpow.pop %v2589
      %v2591 = vmul.f32 %v2565, 1.442695
      %v2592 = vpow.pop %v2591
      %v2593 = vmul.f32 %v2566, 1.442695
      %v2594 = vpow.pop %v2593
      %v2595 = vmul.f32 %v2567, 1.442695
      %v2596 = vpow.pop %v2595
      %v2597 = vmul.f32 %v2568, 1.442695
      %v2598 = vpow.pop %v2597
      %v2599 = vmul.f32 %v2569, 1.442695
      %v2600 = vpow.pop %v2599
      %v2601 = vmul.f32 %v2570, 1.442695
      %v2602 = vpow.pop %v2601
      %s2603 = scalar_lea.vmem [#allocation3], 256
      %v2604 = vld [vmem:[%s2603] sm:$0xff]
      %v2605 = vld [vmem:[%s2603 + $0x8] sm:$0xff]
      %v2606 = vld [vmem:[%s2603 + $0x10] sm:$0xff]
      %v2607 = vld [vmem:[%s2603 + $0x18] sm:$0xff]
      %v2608 = vld [vmem:[%s2603 + $0x20] sm:$0xff]
      %v2609 = vld [vmem:[%s2603 + $0x28] sm:$0xff]
      %v2610 = vld [vmem:[%s2603 + $0x30] sm:$0xff]
      %v2611 = vld [vmem:[%s2603 + $0x38] sm:$0xff]
      %v2612 = vld [vmem:[%s2603 + $0x40] sm:$0xff]
      %v2613 = vld [vmem:[%s2603 + $0x48] sm:$0xff]
      %v2614 = vld [vmem:[%s2603 + $0x50] sm:$0xff]
      %v2615 = vld [vmem:[%s2603 + $0x58] sm:$0xff]
      %v2616 = vld [vmem:[%s2603 + $0x60] sm:$0xff]
      %v2617 = vld [vmem:[%s2603 + $0x68] sm:$0xff]
      %v2618 = vld [vmem:[%s2603 + $0x70] sm:$0xff]
      %v2619 = vld [vmem:[%s2603 + $0x78] sm:$0xff]
      %v2620 = vmul.f32 %v2444, %v2604
      %v2621 = vmul.f32 %v2446, %v2605
      %v2622 = vmul.f32 %v2448, %v2606
      %v2623 = vmul.f32 %v2450, %v2607
      %v2624 = vmul.f32 %v2452, %v2608
      %v2625 = vmul.f32 %v2454, %v2609
      %v2626 = vmul.f32 %v2456, %v2610
      %v2627 = vmul.f32 %v2458, %v2611
      %v2628 = vmul.f32 %v2460, %v2612
      %v2629 = vmul.f32 %v2462, %v2613
      %v2630 = vmul.f32 %v2464, %v2614
      %v2631 = vmul.f32 %v2466, %v2615
      %v2632 = vmul.f32 %v2468, %v2616
      %v2633 = vmul.f32 %v2470, %v2617
      %v2634 = vmul.f32 %v2472, %v2618
      %v2635 = vmul.f32 %v2474, %v2619
      %2636 = vadd.xlane.f32.xlu0 %v2572
      %v2637 = vpop.xlane.xlu0 %2636
      %2638 = vadd.xlane.f32.xlu0 %v2574
      %v2639 = vpop.xlane.xlu0 %2638
      %2640 = vadd.xlane.f32.xlu0 %v2576
      %v2641 = vpop.xlane.xlu0 %2640
      %2642 = vadd.xlane.f32.xlu0 %v2578
      %v2643 = vpop.xlane.xlu0 %2642
      %2644 = vadd.xlane.f32.xlu0 %v2580
      %v2645 = vpop.xlane.xlu0 %2644
      %2646 = vadd.xlane.f32.xlu0 %v2582
      %v2647 = vpop.xlane.xlu0 %2646
      %2648 = vadd.xlane.f32.xlu0 %v2584
      %v2649 = vpop.xlane.xlu0 %2648
      %2650 = vadd.xlane.f32.xlu0 %v2586
      %v2651 = vpop.xlane.xlu0 %2650
      %2652 = vadd.xlane.f32.xlu0 %v2588
      %v2653 = vpop.xlane.xlu0 %2652
      %2654 = vadd.xlane.f32.xlu0 %v2590
      %v2655 = vpop.xlane.xlu0 %2654
      %2656 = vadd.xlane.f32.xlu0 %v2592
      %v2657 = vpop.xlane.xlu0 %2656
      %2658 = vadd.xlane.f32.xlu0 %v2594
      %v2659 = vpop.xlane.xlu0 %2658
      %2660 = vadd.xlane.f32.xlu0 %v2596
      %v2661 = vpop.xlane.xlu0 %2660
      %2662 = vadd.xlane.f32.xlu0 %v2598
      %v2663 = vpop.xlane.xlu0 %2662
      %2664 = vadd.xlane.f32.xlu0 %v2600
      %v2665 = vpop.xlane.xlu0 %2664
      %2666 = vadd.xlane.f32.xlu0 %v2602
      %v2667 = vpop.xlane.xlu0 %2666
      %v2668 = vadd.f32 %v2620, %v2637
      %v2669 = vadd.f32 %v2621, %v2639
      %v2670 = vadd.f32 %v2622, %v2641
      %v2671 = vadd.f32 %v2623, %v2643
      %v2672 = vadd.f32 %v2624, %v2645
      %v2673 = vadd.f32 %v2625, %v2647
      %v2674 = vadd.f32 %v2626, %v2649
      %v2675 = vadd.f32 %v2627, %v2651
      %v2676 = vadd.f32 %v2628, %v2653
      %v2677 = vadd.f32 %v2629, %v2655
      %v2678 = vadd.f32 %v2630, %v2657
      %v2679 = vadd.f32 %v2631, %v2659
      %v2680 = vadd.f32 %v2632, %v2661
      %v2681 = vadd.f32 %v2633, %v2663
      %v2682 = vadd.f32 %v2634, %v2665
      %v2683 = vadd.f32 %v2635, %v2667
      %2684 = vst.msk [vmem:[%s2603] sm:$0xff] %vm1042, %v2668
      %2685 = vst.msk [vmem:[%s2603 + $0x8] sm:$0xff] %vm1042, %v2669
      %2686 = vst.msk [vmem:[%s2603 + $0x10] sm:$0xff] %vm1042, %v2670
      %2687 = vst.msk [vmem:[%s2603 + $0x18] sm:$0xff] %vm1042, %v2671
      %2688 = vst.msk [vmem:[%s2603 + $0x20] sm:$0xff] %vm1042, %v2672
      %2689 = vst.msk [vmem:[%s2603 + $0x28] sm:$0xff] %vm1042, %v2673
      %2690 = vst.msk [vmem:[%s2603 + $0x30] sm:$0xff] %vm1042, %v2674
      %2691 = vst.msk [vmem:[%s2603 + $0x38] sm:$0xff] %vm1042, %v2675
      %2692 = vst.msk [vmem:[%s2603 + $0x40] sm:$0xff] %vm1042, %v2676
      %2693 = vst.msk [vmem:[%s2603 + $0x48] sm:$0xff] %vm1042, %v2677
      %2694 = vst.msk [vmem:[%s2603 + $0x50] sm:$0xff] %vm1042, %v2678
      %2695 = vst.msk [vmem:[%s2603 + $0x58] sm:$0xff] %vm1042, %v2679
      %2696 = vst.msk [vmem:[%s2603 + $0x60] sm:$0xff] %vm1042, %v2680
      %2697 = vst.msk [vmem:[%s2603 + $0x68] sm:$0xff] %vm1042, %v2681
      %2698 = vst.msk [vmem:[%s2603 + $0x70] sm:$0xff] %vm1042, %v2682
      %2699 = vst.msk [vmem:[%s2603 + $0x78] sm:$0xff] %vm1042, %v2683
      %s2700 = scalar_lea.vmem [#allocation4], 256
      %v2701 = vld [vmem:[%s2700] sm:$0xff]
      %v2702 = vld [vmem:[%s2700 + $0x8] sm:$0xff]
      %v2703 = vld [vmem:[%s2700 + $0x10] sm:$0xff]
      %v2704 = vld [vmem:[%s2700 + $0x18] sm:$0xff]
      %v2705 = vld [vmem:[%s2700 + $0x20] sm:$0xff]
      %v2706 = vld [vmem:[%s2700 + $0x28] sm:$0xff]
      %v2707 = vld [vmem:[%s2700 + $0x30] sm:$0xff]
      %v2708 = vld [vmem:[%s2700 + $0x38] sm:$0xff]
      %v2709 = vld [vmem:[%s2700 + $0x40] sm:$0xff]
      %v2710 = vld [vmem:[%s2700 + $0x48] sm:$0xff]
      %v2711 = vld [vmem:[%s2700 + $0x50] sm:$0xff]
      %v2712 = vld [vmem:[%s2700 + $0x58] sm:$0xff]
      %v2713 = vld [vmem:[%s2700 + $0x60] sm:$0xff]
      %v2714 = vld [vmem:[%s2700 + $0x68] sm:$0xff]
      %v2715 = vld [vmem:[%s2700 + $0x70] sm:$0xff]
      %v2716 = vld [vmem:[%s2700 + $0x78] sm:$0xff]
      %2718 = vset.pattern.permute.xlu0 0
      %2719 = vperm.xlu0 %2718, %v2444
      %v2720 = vpop.permute.xlu0 %2719
      %2723 = vset.pattern.permute.xlu0 0
      %2724 = vperm.xlu0 %2723, %v2446
      %v2725 = vpop.permute.xlu0 %2724
      %2728 = vset.pattern.permute.xlu0 0
      %2729 = vperm.xlu0 %2728, %v2448
      %v2730 = vpop.permute.xlu0 %2729
      %2733 = vset.pattern.permute.xlu0 0
      %2734 = vperm.xlu0 %2733, %v2450
      %v2735 = vpop.permute.xlu0 %2734
      %2738 = vset.pattern.permute.xlu0 0
      %2739 = vperm.xlu0 %2738, %v2452
      %v2740 = vpop.permute.xlu0 %2739
      %2743 = vset.pattern.permute.xlu0 0
      %2744 = vperm.xlu0 %2743, %v2454
      %v2745 = vpop.permute.xlu0 %2744
      %2748 = vset.pattern.permute.xlu0 0
      %2749 = vperm.xlu0 %2748, %v2456
      %v2750 = vpop.permute.xlu0 %2749
      %2753 = vset.pattern.permute.xlu0 0
      %2754 = vperm.xlu0 %2753, %v2458
      %v2755 = vpop.permute.xlu0 %2754
      %2758 = vset.pattern.permute.xlu0 0
      %2759 = vperm.xlu0 %2758, %v2460
      %v2760 = vpop.permute.xlu0 %2759
      %2763 = vset.pattern.permute.xlu0 0
      %2764 = vperm.xlu0 %2763, %v2462
      %v2765 = vpop.permute.xlu0 %2764
      %2768 = vset.pattern.permute.xlu0 0
      %2769 = vperm.xlu0 %2768, %v2464
      %v2770 = vpop.permute.xlu0 %2769
      %2773 = vset.pattern.permute.xlu0 0
      %2774 = vperm.xlu0 %2773, %v2466
      %v2775 = vpop.permute.xlu0 %2774
      %2778 = vset.pattern.permute.xlu0 0
      %2779 = vperm.xlu0 %2778, %v2468
      %v2780 = vpop.permute.xlu0 %2779
      %2783 = vset.pattern.permute.xlu0 0
      %2784 = vperm.xlu0 %2783, %v2470
      %v2785 = vpop.permute.xlu0 %2784
      %2788 = vset.pattern.permute.xlu0 0
      %2789 = vperm.xlu0 %2788, %v2472
      %v2790 = vpop.permute.xlu0 %2789
      %2793 = vset.pattern.permute.xlu0 0
      %2794 = vperm.xlu0 %2793, %v2474
      %v2795 = vpop.permute.xlu0 %2794
      %v2797 = vmul.f32 %v2720, %v2701
      %v2798 = vmul.f32 %v2725, %v2702
      %v2799 = vmul.f32 %v2730, %v2703
      %v2800 = vmul.f32 %v2735, %v2704
      %v2801 = vmul.f32 %v2740, %v2705
      %v2802 = vmul.f32 %v2745, %v2706
      %v2803 = vmul.f32 %v2750, %v2707
      %v2804 = vmul.f32 %v2755, %v2708
      %v2805 = vmul.f32 %v2760, %v2709
      %v2806 = vmul.f32 %v2765, %v2710
      %v2807 = vmul.f32 %v2770, %v2711
      %v2808 = vmul.f32 %v2775, %v2712
      %v2809 = vmul.f32 %v2780, %v2713
      %v2810 = vmul.f32 %v2785, %v2714
      %v2811 = vmul.f32 %v2790, %v2715
      %v2812 = vmul.f32 %v2795, %v2716
      %v2813 = vpack.c.bf16 %v2574, %v2572
      %v2814 = vpack.c.bf16 %v2578, %v2576
      %v2815 = vpack.c.bf16 %v2582, %v2580
      %v2816 = vpack.c.bf16 %v2586, %v2584
      %v2817 = vpack.c.bf16 %v2590, %v2588
      %v2818 = vpack.c.bf16 %v2594, %v2592
      %v2819 = vpack.c.bf16 %v2598, %v2596
      %v2820 = vpack.c.bf16 %v2602, %v2600
      %2821 = vrot.lane.b32.xlu0 %v552, 112
      %v2822 = vpop.permute.xlu0 %2821
      %2823 = vrot.lane.b32.xlu0 %v553, 112
      %v2824 = vpop.permute.xlu0 %2823
      %2825 = vrot.lane.b32.xlu0 %v554, 112
      %v2826 = vpop.permute.xlu0 %2825
      %2827 = vrot.lane.b32.xlu0 %v555, 112
      %v2828 = vpop.permute.xlu0 %2827
      %2829 = vrot.lane.b32.xlu0 %v556, 112
      %v2830 = vpop.permute.xlu0 %2829
      %2831 = vrot.lane.b32.xlu0 %v557, 112
      %v2832 = vpop.permute.xlu0 %2831
      %2833 = vrot.lane.b32.xlu0 %v558, 112
      %v2834 = vpop.permute.xlu0 %2833
      %2835 = vrot.lane.b32.xlu0 %v559, 112
      %v2836 = vpop.permute.xlu0 %2835
      %2845 = vmatprep.subr.bf16.mxu0 0
      %2846 = vmatpush1.bf16.msra.mxu0 %v2822
      %2847 = vmatprep.subr.bf16.mxu0 0
      %2848 = vmatpush1.bf16.msra.mxu0 %v2824
      %2849 = vmatprep.subr.bf16.mxu0 0
      %2850 = vmatpush1.bf16.msra.mxu0 %v2826
      %2851 = vmatprep.subr.bf16.mxu0 0
      %2852 = vmatpush1.bf16.msra.mxu0 %v2828
      %2853 = vmatprep.subr.bf16.mxu0 0
      %2854 = vmatpush1.bf16.msra.mxu0 %v2830
      %2855 = vmatprep.subr.bf16.mxu0 0
      %2856 = vmatpush1.bf16.msra.mxu0 %v2832
      %2857 = vmatprep.subr.bf16.mxu0 0
      %2858 = vmatpush1.bf16.msra.mxu0 %v2834
      %2859 = vmatprep.subr.bf16.mxu0 0
      %2860 = vmatpush1.bf16.msra.mxu0 %v2836
      %2861 = vmatprep.subr.bf16.mxu0 0
      %2862 = vmatpush1.bf16.msra.mxu0 0
      %2863 = vmatprep.subr.bf16.mxu0 0
      %2864 = vmatpush1.bf16.msra.mxu0 0
      %2865 = vmatprep.subr.bf16.mxu0 0
      %2866 = vmatpush1.bf16.msra.mxu0 0
      %2867 = vmatprep.subr.bf16.mxu0 0
      %2868 = vmatpush1.bf16.msra.mxu0 0
      %2869 = vmatprep.subr.bf16.mxu0 0
      %2870 = vmatpush1.bf16.msra.mxu0 0
      %2871 = vmatprep.subr.bf16.mxu0 0
      %2872 = vmatpush1.bf16.msra.mxu0 0
      %2873 = vmatprep.subr.bf16.mxu0 0
      %2874 = vmatpush1.bf16.msra.mxu0 0
      %2875 = vmatprep.subr.bf16.mxu0 0
      %2876 = vmatpush1.bf16.msra.mxu0 0
      %2877 = vmatprep.mubr.bf16.mxu0 0
      %2878 = vmatmul.mubr.bf16.gmra.mrb[0].mxu0 %v2813
      %v2879 = vpop.f32.mrb[0].mxu0
      %v2880 = vadd.f32 0.0, %v2879
      %v2881 = vpop.f32.mrb[0].mxu0
      %v2882 = vpop.f32.mrb[0].mxu0
      %v2883 = vadd.f32 0.0, %v2882
      %v2884 = vpop.f32.mrb[0].mxu0
      %2885 = vmatprep.mubr.bf16.mxu0 0
      %2886 = vmatmul.mubr.bf16.gmra.mrb[0].mxu0 %v2814
      %v2887 = vpop.f32.mrb[0].mxu0
      %v2888 = vadd.f32 0.0, %v2887
      %v2889 = vpop.f32.mrb[0].mxu0
      %v2890 = vpop.f32.mrb[0].mxu0
      %v2891 = vadd.f32 0.0, %v2890
      %v2892 = vpop.f32.mrb[0].mxu0
      %2893 = vmatprep.mubr.bf16.mxu0 0
      %2894 = vmatmul.mubr.bf16.gmra.mrb[0].mxu0 %v2815
      %v2895 = vpop.f32.mrb[0].mxu0
      %v2896 = vadd.f32 0.0, %v2895
      %v2897 = vpop.f32.mrb[0].mxu0
      %v2898 = vpop.f32.mrb[0].mxu0
      %v2899 = vadd.f32 0.0, %v2898
      %v2900 = vpop.f32.mrb[0].mxu0
      %2901 = vmatprep.mubr.bf16.mxu0 0
      %2902 = vmatmul.mubr.bf16.gmra.mrb[0].mxu0 %v2816
      %v2903 = vpop.f32.mrb[0].mxu0
      %v2904 = vadd.f32 0.0, %v2903
      %v2905 = vpop.f32.mrb[0].mxu0
      %v2906 = vpop.f32.mrb[0].mxu0
      %v2907 = vadd.f32 0.0, %v2906
      %v2908 = vpop.f32.mrb[0].mxu0
      %2909 = vmatprep.mubr.bf16.mxu0 0
      %2910 = vmatmul.mubr.bf16.gmra.mrb[0].mxu0 %v2817
      %v2911 = vpop.f32.mrb[0].mxu0
      %v2912 = vadd.f32 0.0, %v2911
      %v2913 = vpop.f32.mrb[0].mxu0
      %v2914 = vpop.f32.mrb[0].mxu0
      %v2915 = vadd.f32 0.0, %v2914
      %v2916 = vpop.f32.mrb[0].mxu0
      %2917 = vmatprep.mubr.bf16.mxu0 0
      %2918 = vmatmul.mubr.bf16.gmra.mrb[0].mxu0 %v2818
      %v2919 = vpop.f32.mrb[0].mxu0
      %v2920 = vadd.f32 0.0, %v2919
      %v2921 = vpop.f32.mrb[0].mxu0
      %v2922 = vpop.f32.mrb[0].mxu0
      %v2923 = vadd.f32 0.0, %v2922
      %v2924 = vpop.f32.mrb[0].mxu0
      %2925 = vmatprep.mubr.bf16.mxu0 0
      %2926 = vmatmul.mubr.bf16.gmra.mrb[0].mxu0 %v2819
      %v2927 = vpop.f32.mrb[0].mxu0
      %v2928 = vadd.f32 0.0, %v2927
      %v2929 = vpop.f32.mrb[0].mxu0
      %v2930 = vpop.f32.mrb[0].mxu0
      %v2931 = vadd.f32 0.0, %v2930
      %v2932 = vpop.f32.mrb[0].mxu0
      %2933 = vmatprep.mubr.bf16.mxu0 0
      %2934 = vmatmul.mubr.bf16.gmra.mrb[0].mxu0 %v2820
      %v2935 = vpop.f32.mrb[0].mxu0
      %v2936 = vadd.f32 0.0, %v2935
      %v2937 = vpop.f32.mrb[0].mxu0
      %v2938 = vpop.f32.mrb[0].mxu0
      %v2939 = vadd.f32 0.0, %v2938
      %v2940 = vpop.f32.mrb[0].mxu0
      %2941 = vdwg.mxu0
      %v2942 = vadd.f32 %v2797, %v2880
      %v2943 = vadd.f32 %v2798, %v2883
      %v2944 = vadd.f32 %v2799, %v2888
      %v2945 = vadd.f32 %v2800, %v2891
      %v2946 = vadd.f32 %v2801, %v2896
      %v2947 = vadd.f32 %v2802, %v2899
      %v2948 = vadd.f32 %v2803, %v2904
      %v2949 = vadd.f32 %v2804, %v2907
      %v2950 = vadd.f32 %v2805, %v2912
      %v2951 = vadd.f32 %v2806, %v2915
      %v2952 = vadd.f32 %v2807, %v2920
      %v2953 = vadd.f32 %v2808, %v2923
      %v2954 = vadd.f32 %v2809, %v2928
      %v2955 = vadd.f32 %v2810, %v2931
      %v2956 = vadd.f32 %v2811, %v2936
      %v2957 = vadd.f32 %v2812, %v2939
      %2958 = vst.msk [vmem:[%s2700] sm:$0xff] %vm560, %v2942
      %2959 = vst.msk [vmem:[%s2700 + $0x8] sm:$0xff] %vm560, %v2943
      %2960 = vst.msk [vmem:[%s2700 + $0x10] sm:$0xff] %vm560, %v2944
      %2961 = vst.msk [vmem:[%s2700 + $0x18] sm:$0xff] %vm560, %v2945
      %2962 = vst.msk [vmem:[%s2700 + $0x20] sm:$0xff] %vm560, %v2946
      %2963 = vst.msk [vmem:[%s2700 + $0x28] sm:$0xff] %vm560, %v2947
      %2964 = vst.msk [vmem:[%s2700 + $0x30] sm:$0xff] %vm560, %v2948
      %2965 = vst.msk [vmem:[%s2700 + $0x38] sm:$0xff] %vm560, %v2949
      %2966 = vst.msk [vmem:[%s2700 + $0x40] sm:$0xff] %vm560, %v2950
      %2967 = vst.msk [vmem:[%s2700 + $0x48] sm:$0xff] %vm560, %v2951
      %2968 = vst.msk [vmem:[%s2700 + $0x50] sm:$0xff] %vm560, %v2952
      %2969 = vst.msk [vmem:[%s2700 + $0x58] sm:$0xff] %vm560, %v2953
      %2970 = vst.msk [vmem:[%s2700 + $0x60] sm:$0xff] %vm560, %v2954
      %2971 = vst.msk [vmem:[%s2700 + $0x68] sm:$0xff] %vm560, %v2955
      %2972 = vst.msk [vmem:[%s2700 + $0x70] sm:$0xff] %vm560, %v2956
      %2973 = vst.msk [vmem:[%s2700 + $0x78] sm:$0xff] %vm560, %v2957
      %2974 = vst.msk [vmem:[%s2362] sm:$0xff] %vm1042, %v2411
      %2975 = vst.msk [vmem:[%s2362 + $0x8] sm:$0xff] %vm1042, %v2412
      %2976 = vst.msk [vmem:[%s2362 + $0x10] sm:$0xff] %vm1042, %v2413
      %2977 = vst.msk [vmem:[%s2362 + $0x18] sm:$0xff] %vm1042, %v2414
      %2978 = vst.msk [vmem:[%s2362 + $0x20] sm:$0xff] %vm1042, %v2415
      %2979 = vst.msk [vmem:[%s2362 + $0x28] sm:$0xff] %vm1042, %v2416
      %2980 = vst.msk [vmem:[%s2362 + $0x30] sm:$0xff] %vm1042, %v2417
      %2981 = vst.msk [vmem:[%s2362 + $0x38] sm:$0xff] %vm1042, %v2418
      %2982 = vst.msk [vmem:[%s2362 + $0x40] sm:$0xff] %vm1042, %v2419
      %2983 = vst.msk [vmem:[%s2362 + $0x48] sm:$0xff] %vm1042, %v2420
      %2984 = vst.msk [vmem:[%s2362 + $0x50] sm:$0xff] %vm1042, %v2421
      %2985 = vst.msk [vmem:[%s2362 + $0x58] sm:$0xff] %vm1042, %v2422
      %2986 = vst.msk [vmem:[%s2362 + $0x60] sm:$0xff] %vm1042, %v2423
      %2987 = vst.msk [vmem:[%s2362 + $0x68] sm:$0xff] %vm1042, %v2424
      %2988 = vst.msk [vmem:[%s2362 + $0x70] sm:$0xff] %vm1042, %v2425
      %2989 = vst.msk [vmem:[%s2362 + $0x78] sm:$0xff] %vm1042, %v2426
      %2990 = vrot.lane.b32.xlu0 %v536, 104
      %v2991 = vpop.permute.xlu0 %2990
      %2992 = vrot.lane.b32.xlu0 %v537, 104
      %v2993 = vpop.permute.xlu0 %2992
      %2994 = vrot.lane.b32.xlu0 %v538, 104
      %v2995 = vpop.permute.xlu0 %2994
      %2996 = vrot.lane.b32.xlu0 %v539, 104
      %v2997 = vpop.permute.xlu0 %2996
      %2998 = vrot.lane.b32.xlu0 %v540, 104
      %v2999 = vpop.permute.xlu0 %2998
      %3000 = vrot.lane.b32.xlu0 %v541, 104
      %v3001 = vpop.permute.xlu0 %3000
      %3002 = vrot.lane.b32.xlu0 %v542, 104
      %v3003 = vpop.permute.xlu0 %3002
      %3004 = vrot.lane.b32.xlu0 %v543, 104
      %v3005 = vpop.permute.xlu0 %3004
      %3006 = vrot.lane.b32.xlu0 %v544, 104
      %v3007 = vpop.permute.xlu0 %3006
      %3008 = vrot.lane.b32.xlu0 %v545, 104
      %v3009 = vpop.permute.xlu0 %3008
      %3010 = vrot.lane.b32.xlu0 %v546, 104
      %v3011 = vpop.permute.xlu0 %3010
      %3012 = vrot.lane.b32.xlu0 %v547, 104
      %v3013 = vpop.permute.xlu0 %3012
      %3014 = vrot.lane.b32.xlu0 %v548, 104
      %v3015 = vpop.permute.xlu0 %3014
      %3016 = vrot.lane.b32.xlu0 %v549, 104
      %v3017 = vpop.permute.xlu0 %3016
      %3018 = vrot.lane.b32.xlu0 %v550, 104
      %v3019 = vpop.permute.xlu0 %3018
      %3020 = vrot.lane.b32.xlu0 %v551, 104
      %v3021 = vpop.permute.xlu0 %3020
      %v3023 = vsel %vm560, %v2991, 0
      %v3026 = vsel %vm560, %v2993, 0
      %v3029 = vsel %vm560, %v2995, 0
      %v3032 = vsel %vm560, %v2997, 0
      %v3035 = vsel %vm560, %v2999, 0
      %v3038 = vsel %vm560, %v3001, 0
      %v3041 = vsel %vm560, %v3003, 0
      %v3044 = vsel %vm560, %v3005, 0
      %v3047 = vsel %vm560, %v3007, 0
      %v3050 = vsel %vm560, %v3009, 0
      %v3053 = vsel %vm560, %v3011, 0
      %v3056 = vsel %vm560, %v3013, 0
      %v3059 = vsel %vm560, %v3015, 0
      %v3062 = vsel %vm560, %v3017, 0
      %v3065 = vsel %vm560, %v3019, 0
      %v3068 = vsel %vm560, %v3021, 0
      %3070 = vmatprep.subr.bf16.mxu0 0
      %3071 = vmatpush1.bf16.xpose.msra.mxu0 %v3047
      %3072 = vmatprep.subr.bf16.mxu0 0
      %3073 = vmatpush1.bf16.xpose.msra.mxu0 %v3050
      %3074 = vmatprep.subr.bf16.mxu0 0
      %3075 = vmatpush1.bf16.xpose.msra.mxu0 %v3053
      %3076 = vmatprep.subr.bf16.mxu0 0
      %3077 = vmatpush1.bf16.xpose.msra.mxu0 %v3056
      %3078 = vmatprep.subr.bf16.mxu0 0
      %3079 = vmatpush1.bf16.xpose.msra.mxu0 %v3059
      %3080 = vmatprep.subr.bf16.mxu0 0
      %3081 = vmatpush1.bf16.xpose.msra.mxu0 %v3062
      %3082 = vmatprep.subr.bf16.mxu0 0
      %3083 = vmatpush1.bf16.xpose.msra.mxu0 %v3065
      %3084 = vmatprep.subr.bf16.mxu0 0
      %3085 = vmatpush1.bf16.xpose.msra.mxu0 %v3068
      %3086 = vmatprep.subr.bf16.mxu0 0
      %3087 = vmatpush1.bf16.xpose.msra.mxu0 0
      %3088 = vmatprep.subr.bf16.mxu0 0
      %3089 = vmatpush1.bf16.xpose.msra.mxu0 0
      %3090 = vmatprep.subr.bf16.mxu0 0
      %3091 = vmatpush1.bf16.xpose.msra.mxu0 0
      %3092 = vmatprep.subr.bf16.mxu0 0
      %3093 = vmatpush1.bf16.xpose.msra.mxu0 0
      %3094 = vmatprep.subr.bf16.mxu0 0
      %3095 = vmatpush1.bf16.xpose.msra.mxu0 0
      %3096 = vmatprep.subr.bf16.mxu0 0
      %3097 = vmatpush1.bf16.xpose.msra.mxu0 0
      %3098 = vmatprep.subr.bf16.mxu0 0
      %3099 = vmatpush1.bf16.xpose.msra.mxu0 0
      %3100 = vmatprep.subr.bf16.mxu0 0
      %3101 = vmatpush1.bf16.xpose.msra.mxu0 0
      %3102 = vmatprep.mubr.bf16.mxu0 0
      %3103 = vmatmul.mubr.bf16.gmra.mrb[0].mxu0 %v3023
      %v3104 = vpop.f32.mrb[0].mxu0
      %v3105 = vadd.f32 0.0, %v3104
      %v3106 = vpop.f32.mrb[0].mxu0
      %v3107 = vpop.f32.mrb[0].mxu0
      %v3108 = vadd.f32 0.0, %v3107
      %v3109 = vpop.f32.mrb[0].mxu0
      %3110 = vmatprep.mubr.bf16.mxu0 0
      %3111 = vmatmul.mubr.bf16.gmra.mrb[0].mxu0 %v3026
      %v3112 = vpop.f32.mrb[0].mxu0
      %v3113 = vadd.f32 0.0, %v3112
      %v3114 = vpop.f32.mrb[0].mxu0
      %v3115 = vpop.f32.mrb[0].mxu0
      %v3116 = vadd.f32 0.0, %v3115
      %v3117 = vpop.f32.mrb[0].mxu0
      %3118 = vmatprep.mubr.bf16.mxu0 0
      %3119 = vmatmul.mubr.bf16.gmra.mrb[0].mxu0 %v3029
      %v3120 = vpop.f32.mrb[0].mxu0
      %v3121 = vadd.f32 0.0, %v3120
      %v3122 = vpop.f32.mrb[0].mxu0
      %v3123 = vpop.f32.mrb[0].mxu0
      %v3124 = vadd.f32 0.0, %v3123
      %v3125 = vpop.f32.mrb[0].mxu0
      %3126 = vmatprep.mubr.bf16.mxu0 0
      %3127 = vmatmul.mubr.bf16.gmra.mrb[0].mxu0 %v3032
      %v3128 = vpop.f32.mrb[0].mxu0
      %v3129 = vadd.f32 0.0, %v3128
      %v3130 = vpop.f32.mrb[0].mxu0
      %v3131 = vpop.f32.mrb[0].mxu0
      %v3132 = vadd.f32 0.0, %v3131
      %v3133 = vpop.f32.mrb[0].mxu0
      %3134 = vmatprep.mubr.bf16.mxu0 0
      %3135 = vmatmul.mubr.bf16.gmra.mrb[0].mxu0 %v3035
      %v3136 = vpop.f32.mrb[0].mxu0
      %v3137 = vadd.f32 0.0, %v3136
      %v3138 = vpop.f32.mrb[0].mxu0
      %v3139 = vpop.f32.mrb[0].mxu0
      %v3140 = vadd.f32 0.0, %v3139
      %v3141 = vpop.f32.mrb[0].mxu0
      %3142 = vmatprep.mubr.bf16.mxu0 0
      %3143 = vmatmul.mubr.bf16.gmra.mrb[0].mxu0 %v3038
      %v3144 = vpop.f32.mrb[0].mxu0
      %v3145 = vadd.f32 0.0, %v3144
      %v3146 = vpop.f32.mrb[0].mxu0
      %v3147 = vpop.f32.mrb[0].mxu0
      %v3148 = vadd.f32 0.0, %v3147
      %v3149 = vpop.f32.mrb[0].mxu0
      %3150 = vmatprep.mubr.bf16.mxu0 0
      %3151 = vmatmul.mubr.bf16.gmra.mrb[0].mxu0 %v3041
      %v3152 = vpop.f32.mrb[0].mxu0
      %v3153 = vadd.f32 0.0, %v3152
      %v3154 = vpop.f32.mrb[0].mxu0
      %v3155 = vpop.f32.mrb[0].mxu0
      %v3156 = vadd.f32 0.0, %v3155
      %v3157 = vpop.f32.mrb[0].mxu0
      %3158 = vmatprep.mubr.bf16.mxu0 0
      %3159 = vmatmul.mubr.bf16.gmra.mrb[0].mxu0 %v3044
      %v3160 = vpop.f32.mrb[0].mxu0
      %v3161 = vadd.f32 0.0, %v3160
      %v3162 = vpop.f32.mrb[0].mxu0
      %v3163 = vpop.f32.mrb[0].mxu0
      %v3164 = vadd.f32 0.0, %v3163
      %v3165 = vpop.f32.mrb[0].mxu0
      %3166 = vdwg.mxu0
      %v3167 = vmul.f32 %v3105, 0.35355338
      %v3168 = vmul.f32 %v3108, 0.35355338
      %v3169 = vmul.f32 %v3113, 0.35355338
      %v3170 = vmul.f32 %v3116, 0.35355338
      %v3171 = vmul.f32 %v3121, 0.35355338
      %v3172 = vmul.f32 %v3124, 0.35355338
      %v3173 = vmul.f32 %v3129, 0.35355338
      %v3174 = vmul.f32 %v3132, 0.35355338
      %v3175 = vmul.f32 %v3137, 0.35355338
      %v3176 = vmul.f32 %v3140, 0.35355338
      %v3177 = vmul.f32 %v3145, 0.35355338
      %v3178 = vmul.f32 %v3148, 0.35355338
      %v3179 = vmul.f32 %v3153, 0.35355338
      %v3180 = vmul.f32 %v3156, 0.35355338
      %v3181 = vmul.f32 %v3161, 0.35355338
      %v3182 = vmul.f32 %v3164, 0.35355338
      %s3183 = scalar_lea.vmem [#allocation2], 384
      %v3184 = vld [vmem:[%s3183] sm:$0xff]
      %v3185 = vld [vmem:[%s3183 + $0x8] sm:$0xff]
      %v3186 = vld [vmem:[%s3183 + $0x10] sm:$0xff]
      %v3187 = vld [vmem:[%s3183 + $0x18] sm:$0xff]
      %v3188 = vld [vmem:[%s3183 + $0x20] sm:$0xff]
      %v3189 = vld [vmem:[%s3183 + $0x28] sm:$0xff]
      %v3190 = vld [vmem:[%s3183 + $0x30] sm:$0xff]
      %v3191 = vld [vmem:[%s3183 + $0x38] sm:$0xff]
      %v3192 = vld [vmem:[%s3183 + $0x40] sm:$0xff]
      %v3193 = vld [vmem:[%s3183 + $0x48] sm:$0xff]
      %v3194 = vld [vmem:[%s3183 + $0x50] sm:$0xff]
      %v3195 = vld [vmem:[%s3183 + $0x58] sm:$0xff]
      %v3196 = vld [vmem:[%s3183 + $0x60] sm:$0xff]
      %v3197 = vld [vmem:[%s3183 + $0x68] sm:$0xff]
      %v3198 = vld [vmem:[%s3183 + $0x70] sm:$0xff]
      %v3199 = vld [vmem:[%s3183 + $0x78] sm:$0xff]
      %3200 = vmax.xlane.f32.xlu0 %v3167
      %v3201 = vpop.xlane.xlu0 %3200
      %3202 = vmax.xlane.f32.xlu0 %v3168
      %v3203 = vpop.xlane.xlu0 %3202
      %3204 = vmax.xlane.f32.xlu0 %v3169
      %v3205 = vpop.xlane.xlu0 %3204
      %3206 = vmax.xlane.f32.xlu0 %v3170
      %v3207 = vpop.xlane.xlu0 %3206
      %3208 = vmax.xlane.f32.xlu0 %v3171
      %v3209 = vpop.xlane.xlu0 %3208
      %3210 = vmax.xlane.f32.xlu0 %v3172
      %v3211 = vpop.xlane.xlu0 %3210
      %3212 = vmax.xlane.f32.xlu0 %v3173
      %v3213 = vpop.xlane.xlu0 %3212
      %3214 = vmax.xlane.f32.xlu0 %v3174
      %v3215 = vpop.xlane.xlu0 %3214
      %3216 = vmax.xlane.f32.xlu0 %v3175
      %v3217 = vpop.xlane.xlu0 %3216
      %3218 = vmax.xlane.f32.xlu0 %v3176
      %v3219 = vpop.xlane.xlu0 %3218
      %3220 = vmax.xlane.f32.xlu0 %v3177
      %v3221 = vpop.xlane.xlu0 %3220
      %3222 = vmax.xlane.f32.xlu0 %v3178
      %v3223 = vpop.xlane.xlu0 %3222
      %3224 = vmax.xlane.f32.xlu0 %v3179
      %v3225 = vpop.xlane.xlu0 %3224
      %3226 = vmax.xlane.f32.xlu0 %v3180
      %v3227 = vpop.xlane.xlu0 %3226
      %3228 = vmax.xlane.f32.xlu0 %v3181
      %v3229 = vpop.xlane.xlu0 %3228
      %3230 = vmax.xlane.f32.xlu0 %v3182
      %v3231 = vpop.xlane.xlu0 %3230
      %v3232 = vmax.f32 %v3184, %v3201
      %v3233 = vmax.f32 %v3185, %v3203
      %v3234 = vmax.f32 %v3186, %v3205
      %v3235 = vmax.f32 %v3187, %v3207
      %v3236 = vmax.f32 %v3188, %v3209
      %v3237 = vmax.f32 %v3189, %v3211
      %v3238 = vmax.f32 %v3190, %v3213
      %v3239 = vmax.f32 %v3191, %v3215
      %v3240 = vmax.f32 %v3192, %v3217
      %v3241 = vmax.f32 %v3193, %v3219
      %v3242 = vmax.f32 %v3194, %v3221
      %v3243 = vmax.f32 %v3195, %v3223
      %v3244 = vmax.f32 %v3196, %v3225
      %v3245 = vmax.f32 %v3197, %v3227
      %v3246 = vmax.f32 %v3198, %v3229
      %v3247 = vmax.f32 %v3199, %v3231
      %v3248 = vsub.f32 %v3184, %v3232
      %v3249 = vsub.f32 %v3185, %v3233
      %v3250 = vsub.f32 %v3186, %v3234
      %v3251 = vsub.f32 %v3187, %v3235
      %v3252 = vsub.f32 %v3188, %v3236
      %v3253 = vsub.f32 %v3189, %v3237
      %v3254 = vsub.f32 %v3190, %v3238
      %v3255 = vsub.f32 %v3191, %v3239
      %v3256 = vsub.f32 %v3192, %v3240
      %v3257 = vsub.f32 %v3193, %v3241
      %v3258 = vsub.f32 %v3194, %v3242
      %v3259 = vsub.f32 %v3195, %v3243
      %v3260 = vsub.f32 %v3196, %v3244
      %v3261 = vsub.f32 %v3197, %v3245
      %v3262 = vsub.f32 %v3198, %v3246
      %v3263 = vsub.f32 %v3199, %v3247
      %v3264 = vmul.f32 %v3248, 1.442695
      %v3265 = vpow.pop %v3264
      %v3266 = vmul.f32 %v3249, 1.442695
      %v3267 = vpow.pop %v3266
      %v3268 = vmul.f32 %v3250, 1.442695
      %v3269 = vpow.pop %v3268
      %v3270 = vmul.f32 %v3251, 1.442695
      %v3271 = vpow.pop %v3270
      %v3272 = vmul.f32 %v3252, 1.442695
      %v3273 = vpow.pop %v3272
      %v3274 = vmul.f32 %v3253, 1.442695
      %v3275 = vpow.pop %v3274
      %v3276 = vmul.f32 %v3254, 1.442695
      %v3277 = vpow.pop %v3276
      %v3278 = vmul.f32 %v3255, 1.442695
      %v3279 = vpow.pop %v3278
      %v3280 = vmul.f32 %v3256, 1.442695
      %v3281 = vpow.pop %v3280
      %v3282 = vmul.f32 %v3257, 1.442695
      %v3283 = vpow.pop %v3282
      %v3284 = vmul.f32 %v3258, 1.442695
      %v3285 = vpow.pop %v3284
      %v3286 = vmul.f32 %v3259, 1.442695
      %v3287 = vpow.pop %v3286
      %v3288 = vmul.f32 %v3260, 1.442695
      %v3289 = vpow.pop %v3288
      %v3290 = vmul.f32 %v3261, 1.442695
      %v3291 = vpow.pop %v3290
      %v3292 = vmul.f32 %v3262, 1.442695
      %v3293 = vpow.pop %v3292
      %v3294 = vmul.f32 %v3263, 1.442695
      %v3295 = vpow.pop %v3294
      %3297 = vset.pattern.permute.xlu0 0
      %3298 = vperm.xlu0 %3297, %v3232
      %v3299 = vpop.permute.xlu0 %3298
      %3302 = vset.pattern.permute.xlu0 0
      %3303 = vperm.xlu0 %3302, %v3233
      %v3304 = vpop.permute.xlu0 %3303
      %3307 = vset.pattern.permute.xlu0 0
      %3308 = vperm.xlu0 %3307, %v3234
      %v3309 = vpop.permute.xlu0 %3308
      %3312 = vset.pattern.permute.xlu0 0
      %3313 = vperm.xlu0 %3312, %v3235
      %v3314 = vpop.permute.xlu0 %3313
      %3317 = vset.pattern.permute.xlu0 0
      %3318 = vperm.xlu0 %3317, %v3236
      %v3319 = vpop.permute.xlu0 %3318
      %3322 = vset.pattern.permute.xlu0 0
      %3323 = vperm.xlu0 %3322, %v3237
      %v3324 = vpop.permute.xlu0 %3323
      %3327 = vset.pattern.permute.xlu0 0
      %3328 = vperm.xlu0 %3327, %v3238
      %v3329 = vpop.permute.xlu0 %3328
      %3332 = vset.pattern.permute.xlu0 0
      %3333 = vperm.xlu0 %3332, %v3239
      %v3334 = vpop.permute.xlu0 %3333
      %3337 = vset.pattern.permute.xlu0 0
      %3338 = vperm.xlu0 %3337, %v3240
      %v3339 = vpop.permute.xlu0 %3338
      %3342 = vset.pattern.permute.xlu0 0
      %3343 = vperm.xlu0 %3342, %v3241
      %v3344 = vpop.permute.xlu0 %3343
      %3347 = vset.pattern.permute.xlu0 0
      %3348 = vperm.xlu0 %3347, %v3242
      %v3349 = vpop.permute.xlu0 %3348
      %3352 = vset.pattern.permute.xlu0 0
      %3353 = vperm.xlu0 %3352, %v3243
      %v3354 = vpop.permute.xlu0 %3353
      %3357 = vset.pattern.permute.xlu0 0
      %3358 = vperm.xlu0 %3357, %v3244
      %v3359 = vpop.permute.xlu0 %3358
      %3362 = vset.pattern.permute.xlu0 0
      %3363 = vperm.xlu0 %3362, %v3245
      %v3364 = vpop.permute.xlu0 %3363
      %3367 = vset.pattern.permute.xlu0 0
      %3368 = vperm.xlu0 %3367, %v3246
      %v3369 = vpop.permute.xlu0 %3368
      %3372 = vset.pattern.permute.xlu0 0
      %3373 = vperm.xlu0 %3372, %v3247
      %v3374 = vpop.permute.xlu0 %3373
      %v3376 = vsub.f32 %v3167, %v3299
      %v3377 = vsub.f32 %v3168, %v3304
      %v3378 = vsub.f32 %v3169, %v3309
      %v3379 = vsub.f32 %v3170, %v3314
      %v3380 = vsub.f32 %v3171, %v3319
      %v3381 = vsub.f32 %v3172, %v3324
      %v3382 = vsub.f32 %v3173, %v3329
      %v3383 = vsub.f32 %v3174, %v3334
      %v3384 = vsub.f32 %v3175, %v3339
      %v3385 = vsub.f32 %v3176, %v3344
      %v3386 = vsub.f32 %v3177, %v3349
      %v3387 = vsub.f32 %v3178, %v3354
      %v3388 = vsub.f32 %v3179, %v3359
      %v3389 = vsub.f32 %v3180, %v3364
      %v3390 = vsub.f32 %v3181, %v3369
      %v3391 = vsub.f32 %v3182, %v3374
      %v3392 = vmul.f32 %v3376, 1.442695
      %v3393 = vpow.pop %v3392
      %v3394 = vmul.f32 %v3377, 1.442695
      %v3395 = vpow.pop %v3394
      %v3396 = vmul.f32 %v3378, 1.442695
      %v3397 = vpow.pop %v3396
      %v3398 = vmul.f32 %v3379, 1.442695
      %v3399 = vpow.pop %v3398
      %v3400 = vmul.f32 %v3380, 1.442695
      %v3401 = vpow.pop %v3400
      %v3402 = vmul.f32 %v3381, 1.442695
      %v3403 = vpow.pop %v3402
      %v3404 = vmul.f32 %v3382, 1.442695
      %v3405 = vpow.pop %v3404
      %v3406 = vmul.f32 %v3383, 1.442695
      %v3407 = vpow.pop %v3406
      %v3408 = vmul.f32 %v3384, 1.442695
      %v3409 = vpow.pop %v3408
      %v3410 = vmul.f32 %v3385, 1.442695
      %v3411 = vpow.pop %v3410
      %v3412 = vmul.f32 %v3386, 1.442695
      %v3413 = vpow.pop %v3412
      %v3414 = vmul.f32 %v3387, 1.442695
      %v3415 = vpow.pop %v3414
      %v3416 = vmul.f32 %v3388, 1.442695
      %v3417 = vpow.pop %v3416
      %v3418 = vmul.f32 %v3389, 1.442695
      %v3419 = vpow.pop %v3418
      %v3420 = vmul.f32 %v3390, 1.442695
      %v3421 = vpow.pop %v3420
      %v3422 = vmul.f32 %v3391, 1.442695
      %v3423 = vpow.pop %v3422
      %s3424 = scalar_lea.vmem [#allocation3], 384
      %v3425 = vld [vmem:[%s3424] sm:$0xff]
      %v3426 = vld [vmem:[%s3424 + $0x8] sm:$0xff]
      %v3427 = vld [vmem:[%s3424 + $0x10] sm:$0xff]
      %v3428 = vld [vmem:[%s3424 + $0x18] sm:$0xff]
      %v3429 = vld [vmem:[%s3424 + $0x20] sm:$0xff]
      %v3430 = vld [vmem:[%s3424 + $0x28] sm:$0xff]
      %v3431 = vld [vmem:[%s3424 + $0x30] sm:$0xff]
      %v3432 = vld [vmem:[%s3424 + $0x38] sm:$0xff]
      %v3433 = vld [vmem:[%s3424 + $0x40] sm:$0xff]
      %v3434 = vld [vmem:[%s3424 + $0x48] sm:$0xff]
      %v3435 = vld [vmem:[%s3424 + $0x50] sm:$0xff]
      %v3436 = vld [vmem:[%s3424 + $0x58] sm:$0xff]
      %v3437 = vld [vmem:[%s3424 + $0x60] sm:$0xff]
      %v3438 = vld [vmem:[%s3424 + $0x68] sm:$0xff]
      %v3439 = vld [vmem:[%s3424 + $0x70] sm:$0xff]
      %v3440 = vld [vmem:[%s3424 + $0x78] sm:$0xff]
      %v3441 = vmul.f32 %v3265, %v3425
      %v3442 = vmul.f32 %v3267, %v3426
      %v3443 = vmul.f32 %v3269, %v3427
      %v3444 = vmul.f32 %v3271, %v3428
      %v3445 = vmul.f32 %v3273, %v3429
      %v3446 = vmul.f32 %v3275, %v3430
      %v3447 = vmul.f32 %v3277, %v3431
      %v3448 = vmul.f32 %v3279, %v3432
      %v3449 = vmul.f32 %v3281, %v3433
      %v3450 = vmul.f32 %v3283, %v3434
      %v3451 = vmul.f32 %v3285, %v3435
      %v3452 = vmul.f32 %v3287, %v3436
      %v3453 = vmul.f32 %v3289, %v3437
      %v3454 = vmul.f32 %v3291, %v3438
      %v3455 = vmul.f32 %v3293, %v3439
      %v3456 = vmul.f32 %v3295, %v3440
      %3457 = vadd.xlane.f32.xlu0 %v3393
      %v3458 = vpop.xlane.xlu0 %3457
      %3459 = vadd.xlane.f32.xlu0 %v3395
      %v3460 = vpop.xlane.xlu0 %3459
      %3461 = vadd.xlane.f32.xlu0 %v3397
      %v3462 = vpop.xlane.xlu0 %3461
      %3463 = vadd.xlane.f32.xlu0 %v3399
      %v3464 = vpop.xlane.xlu0 %3463
      %3465 = vadd.xlane.f32.xlu0 %v3401
      %v3466 = vpop.xlane.xlu0 %3465
      %3467 = vadd.xlane.f32.xlu0 %v3403
      %v3468 = vpop.xlane.xlu0 %3467
      %3469 = vadd.xlane.f32.xlu0 %v3405
      %v3470 = vpop.xlane.xlu0 %3469
      %3471 = vadd.xlane.f32.xlu0 %v3407
      %v3472 = vpop.xlane.xlu0 %3471
      %3473 = vadd.xlane.f32.xlu0 %v3409
      %v3474 = vpop.xlane.xlu0 %3473
      %3475 = vadd.xlane.f32.xlu0 %v3411
      %v3476 = vpop.xlane.xlu0 %3475
      %3477 = vadd.xlane.f32.xlu0 %v3413
      %v3478 = vpop.xlane.xlu0 %3477
      %3479 = vadd.xlane.f32.xlu0 %v3415
      %v3480 = vpop.xlane.xlu0 %3479
      %3481 = vadd.xlane.f32.xlu0 %v3417
      %v3482 = vpop.xlane.xlu0 %3481
      %3483 = vadd.xlane.f32.xlu0 %v3419
      %v3484 = vpop.xlane.xlu0 %3483
      %3485 = vadd.xlane.f32.xlu0 %v3421
      %v3486 = vpop.xlane.xlu0 %3485
      %3487 = vadd.xlane.f32.xlu0 %v3423
      %v3488 = vpop.xlane.xlu0 %3487
      %v3489 = vadd.f32 %v3441, %v3458
      %v3490 = vadd.f32 %v3442, %v3460
      %v3491 = vadd.f32 %v3443, %v3462
      %v3492 = vadd.f32 %v3444, %v3464
      %v3493 = vadd.f32 %v3445, %v3466
      %v3494 = vadd.f32 %v3446, %v3468
      %v3495 = vadd.f32 %v3447, %v3470
      %v3496 = vadd.f32 %v3448, %v3472
      %v3497 = vadd.f32 %v3449, %v3474
      %v3498 = vadd.f32 %v3450, %v3476
      %v3499 = vadd.f32 %v3451, %v3478
      %v3500 = vadd.f32 %v3452, %v3480
      %v3501 = vadd.f32 %v3453, %v3482
      %v3502 = vadd.f32 %v3454, %v3484
      %v3503 = vadd.f32 %v3455, %v3486
      %v3504 = vadd.f32 %v3456, %v3488
      %3505 = vst.msk [vmem:[%s3424] sm:$0xff] %vm1042, %v3489
      %3506 = vst.msk [vmem:[%s3424 + $0x8] sm:$0xff] %vm1042, %v3490
      %3507 = vst.msk [vmem:[%s3424 + $0x10] sm:$0xff] %vm1042, %v3491
      %3508 = vst.msk [vmem:[%s3424 + $0x18] sm:$0xff] %vm1042, %v3492
      %3509 = vst.msk [vmem:[%s3424 + $0x20] sm:$0xff] %vm1042, %v3493
      %3510 = vst.msk [vmem:[%s3424 + $0x28] sm:$0xff] %vm1042, %v3494
      %3511 = vst.msk [vmem:[%s3424 + $0x30] sm:$0xff] %vm1042, %v3495
      %3512 = vst.msk [vmem:[%s3424 + $0x38] sm:$0xff] %vm1042, %v3496
      %3513 = vst.msk [vmem:[%s3424 + $0x40] sm:$0xff] %vm1042, %v3497
      %3514 = vst.msk [vmem:[%s3424 + $0x48] sm:$0xff] %vm1042, %v3498
      %3515 = vst.msk [vmem:[%s3424 + $0x50] sm:$0xff] %vm1042, %v3499
      %3516 = vst.msk [vmem:[%s3424 + $0x58] sm:$0xff] %vm1042, %v3500
      %3517 = vst.msk [vmem:[%s3424 + $0x60] sm:$0xff] %vm1042, %v3501
      %3518 = vst.msk [vmem:[%s3424 + $0x68] sm:$0xff] %vm1042, %v3502
      %3519 = vst.msk [vmem:[%s3424 + $0x70] sm:$0xff] %vm1042, %v3503
      %3520 = vst.msk [vmem:[%s3424 + $0x78] sm:$0xff] %vm1042, %v3504
      %s3521 = scalar_lea.vmem [#allocation4], 384
      %v3522 = vld [vmem:[%s3521] sm:$0xff]
      %v3523 = vld [vmem:[%s3521 + $0x8] sm:$0xff]
      %v3524 = vld [vmem:[%s3521 + $0x10] sm:$0xff]
      %v3525 = vld [vmem:[%s3521 + $0x18] sm:$0xff]
      %v3526 = vld [vmem:[%s3521 + $0x20] sm:$0xff]
      %v3527 = vld [vmem:[%s3521 + $0x28] sm:$0xff]
      %v3528 = vld [vmem:[%s3521 + $0x30] sm:$0xff]
      %v3529 = vld [vmem:[%s3521 + $0x38] sm:$0xff]
      %v3530 = vld [vmem:[%s3521 + $0x40] sm:$0xff]
      %v3531 = vld [vmem:[%s3521 + $0x48] sm:$0xff]
      %v3532 = vld [vmem:[%s3521 + $0x50] sm:$0xff]
      %v3533 = vld [vmem:[%s3521 + $0x58] sm:$0xff]
      %v3534 = vld [vmem:[%s3521 + $0x60] sm:$0xff]
      %v3535 = vld [vmem:[%s3521 + $0x68] sm:$0xff]
      %v3536 = vld [vmem:[%s3521 + $0x70] sm:$0xff]
      %v3537 = vld [vmem:[%s3521 + $0x78] sm:$0xff]
      %3539 = vset.pattern.permute.xlu0 0
      %3540 = vperm.xlu0 %3539, %v3265
      %v3541 = vpop.permute.xlu0 %3540
      %3544 = vset.pattern.permute.xlu0 0
      %3545 = vperm.xlu0 %3544, %v3267
      %v3546 = vpop.permute.xlu0 %3545
      %3549 = vset.pattern.permute.xlu0 0
      %3550 = vperm.xlu0 %3549, %v3269
      %v3551 = vpop.permute.xlu0 %3550
      %3554 = vset.pattern.permute.xlu0 0
      %3555 = vperm.xlu0 %3554, %v3271
      %v3556 = vpop.permute.xlu0 %3555
      %3559 = vset.pattern.permute.xlu0 0
      %3560 = vperm.xlu0 %3559, %v3273
      %v3561 = vpop.permute.xlu0 %3560
      %3564 = vset.pattern.permute.xlu0 0
      %3565 = vperm.xlu0 %3564, %v3275
      %v3566 = vpop.permute.xlu0 %3565
      %3569 = vset.pattern.permute.xlu0 0
      %3570 = vperm.xlu0 %3569, %v3277
      %v3571 = vpop.permute.xlu0 %3570
      %3574 = vset.pattern.permute.xlu0 0
      %3575 = vperm.xlu0 %3574, %v3279
      %v3576 = vpop.permute.xlu0 %3575
      %3579 = vset.pattern.permute.xlu0 0
      %3580 = vperm.xlu0 %3579, %v3281
      %v3581 = vpop.permute.xlu0 %3580
      %3584 = vset.pattern.permute.xlu0 0
      %3585 = vperm.xlu0 %3584, %v3283
      %v3586 = vpop.permute.xlu0 %3585
      %3589 = vset.pattern.permute.xlu0 0
      %3590 = vperm.xlu0 %3589, %v3285
      %v3591 = vpop.permute.xlu0 %3590
      %3594 = vset.pattern.permute.xlu0 0
      %3595 = vperm.xlu0 %3594, %v3287
      %v3596 = vpop.permute.xlu0 %3595
      %3599 = vset.pattern.permute.xlu0 0
      %3600 = vperm.xlu0 %3599, %v3289
      %v3601 = vpop.permute.xlu0 %3600
      %3604 = vset.pattern.permute.xlu0 0
      %3605 = vperm.xlu0 %3604, %v3291
      %v3606 = vpop.permute.xlu0 %3605
      %3609 = vset.pattern.permute.xlu0 0
      %3610 = vperm.xlu0 %3609, %v3293
      %v3611 = vpop.permute.xlu0 %3610
      %3614 = vset.pattern.permute.xlu0 0
      %3615 = vperm.xlu0 %3614, %v3295
      %v3616 = vpop.permute.xlu0 %3615
      %v3618 = vmul.f32 %v3541, %v3522
      %v3619 = vmul.f32 %v3546, %v3523
      %v3620 = vmul.f32 %v3551, %v3524
      %v3621 = vmul.f32 %v3556, %v3525
      %v3622 = vmul.f32 %v3561, %v3526
      %v3623 = vmul.f32 %v3566, %v3527
      %v3624 = vmul.f32 %v3571, %v3528
      %v3625 = vmul.f32 %v3576, %v3529
      %v3626 = vmul.f32 %v3581, %v3530
      %v3627 = vmul.f32 %v3586, %v3531
      %v3628 = vmul.f32 %v3591, %v3532
      %v3629 = vmul.f32 %v3596, %v3533
      %v3630 = vmul.f32 %v3601, %v3534
      %v3631 = vmul.f32 %v3606, %v3535
      %v3632 = vmul.f32 %v3611, %v3536
      %v3633 = vmul.f32 %v3616, %v3537
      %v3634 = vpack.c.bf16 %v3395, %v3393
      %v3635 = vpack.c.bf16 %v3399, %v3397
      %v3636 = vpack.c.bf16 %v3403, %v3401
      %v3637 = vpack.c.bf16 %v3407, %v3405
      %v3638 = vpack.c.bf16 %v3411, %v3409
      %v3639 = vpack.c.bf16 %v3415, %v3413
      %v3640 = vpack.c.bf16 %v3419, %v3417
      %v3641 = vpack.c.bf16 %v3423, %v3421
      %3642 = vrot.lane.b32.xlu0 %v552, 104
      %v3643 = vpop.permute.xlu0 %3642
      %3644 = vrot.lane.b32.xlu0 %v553, 104
      %v3645 = vpop.permute.xlu0 %3644
      %3646 = vrot.lane.b32.xlu0 %v554, 104
      %v3647 = vpop.permute.xlu0 %3646
      %3648 = vrot.lane.b32.xlu0 %v555, 104
      %v3649 = vpop.permute.xlu0 %3648
      %3650 = vrot.lane.b32.xlu0 %v556, 104
      %v3651 = vpop.permute.xlu0 %3650
      %3652 = vrot.lane.b32.xlu0 %v557, 104
      %v3653 = vpop.permute.xlu0 %3652
      %3654 = vrot.lane.b32.xlu0 %v558, 104
      %v3655 = vpop.permute.xlu0 %3654
      %3656 = vrot.lane.b32.xlu0 %v559, 104
      %v3657 = vpop.permute.xlu0 %3656
      %3666 = vmatprep.subr.bf16.mxu0 0
      %3667 = vmatpush1.bf16.msra.mxu0 %v3643
      %3668 = vmatprep.subr.bf16.mxu0 0
      %3669 = vmatpush1.bf16.msra.mxu0 %v3645
      %3670 = vmatprep.subr.bf16.mxu0 0
      %3671 = vmatpush1.bf16.msra.mxu0 %v3647
      %3672 = vmatprep.subr.bf16.mxu0 0
      %3673 = vmatpush1.bf16.msra.mxu0 %v3649
      %3674 = vmatprep.subr.bf16.mxu0 0
      %3675 = vmatpush1.bf16.msra.mxu0 %v3651
      %3676 = vmatprep.subr.bf16.mxu0 0
      %3677 = vmatpush1.bf16.msra.mxu0 %v3653
      %3678 = vmatprep.subr.bf16.mxu0 0
      %3679 = vmatpush1.bf16.msra.mxu0 %v3655
      %3680 = vmatprep.subr.bf16.mxu0 0
      %3681 = vmatpush1.bf16.msra.mxu0 %v3657
      %3682 = vmatprep.subr.bf16.mxu0 0
      %3683 = vmatpush1.bf16.msra.mxu0 0
      %3684 = vmatprep.subr.bf16.mxu0 0
      %3685 = vmatpush1.bf16.msra.mxu0 0
      %3686 = vmatprep.subr.bf16.mxu0 0
      %3687 = vmatpush1.bf16.msra.mxu0 0
      %3688 = vmatprep.subr.bf16.mxu0 0
      %3689 = vmatpush1.bf16.msra.mxu0 0
      %3690 = vmatprep.subr.bf16.mxu0 0
      %3691 = vmatpush1.bf16.msra.mxu0 0
      %3692 = vmatprep.subr.bf16.mxu0 0
      %3693 = vmatpush1.bf16.msra.mxu0 0
      %3694 = vmatprep.subr.bf16.mxu0 0
      %3695 = vmatpush1.bf16.msra.mxu0 0
      %3696 = vmatprep.subr.bf16.mxu0 0
      %3697 = vmatpush1.bf16.msra.mxu0 0
      %3698 = vmatprep.mubr.bf16.mxu0 0
      %3699 = vmatmul.mubr.bf16.gmra.mrb[0].mxu0 %v3634
      %v3700 = vpop.f32.mrb[0].mxu0
      %v3701 = vadd.f32 0.0, %v3700
      %v3702 = vpop.f32.mrb[0].mxu0
      %v3703 = vpop.f32.mrb[0].mxu0
      %v3704 = vadd.f32 0.0, %v3703
      %v3705 = vpop.f32.mrb[0].mxu0
      %3706 = vmatprep.mubr.bf16.mxu0 0
      %3707 = vmatmul.mubr.bf16.gmra.mrb[0].mxu0 %v3635
      %v3708 = vpop.f32.mrb[0].mxu0
      %v3709 = vadd.f32 0.0, %v3708
      %v3710 = vpop.f32.mrb[0].mxu0
      %v3711 = vpop.f32.mrb[0].mxu0
      %v3712 = vadd.f32 0.0, %v3711
      %v3713 = vpop.f32.mrb[0].mxu0
      %3714 = vmatprep.mubr.bf16.mxu0 0
      %3715 = vmatmul.mubr.bf16.gmra.mrb[0].mxu0 %v3636
      %v3716 = vpop.f32.mrb[0].mxu0
      %v3717 = vadd.f32 0.0, %v3716
      %v3718 = vpop.f32.mrb[0].mxu0
      %v3719 = vpop.f32.mrb[0].mxu0
      %v3720 = vadd.f32 0.0, %v3719
      %v3721 = vpop.f32.mrb[0].mxu0
      %3722 = vmatprep.mubr.bf16.mxu0 0
      %3723 = vmatmul.mubr.bf16.gmra.mrb[0].mxu0 %v3637
      %v3724 = vpop.f32.mrb[0].mxu0
      %v3725 = vadd.f32 0.0, %v3724
      %v3726 = vpop.f32.mrb[0].mxu0
      %v3727 = vpop.f32.mrb[0].mxu0
      %v3728 = vadd.f32 0.0, %v3727
      %v3729 = vpop.f32.mrb[0].mxu0
      %3730 = vmatprep.mubr.bf16.mxu0 0
      %3731 = vmatmul.mubr.bf16.gmra.mrb[0].mxu0 %v3638
      %v3732 = vpop.f32.mrb[0].mxu0
      %v3733 = vadd.f32 0.0, %v3732
      %v3734 = vpop.f32.mrb[0].mxu0
      %v3735 = vpop.f32.mrb[0].mxu0
      %v3736 = vadd.f32 0.0, %v3735
      %v3737 = vpop.f32.mrb[0].mxu0
      %3738 = vmatprep.mubr.bf16.mxu0 0
      %3739 = vmatmul.mubr.bf16.gmra.mrb[0].mxu0 %v3639
      %v3740 = vpop.f32.mrb[0].mxu0
      %v3741 = vadd.f32 0.0, %v3740
      %v3742 = vpop.f32.mrb[0].mxu0
      %v3743 = vpop.f32.mrb[0].mxu0
      %v3744 = vadd.f32 0.0, %v3743
      %v3745 = vpop.f32.mrb[0].mxu0
      %3746 = vmatprep.mubr.bf16.mxu0 0
      %3747 = vmatmul.mubr.bf16.gmra.mrb[0].mxu0 %v3640
      %v3748 = vpop.f32.mrb[0].mxu0
      %v3749 = vadd.f32 0.0, %v3748
      %v3750 = vpop.f32.mrb[0].mxu0
      %v3751 = vpop.f32.mrb[0].mxu0
      %v3752 = vadd.f32 0.0, %v3751
      %v3753 = vpop.f32.mrb[0].mxu0
      %3754 = vmatprep.mubr.bf16.mxu0 0
      %3755 = vmatmul.mubr.bf16.gmra.mrb[0].mxu0 %v3641
      %v3756 = vpop.f32.mrb[0].mxu0
      %v3757 = vadd.f32 0.0, %v3756
      %v3758 = vpop.f32.mrb[0].mxu0
      %v3759 = vpop.f32.mrb[0].mxu0
      %v3760 = vadd.f32 0.0, %v3759
      %v3761 = vpop.f32.mrb[0].mxu0
      %3762 = vdwg.mxu0
      %v3763 = vadd.f32 %v3618, %v3701
      %v3764 = vadd.f32 %v3619, %v3704
      %v3765 = vadd.f32 %v3620, %v3709
      %v3766 = vadd.f32 %v3621, %v3712
      %v3767 = vadd.f32 %v3622, %v3717
      %v3768 = vadd.f32 %v3623, %v3720
      %v3769 = vadd.f32 %v3624, %v3725
      %v3770 = vadd.f32 %v3625, %v3728
      %v3771 = vadd.f32 %v3626, %v3733
      %v3772 = vadd.f32 %v3627, %v3736
      %v3773 = vadd.f32 %v3628, %v3741
      %v3774 = vadd.f32 %v3629, %v3744
      %v3775 = vadd.f32 %v3630, %v3749
      %v3776 = vadd.f32 %v3631, %v3752
      %v3777 = vadd.f32 %v3632, %v3757
      %v3778 = vadd.f32 %v3633, %v3760
      %3779 = vst.msk [vmem:[%s3521] sm:$0xff] %vm560, %v3763
      %3780 = vst.msk [vmem:[%s3521 + $0x8] sm:$0xff] %vm560, %v3764
      %3781 = vst.msk [vmem:[%s3521 + $0x10] sm:$0xff] %vm560, %v3765
      %3782 = vst.msk [vmem:[%s3521 + $0x18] sm:$0xff] %vm560, %v3766
      %3783 = vst.msk [vmem:[%s3521 + $0x20] sm:$0xff] %vm560, %v3767
      %3784 = vst.msk [vmem:[%s3521 + $0x28] sm:$0xff] %vm560, %v3768
      %3785 = vst.msk [vmem:[%s3521 + $0x30] sm:$0xff] %vm560, %v3769
      %3786 = vst.msk [vmem:[%s3521 + $0x38] sm:$0xff] %vm560, %v3770
      %3787 = vst.msk [vmem:[%s3521 + $0x40] sm:$0xff] %vm560, %v3771
      %3788 = vst.msk [vmem:[%s3521 + $0x48] sm:$0xff] %vm560, %v3772
      %3789 = vst.msk [vmem:[%s3521 + $0x50] sm:$0xff] %vm560, %v3773
      %3790 = vst.msk [vmem:[%s3521 + $0x58] sm:$0xff] %vm560, %v3774
      %3791 = vst.msk [vmem:[%s3521 + $0x60] sm:$0xff] %vm560, %v3775
      %3792 = vst.msk [vmem:[%s3521 + $0x68] sm:$0xff] %vm560, %v3776
      %3793 = vst.msk [vmem:[%s3521 + $0x70] sm:$0xff] %vm560, %v3777
      %3794 = vst.msk [vmem:[%s3521 + $0x78] sm:$0xff] %vm560, %v3778
      %3795 = vst.msk [vmem:[%s3183] sm:$0xff] %vm1042, %v3232
      %3796 = vst.msk [vmem:[%s3183 + $0x8] sm:$0xff] %vm1042, %v3233
      %3797 = vst.msk [vmem:[%s3183 + $0x10] sm:$0xff] %vm1042, %v3234
      %3798 = vst.msk [vmem:[%s3183 + $0x18] sm:$0xff] %vm1042, %v3235
      %3799 = vst.msk [vmem:[%s3183 + $0x20] sm:$0xff] %vm1042, %v3236
      %3800 = vst.msk [vmem:[%s3183 + $0x28] sm:$0xff] %vm1042, %v3237
      %3801 = vst.msk [vmem:[%s3183 + $0x30] sm:$0xff] %vm1042, %v3238
      %3802 = vst.msk [vmem:[%s3183 + $0x38] sm:$0xff] %vm1042, %v3239
      %3803 = vst.msk [vmem:[%s3183 + $0x40] sm:$0xff] %vm1042, %v3240
      %3804 = vst.msk [vmem:[%s3183 + $0x48] sm:$0xff] %vm1042, %v3241
      %3805 = vst.msk [vmem:[%s3183 + $0x50] sm:$0xff] %vm1042, %v3242
      %3806 = vst.msk [vmem:[%s3183 + $0x58] sm:$0xff] %vm1042, %v3243
      %3807 = vst.msk [vmem:[%s3183 + $0x60] sm:$0xff] %vm1042, %v3244
      %3808 = vst.msk [vmem:[%s3183 + $0x68] sm:$0xff] %vm1042, %v3245
      %3809 = vst.msk [vmem:[%s3183 + $0x70] sm:$0xff] %vm1042, %v3246
      %3810 = vst.msk [vmem:[%s3183 + $0x78] sm:$0xff] %vm1042, %v3247
      %p3811 = scmp.eq.s32.totalorder %s21, 1
      // Predicated region
      $region37: #{block_forward.10} parent=31 // pred_check
        %p3812 = pneg %p3811
      $region38: #{block_forward.10} parent=31 // pred_check_branch
        %3814 = sbr.rel (%p3812) target = $region40
      $region39: #{block_forward.10} parent=31 // pred_region
        %v3815 = vld [vmem:[#allocation3] sm:$0xff]
        %v3816 = vld [vmem:[#allocation3 + $0x8] sm:$0xff]
        %v3817 = vld [vmem:[#allocation3 + $0x10] sm:$0xff]
        %v3818 = vld [vmem:[#allocation3 + $0x18] sm:$0xff]
        %v3819 = vld [vmem:[#allocation3 + $0x20] sm:$0xff]
        %v3820 = vld [vmem:[#allocation3 + $0x28] sm:$0xff]
        %v3821 = vld [vmem:[#allocation3 + $0x30] sm:$0xff]
        %v3822 = vld [vmem:[#allocation3 + $0x38] sm:$0xff]
        %v3823 = vld [vmem:[#allocation3 + $0x40] sm:$0xff]
        %v3824 = vld [vmem:[#allocation3 + $0x48] sm:$0xff]
        %v3825 = vld [vmem:[#allocation3 + $0x50] sm:$0xff]
        %v3826 = vld [vmem:[#allocation3 + $0x58] sm:$0xff]
        %v3827 = vld [vmem:[#allocation3 + $0x60] sm:$0xff]
        %v3828 = vld [vmem:[#allocation3 + $0x68] sm:$0xff]
        %v3829 = vld [vmem:[#allocation3 + $0x70] sm:$0xff]
        %v3830 = vld [vmem:[#allocation3 + $0x78] sm:$0xff]
        %v3831 = vrcp.pop %v3815
        %v3832 = vrcp.pop %v3816
        %v3833 = vrcp.pop %v3817
        %v3834 = vrcp.pop %v3818
        %v3835 = vrcp.pop %v3819
        %v3836 = vrcp.pop %v3820
        %v3837 = vrcp.pop %v3821
        %v3838 = vrcp.pop %v3822
        %v3839 = vrcp.pop %v3823
        %v3840 = vrcp.pop %v3824
        %v3841 = vrcp.pop %v3825
        %v3842 = vrcp.pop %v3826
        %v3843 = vrcp.pop %v3827
        %v3844 = vrcp.pop %v3828
        %v3845 = vrcp.pop %v3829
        %v3846 = vrcp.pop %v3830
        %v3847 = vld [vmem:[#allocation4] sm:$0xff]
        %v3848 = vld [vmem:[#allocation4 + $0x8] sm:$0xff]
        %v3849 = vld [vmem:[#allocation4 + $0x10] sm:$0xff]
        %v3850 = vld [vmem:[#allocation4 + $0x18] sm:$0xff]
        %v3851 = vld [vmem:[#allocation4 + $0x20] sm:$0xff]
        %v3852 = vld [vmem:[#allocation4 + $0x28] sm:$0xff]
        %v3853 = vld [vmem:[#allocation4 + $0x30] sm:$0xff]
        %v3854 = vld [vmem:[#allocation4 + $0x38] sm:$0xff]
        %v3855 = vld [vmem:[#allocation4 + $0x40] sm:$0xff]
        %v3856 = vld [vmem:[#allocation4 + $0x48] sm:$0xff]
        %v3857 = vld [vmem:[#allocation4 + $0x50] sm:$0xff]
        %v3858 = vld [vmem:[#allocation4 + $0x58] sm:$0xff]
        %v3859 = vld [vmem:[#allocation4 + $0x60] sm:$0xff]
        %v3860 = vld [vmem:[#allocation4 + $0x68] sm:$0xff]
        %v3861 = vld [vmem:[#allocation4 + $0x70] sm:$0xff]
        %v3862 = vld [vmem:[#allocation4 + $0x78] sm:$0xff]
        %3864 = vset.pattern.permute.xlu0 0
        %3865 = vperm.xlu0 %3864, %v3831
        %v3866 = vpop.permute.xlu0 %3865
        %3869 = vset.pattern.permute.xlu0 0
        %3870 = vperm.xlu0 %3869, %v3832
        %v3871 = vpop.permute.xlu0 %3870
        %3874 = vset.pattern.permute.xlu0 0
        %3875 = vperm.xlu0 %3874, %v3833
        %v3876 = vpop.permute.xlu0 %3875
        %3879 = vset.pattern.permute.xlu0 0
        %3880 = vperm.xlu0 %3879, %v3834
        %v3881 = vpop.permute.xlu0 %3880
        %3884 = vset.pattern.permute.xlu0 0
        %3885 = vperm.xlu0 %3884, %v3835
        %v3886 = vpop.permute.xlu0 %3885
        %3889 = vset.pattern.permute.xlu0 0
        %3890 = vperm.xlu0 %3889, %v3836
        %v3891 = vpop.permute.xlu0 %3890
        %3894 = vset.pattern.permute.xlu0 0
        %3895 = vperm.xlu0 %3894, %v3837
        %v3896 = vpop.permute.xlu0 %3895
        %3899 = vset.pattern.permute.xlu0 0
        %3900 = vperm.xlu0 %3899, %v3838
        %v3901 = vpop.permute.xlu0 %3900
        %3904 = vset.pattern.permute.xlu0 0
        %3905 = vperm.xlu0 %3904, %v3839
        %v3906 = vpop.permute.xlu0 %3905
        %3909 = vset.pattern.permute.xlu0 0
        %3910 = vperm.xlu0 %3909, %v3840
        %v3911 = vpop.permute.xlu0 %3910
        %3914 = vset.pattern.permute.xlu0 0
        %3915 = vperm.xlu0 %3914, %v3841
        %v3916 = vpop.permute.xlu0 %3915
        %3919 = vset.pattern.permute.xlu0 0
        %3920 = vperm.xlu0 %3919, %v3842
        %v3921 = vpop.permute.xlu0 %3920
        %3924 = vset.pattern.permute.xlu0 0
        %3925 = vperm.xlu0 %3924, %v3843
        %v3926 = vpop.permute.xlu0 %3925
        %3929 = vset.pattern.permute.xlu0 0
        %3930 = vperm.xlu0 %3929, %v3844
        %v3931 = vpop.permute.xlu0 %3930
        %3934 = vset.pattern.permute.xlu0 0
        %3935 = vperm.xlu0 %3934, %v3845
        %v3936 = vpop.permute.xlu0 %3935
        %3939 = vset.pattern.permute.xlu0 0
        %3940 = vperm.xlu0 %3939, %v3846
        %v3941 = vpop.permute.xlu0 %3940
        %v3943 = vmul.f32 %v3847, %v3866
        %v3944 = vmul.f32 %v3848, %v3871
        %v3945 = vmul.f32 %v3849, %v3876
        %v3946 = vmul.f32 %v3850, %v3881
        %v3947 = vmul.f32 %v3851, %v3886
        %v3948 = vmul.f32 %v3852, %v3891
        %v3949 = vmul.f32 %v3853, %v3896
        %v3950 = vmul.f32 %v3854, %v3901
        %v3951 = vmul.f32 %v3855, %v3906
        %v3952 = vmul.f32 %v3856, %v3911
        %v3953 = vmul.f32 %v3857, %v3916
        %v3954 = vmul.f32 %v3858, %v3921
        %v3955 = vmul.f32 %v3859, %v3926
        %v3956 = vmul.f32 %v3860, %v3931
        %v3957 = vmul.f32 %v3861, %v3936
        %v3958 = vmul.f32 %v3862, %v3941
        %v3959 = vld [vmem:[%s1774] sm:$0xff]
        %v3960 = vld [vmem:[%s1774 + $0x8] sm:$0xff]
        %v3961 = vld [vmem:[%s1774 + $0x10] sm:$0xff]
        %v3962 = vld [vmem:[%s1774 + $0x18] sm:$0xff]
        %v3963 = vld [vmem:[%s1774 + $0x20] sm:$0xff]
        %v3964 = vld [vmem:[%s1774 + $0x28] sm:$0xff]
        %v3965 = vld [vmem:[%s1774 + $0x30] sm:$0xff]
        %v3966 = vld [vmem:[%s1774 + $0x38] sm:$0xff]
        %v3967 = vld [vmem:[%s1774 + $0x40] sm:$0xff]
        %v3968 = vld [vmem:[%s1774 + $0x48] sm:$0xff]
        %v3969 = vld [vmem:[%s1774 + $0x50] sm:$0xff]
        %v3970 = vld [vmem:[%s1774 + $0x58] sm:$0xff]
        %v3971 = vld [vmem:[%s1774 + $0x60] sm:$0xff]
        %v3972 = vld [vmem:[%s1774 + $0x68] sm:$0xff]
        %v3973 = vld [vmem:[%s1774 + $0x70] sm:$0xff]
        %v3974 = vld [vmem:[%s1774 + $0x78] sm:$0xff]
        %v3975 = vrcp.pop %v3959
        %v3976 = vrcp.pop %v3960
        %v3977 = vrcp.pop %v3961
        %v3978 = vrcp.pop %v3962
        %v3979 = vrcp.pop %v3963
        %v3980 = vrcp.pop %v3964
        %v3981 = vrcp.pop %v3965
        %v3982 = vrcp.pop %v3966
        %v3983 = vrcp.pop %v3967
        %v3984 = vrcp.pop %v3968
        %v3985 = vrcp.pop %v3969
        %v3986 = vrcp.pop %v3970
        %v3987 = vrcp.pop %v3971
        %v3988 = vrcp.pop %v3972
        %v3989 = vrcp.pop %v3973
        %v3990 = vrcp.pop %v3974
        %v3991 = vld [vmem:[%s1871] sm:$0xff]
        %v3992 = vld [vmem:[%s1871 + $0x8] sm:$0xff]
        %v3993 = vld [vmem:[%s1871 + $0x10] sm:$0xff]
        %v3994 = vld [vmem:[%s1871 + $0x18] sm:$0xff]
        %v3995 = vld [vmem:[%s1871 + $0x20] sm:$0xff]
        %v3996 = vld [vmem:[%s1871 + $0x28] sm:$0xff]
        %v3997 = vld [vmem:[%s1871 + $0x30] sm:$0xff]
        %v3998 = vld [vmem:[%s1871 + $0x38] sm:$0xff]
        %v3999 = vld [vmem:[%s1871 + $0x40] sm:$0xff]
        %v4000 = vld [vmem:[%s1871 + $0x48] sm:$0xff]
        %v4001 = vld [vmem:[%s1871 + $0x50] sm:$0xff]
        %v4002 = vld [vmem:[%s1871 + $0x58] sm:$0xff]
        %v4003 = vld [vmem:[%s1871 + $0x60] sm:$0xff]
        %v4004 = vld [vmem:[%s1871 + $0x68] sm:$0xff]
        %v4005 = vld [vmem:[%s1871 + $0x70] sm:$0xff]
        %v4006 = vld [vmem:[%s1871 + $0x78] sm:$0xff]
        %4008 = vset.pattern.permute.xlu0 0
        %4009 = vperm.xlu0 %4008, %v3975
        %v4010 = vpop.permute.xlu0 %4009
        %4013 = vset.pattern.permute.xlu0 0
        %4014 = vperm.xlu0 %4013, %v3976
        %v4015 = vpop.permute.xlu0 %4014
        %4018 = vset.pattern.permute.xlu0 0
        %4019 = vperm.xlu0 %4018, %v3977
        %v4020 = vpop.permute.xlu0 %4019
        %4023 = vset.pattern.permute.xlu0 0
        %4024 = vperm.xlu0 %4023, %v3978
        %v4025 = vpop.permute.xlu0 %4024
        %4028 = vset.pattern.permute.xlu0 0
        %4029 = vperm.xlu0 %4028, %v3979
        %v4030 = vpop.permute.xlu0 %4029
        %4033 = vset.pattern.permute.xlu0 0
        %4034 = vperm.xlu0 %4033, %v3980
        %v4035 = vpop.permute.xlu0 %4034
        %4038 = vset.pattern.permute.xlu0 0
        %4039 = vperm.xlu0 %4038, %v3981
        %v4040 = vpop.permute.xlu0 %4039
        %4043 = vset.pattern.permute.xlu0 0
        %4044 = vperm.xlu0 %4043, %v3982
        %v4045 = vpop.permute.xlu0 %4044
        %4048 = vset.pattern.permute.xlu0 0
        %4049 = vperm.xlu0 %4048, %v3983
        %v4050 = vpop.permute.xlu0 %4049
        %4053 = vset.pattern.permute.xlu0 0
        %4054 = vperm.xlu0 %4053, %v3984
        %v4055 = vpop.permute.xlu0 %4054
        %4058 = vset.pattern.permute.xlu0 0
        %4059 = vperm.xlu0 %4058, %v3985
        %v4060 = vpop.permute.xlu0 %4059
        %4063 = vset.pattern.permute.xlu0 0
        %4064 = vperm.xlu0 %4063, %v3986
        %v4065 = vpop.permute.xlu0 %4064
        %4068 = vset.pattern.permute.xlu0 0
        %4069 = vperm.xlu0 %4068, %v3987
        %v4070 = vpop.permute.xlu0 %4069
        %4073 = vset.pattern.permute.xlu0 0
        %4074 = vperm.xlu0 %4073, %v3988
        %v4075 = vpop.permute.xlu0 %4074
        %4078 = vset.pattern.permute.xlu0 0
        %4079 = vperm.xlu0 %4078, %v3989
        %v4080 = vpop.permute.xlu0 %4079
        %4083 = vset.pattern.permute.xlu0 0
        %4084 = vperm.xlu0 %4083, %v3990
        %v4085 = vpop.permute.xlu0 %4084
        %v4087 = vmul.f32 %v3991, %v4010
        %v4088 = vmul.f32 %v3992, %v4015
        %v4089 = vmul.f32 %v3993, %v4020
        %v4090 = vmul.f32 %v3994, %v4025
        %v4091 = vmul.f32 %v3995, %v4030
        %v4092 = vmul.f32 %v3996, %v4035
        %v4093 = vmul.f32 %v3997, %v4040
        %v4094 = vmul.f32 %v3998, %v4045
        %v4095 = vmul.f32 %v3999, %v4050
        %v4096 = vmul.f32 %v4000, %v4055
        %v4097 = vmul.f32 %v4001, %v4060
        %v4098 = vmul.f32 %v4002, %v4065
        %v4099 = vmul.f32 %v4003, %v4070
        %v4100 = vmul.f32 %v4004, %v4075
        %v4101 = vmul.f32 %v4005, %v4080
        %v4102 = vmul.f32 %v4006, %v4085
        %v4103 = vld [vmem:[%s2603] sm:$0xff]
        %v4104 = vld [vmem:[%s2603 + $0x8] sm:$0xff]
        %v4105 = vld [vmem:[%s2603 + $0x10] sm:$0xff]
        %v4106 = vld [vmem:[%s2603 + $0x18] sm:$0xff]
        %v4107 = vld [vmem:[%s2603 + $0x20] sm:$0xff]
        %v4108 = vld [vmem:[%s2603 + $0x28] sm:$0xff]
        %v4109 = vld [vmem:[%s2603 + $0x30] sm:$0xff]
        %v4110 = vld [vmem:[%s2603 + $0x38] sm:$0xff]
        %v4111 = vld [vmem:[%s2603 + $0x40] sm:$0xff]
        %v4112 = vld [vmem:[%s2603 + $0x48] sm:$0xff]
        %v4113 = vld [vmem:[%s2603 + $0x50] sm:$0xff]
        %v4114 = vld [vmem:[%s2603 + $0x58] sm:$0xff]
        %v4115 = vld [vmem:[%s2603 + $0x60] sm:$0xff]
        %v4116 = vld [vmem:[%s2603 + $0x68] sm:$0xff]
        %v4117 = vld [vmem:[%s2603 + $0x70] sm:$0xff]
        %v4118 = vld [vmem:[%s2603 + $0x78] sm:$0xff]
        %v4119 = vrcp.pop %v4103
        %v4120 = vrcp.pop %v4104
        %v4121 = vrcp.pop %v4105
        %v4122 = vrcp.pop %v4106
        %v4123 = vrcp.pop %v4107
        %v4124 = vrcp.pop %v4108
        %v4125 = vrcp.pop %v4109
        %v4126 = vrcp.pop %v4110
        %v4127 = vrcp.pop %v4111
        %v4128 = vrcp.pop %v4112
        %v4129 = vrcp.pop %v4113
        %v4130 = vrcp.pop %v4114
        %v4131 = vrcp.pop %v4115
        %v4132 = vrcp.pop %v4116
        %v4133 = vrcp.pop %v4117
        %v4134 = vrcp.pop %v4118
        %v4135 = vld [vmem:[%s2700] sm:$0xff]
        %v4136 = vld [vmem:[%s2700 + $0x8] sm:$0xff]
        %v4137 = vld [vmem:[%s2700 + $0x10] sm:$0xff]
        %v4138 = vld [vmem:[%s2700 + $0x18] sm:$0xff]
        %v4139 = vld [vmem:[%s2700 + $0x20] sm:$0xff]
        %v4140 = vld [vmem:[%s2700 + $0x28] sm:$0xff]
        %v4141 = vld [vmem:[%s2700 + $0x30] sm:$0xff]
        %v4142 = vld [vmem:[%s2700 + $0x38] sm:$0xff]
        %v4143 = vld [vmem:[%s2700 + $0x40] sm:$0xff]
        %v4144 = vld [vmem:[%s2700 + $0x48] sm:$0xff]
        %v4145 = vld [vmem:[%s2700 + $0x50] sm:$0xff]
        %v4146 = vld [vmem:[%s2700 + $0x58] sm:$0xff]
        %v4147 = vld [vmem:[%s2700 + $0x60] sm:$0xff]
        %v4148 = vld [vmem:[%s2700 + $0x68] sm:$0xff]
        %v4149 = vld [vmem:[%s2700 + $0x70] sm:$0xff]
        %v4150 = vld [vmem:[%s2700 + $0x78] sm:$0xff]
        %4152 = vset.pattern.permute.xlu0 0
        %4153 = vperm.xlu0 %4152, %v4119
        %v4154 = vpop.permute.xlu0 %4153
        %4157 = vset.pattern.permute.xlu0 0
        %4158 = vperm.xlu0 %4157, %v4120
        %v4159 = vpop.permute.xlu0 %4158
        %4162 = vset.pattern.permute.xlu0 0
        %4163 = vperm.xlu0 %4162, %v4121
        %v4164 = vpop.permute.xlu0 %4163
        %4167 = vset.pattern.permute.xlu0 0
        %4168 = vperm.xlu0 %4167, %v4122
        %v4169 = vpop.permute.xlu0 %4168
        %4172 = vset.pattern.permute.xlu0 0
        %4173 = vperm.xlu0 %4172, %v4123
        %v4174 = vpop.permute.xlu0 %4173
        %4177 = vset.pattern.permute.xlu0 0
        %4178 = vperm.xlu0 %4177, %v4124
        %v4179 = vpop.permute.xlu0 %4178
        %4182 = vset.pattern.permute.xlu0 0
        %4183 = vperm.xlu0 %4182, %v4125
        %v4184 = vpop.permute.xlu0 %4183
        %4187 = vset.pattern.permute.xlu0 0
        %4188 = vperm.xlu0 %4187, %v4126
        %v4189 = vpop.permute.xlu0 %4188
        %4192 = vset.pattern.permute.xlu0 0
        %4193 = vperm.xlu0 %4192, %v4127
        %v4194 = vpop.permute.xlu0 %4193
        %4197 = vset.pattern.permute.xlu0 0
        %4198 = vperm.xlu0 %4197, %v4128
        %v4199 = vpop.permute.xlu0 %4198
        %4202 = vset.pattern.permute.xlu0 0
        %4203 = vperm.xlu0 %4202, %v4129
        %v4204 = vpop.permute.xlu0 %4203
        %4207 = vset.pattern.permute.xlu0 0
        %4208 = vperm.xlu0 %4207, %v4130
        %v4209 = vpop.permute.xlu0 %4208
        %4212 = vset.pattern.permute.xlu0 0
        %4213 = vperm.xlu0 %4212, %v4131
        %v4214 = vpop.permute.xlu0 %4213
        %4217 = vset.pattern.permute.xlu0 0
        %4218 = vperm.xlu0 %4217, %v4132
        %v4219 = vpop.permute.xlu0 %4218
        %4222 = vset.pattern.permute.xlu0 0
        %4223 = vperm.xlu0 %4222, %v4133
        %v4224 = vpop.permute.xlu0 %4223
        %4227 = vset.pattern.permute.xlu0 0
        %4228 = vperm.xlu0 %4227, %v4134
        %v4229 = vpop.permute.xlu0 %4228
        %v4231 = vmul.f32 %v4135, %v4154
        %v4232 = vmul.f32 %v4136, %v4159
        %v4233 = vmul.f32 %v4137, %v4164
        %v4234 = vmul.f32 %v4138, %v4169
        %v4235 = vmul.f32 %v4139, %v4174
        %v4236 = vmul.f32 %v4140, %v4179
        %v4237 = vmul.f32 %v4141, %v4184
        %v4238 = vmul.f32 %v4142, %v4189
        %v4239 = vmul.f32 %v4143, %v4194
        %v4240 = vmul.f32 %v4144, %v4199
        %v4241 = vmul.f32 %v4145, %v4204
        %v4242 = vmul.f32 %v4146, %v4209
        %v4243 = vmul.f32 %v4147, %v4214
        %v4244 = vmul.f32 %v4148, %v4219
        %v4245 = vmul.f32 %v4149, %v4224
        %v4246 = vmul.f32 %v4150, %v4229
        %v4247 = vld [vmem:[%s3424] sm:$0xff]
        %v4248 = vld [vmem:[%s3424 + $0x8] sm:$0xff]
        %v4249 = vld [vmem:[%s3424 + $0x10] sm:$0xff]
        %v4250 = vld [vmem:[%s3424 + $0x18] sm:$0xff]
        %v4251 = vld [vmem:[%s3424 + $0x20] sm:$0xff]
        %v4252 = vld [vmem:[%s3424 + $0x28] sm:$0xff]
        %v4253 = vld [vmem:[%s3424 + $0x30] sm:$0xff]
        %v4254 = vld [vmem:[%s3424 + $0x38] sm:$0xff]
        %v4255 = vld [vmem:[%s3424 + $0x40] sm:$0xff]
        %v4256 = vld [vmem:[%s3424 + $0x48] sm:$0xff]
        %v4257 = vld [vmem:[%s3424 + $0x50] sm:$0xff]
        %v4258 = vld [vmem:[%s3424 + $0x58] sm:$0xff]
        %v4259 = vld [vmem:[%s3424 + $0x60] sm:$0xff]
        %v4260 = vld [vmem:[%s3424 + $0x68] sm:$0xff]
        %v4261 = vld [vmem:[%s3424 + $0x70] sm:$0xff]
        %v4262 = vld [vmem:[%s3424 + $0x78] sm:$0xff]
        %v4263 = vrcp.pop %v4247
        %v4264 = vrcp.pop %v4248
        %v4265 = vrcp.pop %v4249
        %v4266 = vrcp.pop %v4250
        %v4267 = vrcp.pop %v4251
        %v4268 = vrcp.pop %v4252
        %v4269 = vrcp.pop %v4253
        %v4270 = vrcp.pop %v4254
        %v4271 = vrcp.pop %v4255
        %v4272 = vrcp.pop %v4256
        %v4273 = vrcp.pop %v4257
        %v4274 = vrcp.pop %v4258
        %v4275 = vrcp.pop %v4259
        %v4276 = vrcp.pop %v4260
        %v4277 = vrcp.pop %v4261
        %v4278 = vrcp.pop %v4262
        %v4279 = vld [vmem:[%s3521] sm:$0xff]
        %v4280 = vld [vmem:[%s3521 + $0x8] sm:$0xff]
        %v4281 = vld [vmem:[%s3521 + $0x10] sm:$0xff]
        %v4282 = vld [vmem:[%s3521 + $0x18] sm:$0xff]
        %v4283 = vld [vmem:[%s3521 + $0x20] sm:$0xff]
        %v4284 = vld [vmem:[%s3521 + $0x28] sm:$0xff]
        %v4285 = vld [vmem:[%s3521 + $0x30] sm:$0xff]
        %v4286 = vld [vmem:[%s3521 + $0x38] sm:$0xff]
        %v4287 = vld [vmem:[%s3521 + $0x40] sm:$0xff]
        %v4288 = vld [vmem:[%s3521 + $0x48] sm:$0xff]
        %v4289 = vld [vmem:[%s3521 + $0x50] sm:$0xff]
        %v4290 = vld [vmem:[%s3521 + $0x58] sm:$0xff]
        %v4291 = vld [vmem:[%s3521 + $0x60] sm:$0xff]
        %v4292 = vld [vmem:[%s3521 + $0x68] sm:$0xff]
        %v4293 = vld [vmem:[%s3521 + $0x70] sm:$0xff]
        %v4294 = vld [vmem:[%s3521 + $0x78] sm:$0xff]
        %4296 = vset.pattern.permute.xlu0 0
        %4297 = vperm.xlu0 %4296, %v4263
        %v4298 = vpop.permute.xlu0 %4297
        %4301 = vset.pattern.permute.xlu0 0
        %4302 = vperm.xlu0 %4301, %v4264
        %v4303 = vpop.permute.xlu0 %4302
        %4306 = vset.pattern.permute.xlu0 0
        %4307 = vperm.xlu0 %4306, %v4265
        %v4308 = vpop.permute.xlu0 %4307
        %4311 = vset.pattern.permute.xlu0 0
        %4312 = vperm.xlu0 %4311, %v4266
        %v4313 = vpop.permute.xlu0 %4312
        %4316 = vset.pattern.permute.xlu0 0
        %4317 = vperm.xlu0 %4316, %v4267
        %v4318 = vpop.permute.xlu0 %4317
        %4321 = vset.pattern.permute.xlu0 0
        %4322 = vperm.xlu0 %4321, %v4268
        %v4323 = vpop.permute.xlu0 %4322
        %4326 = vset.pattern.permute.xlu0 0
        %4327 = vperm.xlu0 %4326, %v4269
        %v4328 = vpop.permute.xlu0 %4327
        %4331 = vset.pattern.permute.xlu0 0
        %4332 = vperm.xlu0 %4331, %v4270
        %v4333 = vpop.permute.xlu0 %4332
        %4336 = vset.pattern.permute.xlu0 0
        %4337 = vperm.xlu0 %4336, %v4271
        %v4338 = vpop.permute.xlu0 %4337
        %4341 = vset.pattern.permute.xlu0 0
        %4342 = vperm.xlu0 %4341, %v4272
        %v4343 = vpop.permute.xlu0 %4342
        %4346 = vset.pattern.permute.xlu0 0
        %4347 = vperm.xlu0 %4346, %v4273
        %v4348 = vpop.permute.xlu0 %4347
        %4351 = vset.pattern.permute.xlu0 0
        %4352 = vperm.xlu0 %4351, %v4274
        %v4353 = vpop.permute.xlu0 %4352
        %4356 = vset.pattern.permute.xlu0 0
        %4357 = vperm.xlu0 %4356, %v4275
        %v4358 = vpop.permute.xlu0 %4357
        %4361 = vset.pattern.permute.xlu0 0
        %4362 = vperm.xlu0 %4361, %v4276
        %v4363 = vpop.permute.xlu0 %4362
        %4366 = vset.pattern.permute.xlu0 0
        %4367 = vperm.xlu0 %4366, %v4277
        %v4368 = vpop.permute.xlu0 %4367
        %4371 = vset.pattern.permute.xlu0 0
        %4372 = vperm.xlu0 %4371, %v4278
        %v4373 = vpop.permute.xlu0 %4372
        %v4375 = vmul.f32 %v4279, %v4298
        %v4376 = vmul.f32 %v4280, %v4303
        %v4377 = vmul.f32 %v4281, %v4308
        %v4378 = vmul.f32 %v4282, %v4313
        %v4379 = vmul.f32 %v4283, %v4318
        %v4380 = vmul.f32 %v4284, %v4323
        %v4381 = vmul.f32 %v4285, %v4328
        %v4382 = vmul.f32 %v4286, %v4333
        %v4383 = vmul.f32 %v4287, %v4338
        %v4384 = vmul.f32 %v4288, %v4343
        %v4385 = vmul.f32 %v4289, %v4348
        %v4386 = vmul.f32 %v4290, %v4353
        %v4387 = vmul.f32 %v4291, %v4358
        %v4388 = vmul.f32 %v4292, %v4363
        %v4389 = vmul.f32 %v4293, %v4368
        %v4390 = vmul.f32 %v4294, %v4373
        %4407 = vrot.lane.b32.xlu0 %v4087, 8
        %v4408 = vpop.permute.xlu0 %4407
        %4409 = vrot.lane.b32.xlu0 %v4088, 8
        %v4410 = vpop.permute.xlu0 %4409
        %4411 = vrot.lane.b32.xlu0 %v4089, 8
        %v4412 = vpop.permute.xlu0 %4411
        %4413 = vrot.lane.b32.xlu0 %v4090, 8
        %v4414 = vpop.permute.xlu0 %4413
        %4415 = vrot.lane.b32.xlu0 %v4091, 8
        %v4416 = vpop.permute.xlu0 %4415
        %4417 = vrot.lane.b32.xlu0 %v4092, 8
        %v4418 = vpop.permute.xlu0 %4417
        %4419 = vrot.lane.b32.xlu0 %v4093, 8
        %v4420 = vpop.permute.xlu0 %4419
        %4421 = vrot.lane.b32.xlu0 %v4094, 8
        %v4422 = vpop.permute.xlu0 %4421
        %4423 = vrot.lane.b32.xlu0 %v4095, 8
        %v4424 = vpop.permute.xlu0 %4423
        %4425 = vrot.lane.b32.xlu0 %v4096, 8
        %v4426 = vpop.permute.xlu0 %4425
        %4427 = vrot.lane.b32.xlu0 %v4097, 8
        %v4428 = vpop.permute.xlu0 %4427
        %4429 = vrot.lane.b32.xlu0 %v4098, 8
        %v4430 = vpop.permute.xlu0 %4429
        %4431 = vrot.lane.b32.xlu0 %v4099, 8
        %v4432 = vpop.permute.xlu0 %4431
        %4433 = vrot.lane.b32.xlu0 %v4100, 8
        %v4434 = vpop.permute.xlu0 %4433
        %4435 = vrot.lane.b32.xlu0 %v4101, 8
        %v4436 = vpop.permute.xlu0 %4435
        %4437 = vrot.lane.b32.xlu0 %v4102, 8
        %v4438 = vpop.permute.xlu0 %4437
        %4471 = vrot.lane.b32.xlu0 %v4231, 16
        %v4472 = vpop.permute.xlu0 %4471
        %4473 = vrot.lane.b32.xlu0 %v4232, 16
        %v4474 = vpop.permute.xlu0 %4473
        %4475 = vrot.lane.b32.xlu0 %v4233, 16
        %v4476 = vpop.permute.xlu0 %4475
        %4477 = vrot.lane.b32.xlu0 %v4234, 16
        %v4478 = vpop.permute.xlu0 %4477
        %4479 = vrot.lane.b32.xlu0 %v4235, 16
        %v4480 = vpop.permute.xlu0 %4479
        %4481 = vrot.lane.b32.xlu0 %v4236, 16
        %v4482 = vpop.permute.xlu0 %4481
        %4483 = vrot.lane.b32.xlu0 %v4237, 16
        %v4484 = vpop.permute.xlu0 %4483
        %4485 = vrot.lane.b32.xlu0 %v4238, 16
        %v4486 = vpop.permute.xlu0 %4485
        %4487 = vrot.lane.b32.xlu0 %v4239, 16
        %v4488 = vpop.permute.xlu0 %4487
        %4489 = vrot.lane.b32.xlu0 %v4240, 16
        %v4490 = vpop.permute.xlu0 %4489
        %4491 = vrot.lane.b32.xlu0 %v4241, 16
        %v4492 = vpop.permute.xlu0 %4491
        %4493 = vrot.lane.b32.xlu0 %v4242, 16
        %v4494 = vpop.permute.xlu0 %4493
        %4495 = vrot.lane.b32.xlu0 %v4243, 16
        %v4496 = vpop.permute.xlu0 %4495
        %4497 = vrot.lane.b32.xlu0 %v4244, 16
        %v4498 = vpop.permute.xlu0 %4497
        %4499 = vrot.lane.b32.xlu0 %v4245, 16
        %v4500 = vpop.permute.xlu0 %4499
        %4501 = vrot.lane.b32.xlu0 %v4246, 16
        %v4502 = vpop.permute.xlu0 %4501
        %4535 = vrot.lane.b32.xlu0 %v4375, 24
        %v4536 = vpop.permute.xlu0 %4535
        %4537 = vrot.lane.b32.xlu0 %v4376, 24
        %v4538 = vpop.permute.xlu0 %4537
        %4539 = vrot.lane.b32.xlu0 %v4377, 24
        %v4540 = vpop.permute.xlu0 %4539
        %4541 = vrot.lane.b32.xlu0 %v4378, 24
        %v4542 = vpop.permute.xlu0 %4541
        %4543 = vrot.lane.b32.xlu0 %v4379, 24
        %v4544 = vpop.permute.xlu0 %4543
        %4545 = vrot.lane.b32.xlu0 %v4380, 24
        %v4546 = vpop.permute.xlu0 %4545
        %4547 = vrot.lane.b32.xlu0 %v4381, 24
        %v4548 = vpop.permute.xlu0 %4547
        %4549 = vrot.lane.b32.xlu0 %v4382, 24
        %v4550 = vpop.permute.xlu0 %4549
        %4551 = vrot.lane.b32.xlu0 %v4383, 24
        %v4552 = vpop.permute.xlu0 %4551
        %4553 = vrot.lane.b32.xlu0 %v4384, 24
        %v4554 = vpop.permute.xlu0 %4553
        %4555 = vrot.lane.b32.xlu0 %v4385, 24
        %v4556 = vpop.permute.xlu0 %4555
        %4557 = vrot.lane.b32.xlu0 %v4386, 24
        %v4558 = vpop.permute.xlu0 %4557
        %4559 = vrot.lane.b32.xlu0 %v4387, 24
        %v4560 = vpop.permute.xlu0 %4559
        %4561 = vrot.lane.b32.xlu0 %v4388, 24
        %v4562 = vpop.permute.xlu0 %4561
        %4563 = vrot.lane.b32.xlu0 %v4389, 24
        %v4564 = vpop.permute.xlu0 %4563
        %4565 = vrot.lane.b32.xlu0 %v4390, 24
        %v4566 = vpop.permute.xlu0 %4565
        %v4583 = vsel %vm560, %v3943, %v4408
        %v4584 = vsel %vm560, %v3944, %v4410
        %v4585 = vsel %vm560, %v3945, %v4412
        %v4586 = vsel %vm560, %v3946, %v4414
        %v4587 = vsel %vm560, %v3947, %v4416
        %v4588 = vsel %vm560, %v3948, %v4418
        %v4589 = vsel %vm560, %v3949, %v4420
        %v4590 = vsel %vm560, %v3950, %v4422
        %v4591 = vsel %vm560, %v3951, %v4424
        %v4592 = vsel %vm560, %v3952, %v4426
        %v4593 = vsel %vm560, %v3953, %v4428
        %v4594 = vsel %vm560, %v3954, %v4430
        %v4595 = vsel %vm560, %v3955, %v4432
        %v4596 = vsel %vm560, %v3956, %v4434
        %v4597 = vsel %vm560, %v3957, %v4436
        %v4598 = vsel %vm560, %v3958, %v4438
        %vm4599 = vcmask 130048
        %v4600 = vsel %vm4599, %v4583, %v4472
        %v4601 = vsel %vm4599, %v4584, %v4474
        %v4602 = vsel %vm4599, %v4585, %v4476
        %v4603 = vsel %vm4599, %v4586, %v4478
        %v4604 = vsel %vm4599, %v4587, %v4480
        %v4605 = vsel %vm4599, %v4588, %v4482
        %v4606 = vsel %vm4599, %v4589, %v4484
        %v4607 = vsel %vm4599, %v4590, %v4486
        %v4608 = vsel %vm4599, %v4591, %v4488
        %v4609 = vsel %vm4599, %v4592, %v4490
        %v4610 = vsel %vm4599, %v4593, %v4492
        %v4611 = vsel %vm4599, %v4594, %v4494
        %v4612 = vsel %vm4599, %v4595, %v4496
        %v4613 = vsel %vm4599, %v4596, %v4498
        %v4614 = vsel %vm4599, %v4597, %v4500
        %v4615 = vsel %vm4599, %v4598, %v4502
        %vm4616 = vcmask 195584
        %v4617 = vsel %vm4616, %v4600, %v4536
        %v4618 = vsel %vm4616, %v4601, %v4538
        %v4619 = vsel %vm4616, %v4602, %v4540
        %v4620 = vsel %vm4616, %v4603, %v4542
        %v4621 = vsel %vm4616, %v4604, %v4544
        %v4622 = vsel %vm4616, %v4605, %v4546
        %v4623 = vsel %vm4616, %v4606, %v4548
        %v4624 = vsel %vm4616, %v4607, %v4550
        %v4625 = vsel %vm4616, %v4608, %v4552
        %v4626 = vsel %vm4616, %v4609, %v4554
        %v4627 = vsel %vm4616, %v4610, %v4556
        %v4628 = vsel %vm4616, %v4611, %v4558
        %v4629 = vsel %vm4616, %v4612, %v4560
        %v4630 = vsel %vm4616, %v4613, %v4562
        %v4631 = vsel %vm4616, %v4614, %v4564
        %v4632 = vsel %vm4616, %v4615, %v4566
        %vm4633 = vcmask 261120
        %4634 = vst.msk [vmem:[%s287] sm:$0xff] %vm4633, %v4617
        %4635 = vst.msk [vmem:[%s287 + $0x8] sm:$0xff] %vm4633, %v4618
        %4636 = vst.msk [vmem:[%s287 + $0x10] sm:$0xff] %vm4633, %v4619
        %4637 = vst.msk [vmem:[%s287 + $0x18] sm:$0xff] %vm4633, %v4620
        %4638 = vst.msk [vmem:[%s287 + $0x20] sm:$0xff] %vm4633, %v4621
        %4639 = vst.msk [vmem:[%s287 + $0x28] sm:$0xff] %vm4633, %v4622
        %4640 = vst.msk [vmem:[%s287 + $0x30] sm:$0xff] %vm4633, %v4623
        %4641 = vst.msk [vmem:[%s287 + $0x38] sm:$0xff] %vm4633, %v4624
        %4642 = vst.msk [vmem:[%s287 + $0x40] sm:$0xff] %vm4633, %v4625
        %4643 = vst.msk [vmem:[%s287 + $0x48] sm:$0xff] %vm4633, %v4626
        %4644 = vst.msk [vmem:[%s287 + $0x50] sm:$0xff] %vm4633, %v4627
        %4645 = vst.msk [vmem:[%s287 + $0x58] sm:$0xff] %vm4633, %v4628
        %4646 = vst.msk [vmem:[%s287 + $0x60] sm:$0xff] %vm4633, %v4629
        %4647 = vst.msk [vmem:[%s287 + $0x68] sm:$0xff] %vm4633, %v4630
        %4648 = vst.msk [vmem:[%s287 + $0x70] sm:$0xff] %vm4633, %v4631
        %4649 = vst.msk [vmem:[%s287 + $0x78] sm:$0xff] %vm4633, %v4632
      $region40: #{block_forward.10} parent=31 // pred_fallthru
        _
      %s4650 = smul.u32 16, %s20
      %p4651 = scmp.lt.s32.totalorder %s19, 1
      %s4652 = scalar_select %p4651, %s19, 1
      %p4653 = scmp.lt.s32.totalorder %s4650, 31
      %s4654 = scalar_select %p4653, %s4650, 31
      %s4655 = smul.addr %s4652, 32
      %s4656 = sadd.s32 %s4654, %s4655
      %s4657 = smul.addr %s4656, 8
      %s4658 = scalar_lea.vmem %s3, %s4657
      // Predicated region
      $region41: #{block_forward.10} parent=31 // pred_check
        %p4659 = pneg %p137
      $region42: #{block_forward.10} parent=31 // pred_check_branch
        %4661 = sbr.rel (%p4659) target = $region44
      $region43: #{block_forward.10} parent=31 // pred_region
        %s4662 = smul.u32 16, %s20
      $region44: #{block_forward.10} parent=31 // pred_fallthru
        _
    $region32: #{block_forward.10} parent=5 // pred_fallthru
      _
    %p4663 = scmp.le.s32.totalorder 2, %s9
    // Predicated region
    $region45: #{block_forward.10} parent=5 // pred_check
      %p4664 = pneg %p4663
    $region46: #{block_forward.10} parent=5 // pred_check_branch
      %4666 = sbr.rel (%p4664) target = $region48
    $region47: #{block_forward.10} parent=5 // pred_region
      %s4667 = ssub.s32 %s9, 2
      // Predicated region
      $region49: #{block_forward.10} parent=47 // pred_check
        %p4668 = pneg %p143
      $region50: #{block_forward.10} parent=47 // pred_check_branch
        %4670 = sbr.rel (%p4668) target = $region52
      $region51: #{block_forward.10} parent=47 // pred_region
        %s4671 = smul.u32 16, %s23
        %p4672 = scmp.lt.s32.totalorder %s22, 1
        %s4673 = scalar_select %p4672, %s22, 1
        %p4674 = scmp.lt.s32.totalorder %s4671, 31
        %s4675 = scalar_select %p4674, %s4671, 31
        %s4676 = smul.addr %s4673, 32
        %s4677 = sadd.s32 %s4675, %s4676
        %s4678 = smul.addr %s4677, 8
        %s4679 = scalar_lea.vmem %s3, %s4678
      $region52: #{block_forward.10} parent=47 // pred_fallthru
        _
    $region48: #{block_forward.10} parent=5 // pred_fallthru
      _
  $region6: #{block_forward.10} parent=0 // loop_footer
    %s13 = sadd.s32 1, %s9
  $region7: #{block_forward.10} parent=0 // loop_footer_branch
    %8 = sbr.rel target = $region3
  $region8: #{block_forward.10} parent=0 // loop_exit
    _

</llo_original>
